<compile_context>
chip_gen: v5e
topology: v5e:2x2
jax: 0.10.0
libtpu: 0.0.40
codegen_flags: <defaults>
</compile_context>

<pallas_src>
import math

import jax
import jax.numpy as jnp
from jax.experimental import pallas as pl
from jax.experimental.pallas import tpu as pltpu


# Scoped-VMEM cap: above the 16/32 MiB defaults, below v7x's 64 MiB physical.
_VMEM_LIMIT_BYTES = 48 * 1024 * 1024
_TARGET_PIXELS = 2048      # ~output pixels per grid step / per in-kernel matmul


def _pick_row_tile(H, W, target=_TARGET_PIXELS):
    """Row tile: a divisor of H that is a multiple of 8 (or H itself), sized so
    th*W stays near `target` pixels.  th>=8 keeps halo read amplification at
    (th+2)/th <= 1.25; th%8==0 (or th==H) keeps the lane-dense conv4 output
    block (1, th, W) legal under the (8,128) tiling rule."""
    divs = [d for d in range(1, H + 1) if H % d == 0]
    cands = [d for d in divs if d % 8 == 0 or d == H]
    fit = [d for d in cands if d * W <= max(target, 8 * W)]
    if fit:
        return max(fit)
    return min(cands)


def _pick_chunk_rows(th, W, target=_TARGET_PIXELS):
    """Rows per in-kernel im2col/matmul chunk (divides th).  Bounds the
    (rc*W, 9*Cin) bf16 LHS scratch while keeping the MXU M dimension large."""
    best = 1
    for d in range(1, th + 1):
        if th % d == 0 and d * W <= max(target, W):
            best = d
    return best


# ----------------------------------------------------------------------------
# In-kernel helpers
# ----------------------------------------------------------------------------

def _fill_xpad(xpad_ref, mid_ref, top_ref, bot_ref):
    """Assemble the zero-padded (th+2, W+2, Cin) halo block in VMEM scratch.

    The width pad happens here (VMEM stores only); the height halo rows come
    from the clamped top/bot BlockSpec operands and are zeroed at the image
    border via `pl.when` (no 0/1 multiply, so non-finite inputs stay safe).
    """
    i = pl.program_id(1)
    nrb = pl.num_programs(1)
    th, W, cin = mid_ref.shape[1], mid_ref.shape[2], mid_ref.shape[3]

    zcol = jnp.zeros((th + 2, 1, cin), xpad_ref.dtype)
    zrow = jnp.zeros((1, W, cin), xpad_ref.dtype)

    xpad_ref[:, 0:1, :] = zcol                   # left pad column
    xpad_ref[:, W + 1:W + 2, :] = zcol           # right pad column
    xpad_ref[1:th + 1, 1:W + 1, :] = mid_ref[0]  # interior rows

    @pl.when(i > 0)
    def _():
        xpad_ref[0:1, 1:W + 1, :] = top_ref[0]

    @pl.when(i == 0)
    def _():
        xpad_ref[0:1, 1:W + 1, :] = zrow

    @pl.when(i < nrb - 1)
    def _():
        xpad_ref[th + 1:th + 2, 1:W + 1, :] = bot_ref[0]

    @pl.when(i == nrb - 1)
    def _():
        xpad_ref[th + 1:th + 2, 1:W + 1, :] = zrow


# ----------------------------------------------------------------------------
# Kernels
# ----------------------------------------------------------------------------

def _make_conv_gdn_kernel(rc):
    """3x3 conv (stride 1, pad 1) + bias + GDN via in-VMEM im2col matmul."""

    def kernel(mid_ref, top_ref, bot_ref, w_ref, b_ref, gT_ref, beta_ref,
               o_ref, xpad_ref, lhs_ref):
        th, W, cin = mid_ref.shape[1], mid_ref.shape[2], mid_ref.shape[3]
        cout = o_ref.shape[3]

        _fill_xpad(xpad_ref, mid_ref, top_ref, bot_ref)

        for c0 in range(0, th, rc):              # static row-chunk loop
            # Build the (rc*W, 9*Cin) bf16 im2col LHS from static halo slices.
            for t in range(9):
                dy, dx = t // 3, t % 3
                tap = xpad_ref[c0 + dy:c0 + dy + rc, dx:dx + W, :]
                lhs_ref[:, t * cin:(t + 1) * cin] = tap.reshape(rc * W, cin)

            # One deep-K MXU matmul (bf16 x bf16 -> f32) + bias.
            y = jnp.dot(lhs_ref[...], w_ref[...],
                        preferred_element_type=jnp.float32) + b_ref[...]

            # GDN: denominator matmul in bf16 on the MXU; rsqrt/scale in f32.
            den = jnp.dot((y * y).astype(jnp.bfloat16), gT_ref[...],
                          preferred_element_type=jnp.float32) + beta_ref[...]
            y = y * jax.lax.rsqrt(den)

            o_ref[0, c0:c0 + rc] = y.astype(o_ref.dtype).reshape(rc, W, cout)

    return kernel


def _conv_out_kernel(mid_ref, top_ref, bot_ref, w_ref, b_ref, o_ref, xpad_ref):
    """Final 3x3 conv with Cout=1: lane-dense (th, W) output via VPU multiply
    + cross-lane (channel) reduce instead of an N=1 MXU matmul."""
    th, W, cin = mid_ref.shape[1], mid_ref.shape[2], mid_ref.shape[3]

    _fill_xpad(xpad_ref, mid_ref, top_ref, bot_ref)

    acc = jnp.zeros((th, W), jnp.float32)
    for t in range(9):
        dy, dx = t // 3, t % 3
        tap = xpad_ref[dy:dy + th, dx:dx + W, :].astype(jnp.float32)
        wv = w_ref[t:t + 1, :].reshape(1, 1, cin)
        acc = acc + jnp.sum(tap * wv, axis=-1)

    o_ref[...] = (acc + b_ref[...]).reshape(1, th, W)


# ----------------------------------------------------------------------------
# Layer wrappers
# ----------------------------------------------------------------------------

def conv1_gdn_layer(x_nhwc, w, b, gamma, beta, *, th):
    """Layer 1 (Cin=3): 3x3 conv folded into one K=27 matmul + bias + GDN."""
    B, H, W, Cin = x_nhwc.shape
    Cout = w.shape[0]
    K = 9 * Cin

    xb = x_nhwc.astype(jnp.bfloat16)
    xp = jnp.pad(xb, ((0, 0), (1, 1), (1, 1), (0, 0)))
    # HBM im2col only for the tiny 3-channel input (27 channels, negligible).
    x27 = jnp.concatenate(
        [xp[:, dy:dy + H, dx:dx + W, :] for dy in range(3) for dx in range(3)],
        axis=-1)                                                 # (B,H,W,27)

    w_mat = jnp.transpose(w, (2, 3, 1, 0)).reshape(K, Cout).astype(jnp.bfloat16)
    b2 = b.reshape(1, Cout).astype(jnp.float32)
    gT = jnp.transpose(gamma).astype(jnp.bfloat16)
    beta2 = beta.reshape(1, Cout).astype(jnp.float32)

    def kernel(x_ref, w_ref, b_ref, gT_ref, beta_ref, o_ref):
        th_, W_, K_ = x_ref.shape[1], x_ref.shape[2], x_ref.shape[3]
        cout = o_ref.shape[3]
        x2d = x_ref[0].reshape(th_ * W_, K_)
        y = jnp.dot(x2d, w_ref[...],
                    preferred_element_type=jnp.float32) + b_ref[...]
        den = jnp.dot((y * y).astype(jnp.bfloat16), gT_ref[...],
                      preferred_element_type=jnp.float32) + beta_ref[...]
        y = y * jax.lax.rsqrt(den)
        o_ref[...] = y.astype(o_ref.dtype).reshape(1, th_, W_, cout)

    return pl.pallas_call(
        kernel,
        out_shape=jax.ShapeDtypeStruct((B, H, W, Cout), jnp.bfloat16),
        grid=(B, H // th),
        in_specs=[
            pl.BlockSpec((1, th, W, K), lambda bb, i: (bb, i, 0, 0)),
            pl.BlockSpec((K, Cout), lambda bb, i: (0, 0)),
            pl.BlockSpec((1, Cout), lambda bb, i: (0, 0)),
            pl.BlockSpec((Cout, Cout), lambda bb, i: (0, 0)),
            pl.BlockSpec((1, Cout), lambda bb, i: (0, 0)),
        ],
        out_specs=pl.BlockSpec((1, th, W, Cout), lambda bb, i: (bb, i, 0, 0)),
        compiler_params=pltpu.CompilerParams(
            dimension_semantics=("parallel", "parallel"),
            vmem_limit_bytes=_VMEM_LIMIT_BYTES),
    )(x27, w_mat, b2, gT, beta2)


def conv_gdn_layer(x_nhwc, w, b, gamma, beta, *, th):
    """Middle layers: 3x3 conv + bias + GDN; unpadded bf16 activation in,
    unpadded bf16 activation out (no HBM pad round trip)."""
    B, H, W, Cin = x_nhwc.shape
    Cout = w.shape[0]
    assert H % th == 0, "row tile must divide H"
    nrb = H // th
    rc = _pick_chunk_rows(th, W)

    wt = jnp.transpose(w, (2, 3, 1, 0)).reshape(9 * Cin, Cout).astype(jnp.bfloat16)
    b2 = b.reshape(1, Cout).astype(jnp.float32)
    gT = jnp.transpose(gamma).astype(jnp.bfloat16)   # den_i = b_i + sum_j g[i,j] y_j^2
    beta2 = beta.reshape(1, Cout).astype(jnp.float32)

    def mid_map(bb, i):
        return (bb, i, 0, 0)

    def top_map(bb, i):                   # image row i*th - 1 (clamped)
        return (bb, jnp.maximum(i * th - 1, 0), 0, 0)

    def bot_map(bb, i):                   # image row i*th + th (clamped)
        return (bb, jnp.minimum(i * th + th, H - 1), 0, 0)

    return pl.pallas_call(
        _make_conv_gdn_kernel(rc),
        out_shape=jax.ShapeDtypeStruct((B, H, W, Cout), jnp.bfloat16),
        grid=(B, nrb),
        in_specs=[
            pl.BlockSpec((1, th, W, Cin), mid_map),
            pl.BlockSpec((1, 1, W, Cin), top_map),
            pl.BlockSpec((1, 1, W, Cin), bot_map),
            pl.BlockSpec((9 * Cin, Cout), lambda bb, i: (0, 0)),
            pl.BlockSpec((1, Cout), lambda bb, i: (0, 0)),
            pl.BlockSpec((Cout, Cout), lambda bb, i: (0, 0)),
            pl.BlockSpec((1, Cout), lambda bb, i: (0, 0)),
        ],
        out_specs=pl.BlockSpec((1, th, W, Cout), lambda bb, i: (bb, i, 0, 0)),
        scratch_shapes=[
            pltpu.VMEM((th + 2, W + 2, Cin), jnp.bfloat16),   # halo block
            pltpu.VMEM((rc * W, 9 * Cin), jnp.bfloat16),      # im2col LHS
        ],
        compiler_params=pltpu.CompilerParams(
            dimension_semantics=("parallel", "parallel"),
            vmem_limit_bytes=_VMEM_LIMIT_BYTES),
    )(x_nhwc, x_nhwc, x_nhwc, wt, b2, gT, beta2)


def conv_out_layer(x_nhwc, w, b, *, th):
    """Final 3x3 conv, Cout=1: lane-dense (B, H, W) f32 output."""
    B, H, W, Cin = x_nhwc.shape
    assert w.shape[0] == 1
    assert H % th == 0
    nrb = H // th

    # (1, Cin, 3, 3) -> (9, Cin), tap index t = dy*3 + dx.
    w9 = jnp.transpose(w[0], (1, 2, 0)).reshape(9, Cin).astype(jnp.float32)
    b2 = b.reshape(1, 1).astype(jnp.float32)

    def mid_map(bb, i):
        return (bb, i, 0, 0)

    def top_map(bb, i):
        return (bb, jnp.maximum(i * th - 1, 0), 0, 0)

    def bot_map(bb, i):
        return (bb, jnp.minimum(i * th + th, H - 1), 0, 0)

    return pl.pallas_call(
        _conv_out_kernel,
        out_shape=jax.ShapeDtypeStruct((B, H, W), jnp.float32),
        grid=(B, nrb),
        in_specs=[
            pl.BlockSpec((1, th, W, Cin), mid_map),
            pl.BlockSpec((1, 1, W, Cin), top_map),
            pl.BlockSpec((1, 1, W, Cin), bot_map),
            pl.BlockSpec((9, Cin), lambda bb, i: (0, 0)),
            pl.BlockSpec((1, 1), lambda bb, i: (0, 0)),
        ],
        out_specs=pl.BlockSpec((1, th, W), lambda bb, i: (bb, i, 0)),
        scratch_shapes=[pltpu.VMEM((th + 2, W + 2, Cin), jnp.bfloat16)],
        compiler_params=pltpu.CompilerParams(
            dimension_semantics=("parallel", "parallel"),
            vmem_limit_bytes=_VMEM_LIMIT_BYTES),
    )(x_nhwc, x_nhwc, x_nhwc, w9, b2)


# ----------------------------------------------------------------------------
# Parameter init (mirrors the PyTorch __init__ shapes)
# ----------------------------------------------------------------------------

def _xavier_normal(key, shape, gain):
    cout, cin, kh, kw = shape
    fan_in, fan_out = cin * kh * kw, cout * kh * kw
    std = gain * math.sqrt(2.0 / (fan_in + fan_out))
    return std * jax.random.normal(key, shape, dtype=jnp.float32)


def init_params(key, out_channel_N=32):
    N = out_channel_N
    ks = jax.random.split(key, 7)
    p = {}
    p["w1"] = _xavier_normal(ks[0], (N, 3, 3, 3), math.sqrt(2 * (1 + N) / 2))
    p["b1"] = jnp.full((N,), 0.01, jnp.float32)
    p["w2"] = _xavier_normal(ks[1], (N, N, 3, 3), math.sqrt(2.0))
    p["b2"] = jnp.full((N,), 0.01, jnp.float32)
    p["w3"] = _xavier_normal(ks[2], (N, N, 3, 3), math.sqrt(2.0))
    p["b3"] = jnp.full((N,), 0.01, jnp.float32)
    p["w4"] = _xavier_normal(ks[3], (1, N, 3, 3),
                             math.sqrt(2 * (1 + N) / (N + N)))
    p["b4"] = jnp.full((1,), 0.01, jnp.float32)
    # GDN: beta = 1, gamma = 0.1*I plus a small non-symmetric positive
    # perturbation (exercises the transposed-gamma handling in the kernel).
    for idx, kk in zip((1, 2, 3), ks[4:7]):
        p[f"gdn{idx}_beta"] = jnp.ones((N,), jnp.float32)
        p[f"gdn{idx}_gamma"] = (
            0.1 * jnp.eye(N, dtype=jnp.float32)
            + 0.01 * jnp.abs(jax.random.normal(kk, (N, N), dtype=jnp.float32)))
    return p


# ----------------------------------------------------------------------------
# Full forward (PyTorch-equivalent: NCHW in, NCHW out)
# ----------------------------------------------------------------------------

@jax.jit
def analysis_side_net(x_nchw, params):
    x = jnp.transpose(x_nchw, (0, 2, 3, 1)).astype(jnp.float32)   # NHWC
    _, H, W, _ = x.shape
    th = _pick_row_tile(H, W)
    x = conv1_gdn_layer(x, params["w1"], params["b1"],
                        params["gdn1_gamma"], params["gdn1_beta"], th=th)
    x = conv_gdn_layer(x, params["w2"], params["b2"],
                       params["gdn2_gamma"], params["gdn2_beta"], th=th)
    x = conv_gdn_layer(x, params["w3"], params["b3"],
                       params["gdn3_gamma"], params["gdn3_beta"], th=th)
    y = conv_out_layer(x, params["w4"], params["b4"], th=th)      # (B, H, W)
    return y[:, None, :, :]                                        # NCHW (B,1,H,W)


# ----------------------------------------------------------------------------
# Pure-JAX reference with matched quantization points
# (bf16 conv inputs/weights, f32 accumulation, bf16 GDN-denominator matmul)
# ----------------------------------------------------------------------------

def _ref_forward(x_nchw, params):
    def conv(x, w, b):
        y = jax.lax.conv_general_dilated(
            x.astype(jnp.bfloat16), w.astype(jnp.bfloat16),
            window_strides=(1, 1), padding=((1, 1), (1, 1)),
            dimension_numbers=("NCHW", "OIHW", "NCHW"),
            preferred_element_type=jnp.float32)
        return y + b.reshape(1, -1, 1, 1)

    def gdn(x, gamma, beta):
        # y_i = x_i / sqrt(beta_i + sum_j gamma[i, j] * x_j^2)
        den = jnp.einsum("bjhw,ij->bihw", (x * x).astype(jnp.bfloat16),
                         gamma.astype(jnp.bfloat16),
                         preferred_element_type=jnp.float32)
        den = den + beta.reshape(1, -1, 1, 1)
        return x * jax.lax.rsqrt(den)

    x = gdn(conv(x_nchw, params["w1"], params["b1"]),
            params["gdn1_gamma"], params["gdn1_beta"])
    x = gdn(conv(x, params["w2"], params["b2"]),
            params["gdn2_gamma"], params["gdn2_beta"])
    x = gdn(conv(x, params["w3"], params["b3"]),
            params["gdn3_gamma"], params["gdn3_beta"])
    return conv(x, params["w4"], params["b4"])


if __name__ == "__main__":
    key = jax.random.PRNGKey(0)
    k_x, k_p = jax.random.split(key)

    B, H, W = 2, 16, 16
    N = 32  # small out_channel_N for the test (module default is 192)
    x = jax.random.normal(k_x, (B, 3, H, W), dtype=jnp.float32)
    params = init_params(k_p, out_channel_N=N)

    out = analysis_side_net(x, params)
    out = jax.block_until_ready(out)
    assert out.shape == (B, 1, H, W), out.shape

    ref = _ref_forward(x, params)
    err = float(jnp.max(jnp.abs(out - ref)))
    tol = 2e-2 * max(1.0, float(jnp.max(jnp.abs(ref))))
    if err > tol:
        raise AssertionError(
            f"mismatch vs reference: max abs err = {err} (tol {tol})")

    print("KERNEL_OK")
</pallas_src>

<mosaic_0001>
module attributes {stable_mosaic.version = 11 : i64} {
  func.func @kernel(%arg0: i32, %arg1: i32, %arg2: memref<1x16x16x27xbf16, #tpu.memory_space<vmem>>, %arg3: memref<27x32xbf16, #tpu.memory_space<vmem>>, %arg4: memref<1x32xf32, #tpu.memory_space<vmem>>, %arg5: memref<32x32xbf16, #tpu.memory_space<vmem>>, %arg6: memref<1x32xf32, #tpu.memory_space<vmem>>, %arg7: memref<1x16x16x32xbf16, #tpu.memory_space<vmem>>) attributes {dimension_semantics = [#tpu.dimension_semantics<parallel>, #tpu.dimension_semantics<parallel>], iteration_bounds = array<i64: 2, 1>, scalar_prefetch = 0 : i64, scratch_operands = 0 : i64, tpu.core_type = #tpu.core_type<tc>, window_params = [{transform_indices = @transform_0, window_bounds = array<i64: 1, 16, 16, 27>}, {pipeline_mode = #tpu.pipeline_mode<synchronous>, transform_indices = @transform_1, window_bounds = array<i64: 27, 32>}, {pipeline_mode = #tpu.pipeline_mode<synchronous>, transform_indices = @transform_2, window_bounds = array<i64: 1, 32>}, {pipeline_mode = #tpu.pipeline_mode<synchronous>, transform_indices = @transform_3, window_bounds = array<i64: 32, 32>}, {pipeline_mode = #tpu.pipeline_mode<synchronous>, transform_indices = @transform_4, window_bounds = array<i64: 1, 32>}, {transform_indices = @transform_5, window_bounds = array<i64: 1, 16, 16, 32>}]} {
    %c0 = arith.constant 0 : index
    %c0_0 = arith.constant 0 : index
    %c0_1 = arith.constant 0 : index
    %c0_2 = arith.constant 0 : index
    %0 = vector.load %arg2[%c0, %c0_0, %c0_1, %c0_2] : memref<1x16x16x27xbf16, #tpu.memory_space<vmem>>, vector<1x16x16x27xbf16>
    %1 = vector.shape_cast %0 : vector<1x16x16x27xbf16> to vector<16x16x27xbf16>
    %2 = vector.shape_cast %1 : vector<16x16x27xbf16> to vector<256x27xbf16>
    %c0_3 = arith.constant 0 : index
    %c0_4 = arith.constant 0 : index
    %3 = vector.load %arg3[%c0_3, %c0_4] : memref<27x32xbf16, #tpu.memory_space<vmem>>, vector<27x32xbf16>
    %cst = arith.constant dense<0.000000e+00> : vector<256x32xf32>
    %4 = tpu.matmul %2, %3, %cst {dimension_numbers = #tpu.dot_dimension_numbers<[1], [0], [0], [1], [0, 0, 1, 1], [], []>} : vector<256x27xbf16>, vector<27x32xbf16>, vector<256x32xf32> -> vector<256x32xf32>
    %c0_5 = arith.constant 0 : index
    %c0_6 = arith.constant 0 : index
    %5 = vector.load %arg4[%c0_5, %c0_6] : memref<1x32xf32, #tpu.memory_space<vmem>>, vector<1x32xf32>
    %6 = vector.broadcast %5 : vector<1x32xf32> to vector<256x32xf32>
    %7 = arith.addf %4, %6 : vector<256x32xf32>
    %8 = arith.mulf %7, %7 : vector<256x32xf32>
    %9 = arith.truncf %8 : vector<256x32xf32> to vector<256x32xbf16>
    %c0_7 = arith.constant 0 : index
    %c0_8 = arith.constant 0 : index
    %10 = vector.load %arg5[%c0_7, %c0_8] : memref<32x32xbf16, #tpu.memory_space<vmem>>, vector<32x32xbf16>
    %cst_9 = arith.constant dense<0.000000e+00> : vector<256x32xf32>
    %11 = tpu.matmul %9, %10, %cst_9 {dimension_numbers = #tpu.dot_dimension_numbers<[1], [0], [0], [1], [0, 0, 1, 1], [], []>} : vector<256x32xbf16>, vector<32x32xbf16>, vector<256x32xf32> -> vector<256x32xf32>
    %c0_10 = arith.constant 0 : index
    %c0_11 = arith.constant 0 : index
    %12 = vector.load %arg6[%c0_10, %c0_11] : memref<1x32xf32, #tpu.memory_space<vmem>>, vector<1x32xf32>
    %13 = vector.broadcast %12 : vector<1x32xf32> to vector<256x32xf32>
    %14 = arith.addf %11, %13 : vector<256x32xf32>
    %15 = math.rsqrt %14 : vector<256x32xf32>
    %16 = arith.mulf %7, %15 : vector<256x32xf32>
    %17 = arith.truncf %16 : vector<256x32xf32> to vector<256x32xbf16>
    %18 = vector.shape_cast %17 : vector<256x32xbf16> to vector<1x16x16x32xbf16>
    %c0_12 = arith.constant 0 : index
    %c0_13 = arith.constant 0 : index
    %c0_14 = arith.constant 0 : index
    %c0_15 = arith.constant 0 : index
    %19 = vector.load %arg7[%c0_12, %c0_13, %c0_14, %c0_15] : memref<1x16x16x32xbf16, #tpu.memory_space<vmem>>, vector<1x16x16x32xbf16>
    tpu.vector_store %arg7[%c0_12, %c0_13, %c0_14, %c0_15], %18 {strides = array<i32>} : memref<1x16x16x32xbf16, #tpu.memory_space<vmem>>, vector<1x16x16x32xbf16>,
    return
  }
  func.func @transform_0(%arg0: i32, %arg1: i32) -> (i32, i32, i32, i32) {
    %c0_i32 = arith.constant 0 : i32
    %c0_i32_0 = arith.constant 0 : i32
    %c0_i32_1 = arith.constant 0 : i32
    return %arg0, %arg1, %c0_i32, %c0_i32_0 : i32, i32, i32, i32
  }
  func.func @transform_1(%arg0: i32, %arg1: i32) -> (i32, i32) {
    %c0_i32 = arith.constant 0 : i32
    %c0_i32_0 = arith.constant 0 : i32
    %c0_i32_1 = arith.constant 0 : i32
    return %c0_i32, %c0_i32_0 : i32, i32
  }
  func.func @transform_2(%arg0: i32, %arg1: i32) -> (i32, i32) {
    %c0_i32 = arith.constant 0 : i32
    %c0_i32_0 = arith.constant 0 : i32
    %c0_i32_1 = arith.constant 0 : i32
    return %c0_i32, %c0_i32_0 : i32, i32
  }
  func.func @transform_3(%arg0: i32, %arg1: i32) -> (i32, i32) {
    %c0_i32 = arith.constant 0 : i32
    %c0_i32_0 = arith.constant 0 : i32
    %c0_i32_1 = arith.constant 0 : i32
    return %c0_i32, %c0_i32_0 : i32, i32
  }
  func.func @transform_4(%arg0: i32, %arg1: i32) -> (i32, i32) {
    %c0_i32 = arith.constant 0 : i32
    %c0_i32_0 = arith.constant 0 : i32
    %c0_i32_1 = arith.constant 0 : i32
    return %c0_i32, %c0_i32_0 : i32, i32
  }
  func.func @transform_5(%arg0: i32, %arg1: i32) -> (i32, i32, i32, i32) {
    %c0_i32 = arith.constant 0 : i32
    %c0_i32_0 = arith.constant 0 : i32
    %c0_i32_1 = arith.constant 0 : i32
    return %arg0, %arg1, %c0_i32, %c0_i32_0 : i32, i32, i32, i32
  }
}

module attributes {stable_mosaic.version = 11 : i64} {
  func.func @kernel(%arg0: i32, %arg1: i32, %arg2: memref<1x16x16x32xbf16, #tpu.memory_space<vmem>>, %arg3: memref<1x1x16x32xbf16, #tpu.memory_space<vmem>>, %arg4: memref<1x1x16x32xbf16, #tpu.memory_space<vmem>>, %arg5: memref<288x32xbf16, #tpu.memory_space<vmem>>, %arg6: memref<1x32xf32, #tpu.memory_space<vmem>>, %arg7: memref<32x32xbf16, #tpu.memory_space<vmem>>, %arg8: memref<1x32xf32, #tpu.memory_space<vmem>>, %arg9: memref<1x16x16x32xbf16, #tpu.memory_space<vmem>>, %arg10: memref<18x18x32xbf16, #tpu.memory_space<vmem>>, %arg11: memref<256x288xbf16, #tpu.memory_space<vmem>>) attributes {dimension_semantics = [#tpu.dimension_semantics<parallel>, #tpu.dimension_semantics<parallel>], iteration_bounds = array<i64: 2, 1>, scalar_prefetch = 0 : i64, scratch_operands = 2 : i64, tpu.core_type = #tpu.core_type<tc>, window_params = [{transform_indices = @transform_0, window_bounds = array<i64: 1, 16, 16, 32>}, {transform_indices = @transform_1, window_bounds = array<i64: 1, 1, 16, 32>}, {transform_indices = @transform_2, window_bounds = array<i64: 1, 1, 16, 32>}, {pipeline_mode = #tpu.pipeline_mode<synchronous>, transform_indices = @transform_3, window_bounds = array<i64: 288, 32>}, {pipeline_mode = #tpu.pipeline_mode<synchronous>, transform_indices = @transform_4, window_bounds = array<i64: 1, 32>}, {pipeline_mode = #tpu.pipeline_mode<synchronous>, transform_indices = @transform_5, window_bounds = array<i64: 32, 32>}, {pipeline_mode = #tpu.pipeline_mode<synchronous>, transform_indices = @transform_6, window_bounds = array<i64: 1, 32>}, {transform_indices = @transform_7, window_bounds = array<i64: 1, 16, 16, 32>}]} {
    %cst = arith.constant 0.000000e+00 : bf16
    %0 = vector.broadcast %cst : bf16 to vector<18x1x32xbf16>
    %cst_0 = arith.constant 0.000000e+00 : bf16
    %1 = vector.broadcast %cst_0 : bf16 to vector<1x16x32xbf16>
    %c0 = arith.constant 0 : index
    %c0_1 = arith.constant 0 : index
    %c0_2 = arith.constant 0 : index
    %2 = vector.load %arg10[%c0, %c0_1, %c0_2] : memref<18x18x32xbf16, #tpu.memory_space<vmem>>, vector<18x1x32xbf16>
    tpu.vector_store %arg10[%c0, %c0_1, %c0_2], %0 {strides = array<i32>} : memref<18x18x32xbf16, #tpu.memory_space<vmem>>, vector<18x1x32xbf16>,
    %c0_3 = arith.constant 0 : index
    %c17 = arith.constant 17 : index
    %c0_4 = arith.constant 0 : index
    %3 = vector.load %arg10[%c0_3, %c17, %c0_4] : memref<18x18x32xbf16, #tpu.memory_space<vmem>>, vector<18x1x32xbf16>
    tpu.vector_store %arg10[%c0_3, %c17, %c0_4], %0 {strides = array<i32>} : memref<18x18x32xbf16, #tpu.memory_space<vmem>>, vector<18x1x32xbf16>,
    %c0_5 = arith.constant 0 : index
    %c0_6 = arith.constant 0 : index
    %c0_7 = arith.constant 0 : index
    %c0_8 = arith.constant 0 : index
    %4 = vector.load %arg2[%c0_5, %c0_6, %c0_7, %c0_8] : memref<1x16x16x32xbf16, #tpu.memory_space<vmem>>, vector<1x16x16x32xbf16>
    %5 = vector.shape_cast %4 : vector<1x16x16x32xbf16> to vector<16x16x32xbf16>
    %c1 = arith.constant 1 : index
    %c1_9 = arith.constant 1 : index
    %c0_10 = arith.constant 0 : index
    %6 = vector.load %arg10[%c1, %c1_9, %c0_10] : memref<18x18x32xbf16, #tpu.memory_space<vmem>>, vector<16x16x32xbf16>
    tpu.vector_store %arg10[%c1, %c1_9, %c0_10], %5 {strides = array<i32>} : memref<18x18x32xbf16, #tpu.memory_space<vmem>>, vector<16x16x32xbf16>,
    %c0_i32 = arith.constant 0 : i32
    %7 = arith.cmpi sgt, %arg1, %c0_i32 : i32
    %8 = arith.extui %7 : i1 to i32
    %c0_i32_11 = arith.constant 0 : i32
    %9 = arith.cmpi ne, %8, %c0_i32_11 : i32
    scf.if %9 {
      %c0_70 = arith.constant 0 : index
      %c0_71 = arith.constant 0 : index
      %c0_72 = arith.constant 0 : index
      %c0_73 = arith.constant 0 : index
      %66 = vector.load %arg3[%c0_70, %c0_71, %c0_72, %c0_73] : memref<1x1x16x32xbf16, #tpu.memory_space<vmem>>, vector<1x1x16x32xbf16>
      %67 = vector.shape_cast %66 : vector<1x1x16x32xbf16> to vector<1x16x32xbf16>
      %c0_74 = arith.constant 0 : index
      %c1_75 = arith.constant 1 : index
      %c0_76 = arith.constant 0 : index
      %68 = vector.load %arg10[%c0_74, %c1_75, %c0_76] : memref<18x18x32xbf16, #tpu.memory_space<vmem>>, vector<1x16x32xbf16>
      tpu.vector_store %arg10[%c0_74, %c1_75, %c0_76], %67 {strides = array<i32>} : memref<18x18x32xbf16, #tpu.memory_space<vmem>>, vector<1x16x32xbf16>,
    } else {
    }
    %c0_i32_12 = arith.constant 0 : i32
    %10 = arith.cmpi eq, %arg1, %c0_i32_12 : i32
    %11 = arith.extui %10 : i1 to i32
    %c0_i32_13 = arith.constant 0 : i32
    %12 = arith.cmpi ne, %11, %c0_i32_13 : i32
    scf.if %12 {
      %c0_70 = arith.constant 0 : index
      %c1_71 = arith.constant 1 : index
      %c0_72 = arith.constant 0 : index
      %66 = vector.load %arg10[%c0_70, %c1_71, %c0_72] : memref<18x18x32xbf16, #tpu.memory_space<vmem>>, vector<1x16x32xbf16>
      tpu.vector_store %arg10[%c0_70, %c1_71, %c0_72], %1 {strides = array<i32>} : memref<18x18x32xbf16, #tpu.memory_space<vmem>>, vector<1x16x32xbf16>,
    } else {
    }
    %c0_i32_14 = arith.constant 0 : i32
    %13 = arith.cmpi slt, %arg1, %c0_i32_14 : i32
    %14 = arith.extui %13 : i1 to i32
    %c0_i32_15 = arith.constant 0 : i32
    %15 = arith.cmpi ne, %14, %c0_i32_15 : i32
    scf.if %15 {
      %c0_70 = arith.constant 0 : index
      %c0_71 = arith.constant 0 : index
      %c0_72 = arith.constant 0 : index
      %c0_73 = arith.constant 0 : index
      %66 = vector.load %arg4[%c0_70, %c0_71, %c0_72, %c0_73] : memref<1x1x16x32xbf16, #tpu.memory_space<vmem>>, vector<1x1x16x32xbf16>
      %67 = vector.shape_cast %66 : vector<1x1x16x32xbf16> to vector<1x16x32xbf16>
      %c17_74 = arith.constant 17 : index
      %c1_75 = arith.constant 1 : index
      %c0_76 = arith.constant 0 : index
      %68 = vector.load %arg10[%c17_74, %c1_75, %c0_76] : memref<18x18x32xbf16, #tpu.memory_space<vmem>>, vector<1x16x32xbf16>
      tpu.vector_store %arg10[%c17_74, %c1_75, %c0_76], %67 {strides = array<i32>} : memref<18x18x32xbf16, #tpu.memory_space<vmem>>, vector<1x16x32xbf16>,
    } else {
    }
    %c0_i32_16 = arith.constant 0 : i32
    %16 = arith.cmpi eq, %arg1, %c0_i32_16 : i32
    %17 = arith.extui %16 : i1 to i32
    %c0_i32_17 = arith.constant 0 : i32
    %18 = arith.cmpi ne, %17, %c0_i32_17 : i32
    scf.if %18 {
      %c17_70 = arith.constant 17 : index
      %c1_71 = arith.constant 1 : index
      %c0_72 = arith.constant 0 : index
      %66 = vector.load %arg10[%c17_70, %c1_71, %c0_72] : memref<18x18x32xbf16, #tpu.memory_space<vmem>>, vector<1x16x32xbf16>
      tpu.vector_store %arg10[%c17_70, %c1_71, %c0_72], %1 {strides = array<i32>} : memref<18x18x32xbf16, #tpu.memory_space<vmem>>, vector<1x16x32xbf16>,
    } else {
    }
    %c0_18 = arith.constant 0 : index
    %c0_19 = arith.constant 0 : index
    %c0_20 = arith.constant 0 : index
    %19 = vector.load %arg10[%c0_18, %c0_19, %c0_20] : memref<18x18x32xbf16, #tpu.memory_space<vmem>>, vector<16x16x32xbf16>
    %20 = vector.shape_cast %19 : vector<16x16x32xbf16> to vector<256x32xbf16>
    %c0_21 = arith.constant 0 : index
    %c0_22 = arith.constant 0 : index
    %21 = vector.load %arg11[%c0_21, %c0_22] : memref<256x288xbf16, #tpu.memory_space<vmem>>, vector<256x32xbf16>
    tpu.vector_store %arg11[%c0_21, %c0_22], %20 {strides = array<i32>} : memref<256x288xbf16, #tpu.memory_space<vmem>>, vector<256x32xbf16>,
    %c0_23 = arith.constant 0 : index
    %c1_24 = arith.constant 1 : index
    %c0_25 = arith.constant 0 : index
    %22 = vector.load %arg10[%c0_23, %c1_24, %c0_25] : memref<18x18x32xbf16, #tpu.memory_space<vmem>>, vector<16x16x32xbf16>
    %23 = vector.shape_cast %22 : vector<16x16x32xbf16> to vector<256x32xbf16>
    %c0_26 = arith.constant 0 : index
    %c32 = arith.constant 32 : index
    %24 = vector.load %arg11[%c0_26, %c32] : memref<256x288xbf16, #tpu.memory_space<vmem>>, vector<256x32xbf16>
    tpu.vector_store %arg11[%c0_26, %c32], %23 {strides = array<i32>} : memref<256x288xbf16, #tpu.memory_space<vmem>>, vector<256x32xbf16>,
    %c0_27 = arith.constant 0 : index
    %c2 = arith.constant 2 : index
    %c0_28 = arith.constant 0 : index
    %25 = vector.load %arg10[%c0_27, %c2, %c0_28] : memref<18x18x32xbf16, #tpu.memory_space<vmem>>, vector<16x16x32xbf16>
    %26 = vector.shape_cast %25 : vector<16x16x32xbf16> to vector<256x32xbf16>
    %c0_29 = arith.constant 0 : index
    %c64 = arith.constant 64 : index
    %27 = vector.load %arg11[%c0_29, %c64] : memref<256x288xbf16, #tpu.memory_space<vmem>>, vector<256x32xbf16>
    tpu.vector_store %arg11[%c0_29, %c64], %26 {strides = array<i32>} : memref<256x288xbf16, #tpu.memory_space<vmem>>, vector<256x32xbf16>,
    %c1_30 = arith.constant 1 : index
    %c0_31 = arith.constant 0 : index
    %c0_32 = arith.constant 0 : index
    %28 = vector.load %arg10[%c1_30, %c0_31, %c0_32] : memref<18x18x32xbf16, #tpu.memory_space<vmem>>, vector<16x16x32xbf16>
    %29 = vector.shape_cast %28 : vector<16x16x32xbf16> to vector<256x32xbf16>
    %c0_33 = arith.constant 0 : index
    %c96 = arith.constant 96 : index
    %30 = vector.load %arg11[%c0_33, %c96] : memref<256x288xbf16, #tpu.memory_space<vmem>>, vector<256x32xbf16>
    tpu.vector_store %arg11[%c0_33, %c96], %29 {strides = array<i32>} : memref<256x288xbf16, #tpu.memory_space<vmem>>, vector<256x32xbf16>,
    %c1_34 = arith.constant 1 : index
    %c1_35 = arith.constant 1 : index
    %c0_36 = arith.constant 0 : index
    %31 = vector.load %arg10[%c1_34, %c1_35, %c0_36] : memref<18x18x32xbf16, #tpu.memory_space<vmem>>, vector<16x16x32xbf16>
    %32 = vector.shape_cast %31 : vector<16x16x32xbf16> to vector<256x32xbf16>
    %c0_37 = arith.constant 0 : index
    %c128 = arith.constant 128 : index
    %33 = vector.load %arg11[%c0_37, %c128] : memref<256x288xbf16, #tpu.memory_space<vmem>>, vector<256x32xbf16>
    tpu.vector_store %arg11[%c0_37, %c128], %32 {strides = array<i32>} : memref<256x288xbf16, #tpu.memory_space<vmem>>, vector<256x32xbf16>,
    %c1_38 = arith.constant 1 : index
    %c2_39 = arith.constant 2 : index
    %c0_40 = arith.constant 0 : index
    %34 = vector.load %arg10[%c1_38, %c2_39, %c0_40] : memref<18x18x32xbf16, #tpu.memory_space<vmem>>, vector<16x16x32xbf16>
    %35 = vector.shape_cast %34 : vector<16x16x32xbf16> to vector<256x32xbf16>
    %c0_41 = arith.constant 0 : index
    %c160 = arith.constant 160 : index
    %36 = vector.load %arg11[%c0_41, %c160] : memref<256x288xbf16, #tpu.memory_space<vmem>>, vector<256x32xbf16>
    tpu.vector_store %arg11[%c0_41, %c160], %35 {strides = array<i32>} : memref<256x288xbf16, #tpu.memory_space<vmem>>, vector<256x32xbf16>,
    %c2_42 = arith.constant 2 : index
    %c0_43 = arith.constant 0 : index
    %c0_44 = arith.constant 0 : index
    %37 = vector.load %arg10[%c2_42, %c0_43, %c0_44] : memref<18x18x32xbf16, #tpu.memory_space<vmem>>, vector<16x16x32xbf16>
    %38 = vector.shape_cast %37 : vector<16x16x32xbf16> to vector<256x32xbf16>
    %c0_45 = arith.constant 0 : index
    %c192 = arith.constant 192 : index
    %39 = vector.load %arg11[%c0_45, %c192] : memref<256x288xbf16, #tpu.memory_space<vmem>>, vector<256x32xbf16>
    tpu.vector_store %arg11[%c0_45, %c192], %38 {strides = array<i32>} : memref<256x288xbf16, #tpu.memory_space<vmem>>, vector<256x32xbf16>,
    %c2_46 = arith.constant 2 : index
    %c1_47 = arith.constant 1 : index
    %c0_48 = arith.constant 0 : index
    %40 = vector.load %arg10[%c2_46, %c1_47, %c0_48] : memref<18x18x32xbf16, #tpu.memory_space<vmem>>, vector<16x16x32xbf16>
    %41 = vector.shape_cast %40 : vector<16x16x32xbf16> to vector<256x32xbf16>
    %c0_49 = arith.constant 0 : index
    %c224 = arith.constant 224 : index
    %42 = vector.load %arg11[%c0_49, %c224] : memref<256x288xbf16, #tpu.memory_space<vmem>>, vector<256x32xbf16>
    tpu.vector_store %arg11[%c0_49, %c224], %41 {strides = array<i32>} : memref<256x288xbf16, #tpu.memory_space<vmem>>, vector<256x32xbf16>,
    %c2_50 = arith.constant 2 : index
    %c2_51 = arith.constant 2 : index
    %c0_52 = arith.constant 0 : index
    %43 = vector.load %arg10[%c2_50, %c2_51, %c0_52] : memref<18x18x32xbf16, #tpu.memory_space<vmem>>, vector<16x16x32xbf16>
    %44 = vector.shape_cast %43 : vector<16x16x32xbf16> to vector<256x32xbf16>
    %c0_53 = arith.constant 0 : index
    %c256 = arith.constant 256 : index
    %45 = vector.load %arg11[%c0_53, %c256] : memref<256x288xbf16, #tpu.memory_space<vmem>>, vector<256x32xbf16>
    tpu.vector_store %arg11[%c0_53, %c256], %44 {strides = array<i32>} : memref<256x288xbf16, #tpu.memory_space<vmem>>, vector<256x32xbf16>,
    %c0_54 = arith.constant 0 : index
    %c0_55 = arith.constant 0 : index
    %46 = vector.load %arg11[%c0_54, %c0_55] : memref<256x288xbf16, #tpu.memory_space<vmem>>, vector<256x288xbf16>
    %c0_56 = arith.constant 0 : index
    %c0_57 = arith.constant 0 : index
    %47 = vector.load %arg5[%c0_56, %c0_57] : memref<288x32xbf16, #tpu.memory_space<vmem>>, vector<288x32xbf16>
    %cst_58 = arith.constant dense<0.000000e+00> : vector<256x32xf32>
    %48 = tpu.matmul %46, %47, %cst_58 {dimension_numbers = #tpu.dot_dimension_numbers<[1], [0], [0], [1], [0, 0, 1, 1], [], []>} : vector<256x288xbf16>, vector<288x32xbf16>, vector<256x32xf32> -> vector<256x32xf32>
    %c0_59 = arith.constant 0 : index
    %c0_60 = arith.constant 0 : index
    %49 = vector.load %arg6[%c0_59, %c0_60] : memref<1x32xf32, #tpu.memory_space<vmem>>, vector<1x32xf32>
    %50 = vector.broadcast %49 : vector<1x32xf32> to vector<256x32xf32>
    %51 = arith.addf %48, %50 : vector<256x32xf32>
    %52 = arith.mulf %51, %51 : vector<256x32xf32>
    %53 = arith.truncf %52 : vector<256x32xf32> to vector<256x32xbf16>
    %c0_61 = arith.constant 0 : index
    %c0_62 = arith.constant 0 : index
    %54 = vector.load %arg7[%c0_61, %c0_62] : memref<32x32xbf16, #tpu.memory_space<vmem>>, vector<32x32xbf16>
    %cst_63 = arith.constant dense<0.000000e+00> : vector<256x32xf32>
    %55 = tpu.matmul %53, %54, %cst_63 {dimension_numbers = #tpu.dot_dimension_numbers<[1], [0], [0], [1], [0, 0, 1, 1], [], []>} : vector<256x32xbf16>, vector<32x32xbf16>, vector<256x32xf32> -> vector<256x32xf32>
    %c0_64 = arith.constant 0 : index
    %c0_65 = arith.constant 0 : index
    %56 = vector.load %arg8[%c0_64, %c0_65] : memref<1x32xf32, #tpu.memory_space<vmem>>, vector<1x32xf32>
    %57 = vector.broadcast %56 : vector<1x32xf32> to vector<256x32xf32>
    %58 = arith.addf %55, %57 : vector<256x32xf32>
    %59 = math.rsqrt %58 : vector<256x32xf32>
    %60 = arith.mulf %51, %59 : vector<256x32xf32>
    %61 = arith.truncf %60 : vector<256x32xf32> to vector<256x32xbf16>
    %62 = vector.shape_cast %61 : vector<256x32xbf16> to vector<16x16x32xbf16>
    %c0_66 = arith.constant 0 : index
    %c0_67 = arith.constant 0 : index
    %c0_68 = arith.constant 0 : index
    %c0_69 = arith.constant 0 : index
    %63 = vector.load %arg9[%c0_66, %c0_67, %c0_68, %c0_69] : memref<1x16x16x32xbf16, #tpu.memory_space<vmem>>, vector<1x16x16x32xbf16>
    %64 = vector.shape_cast %63 : vector<1x16x16x32xbf16> to vector<16x16x32xbf16>
    %65 = vector.shape_cast %62 : vector<16x16x32xbf16> to vector<1x16x16x32xbf16>
    tpu.vector_store %arg9[%c0_66, %c0_67, %c0_68, %c0_69], %65 {strides = array<i32>} : memref<1x16x16x32xbf16, #tpu.memory_space<vmem>>, vector<1x16x16x32xbf16>,
    return
  }
  func.func @transform_0(%arg0: i32, %arg1: i32) -> (i32, i32, i32, i32) {
    %c0_i32 = arith.constant 0 : i32
    %c0_i32_0 = arith.constant 0 : i32
    %c0_i32_1 = arith.constant 0 : i32
    return %arg0, %arg1, %c0_i32, %c0_i32_0 : i32, i32, i32, i32
  }
  func.func @transform_1(%arg0: i32, %arg1: i32) -> (i32, i32, i32, i32) {
    %c16_i32 = arith.constant 16 : i32
    %0 = arith.muli %arg1, %c16_i32 : i32
    %c1_i32 = arith.constant 1 : i32
    %1 = arith.subi %0, %c1_i32 : i32
    %c0_i32 = arith.constant 0 : i32
    %2 = arith.maxsi %1, %c0_i32 : i32
    %c0_i32_0 = arith.constant 0 : i32
    %c0_i32_1 = arith.constant 0 : i32
    %c0_i32_2 = arith.constant 0 : i32
    return %arg0, %2, %c0_i32_0, %c0_i32_1 : i32, i32, i32, i32
  }
  func.func @transform_2(%arg0: i32, %arg1: i32) -> (i32, i32, i32, i32) {
    %c16_i32 = arith.constant 16 : i32
    %0 = arith.muli %arg1, %c16_i32 : i32
    %c16_i32_0 = arith.constant 16 : i32
    %1 = arith.addi %0, %c16_i32_0 : i32
    %c15_i32 = arith.constant 15 : i32
    %2 = arith.minsi %1, %c15_i32 : i32
    %c0_i32 = arith.constant 0 : i32
    %c0_i32_1 = arith.constant 0 : i32
    %c0_i32_2 = arith.constant 0 : i32
    return %arg0, %2, %c0_i32, %c0_i32_1 : i32, i32, i32, i32
  }
  func.func @transform_3(%arg0: i32, %arg1: i32) -> (i32, i32) {
    %c0_i32 = arith.constant 0 : i32
    %c0_i32_0 = arith.constant 0 : i32
    %c0_i32_1 = arith.constant 0 : i32
    return %c0_i32, %c0_i32_0 : i32, i32
  }
  func.func @transform_4(%arg0: i32, %arg1: i32) -> (i32, i32) {
    %c0_i32 = arith.constant 0 : i32
    %c0_i32_0 = arith.constant 0 : i32
    %c0_i32_1 = arith.constant 0 : i32
    return %c0_i32, %c0_i32_0 : i32, i32
  }
  func.func @transform_5(%arg0: i32, %arg1: i32) -> (i32, i32) {
    %c0_i32 = arith.constant 0 : i32
    %c0_i32_0 = arith.constant 0 : i32
    %c0_i32_1 = arith.constant 0 : i32
    return %c0_i32, %c0_i32_0 : i32, i32
  }
  func.func @transform_6(%arg0: i32, %arg1: i32) -> (i32, i32) {
    %c0_i32 = arith.constant 0 : i32
    %c0_i32_0 = arith.constant 0 : i32
    %c0_i32_1 = arith.constant 0 : i32
    return %c0_i32, %c0_i32_0 : i32, i32
  }
  func.func @transform_7(%arg0: i32, %arg1: i32) -> (i32, i32, i32, i32) {
    %c0_i32 = arith.constant 0 : i32
    %c0_i32_0 = arith.constant 0 : i32
    %c0_i32_1 = arith.constant 0 : i32
    return %arg0, %arg1, %c0_i32, %c0_i32_0 : i32, i32, i32, i32
  }
}

module attributes {stable_mosaic.version = 11 : i64} {
  func.func @_conv_out_kernel(%arg0: i32, %arg1: i32, %arg2: memref<1x16x16x32xbf16, #tpu.memory_space<vmem>>, %arg3: memref<1x1x16x32xbf16, #tpu.memory_space<vmem>>, %arg4: memref<1x1x16x32xbf16, #tpu.memory_space<vmem>>, %arg5: memref<9x32xf32, #tpu.memory_space<vmem>>, %arg6: memref<1x1xf32, #tpu.memory_space<vmem>>, %arg7: memref<1x16x16xf32, #tpu.memory_space<vmem>>, %arg8: memref<18x18x32xbf16, #tpu.memory_space<vmem>>) attributes {dimension_semantics = [#tpu.dimension_semantics<parallel>, #tpu.dimension_semantics<parallel>], iteration_bounds = array<i64: 2, 1>, scalar_prefetch = 0 : i64, scratch_operands = 1 : i64, tpu.core_type = #tpu.core_type<tc>, window_params = [{transform_indices = @transform_0, window_bounds = array<i64: 1, 16, 16, 32>}, {transform_indices = @transform_1, window_bounds = array<i64: 1, 1, 16, 32>}, {transform_indices = @transform_2, window_bounds = array<i64: 1, 1, 16, 32>}, {pipeline_mode = #tpu.pipeline_mode<synchronous>, transform_indices = @transform_3, window_bounds = array<i64: 9, 32>}, {pipeline_mode = #tpu.pipeline_mode<synchronous>, transform_indices = @transform_4, window_bounds = array<i64: 1, 1>}, {transform_indices = @transform_5, window_bounds = array<i64: 1, 16, 16>}]} {
    %cst = arith.constant 0.000000e+00 : bf16
    %0 = vector.broadcast %cst : bf16 to vector<18x1x32xbf16>
    %cst_0 = arith.constant 0.000000e+00 : bf16
    %1 = vector.broadcast %cst_0 : bf16 to vector<1x16x32xbf16>
    %c0 = arith.constant 0 : index
    %c0_1 = arith.constant 0 : index
    %c0_2 = arith.constant 0 : index
    %2 = vector.load %arg8[%c0, %c0_1, %c0_2] : memref<18x18x32xbf16, #tpu.memory_space<vmem>>, vector<18x1x32xbf16>
    tpu.vector_store %arg8[%c0, %c0_1, %c0_2], %0 {strides = array<i32>} : memref<18x18x32xbf16, #tpu.memory_space<vmem>>, vector<18x1x32xbf16>,
    %c0_3 = arith.constant 0 : index
    %c17 = arith.constant 17 : index
    %c0_4 = arith.constant 0 : index
    %3 = vector.load %arg8[%c0_3, %c17, %c0_4] : memref<18x18x32xbf16, #tpu.memory_space<vmem>>, vector<18x1x32xbf16>
    tpu.vector_store %arg8[%c0_3, %c17, %c0_4], %0 {strides = array<i32>} : memref<18x18x32xbf16, #tpu.memory_space<vmem>>, vector<18x1x32xbf16>,
    %c0_5 = arith.constant 0 : index
    %c0_6 = arith.constant 0 : index
    %c0_7 = arith.constant 0 : index
    %c0_8 = arith.constant 0 : index
    %4 = vector.load %arg2[%c0_5, %c0_6, %c0_7, %c0_8] : memref<1x16x16x32xbf16, #tpu.memory_space<vmem>>, vector<1x16x16x32xbf16>
    %5 = vector.shape_cast %4 : vector<1x16x16x32xbf16> to vector<16x16x32xbf16>
    %c1 = arith.constant 1 : index
    %c1_9 = arith.constant 1 : index
    %c0_10 = arith.constant 0 : index
    %6 = vector.load %arg8[%c1, %c1_9, %c0_10] : memref<18x18x32xbf16, #tpu.memory_space<vmem>>, vector<16x16x32xbf16>
    tpu.vector_store %arg8[%c1, %c1_9, %c0_10], %5 {strides = array<i32>} : memref<18x18x32xbf16, #tpu.memory_space<vmem>>, vector<16x16x32xbf16>,
    %c0_i32 = arith.constant 0 : i32
    %7 = arith.cmpi sgt, %arg1, %c0_i32 : i32
    %8 = arith.extui %7 : i1 to i32
    %c0_i32_11 = arith.constant 0 : i32
    %9 = arith.cmpi ne, %8, %c0_i32_11 : i32
    scf.if %9 {
      %c0_71 = arith.constant 0 : index
      %c0_72 = arith.constant 0 : index
      %c0_73 = arith.constant 0 : index
      %c0_74 = arith.constant 0 : index
      %97 = vector.load %arg3[%c0_71, %c0_72, %c0_73, %c0_74] : memref<1x1x16x32xbf16, #tpu.memory_space<vmem>>, vector<1x1x16x32xbf16>
      %98 = vector.shape_cast %97 : vector<1x1x16x32xbf16> to vector<1x16x32xbf16>
      %c0_75 = arith.constant 0 : index
      %c1_76 = arith.constant 1 : index
      %c0_77 = arith.constant 0 : index
      %99 = vector.load %arg8[%c0_75, %c1_76, %c0_77] : memref<18x18x32xbf16, #tpu.memory_space<vmem>>, vector<1x16x32xbf16>
      tpu.vector_store %arg8[%c0_75, %c1_76, %c0_77], %98 {strides = array<i32>} : memref<18x18x32xbf16, #tpu.memory_space<vmem>>, vector<1x16x32xbf16>,
    } else {
    }
    %c0_i32_12 = arith.constant 0 : i32
    %10 = arith.cmpi eq, %arg1, %c0_i32_12 : i32
    %11 = arith.extui %10 : i1 to i32
    %c0_i32_13 = arith.constant 0 : i32
    %12 = arith.cmpi ne, %11, %c0_i32_13 : i32
    scf.if %12 {
      %c0_71 = arith.constant 0 : index
      %c1_72 = arith.constant 1 : index
      %c0_73 = arith.constant 0 : index
      %97 = vector.load %arg8[%c0_71, %c1_72, %c0_73] : memref<18x18x32xbf16, #tpu.memory_space<vmem>>, vector<1x16x32xbf16>
      tpu.vector_store %arg8[%c0_71, %c1_72, %c0_73], %1 {strides = array<i32>} : memref<18x18x32xbf16, #tpu.memory_space<vmem>>, vector<1x16x32xbf16>,
    } else {
    }
    %c0_i32_14 = arith.constant 0 : i32
    %13 = arith.cmpi slt, %arg1, %c0_i32_14 : i32
    %14 = arith.extui %13 : i1 to i32
    %c0_i32_15 = arith.constant 0 : i32
    %15 = arith.cmpi ne, %14, %c0_i32_15 : i32
    scf.if %15 {
      %c0_71 = arith.constant 0 : index
      %c0_72 = arith.constant 0 : index
      %c0_73 = arith.constant 0 : index
      %c0_74 = arith.constant 0 : index
      %97 = vector.load %arg4[%c0_71, %c0_72, %c0_73, %c0_74] : memref<1x1x16x32xbf16, #tpu.memory_space<vmem>>, vector<1x1x16x32xbf16>
      %98 = vector.shape_cast %97 : vector<1x1x16x32xbf16> to vector<1x16x32xbf16>
      %c17_75 = arith.constant 17 : index
      %c1_76 = arith.constant 1 : index
      %c0_77 = arith.constant 0 : index
      %99 = vector.load %arg8[%c17_75, %c1_76, %c0_77] : memref<18x18x32xbf16, #tpu.memory_space<vmem>>, vector<1x16x32xbf16>
      tpu.vector_store %arg8[%c17_75, %c1_76, %c0_77], %98 {strides = array<i32>} : memref<18x18x32xbf16, #tpu.memory_space<vmem>>, vector<1x16x32xbf16>,
    } else {
    }
    %c0_i32_16 = arith.constant 0 : i32
    %16 = arith.cmpi eq, %arg1, %c0_i32_16 : i32
    %17 = arith.extui %16 : i1 to i32
    %c0_i32_17 = arith.constant 0 : i32
    %18 = arith.cmpi ne, %17, %c0_i32_17 : i32
    scf.if %18 {
      %c17_71 = arith.constant 17 : index
      %c1_72 = arith.constant 1 : index
      %c0_73 = arith.constant 0 : index
      %97 = vector.load %arg8[%c17_71, %c1_72, %c0_73] : memref<18x18x32xbf16, #tpu.memory_space<vmem>>, vector<1x16x32xbf16>
      tpu.vector_store %arg8[%c17_71, %c1_72, %c0_73], %1 {strides = array<i32>} : memref<18x18x32xbf16, #tpu.memory_space<vmem>>, vector<1x16x32xbf16>,
    } else {
    }
    %cst_18 = arith.constant 0.000000e+00 : f32
    %19 = vector.broadcast %cst_18 : f32 to vector<16x16xf32>
    %c0_19 = arith.constant 0 : index
    %c0_20 = arith.constant 0 : index
    %c0_21 = arith.constant 0 : index
    %20 = vector.load %arg8[%c0_19, %c0_20, %c0_21] : memref<18x18x32xbf16, #tpu.memory_space<vmem>>, vector<16x16x32xbf16>
    %21 = arith.extf %20 : vector<16x16x32xbf16> to vector<16x16x32xf32>
    %c0_22 = arith.constant 0 : index
    %c0_23 = arith.constant 0 : index
    %22 = vector.load %arg5[%c0_22, %c0_23] : memref<9x32xf32, #tpu.memory_space<vmem>>, vector<1x32xf32>
    %23 = vector.shape_cast %22 : vector<1x32xf32> to vector<1x1x32xf32>
    %24 = vector.broadcast %23 : vector<1x1x32xf32> to vector<16x16x32xf32>
    %25 = arith.mulf %21, %24 : vector<16x16x32xf32>
    %cst_24 = arith.constant dense<0.000000e+00> : vector<16x16xf32>
    %26 = vector.multi_reduction <add>, %25, %cst_24 [2] : vector<16x16x32xf32> to vector<16x16xf32>
    %27 = arith.addf %19, %26 : vector<16x16xf32>
    %c0_25 = arith.constant 0 : index
    %c1_26 = arith.constant 1 : index
    %c0_27 = arith.constant 0 : index
    %28 = vector.load %arg8[%c0_25, %c1_26, %c0_27] : memref<18x18x32xbf16, #tpu.memory_space<vmem>>, vector<16x16x32xbf16>
    %29 = arith.extf %28 : vector<16x16x32xbf16> to vector<16x16x32xf32>
    %c1_28 = arith.constant 1 : index
    %c0_29 = arith.constant 0 : index
    %30 = vector.load %arg5[%c1_28, %c0_29] : memref<9x32xf32, #tpu.memory_space<vmem>>, vector<1x32xf32>
    %31 = vector.shape_cast %30 : vector<1x32xf32> to vector<1x1x32xf32>
    %32 = vector.broadcast %31 : vector<1x1x32xf32> to vector<16x16x32xf32>
    %33 = arith.mulf %29, %32 : vector<16x16x32xf32>
    %cst_30 = arith.constant dense<0.000000e+00> : vector<16x16xf32>
    %34 = vector.multi_reduction <add>, %33, %cst_30 [2] : vector<16x16x32xf32> to vector<16x16xf32>
    %35 = arith.addf %27, %34 : vector<16x16xf32>
    %c0_31 = arith.constant 0 : index
    %c2 = arith.constant 2 : index
    %c0_32 = arith.constant 0 : index
    %36 = vector.load %arg8[%c0_31, %c2, %c0_32] : memref<18x18x32xbf16, #tpu.memory_space<vmem>>, vector<16x16x32xbf16>
    %37 = arith.extf %36 : vector<16x16x32xbf16> to vector<16x16x32xf32>
    %c2_33 = arith.constant 2 : index
    %c0_34 = arith.constant 0 : index
    %38 = vector.load %arg5[%c2_33, %c0_34] : memref<9x32xf32, #tpu.memory_space<vmem>>, vector<1x32xf32>
    %39 = vector.shape_cast %38 : vector<1x32xf32> to vector<1x1x32xf32>
    %40 = vector.broadcast %39 : vector<1x1x32xf32> to vector<16x16x32xf32>
    %41 = arith.mulf %37, %40 : vector<16x16x32xf32>
    %cst_35 = arith.constant dense<0.000000e+00> : vector<16x16xf32>
    %42 = vector.multi_reduction <add>, %41, %cst_35 [2] : vector<16x16x32xf32> to vector<16x16xf32>
    %43 = arith.addf %35, %42 : vector<16x16xf32>
    %c1_36 = arith.constant 1 : index
    %c0_37 = arith.constant 0 : index
    %c0_38 = arith.constant 0 : index
    %44 = vector.load %arg8[%c1_36, %c0_37, %c0_38] : memref<18x18x32xbf16, #tpu.memory_space<vmem>>, vector<16x16x32xbf16>
    %45 = arith.extf %44 : vector<16x16x32xbf16> to vector<16x16x32xf32>
    %c3 = arith.constant 3 : index
    %c0_39 = arith.constant 0 : index
    %46 = vector.load %arg5[%c3, %c0_39] : memref<9x32xf32, #tpu.memory_space<vmem>>, vector<1x32xf32>
    %47 = vector.shape_cast %46 : vector<1x32xf32> to vector<1x1x32xf32>
    %48 = vector.broadcast %47 : vector<1x1x32xf32> to vector<16x16x32xf32>
    %49 = arith.mulf %45, %48 : vector<16x16x32xf32>
    %cst_40 = arith.constant dense<0.000000e+00> : vector<16x16xf32>
    %50 = vector.multi_reduction <add>, %49, %cst_40 [2] : vector<16x16x32xf32> to vector<16x16xf32>
    %51 = arith.addf %43, %50 : vector<16x16xf32>
    %c1_41 = arith.constant 1 : index
    %c1_42 = arith.constant 1 : index
    %c0_43 = arith.constant 0 : index
    %52 = vector.load %arg8[%c1_41, %c1_42, %c0_43] : memref<18x18x32xbf16, #tpu.memory_space<vmem>>, vector<16x16x32xbf16>
    %53 = arith.extf %52 : vector<16x16x32xbf16> to vector<16x16x32xf32>
    %c4 = arith.constant 4 : index
    %c0_44 = arith.constant 0 : index
    %54 = vector.load %arg5[%c4, %c0_44] : memref<9x32xf32, #tpu.memory_space<vmem>>, vector<1x32xf32>
    %55 = vector.shape_cast %54 : vector<1x32xf32> to vector<1x1x32xf32>
    %56 = vector.broadcast %55 : vector<1x1x32xf32> to vector<16x16x32xf32>
    %57 = arith.mulf %53, %56 : vector<16x16x32xf32>
    %cst_45 = arith.constant dense<0.000000e+00> : vector<16x16xf32>
    %58 = vector.multi_reduction <add>, %57, %cst_45 [2] : vector<16x16x32xf32> to vector<16x16xf32>
    %59 = arith.addf %51, %58 : vector<16x16xf32>
    %c1_46 = arith.constant 1 : index
    %c2_47 = arith.constant 2 : index
    %c0_48 = arith.constant 0 : index
    %60 = vector.load %arg8[%c1_46, %c2_47, %c0_48] : memref<18x18x32xbf16, #tpu.memory_space<vmem>>, vector<16x16x32xbf16>
    %61 = arith.extf %60 : vector<16x16x32xbf16> to vector<16x16x32xf32>
    %c5 = arith.constant 5 : index
    %c0_49 = arith.constant 0 : index
    %62 = vector.load %arg5[%c5, %c0_49] : memref<9x32xf32, #tpu.memory_space<vmem>>, vector<1x32xf32>
    %63 = vector.shape_cast %62 : vector<1x32xf32> to vector<1x1x32xf32>
    %64 = vector.broadcast %63 : vector<1x1x32xf32> to vector<16x16x32xf32>
    %65 = arith.mulf %61, %64 : vector<16x16x32xf32>
    %cst_50 = arith.constant dense<0.000000e+00> : vector<16x16xf32>
    %66 = vector.multi_reduction <add>, %65, %cst_50 [2] : vector<16x16x32xf32> to vector<16x16xf32>
    %67 = arith.addf %59, %66 : vector<16x16xf32>
    %c2_51 = arith.constant 2 : index
    %c0_52 = arith.constant 0 : index
    %c0_53 = arith.constant 0 : index
    %68 = vector.load %arg8[%c2_51, %c0_52, %c0_53] : memref<18x18x32xbf16, #tpu.memory_space<vmem>>, vector<16x16x32xbf16>
    %69 = arith.extf %68 : vector<16x16x32xbf16> to vector<16x16x32xf32>
    %c6 = arith.constant 6 : index
    %c0_54 = arith.constant 0 : index
    %70 = vector.load %arg5[%c6, %c0_54] : memref<9x32xf32, #tpu.memory_space<vmem>>, vector<1x32xf32>
    %71 = vector.shape_cast %70 : vector<1x32xf32> to vector<1x1x32xf32>
    %72 = vector.broadcast %71 : vector<1x1x32xf32> to vector<16x16x32xf32>
    %73 = arith.mulf %69, %72 : vector<16x16x32xf32>
    %cst_55 = arith.constant dense<0.000000e+00> : vector<16x16xf32>
    %74 = vector.multi_reduction <add>, %73, %cst_55 [2] : vector<16x16x32xf32> to vector<16x16xf32>
    %75 = arith.addf %67, %74 : vector<16x16xf32>
    %c2_56 = arith.constant 2 : index
    %c1_57 = arith.constant 1 : index
    %c0_58 = arith.constant 0 : index
    %76 = vector.load %arg8[%c2_56, %c1_57, %c0_58] : memref<18x18x32xbf16, #tpu.memory_space<vmem>>, vector<16x16x32xbf16>
    %77 = arith.extf %76 : vector<16x16x32xbf16> to vector<16x16x32xf32>
    %c7 = arith.constant 7 : index
    %c0_59 = arith.constant 0 : index
    %78 = vector.load %arg5[%c7, %c0_59] : memref<9x32xf32, #tpu.memory_space<vmem>>, vector<1x32xf32>
    %79 = vector.shape_cast %78 : vector<1x32xf32> to vector<1x1x32xf32>
    %80 = vector.broadcast %79 : vector<1x1x32xf32> to vector<16x16x32xf32>
    %81 = arith.mulf %77, %80 : vector<16x16x32xf32>
    %cst_60 = arith.constant dense<0.000000e+00> : vector<16x16xf32>
    %82 = vector.multi_reduction <add>, %81, %cst_60 [2] : vector<16x16x32xf32> to vector<16x16xf32>
    %83 = arith.addf %75, %82 : vector<16x16xf32>
    %c2_61 = arith.constant 2 : index
    %c2_62 = arith.constant 2 : index
    %c0_63 = arith.constant 0 : index
    %84 = vector.load %arg8[%c2_61, %c2_62, %c0_63] : memref<18x18x32xbf16, #tpu.memory_space<vmem>>, vector<16x16x32xbf16>
    %85 = arith.extf %84 : vector<16x16x32xbf16> to vector<16x16x32xf32>
    %c8 = arith.constant 8 : index
    %c0_64 = arith.constant 0 : index
    %86 = vector.load %arg5[%c8, %c0_64] : memref<9x32xf32, #tpu.memory_space<vmem>>, vector<1x32xf32>
    %87 = vector.shape_cast %86 : vector<1x32xf32> to vector<1x1x32xf32>
    %88 = vector.broadcast %87 : vector<1x1x32xf32> to vector<16x16x32xf32>
    %89 = arith.mulf %85, %88 : vector<16x16x32xf32>
    %cst_65 = arith.constant dense<0.000000e+00> : vector<16x16xf32>
    %90 = vector.multi_reduction <add>, %89, %cst_65 [2] : vector<16x16x32xf32> to vector<16x16xf32>
    %91 = arith.addf %83, %90 : vector<16x16xf32>
    %c0_66 = arith.constant 0 : index
    %c0_67 = arith.constant 0 : index
    %92 = vector.load %arg6[%c0_66, %c0_67] : memref<1x1xf32, #tpu.memory_space<vmem>>, vector<1x1xf32>
    %93 = vector.broadcast %92 : vector<1x1xf32> to vector<16x16xf32>
    %94 = arith.addf %91, %93 : vector<16x16xf32>
    %95 = vector.shape_cast %94 : vector<16x16xf32> to vector<1x16x16xf32>
    %c0_68 = arith.constant 0 : index
    %c0_69 = arith.constant 0 : index
    %c0_70 = arith.constant 0 : index
    %96 = vector.load %arg7[%c0_68, %c0_69, %c0_70] : memref<1x16x16xf32, #tpu.memory_space<vmem>>, vector<1x16x16xf32>
    tpu.vector_store %arg7[%c0_68, %c0_69, %c0_70], %95 {strides = array<i32>} : memref<1x16x16xf32, #tpu.memory_space<vmem>>, vector<1x16x16xf32>,
    return
  }
  func.func @transform_0(%arg0: i32, %arg1: i32) -> (i32, i32, i32, i32) {
    %c0_i32 = arith.constant 0 : i32
    %c0_i32_0 = arith.constant 0 : i32
    %c0_i32_1 = arith.constant 0 : i32
    return %arg0, %arg1, %c0_i32, %c0_i32_0 : i32, i32, i32, i32
  }
  func.func @transform_1(%arg0: i32, %arg1: i32) -> (i32, i32, i32, i32) {
    %c16_i32 = arith.constant 16 : i32
    %0 = arith.muli %arg1, %c16_i32 : i32
    %c1_i32 = arith.constant 1 : i32
    %1 = arith.subi %0, %c1_i32 : i32
    %c0_i32 = arith.constant 0 : i32
    %2 = arith.maxsi %1, %c0_i32 : i32
    %c0_i32_0 = arith.constant 0 : i32
    %c0_i32_1 = arith.constant 0 : i32
    %c0_i32_2 = arith.constant 0 : i32
    return %arg0, %2, %c0_i32_0, %c0_i32_1 : i32, i32, i32, i32
  }
  func.func @transform_2(%arg0: i32, %arg1: i32) -> (i32, i32, i32, i32) {
    %c16_i32 = arith.constant 16 : i32
    %0 = arith.muli %arg1, %c16_i32 : i32
    %c16_i32_0 = arith.constant 16 : i32
    %1 = arith.addi %0, %c16_i32_0 : i32
    %c15_i32 = arith.constant 15 : i32
    %2 = arith.minsi %1, %c15_i32 : i32
    %c0_i32 = arith.constant 0 : i32
    %c0_i32_1 = arith.constant 0 : i32
    %c0_i32_2 = arith.constant 0 : i32
    return %arg0, %2, %c0_i32, %c0_i32_1 : i32, i32, i32, i32
  }
  func.func @transform_3(%arg0: i32, %arg1: i32) -> (i32, i32) {
    %c0_i32 = arith.constant 0 : i32
    %c0_i32_0 = arith.constant 0 : i32
    %c0_i32_1 = arith.constant 0 : i32
    return %c0_i32, %c0_i32_0 : i32, i32
  }
  func.func @transform_4(%arg0: i32, %arg1: i32) -> (i32, i32) {
    %c0_i32 = arith.constant 0 : i32
    %c0_i32_0 = arith.constant 0 : i32
    %c0_i32_1 = arith.constant 0 : i32
    return %c0_i32, %c0_i32_0 : i32, i32
  }
  func.func @transform_5(%arg0: i32, %arg1: i32) -> (i32, i32, i32) {
    %c0_i32 = arith.constant 0 : i32
    %c0_i32_0 = arith.constant 0 : i32
    return %arg0, %arg1, %c0_i32 : i32, i32, i32
  }
}

</mosaic_0001>

<llo_original>
// kernel: analysis_side_net.4
$region0: #{analysis_side_net.4}
  #allocation0 [shape = 'u32[]', space=smem, size = 0x4, offset = 0x4, fixed_abs, tag = 'smem constant byte address 0x4 - core index']
  #allocation1 [shape = 'u32[72,128]{1,0:T(1,128)}', space=vmem, size = 0x9000, scoped, tag = 'internal scratch']
  %s0 = inlined_call_operand.vmem [shape: bf16[2,16,16,27], index: 0, kind: input, shape index: {}]
  %s1 = inlined_call_operand.vmem [shape: bf16[27,32], index: 1, kind: input, shape index: {}]
  %s2 = inlined_call_operand.vmem [shape: f32[1,32], index: 2, kind: input, shape index: {}]
  %s3 = inlined_call_operand.vmem [shape: bf16[32,32], index: 3, kind: input, shape index: {}]
  %s4 = inlined_call_operand.vmem [shape: f32[1,32], index: 4, kind: input, shape index: {}]
  %s5 = inlined_call_operand.vmem [shape: bf16[2,16,16,32], index: 5, kind: output, shape index: {}]
  %s6 = sld [smem:[#allocation0]]
  $region53: #{analysis_side_net.4} parent=0
    _
  %s8 = ssub.s32 1, %s6
  %s9 = scalar_select 0, %s8, %s6
  loop: start=0, step=1, limit=4
  $region2: #{analysis_side_net.4} parent=0 // loop_pre_header
    _
  $region3: #{analysis_side_net.4} parent=0 // loop_header
    %s11 = sphi 0, %s15
    %p12 = scmp.ge.s32.totalorder %s11, 4
    %s18 = sphi 0, %s30
    %s19 = sphi 0, %s26
    %s20 = sphi 0, %s18
    %s21 = sphi 0, %s19
    %s22 = sphi 0, %s20
    %s23 = sphi 0, %s21
    %s35 = sphi 0, %s37
    %s38 = sphi 0, %s35
    %s39 = sphi 0, %s38
    %s55 = sphi 0, %s39
    %s59 = sphi 0, %s59
    %s61 = sphi 0, %s59
    %s62 = sphi 0, %s61
    %s76 = sphi 0, %s62
    %s80 = sphi 0, %s80
    %s82 = sphi 0, %s80
    %s83 = sphi 0, %s82
    %s97 = sphi 0, %s83
    %s101 = sphi 0, %s101
    %s103 = sphi 0, %s101
    %s104 = sphi 0, %s103
    %s118 = sphi 0, %s104
    %s122 = sphi 0, %s122
    %s124 = sphi 0, %s122
    %s125 = sphi 0, %s124
    %s139 = sphi 0, %s125
    %s147 = sphi 0, %s149
    %s150 = sphi 0, %s147
    %s151 = sphi 0, %s150
    %s167 = sphi 0, %s151
  $region4: #{analysis_side_net.4} parent=0 // loop_header_branch
    %14 = sbr.rel (%p12) target = $region8
  $region5: #{analysis_side_net.4} parent=0 // loop_body
    %s16 = ssub.s32 %s11, 1
    %s17 = ssub.s32 %s11, 2
    %s24 = sadd.s32 1, %s19
    %p25 = scmp.ge.s32.totalorder %s24, 1
    %s26 = scalar_select %p25, 0, %s24
    %s27 = sadd.s32 1, %s18
    %s28 = scalar_select %p25, %s27, %s18
    %p29 = scmp.ge.s32.totalorder %s28, 2
    %s30 = scalar_select %p29, 0, %s28
    %s31 = ssub.s32 %s18, %s30
    %s32 = ssub.s32 %s19, %s26
    %s33 = sor.u32 %s31, %s32
    %p34 = scmp.eq.s32.totalorder %s33, 0
    %s36 = sadd.s32 %s35, 1
    %s37 = scalar_select %p34, %s35, %s36
    %p40 = pneg %p34
    %p41 = scmp.eq.s32.totalorder %s11, 1
    %p42 = por %p40, %p41
    %p43 = scmp.ne.s32.totalorder %s35, %s38
    %p44 = scmp.eq.s32.totalorder %s11, 0
    %p45 = por %p43, %p44
    %p46 = scmp.ne.s32.totalorder %s35, %s38
    %p47 = scmp.eq.s32.totalorder %s16, 1
    %p48 = por %p46, %p47
    %p49 = scmp.ne.s32.totalorder %s38, %s39
    %p50 = scmp.eq.s32.totalorder %s16, 0
    %p51 = por %p49, %p50
    %p52 = scmp.ne.s32.totalorder %s38, %s39
    %p53 = scmp.eq.s32.totalorder %s17, 1
    %p54 = por %p52, %p53
    %p56 = scmp.ne.s32.totalorder %s39, %s55
    %p57 = scmp.eq.s32.totalorder %s17, 0
    %p58 = por %p56, %p57
    %s60 = sadd.s32 %s59, 1
    %p63 = scmp.eq.s32.totalorder %s11, 1
    %p64 = scmp.ne.s32.totalorder %s59, %s61
    %p65 = scmp.eq.s32.totalorder %s11, 0
    %p66 = por %p64, %p65
    %p67 = scmp.ne.s32.totalorder %s59, %s61
    %p68 = scmp.eq.s32.totalorder %s16, 1
    %p69 = por %p67, %p68
    %p70 = scmp.ne.s32.totalorder %s61, %s62
    %p71 = scmp.eq.s32.totalorder %s16, 0
    %p72 = por %p70, %p71
    %p73 = scmp.ne.s32.totalorder %s61, %s62
    %p74 = scmp.eq.s32.totalorder %s17, 1
    %p75 = por %p73, %p74
    %p77 = scmp.ne.s32.totalorder %s62, %s76
    %p78 = scmp.eq.s32.totalorder %s17, 0
    %p79 = por %p77, %p78
    %s81 = sadd.s32 %s80, 1
    %p84 = scmp.eq.s32.totalorder %s11, 1
    %p85 = scmp.ne.s32.totalorder %s80, %s82
    %p86 = scmp.eq.s32.totalorder %s11, 0
    %p87 = por %p85, %p86
    %p88 = scmp.ne.s32.totalorder %s80, %s82
    %p89 = scmp.eq.s32.totalorder %s16, 1
    %p90 = por %p88, %p89
    %p91 = scmp.ne.s32.totalorder %s82, %s83
    %p92 = scmp.eq.s32.totalorder %s16, 0
    %p93 = por %p91, %p92
    %p94 = scmp.ne.s32.totalorder %s82, %s83
    %p95 = scmp.eq.s32.totalorder %s17, 1
    %p96 = por %p94, %p95
    %p98 = scmp.ne.s32.totalorder %s83, %s97
    %p99 = scmp.eq.s32.totalorder %s17, 0
    %p100 = por %p98, %p99
    %s102 = sadd.s32 %s101, 1
    %p105 = scmp.eq.s32.totalorder %s11, 1
    %p106 = scmp.ne.s32.totalorder %s101, %s103
    %p107 = scmp.eq.s32.totalorder %s11, 0
    %p108 = por %p106, %p107
    %p109 = scmp.ne.s32.totalorder %s101, %s103
    %p110 = scmp.eq.s32.totalorder %s16, 1
    %p111 = por %p109, %p110
    %p112 = scmp.ne.s32.totalorder %s103, %s104
    %p113 = scmp.eq.s32.totalorder %s16, 0
    %p114 = por %p112, %p113
    %p115 = scmp.ne.s32.totalorder %s103, %s104
    %p116 = scmp.eq.s32.totalorder %s17, 1
    %p117 = por %p115, %p116
    %p119 = scmp.ne.s32.totalorder %s104, %s118
    %p120 = scmp.eq.s32.totalorder %s17, 0
    %p121 = por %p119, %p120
    %s123 = sadd.s32 %s122, 1
    %p126 = scmp.eq.s32.totalorder %s11, 1
    %p127 = scmp.ne.s32.totalorder %s122, %s124
    %p128 = scmp.eq.s32.totalorder %s11, 0
    %p129 = por %p127, %p128
    %p130 = scmp.ne.s32.totalorder %s122, %s124
    %p131 = scmp.eq.s32.totalorder %s16, 1
    %p132 = por %p130, %p131
    %p133 = scmp.ne.s32.totalorder %s124, %s125
    %p134 = scmp.eq.s32.totalorder %s16, 0
    %p135 = por %p133, %p134
    %p136 = scmp.ne.s32.totalorder %s124, %s125
    %p137 = scmp.eq.s32.totalorder %s17, 1
    %p138 = por %p136, %p137
    %p140 = scmp.ne.s32.totalorder %s125, %s139
    %p141 = scmp.eq.s32.totalorder %s17, 0
    %p142 = por %p140, %p141
    %s143 = ssub.s32 %s18, %s30
    %s144 = ssub.s32 %s19, %s26
    %s145 = sor.u32 %s143, %s144
    %p146 = scmp.eq.s32.totalorder %s145, 0
    %s148 = sadd.s32 %s147, 1
    %s149 = scalar_select %p146, %s147, %s148
    %p152 = pneg %p146
    %p153 = scmp.eq.s32.totalorder %s11, 1
    %p154 = por %p152, %p153
    %p155 = scmp.ne.s32.totalorder %s147, %s150
    %p156 = scmp.eq.s32.totalorder %s11, 0
    %p157 = por %p155, %p156
    %p158 = scmp.ne.s32.totalorder %s147, %s150
    %p159 = scmp.eq.s32.totalorder %s16, 1
    %p160 = por %p158, %p159
    %p161 = scmp.ne.s32.totalorder %s150, %s151
    %p162 = scmp.eq.s32.totalorder %s16, 0
    %p163 = por %p161, %p162
    %p164 = scmp.ne.s32.totalorder %s150, %s151
    %p165 = scmp.eq.s32.totalorder %s17, 1
    %p166 = por %p164, %p165
    %p168 = scmp.ne.s32.totalorder %s151, %s167
    %p169 = scmp.eq.s32.totalorder %s17, 0
    %p170 = por %p168, %p169
    %p171 = scmp.le.s32.totalorder 1, %s11
    %p172 = scmp.lt.s32.totalorder %s11, 3
    %p173 = pnand %p171, %p172
    %p174 = pneg %p173
    // Predicated region
    $region9: #{analysis_side_net.4} parent=5 // pred_check
      _
    $region10: #{analysis_side_net.4} parent=5 // pred_check_branch
      %176 = sbr.rel (%p173) target = $region12
    $region11: #{analysis_side_net.4} parent=5 // pred_region
      %s177 = ssub.s32 %s11, 1
      // Predicated region
      $region13: #{analysis_side_net.4} parent=11 // pred_check
        %p178 = pneg %p72
      $region14: #{analysis_side_net.4} parent=11 // pred_check_branch
        %180 = sbr.rel (%p178) target = $region16
      $region15: #{analysis_side_net.4} parent=11 // pred_region
        _
      $region16: #{analysis_side_net.4} parent=11 // pred_fallthru
        _
      // Predicated region
      $region17: #{analysis_side_net.4} parent=11 // pred_check
        %p181 = pneg %p93
      $region18: #{analysis_side_net.4} parent=11 // pred_check_branch
        %183 = sbr.rel (%p181) target = $region20
      $region19: #{analysis_side_net.4} parent=11 // pred_region
        _
      $region20: #{analysis_side_net.4} parent=11 // pred_fallthru
        _
      // Predicated region
      $region21: #{analysis_side_net.4} parent=11 // pred_check
        %p184 = pneg %p114
      $region22: #{analysis_side_net.4} parent=11 // pred_check_branch
        %186 = sbr.rel (%p184) target = $region24
      $region23: #{analysis_side_net.4} parent=11 // pred_region
        _
      $region24: #{analysis_side_net.4} parent=11 // pred_fallthru
        _
      // Predicated region
      $region25: #{analysis_side_net.4} parent=11 // pred_check
        %p187 = pneg %p135
      $region26: #{analysis_side_net.4} parent=11 // pred_check_branch
        %189 = sbr.rel (%p187) target = $region28
      $region27: #{analysis_side_net.4} parent=11 // pred_region
        _
      $region28: #{analysis_side_net.4} parent=11 // pred_fallthru
        _
    $region12: #{analysis_side_net.4} parent=5 // pred_fallthru
      _
    %p190 = scmp.lt.s32.totalorder %s11, 2
    // Predicated region
    $region29: #{analysis_side_net.4} parent=5 // pred_check
      %p191 = pneg %p190
    $region30: #{analysis_side_net.4} parent=5 // pred_check_branch
      %193 = sbr.rel (%p191) target = $region32
    $region31: #{analysis_side_net.4} parent=5 // pred_region
      // Predicated region
      $region33: #{analysis_side_net.4} parent=31 // pred_check
        %p194 = pneg %p45
      $region34: #{analysis_side_net.4} parent=31 // pred_check_branch
        %196 = sbr.rel (%p194) target = $region36
      $region35: #{analysis_side_net.4} parent=31 // pred_region
        %s197 = smul.u32 16, %s19
        %p198 = scmp.lt.s32.totalorder %s18, 1
        %s199 = scalar_select %p198, %s18, 1
        %p200 = scmp.lt.s32.totalorder %s197, 15
        %s201 = scalar_select %p200, %s197, 15
        %s202 = smul.addr %s201, 2
        %s203 = smul.addr %s199, 32
        %s204 = sadd.s32 %s202, %s203
        %s205 = smul.addr %s204, 4
        %s206 = scalar_lea.vmem %s0, %s205
        %s207 = smul.u32 16, %s19
      $region36: #{analysis_side_net.4} parent=31 // pred_fallthru
        _
    $region32: #{analysis_side_net.4} parent=5 // pred_fallthru
      _
    %p208 = scmp.le.s32.totalorder 1, %s11
    %p209 = scmp.lt.s32.totalorder %s11, 3
    %p210 = pnand %p208, %p209
    %p211 = pneg %p210
    // Predicated region
    $region37: #{analysis_side_net.4} parent=5 // pred_check
      _
    $region38: #{analysis_side_net.4} parent=5 // pred_check_branch
      %213 = sbr.rel (%p210) target = $region40
    $region39: #{analysis_side_net.4} parent=5 // pred_region
      %s214 = ssub.s32 %s11, 1
      %s215 = smul.u32 16, %s21
      %p216 = scmp.lt.s32.totalorder %s20, 1
      %s217 = scalar_select %p216, %s20, 1
      %p218 = scmp.lt.s32.totalorder %s215, 15
      %s219 = scalar_select %p218, %s215, 15
      %s220 = smul.addr %s219, 2
      %s221 = smul.addr %s217, 32
      %s222 = sadd.s32 %s220, %s221
      %s223 = smul.addr %s222, 4
      %s224 = scalar_lea.vmem %s0, %s223
      %p225 = pneg %p51
      %p226 = pneg %p48
      %p227 = pneg %p72
      %p228 = pneg %p69
      %p229 = pneg %p93
      %p230 = pneg %p90
      %p231 = pneg %p114
      %p232 = pneg %p111
      %p233 = pneg %p135
      %p234 = pneg %p132
      %p235 = pneg %p163
      %p236 = pneg %p160
      %s237 = smul.u32 16, %s21
      %p238 = scmp.lt.s32.totalorder %s20, 1
      %s239 = scalar_select %p238, %s20, 1
      %p240 = scmp.lt.s32.totalorder %s237, 15
      %s241 = scalar_select %p240, %s237, 15
      %s242 = smul.addr %s241, 2
      %s243 = smul.addr %s239, 32
      %s244 = sadd.s32 %s242, %s243
      %s245 = smul.addr %s244, 4
      %s246 = scalar_lea.vmem %s5, %s245
      %s247 = smul.u32 16, %s21
      %p248 = scmp.lt.s32.totalorder %s20, 1
      %s249 = scalar_select %p248, %s20, 1
      %p250 = scmp.lt.s32.totalorder %s247, 15
      %s251 = scalar_select %p250, %s247, 15
      %s252 = smul.addr %s251, 2
      %s253 = smul.addr %s249, 32
      %s254 = sadd.s32 %s252, %s253
      %s255 = smul.addr %s254, 4
      %s256 = scalar_lea.vmem %s0, %s255
      %s257 = smul.u32 16, %s21
      %s258 = smul.u32 16, %s21
      %p259 = scmp.lt.s32.totalorder %s20, 1
      %s260 = scalar_select %p259, %s20, 1
      %p261 = scmp.lt.s32.totalorder %s258, 15
      %s262 = scalar_select %p261, %s258, 15
      %s263 = smul.addr %s262, 2
      %s264 = smul.addr %s260, 32
      %s265 = sadd.s32 %s263, %s264
      %s266 = smul.addr %s265, 4
      %s267 = scalar_lea.vmem %s5, %s266
      %s268 = smul.u32 16, %s21
      %v270 = vld [vmem:[%s256] sm:$0xf]
      %v271 = vld [vmem:[%s256 + $0x4] sm:$0xf]
      %v272 = vld [vmem:[%s256 + $0x8] sm:$0xf]
      %v273 = vld [vmem:[%s256 + $0xc] sm:$0xf]
      %v274 = vld [vmem:[%s256 + $0x10] sm:$0xf]
      %v275 = vld [vmem:[%s256 + $0x14] sm:$0xf]
      %v276 = vld [vmem:[%s256 + $0x18] sm:$0xf]
      %v277 = vld [vmem:[%s256 + $0x1c] sm:$0xf]
      %v278 = vld [vmem:[%s256 + $0x20] sm:$0xf]
      %v279 = vld [vmem:[%s256 + $0x24] sm:$0xf]
      %v280 = vld [vmem:[%s256 + $0x28] sm:$0xf]
      %v281 = vld [vmem:[%s256 + $0x2c] sm:$0xf]
      %v282 = vld [vmem:[%s256 + $0x30] sm:$0xf]
      %v283 = vld [vmem:[%s256 + $0x34] sm:$0xf]
      %v284 = vld [vmem:[%s256 + $0x38] sm:$0xf]
      %v285 = vld [vmem:[%s256 + $0x3c] sm:$0xf]
      %v286 = vld [vmem:[%s256 + $0x40] sm:$0xf]
      %v287 = vld [vmem:[%s256 + $0x44] sm:$0xf]
      %v288 = vld [vmem:[%s256 + $0x48] sm:$0xf]
      %v289 = vld [vmem:[%s256 + $0x4c] sm:$0xf]
      %v290 = vld [vmem:[%s256 + $0x50] sm:$0xf]
      %v291 = vld [vmem:[%s256 + $0x54] sm:$0xf]
      %v292 = vld [vmem:[%s256 + $0x58] sm:$0xf]
      %v293 = vld [vmem:[%s256 + $0x5c] sm:$0xf]
      %v294 = vld [vmem:[%s256 + $0x60] sm:$0xf]
      %v295 = vld [vmem:[%s256 + $0x64] sm:$0xf]
      %v296 = vld [vmem:[%s256 + $0x68] sm:$0xf]
      %v297 = vld [vmem:[%s256 + $0x6c] sm:$0xf]
      %v298 = vld [vmem:[%s256 + $0x70] sm:$0xf]
      %v299 = vld [vmem:[%s256 + $0x74] sm:$0xf]
      %v300 = vld [vmem:[%s256 + $0x78] sm:$0xf]
      %v301 = vld [vmem:[%s256 + $0x7c] sm:$0xf]
      %v302 = vld [vmem:[%s1] sm:$0xf]
      %v303 = vld [vmem:[%s1 + $0x4] sm:$0xf]
      %v304 = vld [vmem:[%s1 + $0x8] sm:$0xf]
      %v305 = vld [vmem:[%s1 + $0xc] sm:$0x3]
      %v306 = vld [vmem:[%s2] sm:$0x1]
      %v308 = vperm.slane %v306, 0
      %v342 = vunpack.c.l.b16 %v270
      %v343 = vunpack.c.l.b16 %v271
      %v344 = vunpack.c.l.b16 %v272
      %v345 = vunpack.c.l.b16 %v273
      %v346 = vunpack.c.l.b16 %v274
      %v347 = vunpack.c.l.b16 %v275
      %v348 = vunpack.c.l.b16 %v276
      %v349 = vunpack.c.l.b16 %v277
      %v350 = vunpack.c.l.b16 %v278
      %v351 = vunpack.c.l.b16 %v279
      %v352 = vunpack.c.l.b16 %v280
      %v353 = vunpack.c.l.b16 %v281
      %v354 = vunpack.c.l.b16 %v282
      %v355 = vunpack.c.l.b16 %v283
      %v356 = vunpack.c.l.b16 %v284
      %v357 = vunpack.c.l.b16 %v285
      %v358 = vunpack.c.l.b16 %v286
      %v359 = vunpack.c.l.b16 %v287
      %v360 = vunpack.c.l.b16 %v288
      %v361 = vunpack.c.l.b16 %v289
      %v362 = vunpack.c.l.b16 %v290
      %v363 = vunpack.c.l.b16 %v291
      %v364 = vunpack.c.l.b16 %v292
      %v365 = vunpack.c.l.b16 %v293
      %v366 = vunpack.c.l.b16 %v294
      %v367 = vunpack.c.l.b16 %v295
      %v368 = vunpack.c.l.b16 %v296
      %v369 = vunpack.c.l.b16 %v297
      %v370 = vunpack.c.l.b16 %v298
      %v371 = vunpack.c.l.b16 %v299
      %v372 = vunpack.c.l.b16 %v300
      %v373 = vunpack.c.l.b16 %v301
      %v374 = vpack.c.b16 %v343, %v342
      %v375 = vpack.c.b16 %v345, %v344
      %v376 = vpack.c.b16 %v347, %v346
      %v377 = vpack.c.b16 %v349, %v348
      %v378 = vpack.c.b16 %v351, %v350
      %v379 = vpack.c.b16 %v353, %v352
      %v380 = vpack.c.b16 %v355, %v354
      %v381 = vpack.c.b16 %v357, %v356
      %v382 = vpack.c.b16 %v359, %v358
      %v383 = vpack.c.b16 %v361, %v360
      %v384 = vpack.c.b16 %v363, %v362
      %v385 = vpack.c.b16 %v365, %v364
      %v386 = vpack.c.b16 %v367, %v366
      %v387 = vpack.c.b16 %v369, %v368
      %v388 = vpack.c.b16 %v371, %v370
      %v389 = vpack.c.b16 %v373, %v372
      %v394 = vunpack.c.l.b16 %v302
      %v395 = vunpack.c.l.b16 %v303
      %v396 = vunpack.c.l.b16 %v304
      %v397 = vunpack.c.l.b16 %v305
      %v398 = vpack.c.b16 %v395, %v394
      %v399 = vpack.c.b16 %v397, %v396
      %vm401 = vcmask 220160
      %v403 = vsel %vm401, %v374, 0
      %v406 = vsel %vm401, %v375, 0
      %v409 = vsel %vm401, %v376, 0
      %v412 = vsel %vm401, %v377, 0
      %v415 = vsel %vm401, %v378, 0
      %v418 = vsel %vm401, %v379, 0
      %v421 = vsel %vm401, %v380, 0
      %v424 = vsel %vm401, %v381, 0
      %v427 = vsel %vm401, %v382, 0
      %v430 = vsel %vm401, %v383, 0
      %v433 = vsel %vm401, %v384, 0
      %v436 = vsel %vm401, %v385, 0
      %v439 = vsel %vm401, %v386, 0
      %v442 = vsel %vm401, %v387, 0
      %v445 = vsel %vm401, %v388, 0
      %v448 = vsel %vm401, %v389, 0
      %vm450 = vcmask 1044480
      %vm451 = vcmask 1045504
      %v452 = vsel %vm450, 4294967295, 65535
      %v453 = vsel %vm451, %v452, 0
      %v455 = vand.u32 %v399, %v453
      %457 = vmatpush.bf16.msra.mxu0 0
      %458 = vmatpush.bf16.msra.mxu0 0
      %459 = vmatpush.bf16.msra.mxu0 0
      %460 = vmatpush.bf16.msra.mxu0 0
      %461 = vmatpush.bf16.msra.mxu0 0
      %462 = vmatpush.bf16.msra.mxu0 0
      %463 = vmatpush.bf16.msra.mxu0 %v455
      %464 = vmatpush.bf16.msra.mxu0 %v398
      %465 = vmatmul.bf16.gmra.mxu0 %v403
      %v466 = vpop.f32.mrf.mxu0
      %v467 = vadd.f32 %v308, %v466
      %v468 = vpop.f32.mrf.mxu0
      %v469 = vadd.f32 %v308, %v468
      %470 = vmatmul.bf16.gmra.mxu0 %v406
      %v471 = vpop.f32.mrf.mxu0
      %v472 = vadd.f32 %v308, %v471
      %v473 = vpop.f32.mrf.mxu0
      %v474 = vadd.f32 %v308, %v473
      %475 = vmatmul.bf16.gmra.mxu0 %v409
      %v476 = vpop.f32.mrf.mxu0
      %v477 = vadd.f32 %v308, %v476
      %v478 = vpop.f32.mrf.mxu0
      %v479 = vadd.f32 %v308, %v478
      %480 = vmatmul.bf16.gmra.mxu0 %v412
      %v481 = vpop.f32.mrf.mxu0
      %v482 = vadd.f32 %v308, %v481
      %v483 = vpop.f32.mrf.mxu0
      %v484 = vadd.f32 %v308, %v483
      %485 = vmatmul.bf16.gmra.mxu0 %v415
      %v486 = vpop.f32.mrf.mxu0
      %v487 = vadd.f32 %v308, %v486
      %v488 = vpop.f32.mrf.mxu0
      %v489 = vadd.f32 %v308, %v488
      %490 = vmatmul.bf16.gmra.mxu0 %v418
      %v491 = vpop.f32.mrf.mxu0
      %v492 = vadd.f32 %v308, %v491
      %v493 = vpop.f32.mrf.mxu0
      %v494 = vadd.f32 %v308, %v493
      %495 = vmatmul.bf16.gmra.mxu0 %v421
      %v496 = vpop.f32.mrf.mxu0
      %v497 = vadd.f32 %v308, %v496
      %v498 = vpop.f32.mrf.mxu0
      %v499 = vadd.f32 %v308, %v498
      %500 = vmatmul.bf16.gmra.mxu0 %v424
      %v501 = vpop.f32.mrf.mxu0
      %v502 = vadd.f32 %v308, %v501
      %v503 = vpop.f32.mrf.mxu0
      %v504 = vadd.f32 %v308, %v503
      %505 = vmatmul.bf16.gmra.mxu0 %v427
      %v506 = vpop.f32.mrf.mxu0
      %v507 = vadd.f32 %v308, %v506
      %v508 = vpop.f32.mrf.mxu0
      %v509 = vadd.f32 %v308, %v508
      %510 = vmatmul.bf16.gmra.mxu0 %v430
      %v511 = vpop.f32.mrf.mxu0
      %v512 = vadd.f32 %v308, %v511
      %v513 = vpop.f32.mrf.mxu0
      %v514 = vadd.f32 %v308, %v513
      %515 = vmatmul.bf16.gmra.mxu0 %v433
      %v516 = vpop.f32.mrf.mxu0
      %v517 = vadd.f32 %v308, %v516
      %v518 = vpop.f32.mrf.mxu0
      %v519 = vadd.f32 %v308, %v518
      %520 = vmatmul.bf16.gmra.mxu0 %v436
      %v521 = vpop.f32.mrf.mxu0
      %v522 = vadd.f32 %v308, %v521
      %v523 = vpop.f32.mrf.mxu0
      %v524 = vadd.f32 %v308, %v523
      %525 = vmatmul.bf16.gmra.mxu0 %v439
      %v526 = vpop.f32.mrf.mxu0
      %v527 = vadd.f32 %v308, %v526
      %v528 = vpop.f32.mrf.mxu0
      %v529 = vadd.f32 %v308, %v528
      %530 = vmatmul.bf16.gmra.mxu0 %v442
      %v531 = vpop.f32.mrf.mxu0
      %v532 = vadd.f32 %v308, %v531
      %v533 = vpop.f32.mrf.mxu0
      %v534 = vadd.f32 %v308, %v533
      %535 = vmatmul.bf16.gmra.mxu0 %v445
      %v536 = vpop.f32.mrf.mxu0
      %v537 = vadd.f32 %v308, %v536
      %v538 = vpop.f32.mrf.mxu0
      %v539 = vadd.f32 %v308, %v538
      %540 = vmatmul.bf16.gmra.mxu0 %v448
      %v541 = vpop.f32.mrf.mxu0
      %v542 = vadd.f32 %v308, %v541
      %v543 = vpop.f32.mrf.mxu0
      %v544 = vadd.f32 %v308, %v543
      %545 = vdwg.mxu0
      %v546 = vmul.f32 %v467, %v467
      %v547 = vmul.f32 %v469, %v469
      %v548 = vmul.f32 %v472, %v472
      %v549 = vmul.f32 %v474, %v474
      %v550 = vmul.f32 %v477, %v477
      %v551 = vmul.f32 %v479, %v479
      %v552 = vmul.f32 %v482, %v482
      %v553 = vmul.f32 %v484, %v484
      %v554 = vmul.f32 %v487, %v487
      %v555 = vmul.f32 %v489, %v489
      %v556 = vmul.f32 %v492, %v492
      %v557 = vmul.f32 %v494, %v494
      %v558 = vmul.f32 %v497, %v497
      %v559 = vmul.f32 %v499, %v499
      %v560 = vmul.f32 %v502, %v502
      %v561 = vmul.f32 %v504, %v504
      %v562 = vmul.f32 %v507, %v507
      %v563 = vmul.f32 %v509, %v509
      %v564 = vmul.f32 %v512, %v512
      %v565 = vmul.f32 %v514, %v514
      %v566 = vmul.f32 %v517, %v517
      %v567 = vmul.f32 %v519, %v519
      %v568 = vmul.f32 %v522, %v522
      %v569 = vmul.f32 %v524, %v524
      %v570 = vmul.f32 %v527, %v527
      %v571 = vmul.f32 %v529, %v529
      %v572 = vmul.f32 %v532, %v532
      %v573 = vmul.f32 %v534, %v534
      %v574 = vmul.f32 %v537, %v537
      %v575 = vmul.f32 %v539, %v539
      %v576 = vmul.f32 %v542, %v542
      %v577 = vmul.f32 %v544, %v544
      %v578 = vpack.c.bf16 %v547, %v546
      %v579 = vpack.c.bf16 %v549, %v548
      %v580 = vpack.c.bf16 %v551, %v550
      %v581 = vpack.c.bf16 %v553, %v552
      %v582 = vpack.c.bf16 %v555, %v554
      %v583 = vpack.c.bf16 %v557, %v556
      %v584 = vpack.c.bf16 %v559, %v558
      %v585 = vpack.c.bf16 %v561, %v560
      %v586 = vpack.c.bf16 %v563, %v562
      %v587 = vpack.c.bf16 %v565, %v564
      %v588 = vpack.c.bf16 %v567, %v566
      %v589 = vpack.c.bf16 %v569, %v568
      %v590 = vpack.c.bf16 %v571, %v570
      %v591 = vpack.c.bf16 %v573, %v572
      %v592 = vpack.c.bf16 %v575, %v574
      %v593 = vpack.c.bf16 %v577, %v576
      %v594 = vld [vmem:[%s3] sm:$0xf]
      %v595 = vld [vmem:[%s3 + $0x4] sm:$0xf]
      %v596 = vld [vmem:[%s3 + $0x8] sm:$0xf]
      %v597 = vld [vmem:[%s3 + $0xc] sm:$0xf]
      %v598 = vld [vmem:[%s4] sm:$0x1]
      %v600 = vperm.slane %v598, 0
      %v606 = vunpack.c.l.b16 %v594
      %v607 = vunpack.c.l.b16 %v595
      %v608 = vunpack.c.l.b16 %v596
      %v609 = vunpack.c.l.b16 %v597
      %v610 = vpack.c.b16 %v607, %v606
      %v611 = vpack.c.b16 %v609, %v608
      %vm614 = vcmask 261120
      %v616 = vsel %vm614, %v578, 0
      %v619 = vsel %vm614, %v579, 0
      %v622 = vsel %vm614, %v580, 0
      %v625 = vsel %vm614, %v581, 0
      %v628 = vsel %vm614, %v582, 0
      %v631 = vsel %vm614, %v583, 0
      %v634 = vsel %vm614, %v584, 0
      %v637 = vsel %vm614, %v585, 0
      %v640 = vsel %vm614, %v586, 0
      %v643 = vsel %vm614, %v587, 0
      %v646 = vsel %vm614, %v588, 0
      %v649 = vsel %vm614, %v589, 0
      %v652 = vsel %vm614, %v590, 0
      %v655 = vsel %vm614, %v591, 0
      %v658 = vsel %vm614, %v592, 0
      %v661 = vsel %vm614, %v593, 0
      %663 = vmatpush.bf16.msra.mxu0 0
      %664 = vmatpush.bf16.msra.mxu0 0
      %665 = vmatpush.bf16.msra.mxu0 0
      %666 = vmatpush.bf16.msra.mxu0 0
      %667 = vmatpush.bf16.msra.mxu0 0
      %668 = vmatpush.bf16.msra.mxu0 0
      %669 = vmatpush.bf16.msra.mxu0 %v611
      %670 = vmatpush.bf16.msra.mxu0 %v610
      %671 = vmatmul.bf16.gmra.mxu0 %v616
      %v672 = vpop.f32.mrf.mxu0
      %v673 = vadd.f32 %v600, %v672
      %v674 = vpop.f32.mrf.mxu0
      %v675 = vadd.f32 %v600, %v674
      %676 = vmatmul.bf16.gmra.mxu0 %v619
      %v677 = vpop.f32.mrf.mxu0
      %v678 = vadd.f32 %v600, %v677
      %v679 = vpop.f32.mrf.mxu0
      %v680 = vadd.f32 %v600, %v679
      %681 = vmatmul.bf16.gmra.mxu0 %v622
      %v682 = vpop.f32.mrf.mxu0
      %v683 = vadd.f32 %v600, %v682
      %v684 = vpop.f32.mrf.mxu0
      %v685 = vadd.f32 %v600, %v684
      %686 = vmatmul.bf16.gmra.mxu0 %v625
      %v687 = vpop.f32.mrf.mxu0
      %v688 = vadd.f32 %v600, %v687
      %v689 = vpop.f32.mrf.mxu0
      %v690 = vadd.f32 %v600, %v689
      %691 = vmatmul.bf16.gmra.mxu0 %v628
      %v692 = vpop.f32.mrf.mxu0
      %v693 = vadd.f32 %v600, %v692
      %v694 = vpop.f32.mrf.mxu0
      %v695 = vadd.f32 %v600, %v694
      %696 = vmatmul.bf16.gmra.mxu0 %v631
      %v697 = vpop.f32.mrf.mxu0
      %v698 = vadd.f32 %v600, %v697
      %v699 = vpop.f32.mrf.mxu0
      %v700 = vadd.f32 %v600, %v699
      %701 = vmatmul.bf16.gmra.mxu0 %v634
      %v702 = vpop.f32.mrf.mxu0
      %v703 = vadd.f32 %v600, %v702
      %v704 = vpop.f32.mrf.mxu0
      %v705 = vadd.f32 %v600, %v704
      %706 = vmatmul.bf16.gmra.mxu0 %v637
      %v707 = vpop.f32.mrf.mxu0
      %v708 = vadd.f32 %v600, %v707
      %v709 = vpop.f32.mrf.mxu0
      %v710 = vadd.f32 %v600, %v709
      %711 = vmatmul.bf16.gmra.mxu0 %v640
      %v712 = vpop.f32.mrf.mxu0
      %v713 = vadd.f32 %v600, %v712
      %v714 = vpop.f32.mrf.mxu0
      %v715 = vadd.f32 %v600, %v714
      %716 = vmatmul.bf16.gmra.mxu0 %v643
      %v717 = vpop.f32.mrf.mxu0
      %v718 = vadd.f32 %v600, %v717
      %v719 = vpop.f32.mrf.mxu0
      %v720 = vadd.f32 %v600, %v719
      %721 = vmatmul.bf16.gmra.mxu0 %v646
      %v722 = vpop.f32.mrf.mxu0
      %v723 = vadd.f32 %v600, %v722
      %v724 = vpop.f32.mrf.mxu0
      %v725 = vadd.f32 %v600, %v724
      %726 = vmatmul.bf16.gmra.mxu0 %v649
      %v727 = vpop.f32.mrf.mxu0
      %v728 = vadd.f32 %v600, %v727
      %v729 = vpop.f32.mrf.mxu0
      %v730 = vadd.f32 %v600, %v729
      %731 = vmatmul.bf16.gmra.mxu0 %v652
      %v732 = vpop.f32.mrf.mxu0
      %v733 = vadd.f32 %v600, %v732
      %v734 = vpop.f32.mrf.mxu0
      %v735 = vadd.f32 %v600, %v734
      %736 = vmatmul.bf16.gmra.mxu0 %v655
      %v737 = vpop.f32.mrf.mxu0
      %v738 = vadd.f32 %v600, %v737
      %v739 = vpop.f32.mrf.mxu0
      %v740 = vadd.f32 %v600, %v739
      %741 = vmatmul.bf16.gmra.mxu0 %v658
      %v742 = vpop.f32.mrf.mxu0
      %v743 = vadd.f32 %v600, %v742
      %v744 = vpop.f32.mrf.mxu0
      %v745 = vadd.f32 %v600, %v744
      %746 = vmatmul.bf16.gmra.mxu0 %v661
      %v747 = vpop.f32.mrf.mxu0
      %v748 = vadd.f32 %v600, %v747
      %v749 = vpop.f32.mrf.mxu0
      %v750 = vadd.f32 %v600, %v749
      %751 = vdwg.mxu0
      %v752 = vrsqrt.pop %v673
      %v753 = vmul.f32 %v752, %v673
      %v754 = vmul.f32 %v753, %v752
      %v755 = vmul.f32 0.5, %v754
      %v756 = vsub.f32 1.5, %v755
      %v757 = vmul.f32 %v752, %v756
      %vm758 = vweird.f32 %v673
      %vm759 = vweird.f32 %v752
      %vm760 = vmor %vm758, %vm759
      %v761 = vsel %vm760, %v752, %v757
      %v762 = vrsqrt.pop %v675
      %v763 = vmul.f32 %v762, %v675
      %v764 = vmul.f32 %v763, %v762
      %v765 = vmul.f32 0.5, %v764
      %v766 = vsub.f32 1.5, %v765
      %v767 = vmul.f32 %v762, %v766
      %vm768 = vweird.f32 %v675
      %vm769 = vweird.f32 %v762
      %vm770 = vmor %vm768, %vm769
      %v771 = vsel %vm770, %v762, %v767
      %v772 = vrsqrt.pop %v678
      %v773 = vmul.f32 %v772, %v678
      %v774 = vmul.f32 %v773, %v772
      %v775 = vmul.f32 0.5, %v774
      %v776 = vsub.f32 1.5, %v775
      %v777 = vmul.f32 %v772, %v776
      %vm778 = vweird.f32 %v678
      %vm779 = vweird.f32 %v772
      %vm780 = vmor %vm778, %vm779
      %v781 = vsel %vm780, %v772, %v777
      %v782 = vrsqrt.pop %v680
      %v783 = vmul.f32 %v782, %v680
      %v784 = vmul.f32 %v783, %v782
      %v785 = vmul.f32 0.5, %v784
      %v786 = vsub.f32 1.5, %v785
      %v787 = vmul.f32 %v782, %v786
      %vm788 = vweird.f32 %v680
      %vm789 = vweird.f32 %v782
      %vm790 = vmor %vm788, %vm789
      %v791 = vsel %vm790, %v782, %v787
      %v792 = vrsqrt.pop %v683
      %v793 = vmul.f32 %v792, %v683
      %v794 = vmul.f32 %v793, %v792
      %v795 = vmul.f32 0.5, %v794
      %v796 = vsub.f32 1.5, %v795
      %v797 = vmul.f32 %v792, %v796
      %vm798 = vweird.f32 %v683
      %vm799 = vweird.f32 %v792
      %vm800 = vmor %vm798, %vm799
      %v801 = vsel %vm800, %v792, %v797
      %v802 = vrsqrt.pop %v685
      %v803 = vmul.f32 %v802, %v685
      %v804 = vmul.f32 %v803, %v802
      %v805 = vmul.f32 0.5, %v804
      %v806 = vsub.f32 1.5, %v805
      %v807 = vmul.f32 %v802, %v806
      %vm808 = vweird.f32 %v685
      %vm809 = vweird.f32 %v802
      %vm810 = vmor %vm808, %vm809
      %v811 = vsel %vm810, %v802, %v807
      %v812 = vrsqrt.pop %v688
      %v813 = vmul.f32 %v812, %v688
      %v814 = vmul.f32 %v813, %v812
      %v815 = vmul.f32 0.5, %v814
      %v816 = vsub.f32 1.5, %v815
      %v817 = vmul.f32 %v812, %v816
      %vm818 = vweird.f32 %v688
      %vm819 = vweird.f32 %v812
      %vm820 = vmor %vm818, %vm819
      %v821 = vsel %vm820, %v812, %v817
      %v822 = vrsqrt.pop %v690
      %v823 = vmul.f32 %v822, %v690
      %v824 = vmul.f32 %v823, %v822
      %v825 = vmul.f32 0.5, %v824
      %v826 = vsub.f32 1.5, %v825
      %v827 = vmul.f32 %v822, %v826
      %vm828 = vweird.f32 %v690
      %vm829 = vweird.f32 %v822
      %vm830 = vmor %vm828, %vm829
      %v831 = vsel %vm830, %v822, %v827
      %v832 = vrsqrt.pop %v693
      %v833 = vmul.f32 %v832, %v693
      %v834 = vmul.f32 %v833, %v832
      %v835 = vmul.f32 0.5, %v834
      %v836 = vsub.f32 1.5, %v835
      %v837 = vmul.f32 %v832, %v836
      %vm838 = vweird.f32 %v693
      %vm839 = vweird.f32 %v832
      %vm840 = vmor %vm838, %vm839
      %v841 = vsel %vm840, %v832, %v837
      %v842 = vrsqrt.pop %v695
      %v843 = vmul.f32 %v842, %v695
      %v844 = vmul.f32 %v843, %v842
      %v845 = vmul.f32 0.5, %v844
      %v846 = vsub.f32 1.5, %v845
      %v847 = vmul.f32 %v842, %v846
      %vm848 = vweird.f32 %v695
      %vm849 = vweird.f32 %v842
      %vm850 = vmor %vm848, %vm849
      %v851 = vsel %vm850, %v842, %v847
      %v852 = vrsqrt.pop %v698
      %v853 = vmul.f32 %v852, %v698
      %v854 = vmul.f32 %v853, %v852
      %v855 = vmul.f32 0.5, %v854
      %v856 = vsub.f32 1.5, %v855
      %v857 = vmul.f32 %v852, %v856
      %vm858 = vweird.f32 %v698
      %vm859 = vweird.f32 %v852
      %vm860 = vmor %vm858, %vm859
      %v861 = vsel %vm860, %v852, %v857
      %v862 = vrsqrt.pop %v700
      %v863 = vmul.f32 %v862, %v700
      %v864 = vmul.f32 %v863, %v862
      %v865 = vmul.f32 0.5, %v864
      %v866 = vsub.f32 1.5, %v865
      %v867 = vmul.f32 %v862, %v866
      %vm868 = vweird.f32 %v700
      %vm869 = vweird.f32 %v862
      %vm870 = vmor %vm868, %vm869
      %v871 = vsel %vm870, %v862, %v867
      %v872 = vrsqrt.pop %v703
      %v873 = vmul.f32 %v872, %v703
      %v874 = vmul.f32 %v873, %v872
      %v875 = vmul.f32 0.5, %v874
      %v876 = vsub.f32 1.5, %v875
      %v877 = vmul.f32 %v872, %v876
      %vm878 = vweird.f32 %v703
      %vm879 = vweird.f32 %v872
      %vm880 = vmor %vm878, %vm879
      %v881 = vsel %vm880, %v872, %v877
      %v882 = vrsqrt.pop %v705
      %v883 = vmul.f32 %v882, %v705
      %v884 = vmul.f32 %v883, %v882
      %v885 = vmul.f32 0.5, %v884
      %v886 = vsub.f32 1.5, %v885
      %v887 = vmul.f32 %v882, %v886
      %vm888 = vweird.f32 %v705
      %vm889 = vweird.f32 %v882
      %vm890 = vmor %vm888, %vm889
      %v891 = vsel %vm890, %v882, %v887
      %v892 = vrsqrt.pop %v708
      %v893 = vmul.f32 %v892, %v708
      %v894 = vmul.f32 %v893, %v892
      %v895 = vmul.f32 0.5, %v894
      %v896 = vsub.f32 1.5, %v895
      %v897 = vmul.f32 %v892, %v896
      %vm898 = vweird.f32 %v708
      %vm899 = vweird.f32 %v892
      %vm900 = vmor %vm898, %vm899
      %v901 = vsel %vm900, %v892, %v897
      %v902 = vrsqrt.pop %v710
      %v903 = vmul.f32 %v902, %v710
      %v904 = vmul.f32 %v903, %v902
      %v905 = vmul.f32 0.5, %v904
      %v906 = vsub.f32 1.5, %v905
      %v907 = vmul.f32 %v902, %v906
      %vm908 = vweird.f32 %v710
      %vm909 = vweird.f32 %v902
      %vm910 = vmor %vm908, %vm909
      %v911 = vsel %vm910, %v902, %v907
      %v912 = vrsqrt.pop %v713
      %v913 = vmul.f32 %v912, %v713
      %v914 = vmul.f32 %v913, %v912
      %v915 = vmul.f32 0.5, %v914
      %v916 = vsub.f32 1.5, %v915
      %v917 = vmul.f32 %v912, %v916
      %vm918 = vweird.f32 %v713
      %vm919 = vweird.f32 %v912
      %vm920 = vmor %vm918, %vm919
      %v921 = vsel %vm920, %v912, %v917
      %v922 = vrsqrt.pop %v715
      %v923 = vmul.f32 %v922, %v715
      %v924 = vmul.f32 %v923, %v922
      %v925 = vmul.f32 0.5, %v924
      %v926 = vsub.f32 1.5, %v925
      %v927 = vmul.f32 %v922, %v926
      %vm928 = vweird.f32 %v715
      %vm929 = vweird.f32 %v922
      %vm930 = vmor %vm928, %vm929
      %v931 = vsel %vm930, %v922, %v927
      %v932 = vrsqrt.pop %v718
      %v933 = vmul.f32 %v932, %v718
      %v934 = vmul.f32 %v933, %v932
      %v935 = vmul.f32 0.5, %v934
      %v936 = vsub.f32 1.5, %v935
      %v937 = vmul.f32 %v932, %v936
      %vm938 = vweird.f32 %v718
      %vm939 = vweird.f32 %v932
      %vm940 = vmor %vm938, %vm939
      %v941 = vsel %vm940, %v932, %v937
      %v942 = vrsqrt.pop %v720
      %v943 = vmul.f32 %v942, %v720
      %v944 = vmul.f32 %v943, %v942
      %v945 = vmul.f32 0.5, %v944
      %v946 = vsub.f32 1.5, %v945
      %v947 = vmul.f32 %v942, %v946
      %vm948 = vweird.f32 %v720
      %vm949 = vweird.f32 %v942
      %vm950 = vmor %vm948, %vm949
      %v951 = vsel %vm950, %v942, %v947
      %v952 = vrsqrt.pop %v723
      %v953 = vmul.f32 %v952, %v723
      %v954 = vmul.f32 %v953, %v952
      %v955 = vmul.f32 0.5, %v954
      %v956 = vsub.f32 1.5, %v955
      %v957 = vmul.f32 %v952, %v956
      %vm958 = vweird.f32 %v723
      %vm959 = vweird.f32 %v952
      %vm960 = vmor %vm958, %vm959
      %v961 = vsel %vm960, %v952, %v957
      %v962 = vrsqrt.pop %v725
      %v963 = vmul.f32 %v962, %v725
      %v964 = vmul.f32 %v963, %v962
      %v965 = vmul.f32 0.5, %v964
      %v966 = vsub.f32 1.5, %v965
      %v967 = vmul.f32 %v962, %v966
      %vm968 = vweird.f32 %v725
      %vm969 = vweird.f32 %v962
      %vm970 = vmor %vm968, %vm969
      %v971 = vsel %vm970, %v962, %v967
      %v972 = vrsqrt.pop %v728
      %v973 = vmul.f32 %v972, %v728
      %v974 = vmul.f32 %v973, %v972
      %v975 = vmul.f32 0.5, %v974
      %v976 = vsub.f32 1.5, %v975
      %v977 = vmul.f32 %v972, %v976
      %vm978 = vweird.f32 %v728
      %vm979 = vweird.f32 %v972
      %vm980 = vmor %vm978, %vm979
      %v981 = vsel %vm980, %v972, %v977
      %v982 = vrsqrt.pop %v730
      %v983 = vmul.f32 %v982, %v730
      %v984 = vmul.f32 %v983, %v982
      %v985 = vmul.f32 0.5, %v984
      %v986 = vsub.f32 1.5, %v985
      %v987 = vmul.f32 %v982, %v986
      %vm988 = vweird.f32 %v730
      %vm989 = vweird.f32 %v982
      %vm990 = vmor %vm988, %vm989
      %v991 = vsel %vm990, %v982, %v987
      %v992 = vrsqrt.pop %v733
      %v993 = vmul.f32 %v992, %v733
      %v994 = vmul.f32 %v993, %v992
      %v995 = vmul.f32 0.5, %v994
      %v996 = vsub.f32 1.5, %v995
      %v997 = vmul.f32 %v992, %v996
      %vm998 = vweird.f32 %v733
      %vm999 = vweird.f32 %v992
      %vm1000 = vmor %vm998, %vm999
      %v1001 = vsel %vm1000, %v992, %v997
      %v1002 = vrsqrt.pop %v735
      %v1003 = vmul.f32 %v1002, %v735
      %v1004 = vmul.f32 %v1003, %v1002
      %v1005 = vmul.f32 0.5, %v1004
      %v1006 = vsub.f32 1.5, %v1005
      %v1007 = vmul.f32 %v1002, %v1006
      %vm1008 = vweird.f32 %v735
      %vm1009 = vweird.f32 %v1002
      %vm1010 = vmor %vm1008, %vm1009
      %v1011 = vsel %vm1010, %v1002, %v1007
      %v1012 = vrsqrt.pop %v738
      %v1013 = vmul.f32 %v1012, %v738
      %v1014 = vmul.f32 %v1013, %v1012
      %v1015 = vmul.f32 0.5, %v1014
      %v1016 = vsub.f32 1.5, %v1015
      %v1017 = vmul.f32 %v1012, %v1016
      %vm1018 = vweird.f32 %v738
      %vm1019 = vweird.f32 %v1012
      %vm1020 = vmor %vm1018, %vm1019
      %v1021 = vsel %vm1020, %v1012, %v1017
      %v1022 = vrsqrt.pop %v740
      %v1023 = vmul.f32 %v1022, %v740
      %v1024 = vmul.f32 %v1023, %v1022
      %v1025 = vmul.f32 0.5, %v1024
      %v1026 = vsub.f32 1.5, %v1025
      %v1027 = vmul.f32 %v1022, %v1026
      %vm1028 = vweird.f32 %v740
      %vm1029 = vweird.f32 %v1022
      %vm1030 = vmor %vm1028, %vm1029
      %v1031 = vsel %vm1030, %v1022, %v1027
      %v1032 = vrsqrt.pop %v743
      %v1033 = vmul.f32 %v1032, %v743
      %v1034 = vmul.f32 %v1033, %v1032
      %v1035 = vmul.f32 0.5, %v1034
      %v1036 = vsub.f32 1.5, %v1035
      %v1037 = vmul.f32 %v1032, %v1036
      %vm1038 = vweird.f32 %v743
      %vm1039 = vweird.f32 %v1032
      %vm1040 = vmor %vm1038, %vm1039
      %v1041 = vsel %vm1040, %v1032, %v1037
      %v1042 = vrsqrt.pop %v745
      %v1043 = vmul.f32 %v1042, %v745
      %v1044 = vmul.f32 %v1043, %v1042
      %v1045 = vmul.f32 0.5, %v1044
      %v1046 = vsub.f32 1.5, %v1045
      %v1047 = vmul.f32 %v1042, %v1046
      %vm1048 = vweird.f32 %v745
      %vm1049 = vweird.f32 %v1042
      %vm1050 = vmor %vm1048, %vm1049
      %v1051 = vsel %vm1050, %v1042, %v1047
      %v1052 = vrsqrt.pop %v748
      %v1053 = vmul.f32 %v1052, %v748
      %v1054 = vmul.f32 %v1053, %v1052
      %v1055 = vmul.f32 0.5, %v1054
      %v1056 = vsub.f32 1.5, %v1055
      %v1057 = vmul.f32 %v1052, %v1056
      %vm1058 = vweird.f32 %v748
      %vm1059 = vweird.f32 %v1052
      %vm1060 = vmor %vm1058, %vm1059
      %v1061 = vsel %vm1060, %v1052, %v1057
      %v1062 = vrsqrt.pop %v750
      %v1063 = vmul.f32 %v1062, %v750
      %v1064 = vmul.f32 %v1063, %v1062
      %v1065 = vmul.f32 0.5, %v1064
      %v1066 = vsub.f32 1.5, %v1065
      %v1067 = vmul.f32 %v1062, %v1066
      %vm1068 = vweird.f32 %v750
      %vm1069 = vweird.f32 %v1062
      %vm1070 = vmor %vm1068, %vm1069
      %v1071 = vsel %vm1070, %v1062, %v1067
      %v1072 = vmul.f32 %v467, %v761
      %v1073 = vmul.f32 %v469, %v771
      %v1074 = vmul.f32 %v472, %v781
      %v1075 = vmul.f32 %v474, %v791
      %v1076 = vmul.f32 %v477, %v801
      %v1077 = vmul.f32 %v479, %v811
      %v1078 = vmul.f32 %v482, %v821
      %v1079 = vmul.f32 %v484, %v831
      %v1080 = vmul.f32 %v487, %v841
      %v1081 = vmul.f32 %v489, %v851
      %v1082 = vmul.f32 %v492, %v861
      %v1083 = vmul.f32 %v494, %v871
      %v1084 = vmul.f32 %v497, %v881
      %v1085 = vmul.f32 %v499, %v891
      %v1086 = vmul.f32 %v502, %v901
      %v1087 = vmul.f32 %v504, %v911
      %v1088 = vmul.f32 %v507, %v921
      %v1089 = vmul.f32 %v509, %v931
      %v1090 = vmul.f32 %v512, %v941
      %v1091 = vmul.f32 %v514, %v951
      %v1092 = vmul.f32 %v517, %v961
      %v1093 = vmul.f32 %v519, %v971
      %v1094 = vmul.f32 %v522, %v981
      %v1095 = vmul.f32 %v524, %v991
      %v1096 = vmul.f32 %v527, %v1001
      %v1097 = vmul.f32 %v529, %v1011
      %v1098 = vmul.f32 %v532, %v1021
      %v1099 = vmul.f32 %v534, %v1031
      %v1100 = vmul.f32 %v537, %v1041
      %v1101 = vmul.f32 %v539, %v1051
      %v1102 = vmul.f32 %v542, %v1061
      %v1103 = vmul.f32 %v544, %v1071
      %v1104 = vpack.c.bf16 %v1072, %v1072
      %v1105 = vpack.c.bf16 %v1073, %v1073
      %v1106 = vpack.c.bf16 %v1074, %v1074
      %v1107 = vpack.c.bf16 %v1075, %v1075
      %v1108 = vpack.c.bf16 %v1076, %v1076
      %v1109 = vpack.c.bf16 %v1077, %v1077
      %v1110 = vpack.c.bf16 %v1078, %v1078
      %v1111 = vpack.c.bf16 %v1079, %v1079
      %v1112 = vpack.c.bf16 %v1080, %v1080
      %v1113 = vpack.c.bf16 %v1081, %v1081
      %v1114 = vpack.c.bf16 %v1082, %v1082
      %v1115 = vpack.c.bf16 %v1083, %v1083
      %v1116 = vpack.c.bf16 %v1084, %v1084
      %v1117 = vpack.c.bf16 %v1085, %v1085
      %v1118 = vpack.c.bf16 %v1086, %v1086
      %v1119 = vpack.c.bf16 %v1087, %v1087
      %v1120 = vpack.c.bf16 %v1088, %v1088
      %v1121 = vpack.c.bf16 %v1089, %v1089
      %v1122 = vpack.c.bf16 %v1090, %v1090
      %v1123 = vpack.c.bf16 %v1091, %v1091
      %v1124 = vpack.c.bf16 %v1092, %v1092
      %v1125 = vpack.c.bf16 %v1093, %v1093
      %v1126 = vpack.c.bf16 %v1094, %v1094
      %v1127 = vpack.c.bf16 %v1095, %v1095
      %v1128 = vpack.c.bf16 %v1096, %v1096
      %v1129 = vpack.c.bf16 %v1097, %v1097
      %v1130 = vpack.c.bf16 %v1098, %v1098
      %v1131 = vpack.c.bf16 %v1099, %v1099
      %v1132 = vpack.c.bf16 %v1100, %v1100
      %v1133 = vpack.c.bf16 %v1101, %v1101
      %v1134 = vpack.c.bf16 %v1102, %v1102
      %v1135 = vpack.c.bf16 %v1103, %v1103
      %vm1136 = vcmask 257024
      %1137 = vst.msk [vmem:[%s267] sm:$0xf] %vm1136, %v1104
      %1138 = vst.msk [vmem:[%s267 + $0x4] sm:$0xf] %vm1136, %v1105
      %1139 = vst.msk [vmem:[%s267 + $0x8] sm:$0xf] %vm1136, %v1106
      %1140 = vst.msk [vmem:[%s267 + $0xc] sm:$0xf] %vm1136, %v1107
      %1141 = vst.msk [vmem:[%s267 + $0x10] sm:$0xf] %vm1136, %v1108
      %1142 = vst.msk [vmem:[%s267 + $0x14] sm:$0xf] %vm1136, %v1109
      %1143 = vst.msk [vmem:[%s267 + $0x18] sm:$0xf] %vm1136, %v1110
      %1144 = vst.msk [vmem:[%s267 + $0x1c] sm:$0xf] %vm1136, %v1111
      %1145 = vst.msk [vmem:[%s267 + $0x20] sm:$0xf] %vm1136, %v1112
      %1146 = vst.msk [vmem:[%s267 + $0x24] sm:$0xf] %vm1136, %v1113
      %1147 = vst.msk [vmem:[%s267 + $0x28] sm:$0xf] %vm1136, %v1114
      %1148 = vst.msk [vmem:[%s267 + $0x2c] sm:$0xf] %vm1136, %v1115
      %1149 = vst.msk [vmem:[%s267 + $0x30] sm:$0xf] %vm1136, %v1116
      %1150 = vst.msk [vmem:[%s267 + $0x34] sm:$0xf] %vm1136, %v1117
      %1151 = vst.msk [vmem:[%s267 + $0x38] sm:$0xf] %vm1136, %v1118
      %1152 = vst.msk [vmem:[%s267 + $0x3c] sm:$0xf] %vm1136, %v1119
      %1153 = vst.msk [vmem:[%s267 + $0x40] sm:$0xf] %vm1136, %v1120
      %1154 = vst.msk [vmem:[%s267 + $0x44] sm:$0xf] %vm1136, %v1121
      %1155 = vst.msk [vmem:[%s267 + $0x48] sm:$0xf] %vm1136, %v1122
      %1156 = vst.msk [vmem:[%s267 + $0x4c] sm:$0xf] %vm1136, %v1123
      %1157 = vst.msk [vmem:[%s267 + $0x50] sm:$0xf] %vm1136, %v1124
      %1158 = vst.msk [vmem:[%s267 + $0x54] sm:$0xf] %vm1136, %v1125
      %1159 = vst.msk [vmem:[%s267 + $0x58] sm:$0xf] %vm1136, %v1126
      %1160 = vst.msk [vmem:[%s267 + $0x5c] sm:$0xf] %vm1136, %v1127
      %1161 = vst.msk [vmem:[%s267 + $0x60] sm:$0xf] %vm1136, %v1128
      %1162 = vst.msk [vmem:[%s267 + $0x64] sm:$0xf] %vm1136, %v1129
      %1163 = vst.msk [vmem:[%s267 + $0x68] sm:$0xf] %vm1136, %v1130
      %1164 = vst.msk [vmem:[%s267 + $0x6c] sm:$0xf] %vm1136, %v1131
      %1165 = vst.msk [vmem:[%s267 + $0x70] sm:$0xf] %vm1136, %v1132
      %1166 = vst.msk [vmem:[%s267 + $0x74] sm:$0xf] %vm1136, %v1133
      %1167 = vst.msk [vmem:[%s267 + $0x78] sm:$0xf] %vm1136, %v1134
      %1168 = vst.msk [vmem:[%s267 + $0x7c] sm:$0xf] %vm1136, %v1135
      %s1169 = smul.u32 16, %s21
      %p1170 = scmp.lt.s32.totalorder %s20, 1
      %s1171 = scalar_select %p1170, %s20, 1
      %p1172 = scmp.lt.s32.totalorder %s1169, 15
      %s1173 = scalar_select %p1172, %s1169, 15
      %s1174 = smul.addr %s1173, 2
      %s1175 = smul.addr %s1171, 32
      %s1176 = sadd.s32 %s1174, %s1175
      %s1177 = smul.addr %s1176, 4
      %s1178 = scalar_lea.vmem %s5, %s1177
      // Predicated region
      $region41: #{analysis_side_net.4} parent=39 // pred_check
        %p1179 = pneg %p160
      $region42: #{analysis_side_net.4} parent=39 // pred_check_branch
        %1181 = sbr.rel (%p1179) target = $region44
      $region43: #{analysis_side_net.4} parent=39 // pred_region
        %s1182 = smul.u32 16, %s21
      $region44: #{analysis_side_net.4} parent=39 // pred_fallthru
        _
    $region40: #{analysis_side_net.4} parent=5 // pred_fallthru
      _
    %p1183 = scmp.le.s32.totalorder 2, %s11
    // Predicated region
    $region45: #{analysis_side_net.4} parent=5 // pred_check
      %p1184 = pneg %p1183
    $region46: #{analysis_side_net.4} parent=5 // pred_check_branch
      %1186 = sbr.rel (%p1184) target = $region48
    $region47: #{analysis_side_net.4} parent=5 // pred_region
      %s1187 = ssub.s32 %s11, 2
      // Predicated region
      $region49: #{analysis_side_net.4} parent=47 // pred_check
        %p1188 = pneg %p166
      $region50: #{analysis_side_net.4} parent=47 // pred_check_branch
        %1190 = sbr.rel (%p1188) target = $region52
      $region51: #{analysis_side_net.4} parent=47 // pred_region
        %s1191 = smul.u32 16, %s23
        %p1192 = scmp.lt.s32.totalorder %s22, 1
        %s1193 = scalar_select %p1192, %s22, 1
        %p1194 = scmp.lt.s32.totalorder %s1191, 15
        %s1195 = scalar_select %p1194, %s1191, 15
        %s1196 = smul.addr %s1195, 2
        %s1197 = smul.addr %s1193, 32
        %s1198 = sadd.s32 %s1196, %s1197
        %s1199 = smul.addr %s1198, 4
        %s1200 = scalar_lea.vmem %s5, %s1199
      $region52: #{analysis_side_net.4} parent=47 // pred_fallthru
        _
    $region48: #{analysis_side_net.4} parent=5 // pred_fallthru
      _
  $region6: #{analysis_side_net.4} parent=0 // loop_footer
    %s15 = sadd.s32 1, %s11
  $region7: #{analysis_side_net.4} parent=0 // loop_footer_branch
    %10 = sbr.rel target = $region3
  $region8: #{analysis_side_net.4} parent=0 // loop_exit
    _

// kernel: analysis_side_net.5
$region0: #{analysis_side_net.5}
  #allocation0 [shape = 'u32[]', space=smem, size = 0x4, offset = 0x4, fixed_abs, tag = 'smem constant byte address 0x4 - core index']
  #allocation1 [shape = 'u32[72,128]{1,0:T(1,128)}', space=vmem, size = 0x9000, scoped, tag = 'internal scratch']
  #allocation2 [shape = 'bf16[18,18,32]{2,1,0:T(8,128)(2,1)}', space=vmem, size = 0x1b000, scoped, tag = 'scratch operand']
  #allocation3 [shape = 'bf16[256,288]{1,0:T(8,128)(2,1)}', space=vmem, size = 0x30000, scoped, tag = 'scratch operand']
  %s0 = inlined_call_operand.vmem [shape: bf16[2,16,16,32], index: 0, kind: input, shape index: {}, may-alias: {0,1,2}]
  %s1 = inlined_call_operand.vmem [shape: bf16[2,16,16,32], index: 1, kind: input, shape index: {}, may-alias: {0,1,2}]
  %s2 = inlined_call_operand.vmem [shape: bf16[2,16,16,32], index: 2, kind: input, shape index: {}, may-alias: {0,1,2}]
  %s3 = inlined_call_operand.vmem [shape: bf16[288,32], index: 3, kind: input, shape index: {}]
  %s4 = inlined_call_operand.vmem [shape: f32[1,32], index: 4, kind: input, shape index: {}]
  %s5 = inlined_call_operand.vmem [shape: bf16[32,32], index: 5, kind: input, shape index: {}]
  %s6 = inlined_call_operand.vmem [shape: f32[1,32], index: 6, kind: input, shape index: {}]
  %s7 = inlined_call_operand.vmem [shape: bf16[2,16,16,32], index: 7, kind: output, shape index: {}]
  %s8 = sld [smem:[#allocation0]]
  $region77: #{analysis_side_net.5} parent=0
    _
  %s10 = ssub.s32 1, %s8
  %s11 = scalar_select 0, %s10, %s8
  loop: start=0, step=1, limit=4
  $region2: #{analysis_side_net.5} parent=0 // loop_pre_header
    _
  $region3: #{analysis_side_net.5} parent=0 // loop_header
    %s13 = sphi 0, %s17
    %p14 = scmp.ge.s32.totalorder %s13, 4
    %s20 = sphi 0, %s32
    %s21 = sphi 0, %s28
    %s22 = sphi 0, %s20
    %s23 = sphi 0, %s21
    %s24 = sphi 0, %s22
    %s25 = sphi 0, %s23
    %s37 = sphi 0, %s39
    %s40 = sphi 0, %s37
    %s41 = sphi 0, %s40
    %s57 = sphi 0, %s41
    %s73 = sphi 0, %s75
    %s76 = sphi 0, %s73
    %s77 = sphi 0, %s76
    %s93 = sphi 0, %s77
    %s109 = sphi 0, %s111
    %s112 = sphi 0, %s109
    %s113 = sphi 0, %s112
    %s129 = sphi 0, %s113
    %s133 = sphi 0, %s133
    %s135 = sphi 0, %s133
    %s136 = sphi 0, %s135
    %s150 = sphi 0, %s136
    %s154 = sphi 0, %s154
    %s156 = sphi 0, %s154
    %s157 = sphi 0, %s156
    %s171 = sphi 0, %s157
    %s175 = sphi 0, %s175
    %s177 = sphi 0, %s175
    %s178 = sphi 0, %s177
    %s192 = sphi 0, %s178
    %s196 = sphi 0, %s196
    %s198 = sphi 0, %s196
    %s199 = sphi 0, %s198
    %s213 = sphi 0, %s199
    %s221 = sphi 0, %s223
    %s224 = sphi 0, %s221
    %s225 = sphi 0, %s224
    %s241 = sphi 0, %s225
  $region4: #{analysis_side_net.5} parent=0 // loop_header_branch
    %16 = sbr.rel (%p14) target = $region8
  $region5: #{analysis_side_net.5} parent=0 // loop_body
    %s18 = ssub.s32 %s13, 1
    %s19 = ssub.s32 %s13, 2
    %s26 = sadd.s32 1, %s21
    %p27 = scmp.ge.s32.totalorder %s26, 1
    %s28 = scalar_select %p27, 0, %s26
    %s29 = sadd.s32 1, %s20
    %s30 = scalar_select %p27, %s29, %s20
    %p31 = scmp.ge.s32.totalorder %s30, 2
    %s32 = scalar_select %p31, 0, %s30
    %s33 = ssub.s32 %s20, %s32
    %s34 = ssub.s32 %s21, %s28
    %s35 = sor.u32 %s33, %s34
    %p36 = scmp.eq.s32.totalorder %s35, 0
    %s38 = sadd.s32 %s37, 1
    %s39 = scalar_select %p36, %s37, %s38
    %p42 = pneg %p36
    %p43 = scmp.eq.s32.totalorder %s13, 1
    %p44 = por %p42, %p43
    %p45 = scmp.ne.s32.totalorder %s37, %s40
    %p46 = scmp.eq.s32.totalorder %s13, 0
    %p47 = por %p45, %p46
    %p48 = scmp.ne.s32.totalorder %s37, %s40
    %p49 = scmp.eq.s32.totalorder %s18, 1
    %p50 = por %p48, %p49
    %p51 = scmp.ne.s32.totalorder %s40, %s41
    %p52 = scmp.eq.s32.totalorder %s18, 0
    %p53 = por %p51, %p52
    %p54 = scmp.ne.s32.totalorder %s40, %s41
    %p55 = scmp.eq.s32.totalorder %s19, 1
    %p56 = por %p54, %p55
    %p58 = scmp.ne.s32.totalorder %s41, %s57
    %p59 = scmp.eq.s32.totalorder %s19, 0
    %p60 = por %p58, %p59
    %s61 = smul.u32 %s21, 16
    %s62 = ssub.s32 %s61, 1
    %p63 = scmp.gt.s32.totalorder %s62, 0
    %s64 = scalar_select %p63, %s62, 0
    %s65 = smul.u32 %s28, 16
    %s66 = ssub.s32 %s65, 1
    %p67 = scmp.gt.s32.totalorder %s66, 0
    %s68 = scalar_select %p67, %s66, 0
    %s69 = ssub.s32 %s20, %s32
    %s70 = ssub.s32 %s64, %s68
    %s71 = sor.u32 %s69, %s70
    %p72 = scmp.eq.s32.totalorder %s71, 0
    %s74 = sadd.s32 %s73, 1
    %s75 = scalar_select %p72, %s73, %s74
    %p78 = pneg %p72
    %p79 = scmp.eq.s32.totalorder %s13, 1
    %p80 = por %p78, %p79
    %p81 = scmp.ne.s32.totalorder %s73, %s76
    %p82 = scmp.eq.s32.totalorder %s13, 0
    %p83 = por %p81, %p82
    %p84 = scmp.ne.s32.totalorder %s73, %s76
    %p85 = scmp.eq.s32.totalorder %s18, 1
    %p86 = por %p84, %p85
    %p87 = scmp.ne.s32.totalorder %s76, %s77
    %p88 = scmp.eq.s32.totalorder %s18, 0
    %p89 = por %p87, %p88
    %p90 = scmp.ne.s32.totalorder %s76, %s77
    %p91 = scmp.eq.s32.totalorder %s19, 1
    %p92 = por %p90, %p91
    %p94 = scmp.ne.s32.totalorder %s77, %s93
    %p95 = scmp.eq.s32.totalorder %s19, 0
    %p96 = por %p94, %p95
    %s97 = smul.u32 %s21, 16
    %s98 = sadd.s32 %s97, 16
    %p99 = scmp.lt.s32.totalorder %s98, 15
    %s100 = scalar_select %p99, %s98, 15
    %s101 = smul.u32 %s28, 16
    %s102 = sadd.s32 %s101, 16
    %p103 = scmp.lt.s32.totalorder %s102, 15
    %s104 = scalar_select %p103, %s102, 15
    %s105 = ssub.s32 %s20, %s32
    %s106 = ssub.s32 %s100, %s104
    %s107 = sor.u32 %s105, %s106
    %p108 = scmp.eq.s32.totalorder %s107, 0
    %s110 = sadd.s32 %s109, 1
    %s111 = scalar_select %p108, %s109, %s110
    %p114 = pneg %p108
    %p115 = scmp.eq.s32.totalorder %s13, 1
    %p116 = por %p114, %p115
    %p117 = scmp.ne.s32.totalorder %s109, %s112
    %p118 = scmp.eq.s32.totalorder %s13, 0
    %p119 = por %p117, %p118
    %p120 = scmp.ne.s32.totalorder %s109, %s112
    %p121 = scmp.eq.s32.totalorder %s18, 1
    %p122 = por %p120, %p121
    %p123 = scmp.ne.s32.totalorder %s112, %s113
    %p124 = scmp.eq.s32.totalorder %s18, 0
    %p125 = por %p123, %p124
    %p126 = scmp.ne.s32.totalorder %s112, %s113
    %p127 = scmp.eq.s32.totalorder %s19, 1
    %p128 = por %p126, %p127
    %p130 = scmp.ne.s32.totalorder %s113, %s129
    %p131 = scmp.eq.s32.totalorder %s19, 0
    %p132 = por %p130, %p131
    %s134 = sadd.s32 %s133, 1
    %p137 = scmp.eq.s32.totalorder %s13, 1
    %p138 = scmp.ne.s32.totalorder %s133, %s135
    %p139 = scmp.eq.s32.totalorder %s13, 0
    %p140 = por %p138, %p139
    %p141 = scmp.ne.s32.totalorder %s133, %s135
    %p142 = scmp.eq.s32.totalorder %s18, 1
    %p143 = por %p141, %p142
    %p144 = scmp.ne.s32.totalorder %s135, %s136
    %p145 = scmp.eq.s32.totalorder %s18, 0
    %p146 = por %p144, %p145
    %p147 = scmp.ne.s32.totalorder %s135, %s136
    %p148 = scmp.eq.s32.totalorder %s19, 1
    %p149 = por %p147, %p148
    %p151 = scmp.ne.s32.totalorder %s136, %s150
    %p152 = scmp.eq.s32.totalorder %s19, 0
    %p153 = por %p151, %p152
    %s155 = sadd.s32 %s154, 1
    %p158 = scmp.eq.s32.totalorder %s13, 1
    %p159 = scmp.ne.s32.totalorder %s154, %s156
    %p160 = scmp.eq.s32.totalorder %s13, 0
    %p161 = por %p159, %p160
    %p162 = scmp.ne.s32.totalorder %s154, %s156
    %p163 = scmp.eq.s32.totalorder %s18, 1
    %p164 = por %p162, %p163
    %p165 = scmp.ne.s32.totalorder %s156, %s157
    %p166 = scmp.eq.s32.totalorder %s18, 0
    %p167 = por %p165, %p166
    %p168 = scmp.ne.s32.totalorder %s156, %s157
    %p169 = scmp.eq.s32.totalorder %s19, 1
    %p170 = por %p168, %p169
    %p172 = scmp.ne.s32.totalorder %s157, %s171
    %p173 = scmp.eq.s32.totalorder %s19, 0
    %p174 = por %p172, %p173
    %s176 = sadd.s32 %s175, 1
    %p179 = scmp.eq.s32.totalorder %s13, 1
    %p180 = scmp.ne.s32.totalorder %s175, %s177
    %p181 = scmp.eq.s32.totalorder %s13, 0
    %p182 = por %p180, %p181
    %p183 = scmp.ne.s32.totalorder %s175, %s177
    %p184 = scmp.eq.s32.totalorder %s18, 1
    %p185 = por %p183, %p184
    %p186 = scmp.ne.s32.totalorder %s177, %s178
    %p187 = scmp.eq.s32.totalorder %s18, 0
    %p188 = por %p186, %p187
    %p189 = scmp.ne.s32.totalorder %s177, %s178
    %p190 = scmp.eq.s32.totalorder %s19, 1
    %p191 = por %p189, %p190
    %p193 = scmp.ne.s32.totalorder %s178, %s192
    %p194 = scmp.eq.s32.totalorder %s19, 0
    %p195 = por %p193, %p194
    %s197 = sadd.s32 %s196, 1
    %p200 = scmp.eq.s32.totalorder %s13, 1
    %p201 = scmp.ne.s32.totalorder %s196, %s198
    %p202 = scmp.eq.s32.totalorder %s13, 0
    %p203 = por %p201, %p202
    %p204 = scmp.ne.s32.totalorder %s196, %s198
    %p205 = scmp.eq.s32.totalorder %s18, 1
    %p206 = por %p204, %p205
    %p207 = scmp.ne.s32.totalorder %s198, %s199
    %p208 = scmp.eq.s32.totalorder %s18, 0
    %p209 = por %p207, %p208
    %p210 = scmp.ne.s32.totalorder %s198, %s199
    %p211 = scmp.eq.s32.totalorder %s19, 1
    %p212 = por %p210, %p211
    %p214 = scmp.ne.s32.totalorder %s199, %s213
    %p215 = scmp.eq.s32.totalorder %s19, 0
    %p216 = por %p214, %p215
    %s217 = ssub.s32 %s20, %s32
    %s218 = ssub.s32 %s21, %s28
    %s219 = sor.u32 %s217, %s218
    %p220 = scmp.eq.s32.totalorder %s219, 0
    %s222 = sadd.s32 %s221, 1
    %s223 = scalar_select %p220, %s221, %s222
    %p226 = pneg %p220
    %p227 = scmp.eq.s32.totalorder %s13, 1
    %p228 = por %p226, %p227
    %p229 = scmp.ne.s32.totalorder %s221, %s224
    %p230 = scmp.eq.s32.totalorder %s13, 0
    %p231 = por %p229, %p230
    %p232 = scmp.ne.s32.totalorder %s221, %s224
    %p233 = scmp.eq.s32.totalorder %s18, 1
    %p234 = por %p232, %p233
    %p235 = scmp.ne.s32.totalorder %s224, %s225
    %p236 = scmp.eq.s32.totalorder %s18, 0
    %p237 = por %p235, %p236
    %p238 = scmp.ne.s32.totalorder %s224, %s225
    %p239 = scmp.eq.s32.totalorder %s19, 1
    %p240 = por %p238, %p239
    %p242 = scmp.ne.s32.totalorder %s225, %s241
    %p243 = scmp.eq.s32.totalorder %s19, 0
    %p244 = por %p242, %p243
    %p245 = scmp.le.s32.totalorder 1, %s13
    %p246 = scmp.lt.s32.totalorder %s13, 3
    %p247 = pnand %p245, %p246
    %p248 = pneg %p247
    // Predicated region
    $region9: #{analysis_side_net.5} parent=5 // pred_check
      _
    $region10: #{analysis_side_net.5} parent=5 // pred_check_branch
      %250 = sbr.rel (%p247) target = $region12
    $region11: #{analysis_side_net.5} parent=5 // pred_region
      %s251 = ssub.s32 %s13, 1
      // Predicated region
      $region13: #{analysis_side_net.5} parent=11 // pred_check
        %p252 = pneg %p146
      $region14: #{analysis_side_net.5} parent=11 // pred_check_branch
        %254 = sbr.rel (%p252) target = $region16
      $region15: #{analysis_side_net.5} parent=11 // pred_region
        _
      $region16: #{analysis_side_net.5} parent=11 // pred_fallthru
        _
      // Predicated region
      $region17: #{analysis_side_net.5} parent=11 // pred_check
        %p255 = pneg %p167
      $region18: #{analysis_side_net.5} parent=11 // pred_check_branch
        %257 = sbr.rel (%p255) target = $region20
      $region19: #{analysis_side_net.5} parent=11 // pred_region
        _
      $region20: #{analysis_side_net.5} parent=11 // pred_fallthru
        _
      // Predicated region
      $region21: #{analysis_side_net.5} parent=11 // pred_check
        %p258 = pneg %p188
      $region22: #{analysis_side_net.5} parent=11 // pred_check_branch
        %260 = sbr.rel (%p258) target = $region24
      $region23: #{analysis_side_net.5} parent=11 // pred_region
        _
      $region24: #{analysis_side_net.5} parent=11 // pred_fallthru
        _
      // Predicated region
      $region25: #{analysis_side_net.5} parent=11 // pred_check
        %p261 = pneg %p209
      $region26: #{analysis_side_net.5} parent=11 // pred_check_branch
        %263 = sbr.rel (%p261) target = $region28
      $region27: #{analysis_side_net.5} parent=11 // pred_region
        _
      $region28: #{analysis_side_net.5} parent=11 // pred_fallthru
        _
    $region12: #{analysis_side_net.5} parent=5 // pred_fallthru
      _
    %p264 = scmp.lt.s32.totalorder %s13, 2
    // Predicated region
    $region29: #{analysis_side_net.5} parent=5 // pred_check
      %p265 = pneg %p264
    $region30: #{analysis_side_net.5} parent=5 // pred_check_branch
      %267 = sbr.rel (%p265) target = $region32
    $region31: #{analysis_side_net.5} parent=5 // pred_region
      // Predicated region
      $region33: #{analysis_side_net.5} parent=31 // pred_check
        %p268 = pneg %p47
      $region34: #{analysis_side_net.5} parent=31 // pred_check_branch
        %270 = sbr.rel (%p268) target = $region36
      $region35: #{analysis_side_net.5} parent=31 // pred_region
        %s271 = smul.u32 16, %s21
        %p272 = scmp.lt.s32.totalorder %s20, 1
        %s273 = scalar_select %p272, %s20, 1
        %p274 = scmp.lt.s32.totalorder %s271, 15
        %s275 = scalar_select %p274, %s271, 15
        %s276 = smul.addr %s275, 2
        %s277 = smul.addr %s273, 32
        %s278 = sadd.s32 %s276, %s277
        %s279 = smul.addr %s278, 4
        %s280 = scalar_lea.vmem %s0, %s279
        %s281 = smul.u32 16, %s21
      $region36: #{analysis_side_net.5} parent=31 // pred_fallthru
        _
      // Predicated region
      $region37: #{analysis_side_net.5} parent=31 // pred_check
        %p282 = pneg %p83
      $region38: #{analysis_side_net.5} parent=31 // pred_check_branch
        %284 = sbr.rel (%p282) target = $region40
      $region39: #{analysis_side_net.5} parent=31 // pred_region
        %s285 = smul.u32 %s21, 16
        %s286 = ssub.s32 %s285, 1
        %p287 = scmp.gt.s32.totalorder %s286, 0
        %s288 = scalar_select %p287, %s286, 0
        %p289 = scmp.lt.s32.totalorder %s20, 1
        %s290 = scalar_select %p289, %s20, 1
        %p291 = scmp.lt.s32.totalorder %s288, 15
        %s292 = scalar_select %p291, %s288, 15
        %s293 = smul.addr %s292, 2
        %s294 = smul.addr %s290, 32
        %s295 = sadd.s32 %s293, %s294
        %s296 = smul.addr %s295, 4
        %s297 = scalar_lea.vmem %s1, %s296
        %s298 = smul.u32 %s21, 16
        %s299 = ssub.s32 %s298, 1
        %p300 = scmp.gt.s32.totalorder %s299, 0
        %s301 = scalar_select %p300, %s299, 0
      $region40: #{analysis_side_net.5} parent=31 // pred_fallthru
        _
      // Predicated region
      $region41: #{analysis_side_net.5} parent=31 // pred_check
        %p302 = pneg %p119
      $region42: #{analysis_side_net.5} parent=31 // pred_check_branch
        %304 = sbr.rel (%p302) target = $region44
      $region43: #{analysis_side_net.5} parent=31 // pred_region
        %s305 = smul.u32 %s21, 16
        %s306 = sadd.s32 %s305, 16
        %p307 = scmp.lt.s32.totalorder %s306, 15
        %s308 = scalar_select %p307, %s306, 15
        %p309 = scmp.lt.s32.totalorder %s20, 1
        %s310 = scalar_select %p309, %s20, 1
        %p311 = scmp.lt.s32.totalorder %s308, 15
        %s312 = scalar_select %p311, %s308, 15
        %s313 = smul.addr %s312, 2
        %s314 = smul.addr %s310, 32
        %s315 = sadd.s32 %s313, %s314
        %s316 = smul.addr %s315, 4
        %s317 = scalar_lea.vmem %s2, %s316
        %s318 = smul.u32 %s21, 16
        %s319 = sadd.s32 %s318, 16
        %p320 = scmp.lt.s32.totalorder %s319, 15
        %s321 = scalar_select %p320, %s319, 15
      $region44: #{analysis_side_net.5} parent=31 // pred_fallthru
        _
    $region32: #{analysis_side_net.5} parent=5 // pred_fallthru
      _
    %p322 = scmp.le.s32.totalorder 1, %s13
    %p323 = scmp.lt.s32.totalorder %s13, 3
    %p324 = pnand %p322, %p323
    %p325 = pneg %p324
    // Predicated region
    $region45: #{analysis_side_net.5} parent=5 // pred_check
      _
    $region46: #{analysis_side_net.5} parent=5 // pred_check_branch
      %327 = sbr.rel (%p324) target = $region48
    $region47: #{analysis_side_net.5} parent=5 // pred_region
      %s328 = ssub.s32 %s13, 1
      %s329 = smul.u32 16, %s23
      %p330 = scmp.lt.s32.totalorder %s22, 1
      %s331 = scalar_select %p330, %s22, 1
      %p332 = scmp.lt.s32.totalorder %s329, 15
      %s333 = scalar_select %p332, %s329, 15
      %s334 = smul.addr %s333, 2
      %s335 = smul.addr %s331, 32
      %s336 = sadd.s32 %s334, %s335
      %s337 = smul.addr %s336, 4
      %s338 = scalar_lea.vmem %s0, %s337
      %p339 = pneg %p53
      %p340 = pneg %p50
      %s341 = smul.u32 %s23, 16
      %s342 = ssub.s32 %s341, 1
      %p343 = scmp.gt.s32.totalorder %s342, 0
      %s344 = scalar_select %p343, %s342, 0
      %p345 = scmp.lt.s32.totalorder %s22, 1
      %s346 = scalar_select %p345, %s22, 1
      %p347 = scmp.lt.s32.totalorder %s344, 15
      %s348 = scalar_select %p347, %s344, 15
      %s349 = smul.addr %s348, 2
      %s350 = smul.addr %s346, 32
      %s351 = sadd.s32 %s349, %s350
      %s352 = smul.addr %s351, 4
      %s353 = scalar_lea.vmem %s1, %s352
      %p354 = pneg %p89
      %p355 = pneg %p86
      %s356 = smul.u32 %s23, 16
      %s357 = sadd.s32 %s356, 16
      %p358 = scmp.lt.s32.totalorder %s357, 15
      %s359 = scalar_select %p358, %s357, 15
      %p360 = scmp.lt.s32.totalorder %s22, 1
      %s361 = scalar_select %p360, %s22, 1
      %p362 = scmp.lt.s32.totalorder %s359, 15
      %s363 = scalar_select %p362, %s359, 15
      %s364 = smul.addr %s363, 2
      %s365 = smul.addr %s361, 32
      %s366 = sadd.s32 %s364, %s365
      %s367 = smul.addr %s366, 4
      %s368 = scalar_lea.vmem %s2, %s367
      %p369 = pneg %p125
      %p370 = pneg %p122
      %p371 = pneg %p146
      %p372 = pneg %p143
      %p373 = pneg %p167
      %p374 = pneg %p164
      %p375 = pneg %p188
      %p376 = pneg %p185
      %p377 = pneg %p209
      %p378 = pneg %p206
      %p379 = pneg %p237
      %p380 = pneg %p234
      %s381 = smul.u32 16, %s23
      %p382 = scmp.lt.s32.totalorder %s22, 1
      %s383 = scalar_select %p382, %s22, 1
      %p384 = scmp.lt.s32.totalorder %s381, 15
      %s385 = scalar_select %p384, %s381, 15
      %s386 = smul.addr %s385, 2
      %s387 = smul.addr %s383, 32
      %s388 = sadd.s32 %s386, %s387
      %s389 = smul.addr %s388, 4
      %s390 = scalar_lea.vmem %s7, %s389
      %s391 = smul.u32 16, %s23
      %p392 = scmp.lt.s32.totalorder %s22, 1
      %s393 = scalar_select %p392, %s22, 1
      %p394 = scmp.lt.s32.totalorder %s391, 15
      %s395 = scalar_select %p394, %s391, 15
      %s396 = smul.addr %s395, 2
      %s397 = smul.addr %s393, 32
      %s398 = sadd.s32 %s396, %s397
      %s399 = smul.addr %s398, 4
      %s400 = scalar_lea.vmem %s0, %s399
      %s401 = smul.u32 16, %s23
      %s402 = smul.u32 %s23, 16
      %s403 = ssub.s32 %s402, 1
      %p404 = scmp.gt.s32.totalorder %s403, 0
      %s405 = scalar_select %p404, %s403, 0
      %p406 = scmp.lt.s32.totalorder %s22, 1
      %s407 = scalar_select %p406, %s22, 1
      %p408 = scmp.lt.s32.totalorder %s405, 15
      %s409 = scalar_select %p408, %s405, 15
      %s410 = smul.addr %s409, 2
      %s411 = smul.addr %s407, 32
      %s412 = sadd.s32 %s410, %s411
      %s413 = smul.addr %s412, 4
      %s414 = scalar_lea.vmem %s1, %s413
      %s415 = smul.u32 %s23, 16
      %s416 = ssub.s32 %s415, 1
      %p417 = scmp.gt.s32.totalorder %s416, 0
      %s418 = scalar_select %p417, %s416, 0
      %s419 = smul.u32 %s23, 16
      %s420 = sadd.s32 %s419, 16
      %p421 = scmp.lt.s32.totalorder %s420, 15
      %s422 = scalar_select %p421, %s420, 15
      %p423 = scmp.lt.s32.totalorder %s22, 1
      %s424 = scalar_select %p423, %s22, 1
      %p425 = scmp.lt.s32.totalorder %s422, 15
      %s426 = scalar_select %p425, %s422, 15
      %s427 = smul.addr %s426, 2
      %s428 = smul.addr %s424, 32
      %s429 = sadd.s32 %s427, %s428
      %s430 = smul.addr %s429, 4
      %s431 = scalar_lea.vmem %s2, %s430
      %s432 = smul.u32 %s23, 16
      %s433 = sadd.s32 %s432, 16
      %p434 = scmp.lt.s32.totalorder %s433, 15
      %s435 = scalar_select %p434, %s433, 15
      %s436 = smul.u32 16, %s23
      %p437 = scmp.lt.s32.totalorder %s22, 1
      %s438 = scalar_select %p437, %s22, 1
      %p439 = scmp.lt.s32.totalorder %s436, 15
      %s440 = scalar_select %p439, %s436, 15
      %s441 = smul.addr %s440, 2
      %s442 = smul.addr %s438, 32
      %s443 = sadd.s32 %s441, %s442
      %s444 = smul.addr %s443, 4
      %s445 = scalar_lea.vmem %s7, %s444
      %s446 = smul.u32 16, %s23
      %vm448 = vcmask 253952
      %vm449 = vsmask.f32 256
      %vm450 = vmand %vm448, %vm449
      %v451 = vld [vmem:[#allocation2] sm:$0x1]
      %v452 = vsel %vm450, 0, %v451
      %453 = vst [vmem:[#allocation2] sm:$0x1] %v452
      %v454 = vld [vmem:[#allocation2 + $0xc] sm:$0x1]
      %v455 = vsel %vm450, 0, %v454
      %456 = vst [vmem:[#allocation2 + $0xc] sm:$0x1] %v455
      %v457 = vld [vmem:[#allocation2 + $0x18] sm:$0x1]
      %v458 = vsel %vm450, 0, %v457
      %459 = vst [vmem:[#allocation2 + $0x18] sm:$0x1] %v458
      %v460 = vld [vmem:[#allocation2 + $0x24] sm:$0x1]
      %v461 = vsel %vm450, 0, %v460
      %462 = vst [vmem:[#allocation2 + $0x24] sm:$0x1] %v461
      %v463 = vld [vmem:[#allocation2 + $0x30] sm:$0x1]
      %v464 = vsel %vm450, 0, %v463
      %465 = vst [vmem:[#allocation2 + $0x30] sm:$0x1] %v464
      %v466 = vld [vmem:[#allocation2 + $0x3c] sm:$0x1]
      %v467 = vsel %vm450, 0, %v466
      %468 = vst [vmem:[#allocation2 + $0x3c] sm:$0x1] %v467
      %v469 = vld [vmem:[#allocation2 + $0x48] sm:$0x1]
      %v470 = vsel %vm450, 0, %v469
      %471 = vst [vmem:[#allocation2 + $0x48] sm:$0x1] %v470
      %v472 = vld [vmem:[#allocation2 + $0x54] sm:$0x1]
      %v473 = vsel %vm450, 0, %v472
      %474 = vst [vmem:[#allocation2 + $0x54] sm:$0x1] %v473
      %v475 = vld [vmem:[#allocation2 + $0x60] sm:$0x1]
      %v476 = vsel %vm450, 0, %v475
      %477 = vst [vmem:[#allocation2 + $0x60] sm:$0x1] %v476
      %v478 = vld [vmem:[#allocation2 + $0x6c] sm:$0x1]
      %v479 = vsel %vm450, 0, %v478
      %480 = vst [vmem:[#allocation2 + $0x6c] sm:$0x1] %v479
      %v481 = vld [vmem:[#allocation2 + $0x78] sm:$0x1]
      %v482 = vsel %vm450, 0, %v481
      %483 = vst [vmem:[#allocation2 + $0x78] sm:$0x1] %v482
      %v484 = vld [vmem:[#allocation2 + $0x84] sm:$0x1]
      %v485 = vsel %vm450, 0, %v484
      %486 = vst [vmem:[#allocation2 + $0x84] sm:$0x1] %v485
      %v487 = vld [vmem:[#allocation2 + $0x90] sm:$0x1]
      %v488 = vsel %vm450, 0, %v487
      %489 = vst [vmem:[#allocation2 + $0x90] sm:$0x1] %v488
      %v490 = vld [vmem:[#allocation2 + $0x9c] sm:$0x1]
      %v491 = vsel %vm450, 0, %v490
      %492 = vst [vmem:[#allocation2 + $0x9c] sm:$0x1] %v491
      %v493 = vld [vmem:[#allocation2 + $0xa8] sm:$0x1]
      %v494 = vsel %vm450, 0, %v493
      %495 = vst [vmem:[#allocation2 + $0xa8] sm:$0x1] %v494
      %v496 = vld [vmem:[#allocation2 + $0xb4] sm:$0x1]
      %v497 = vsel %vm450, 0, %v496
      %498 = vst [vmem:[#allocation2 + $0xb4] sm:$0x1] %v497
      %v499 = vld [vmem:[#allocation2 + $0xc0] sm:$0x1]
      %v500 = vsel %vm450, 0, %v499
      %501 = vst [vmem:[#allocation2 + $0xc0] sm:$0x1] %v500
      %v502 = vld [vmem:[#allocation2 + $0xcc] sm:$0x1]
      %v503 = vsel %vm450, 0, %v502
      %504 = vst [vmem:[#allocation2 + $0xcc] sm:$0x1] %v503
      %vm505 = vsmask.f32 7938
      %vm506 = vmand %vm448, %vm505
      %v507 = vld [vmem:[#allocation2 + $0x8] sm:$0x1]
      %v508 = vsel %vm506, 0, %v507
      %509 = vst [vmem:[#allocation2 + $0x8] sm:$0x1] %v508
      %v510 = vld [vmem:[#allocation2 + $0x14] sm:$0x1]
      %v511 = vsel %vm506, 0, %v510
      %512 = vst [vmem:[#allocation2 + $0x14] sm:$0x1] %v511
      %v513 = vld [vmem:[#allocation2 + $0x20] sm:$0x1]
      %v514 = vsel %vm506, 0, %v513
      %515 = vst [vmem:[#allocation2 + $0x20] sm:$0x1] %v514
      %v516 = vld [vmem:[#allocation2 + $0x2c] sm:$0x1]
      %v517 = vsel %vm506, 0, %v516
      %518 = vst [vmem:[#allocation2 + $0x2c] sm:$0x1] %v517
      %v519 = vld [vmem:[#allocation2 + $0x38] sm:$0x1]
      %v520 = vsel %vm506, 0, %v519
      %521 = vst [vmem:[#allocation2 + $0x38] sm:$0x1] %v520
      %v522 = vld [vmem:[#allocation2 + $0x44] sm:$0x1]
      %v523 = vsel %vm506, 0, %v522
      %524 = vst [vmem:[#allocation2 + $0x44] sm:$0x1] %v523
      %v525 = vld [vmem:[#allocation2 + $0x50] sm:$0x1]
      %v526 = vsel %vm506, 0, %v525
      %527 = vst [vmem:[#allocation2 + $0x50] sm:$0x1] %v526
      %v528 = vld [vmem:[#allocation2 + $0x5c] sm:$0x1]
      %v529 = vsel %vm506, 0, %v528
      %530 = vst [vmem:[#allocation2 + $0x5c] sm:$0x1] %v529
      %v531 = vld [vmem:[#allocation2 + $0x68] sm:$0x1]
      %v532 = vsel %vm506, 0, %v531
      %533 = vst [vmem:[#allocation2 + $0x68] sm:$0x1] %v532
      %v534 = vld [vmem:[#allocation2 + $0x74] sm:$0x1]
      %v535 = vsel %vm506, 0, %v534
      %536 = vst [vmem:[#allocation2 + $0x74] sm:$0x1] %v535
      %v537 = vld [vmem:[#allocation2 + $0x80] sm:$0x1]
      %v538 = vsel %vm506, 0, %v537
      %539 = vst [vmem:[#allocation2 + $0x80] sm:$0x1] %v538
      %v540 = vld [vmem:[#allocation2 + $0x8c] sm:$0x1]
      %v541 = vsel %vm506, 0, %v540
      %542 = vst [vmem:[#allocation2 + $0x8c] sm:$0x1] %v541
      %v543 = vld [vmem:[#allocation2 + $0x98] sm:$0x1]
      %v544 = vsel %vm506, 0, %v543
      %545 = vst [vmem:[#allocation2 + $0x98] sm:$0x1] %v544
      %v546 = vld [vmem:[#allocation2 + $0xa4] sm:$0x1]
      %v547 = vsel %vm506, 0, %v546
      %548 = vst [vmem:[#allocation2 + $0xa4] sm:$0x1] %v547
      %v549 = vld [vmem:[#allocation2 + $0xb0] sm:$0x1]
      %v550 = vsel %vm506, 0, %v549
      %551 = vst [vmem:[#allocation2 + $0xb0] sm:$0x1] %v550
      %v552 = vld [vmem:[#allocation2 + $0xbc] sm:$0x1]
      %v553 = vsel %vm506, 0, %v552
      %554 = vst [vmem:[#allocation2 + $0xbc] sm:$0x1] %v553
      %v555 = vld [vmem:[#allocation2 + $0xc8] sm:$0x1]
      %v556 = vsel %vm506, 0, %v555
      %557 = vst [vmem:[#allocation2 + $0xc8] sm:$0x1] %v556
      %v558 = vld [vmem:[#allocation2 + $0xd4] sm:$0x1]
      %v559 = vsel %vm506, 0, %v558
      %560 = vst [vmem:[#allocation2 + $0xd4] sm:$0x1] %v559
      %v561 = vld [vmem:[%s400] sm:$0xf]
      %v562 = vld [vmem:[%s400 + $0x4] sm:$0xf]
      %v563 = vld [vmem:[%s400 + $0x8] sm:$0xf]
      %v564 = vld [vmem:[%s400 + $0xc] sm:$0xf]
      %v565 = vld [vmem:[%s400 + $0x10] sm:$0xf]
      %v566 = vld [vmem:[%s400 + $0x14] sm:$0xf]
      %v567 = vld [vmem:[%s400 + $0x18] sm:$0xf]
      %v568 = vld [vmem:[%s400 + $0x1c] sm:$0xf]
      %v569 = vld [vmem:[%s400 + $0x20] sm:$0xf]
      %v570 = vld [vmem:[%s400 + $0x24] sm:$0xf]
      %v571 = vld [vmem:[%s400 + $0x28] sm:$0xf]
      %v572 = vld [vmem:[%s400 + $0x2c] sm:$0xf]
      %v573 = vld [vmem:[%s400 + $0x30] sm:$0xf]
      %v574 = vld [vmem:[%s400 + $0x34] sm:$0xf]
      %v575 = vld [vmem:[%s400 + $0x38] sm:$0xf]
      %v576 = vld [vmem:[%s400 + $0x3c] sm:$0xf]
      %v577 = vld [vmem:[%s400 + $0x40] sm:$0xf]
      %v578 = vld [vmem:[%s400 + $0x44] sm:$0xf]
      %v579 = vld [vmem:[%s400 + $0x48] sm:$0xf]
      %v580 = vld [vmem:[%s400 + $0x4c] sm:$0xf]
      %v581 = vld [vmem:[%s400 + $0x50] sm:$0xf]
      %v582 = vld [vmem:[%s400 + $0x54] sm:$0xf]
      %v583 = vld [vmem:[%s400 + $0x58] sm:$0xf]
      %v584 = vld [vmem:[%s400 + $0x5c] sm:$0xf]
      %v585 = vld [vmem:[%s400 + $0x60] sm:$0xf]
      %v586 = vld [vmem:[%s400 + $0x64] sm:$0xf]
      %v587 = vld [vmem:[%s400 + $0x68] sm:$0xf]
      %v588 = vld [vmem:[%s400 + $0x6c] sm:$0xf]
      %v589 = vld [vmem:[%s400 + $0x70] sm:$0xf]
      %v590 = vld [vmem:[%s400 + $0x74] sm:$0xf]
      %v591 = vld [vmem:[%s400 + $0x78] sm:$0xf]
      %v592 = vld [vmem:[%s400 + $0x7c] sm:$0xf]
      %vm593 = vsmask.f32 4368
      %vm594 = vmor %vm449, %vm593
      %v596 = vshrl.u32 %v561, 16
      %v598 = vrot.slane %v596, 7
      %v599 = vshll.u32 %v561, 16
      %v601 = vor.u32 %v598, %v599
      %v602 = vrot.slane %v598, 4
      %v604 = vshrl.u32 %v562, 16
      %v606 = vrot.slane %v604, 7
      %v607 = vshll.u32 %v562, 16
      %v609 = vor.u32 %v606, %v607
      %v610 = vsel %vm594, %v602, %v609
      %v611 = vrot.slane %v606, 4
      %v613 = vshrl.u32 %v563, 16
      %v615 = vrot.slane %v613, 7
      %v616 = vshll.u32 %v563, 16
      %v618 = vor.u32 %v615, %v616
      %v619 = vrot.slane %v615, 4
      %v621 = vshrl.u32 %v564, 16
      %v623 = vrot.slane %v621, 7
      %v624 = vshll.u32 %v564, 16
      %v626 = vor.u32 %v623, %v624
      %v627 = vsel %vm594, %v619, %v626
      %v628 = vrot.slane %v623, 4
      %v630 = vshrl.u32 %v565, 16
      %v632 = vrot.slane %v630, 7
      %v633 = vshll.u32 %v565, 16
      %v635 = vor.u32 %v632, %v633
      %v636 = vrot.slane %v632, 4
      %v638 = vshrl.u32 %v566, 16
      %v640 = vrot.slane %v638, 7
      %v641 = vshll.u32 %v566, 16
      %v643 = vor.u32 %v640, %v641
      %v644 = vsel %vm594, %v636, %v643
      %v645 = vrot.slane %v640, 4
      %v647 = vshrl.u32 %v567, 16
      %v649 = vrot.slane %v647, 7
      %v650 = vshll.u32 %v567, 16
      %v652 = vor.u32 %v649, %v650
      %v653 = vrot.slane %v649, 4
      %v655 = vshrl.u32 %v568, 16
      %v657 = vrot.slane %v655, 7
      %v658 = vshll.u32 %v568, 16
      %v660 = vor.u32 %v657, %v658
      %v661 = vsel %vm594, %v653, %v660
      %v662 = vrot.slane %v657, 4
      %v664 = vshrl.u32 %v569, 16
      %v666 = vrot.slane %v664, 7
      %v667 = vshll.u32 %v569, 16
      %v669 = vor.u32 %v666, %v667
      %v670 = vrot.slane %v666, 4
      %v672 = vshrl.u32 %v570, 16
      %v674 = vrot.slane %v672, 7
      %v675 = vshll.u32 %v570, 16
      %v677 = vor.u32 %v674, %v675
      %v678 = vsel %vm594, %v670, %v677
      %v679 = vrot.slane %v674, 4
      %v681 = vshrl.u32 %v571, 16
      %v683 = vrot.slane %v681, 7
      %v684 = vshll.u32 %v571, 16
      %v686 = vor.u32 %v683, %v684
      %v687 = vrot.slane %v683, 4
      %v689 = vshrl.u32 %v572, 16
      %v691 = vrot.slane %v689, 7
      %v692 = vshll.u32 %v572, 16
      %v694 = vor.u32 %v691, %v692
      %v695 = vsel %vm594, %v687, %v694
      %v696 = vrot.slane %v691, 4
      %v698 = vshrl.u32 %v573, 16
      %v700 = vrot.slane %v698, 7
      %v701 = vshll.u32 %v573, 16
      %v703 = vor.u32 %v700, %v701
      %v704 = vrot.slane %v700, 4
      %v706 = vshrl.u32 %v574, 16
      %v708 = vrot.slane %v706, 7
      %v709 = vshll.u32 %v574, 16
      %v711 = vor.u32 %v708, %v709
      %v712 = vsel %vm594, %v704, %v711
      %v713 = vrot.slane %v708, 4
      %v715 = vshrl.u32 %v575, 16
      %v717 = vrot.slane %v715, 7
      %v718 = vshll.u32 %v575, 16
      %v720 = vor.u32 %v717, %v718
      %v721 = vrot.slane %v717, 4
      %v723 = vshrl.u32 %v576, 16
      %v725 = vrot.slane %v723, 7
      %v726 = vshll.u32 %v576, 16
      %v728 = vor.u32 %v725, %v726
      %v729 = vsel %vm594, %v721, %v728
      %v730 = vrot.slane %v725, 4
      %v732 = vshrl.u32 %v577, 16
      %v734 = vrot.slane %v732, 7
      %v735 = vshll.u32 %v577, 16
      %v737 = vor.u32 %v734, %v735
      %v738 = vrot.slane %v734, 4
      %v740 = vshrl.u32 %v578, 16
      %v742 = vrot.slane %v740, 7
      %v743 = vshll.u32 %v578, 16
      %v745 = vor.u32 %v742, %v743
      %v746 = vsel %vm594, %v738, %v745
      %v747 = vrot.slane %v742, 4
      %v749 = vshrl.u32 %v579, 16
      %v751 = vrot.slane %v749, 7
      %v752 = vshll.u32 %v579, 16
      %v754 = vor.u32 %v751, %v752
      %v755 = vrot.slane %v751, 4
      %v757 = vshrl.u32 %v580, 16
      %v759 = vrot.slane %v757, 7
      %v760 = vshll.u32 %v580, 16
      %v762 = vor.u32 %v759, %v760
      %v763 = vsel %vm594, %v755, %v762
      %v764 = vrot.slane %v759, 4
      %v766 = vshrl.u32 %v581, 16
      %v768 = vrot.slane %v766, 7
      %v769 = vshll.u32 %v581, 16
      %v771 = vor.u32 %v768, %v769
      %v772 = vrot.slane %v768, 4
      %v774 = vshrl.u32 %v582, 16
      %v776 = vrot.slane %v774, 7
      %v777 = vshll.u32 %v582, 16
      %v779 = vor.u32 %v776, %v777
      %v780 = vsel %vm594, %v772, %v779
      %v781 = vrot.slane %v776, 4
      %v783 = vshrl.u32 %v583, 16
      %v785 = vrot.slane %v783, 7
      %v786 = vshll.u32 %v583, 16
      %v788 = vor.u32 %v785, %v786
      %v789 = vrot.slane %v785, 4
      %v791 = vshrl.u32 %v584, 16
      %v793 = vrot.slane %v791, 7
      %v794 = vshll.u32 %v584, 16
      %v796 = vor.u32 %v793, %v794
      %v797 = vsel %vm594, %v789, %v796
      %v798 = vrot.slane %v793, 4
      %v800 = vshrl.u32 %v585, 16
      %v802 = vrot.slane %v800, 7
      %v803 = vshll.u32 %v585, 16
      %v805 = vor.u32 %v802, %v803
      %v806 = vrot.slane %v802, 4
      %v808 = vshrl.u32 %v586, 16
      %v810 = vrot.slane %v808, 7
      %v811 = vshll.u32 %v586, 16
      %v813 = vor.u32 %v810, %v811
      %v814 = vsel %vm594, %v806, %v813
      %v815 = vrot.slane %v810, 4
      %v817 = vshrl.u32 %v587, 16
      %v819 = vrot.slane %v817, 7
      %v820 = vshll.u32 %v587, 16
      %v822 = vor.u32 %v819, %v820
      %v823 = vrot.slane %v819, 4
      %v825 = vshrl.u32 %v588, 16
      %v827 = vrot.slane %v825, 7
      %v828 = vshll.u32 %v588, 16
      %v830 = vor.u32 %v827, %v828
      %v831 = vsel %vm594, %v823, %v830
      %v832 = vrot.slane %v827, 4
      %v834 = vshrl.u32 %v589, 16
      %v836 = vrot.slane %v834, 7
      %v837 = vshll.u32 %v589, 16
      %v839 = vor.u32 %v836, %v837
      %v840 = vrot.slane %v836, 4
      %v842 = vshrl.u32 %v590, 16
      %v844 = vrot.slane %v842, 7
      %v845 = vshll.u32 %v590, 16
      %v847 = vor.u32 %v844, %v845
      %v848 = vsel %vm594, %v840, %v847
      %v849 = vrot.slane %v844, 4
      %v851 = vshrl.u32 %v591, 16
      %v853 = vrot.slane %v851, 7
      %v854 = vshll.u32 %v591, 16
      %v856 = vor.u32 %v853, %v854
      %v857 = vrot.slane %v853, 4
      %v859 = vshrl.u32 %v592, 16
      %v861 = vrot.slane %v859, 7
      %v862 = vshll.u32 %v592, 16
      %v864 = vor.u32 %v861, %v862
      %v865 = vsel %vm594, %v857, %v864
      %v866 = vrot.slane %v861, 4
      %s915 = scalar_lea.vmem [#allocation2], 12
      %vm916 = vcmask 257024
      %vm917 = vmand %vm916, %vm505
      %v918 = vld [vmem:[%s915] sm:$0xf]
      %v919 = vsel %vm917, %v601, %v918
      %920 = vst [vmem:[%s915] sm:$0xf] %v919
      %vm921 = vcmask 257024
      %922 = vst.msk [vmem:[%s915 + $0x4] sm:$0xf] %vm921, %v610
      %v923 = vld [vmem:[%s915 + $0x8] sm:$0x1]
      %v924 = vsel %vm450, %v611, %v923
      %925 = vst [vmem:[%s915 + $0x8] sm:$0x1] %v924
      %v926 = vld [vmem:[%s915 + $0xc] sm:$0xf]
      %v927 = vsel %vm917, %v618, %v926
      %928 = vst [vmem:[%s915 + $0xc] sm:$0xf] %v927
      %929 = vst.msk [vmem:[%s915 + $0x10] sm:$0xf] %vm921, %v627
      %v930 = vld [vmem:[%s915 + $0x14] sm:$0x1]
      %v931 = vsel %vm450, %v628, %v930
      %932 = vst [vmem:[%s915 + $0x14] sm:$0x1] %v931
      %v933 = vld [vmem:[%s915 + $0x18] sm:$0xf]
      %v934 = vsel %vm917, %v635, %v933
      %935 = vst [vmem:[%s915 + $0x18] sm:$0xf] %v934
      %936 = vst.msk [vmem:[%s915 + $0x1c] sm:$0xf] %vm921, %v644
      %v937 = vld [vmem:[%s915 + $0x20] sm:$0x1]
      %v938 = vsel %vm450, %v645, %v937
      %939 = vst [vmem:[%s915 + $0x20] sm:$0x1] %v938
      %v940 = vld [vmem:[%s915 + $0x24] sm:$0xf]
      %v941 = vsel %vm917, %v652, %v940
      %942 = vst [vmem:[%s915 + $0x24] sm:$0xf] %v941
      %943 = vst.msk [vmem:[%s915 + $0x28] sm:$0xf] %vm921, %v661
      %v944 = vld [vmem:[%s915 + $0x2c] sm:$0x1]
      %v945 = vsel %vm450, %v662, %v944
      %946 = vst [vmem:[%s915 + $0x2c] sm:$0x1] %v945
      %v947 = vld [vmem:[%s915 + $0x30] sm:$0xf]
      %v948 = vsel %vm917, %v669, %v947
      %949 = vst [vmem:[%s915 + $0x30] sm:$0xf] %v948
      %950 = vst.msk [vmem:[%s915 + $0x34] sm:$0xf] %vm921, %v678
      %v951 = vld [vmem:[%s915 + $0x38] sm:$0x1]
      %v952 = vsel %vm450, %v679, %v951
      %953 = vst [vmem:[%s915 + $0x38] sm:$0x1] %v952
      %v954 = vld [vmem:[%s915 + $0x3c] sm:$0xf]
      %v955 = vsel %vm917, %v686, %v954
      %956 = vst [vmem:[%s915 + $0x3c] sm:$0xf] %v955
      %957 = vst.msk [vmem:[%s915 + $0x40] sm:$0xf] %vm921, %v695
      %v958 = vld [vmem:[%s915 + $0x44] sm:$0x1]
      %v959 = vsel %vm450, %v696, %v958
      %960 = vst [vmem:[%s915 + $0x44] sm:$0x1] %v959
      %v961 = vld [vmem:[%s915 + $0x48] sm:$0xf]
      %v962 = vsel %vm917, %v703, %v961
      %963 = vst [vmem:[%s915 + $0x48] sm:$0xf] %v962
      %964 = vst.msk [vmem:[%s915 + $0x4c] sm:$0xf] %vm921, %v712
      %v965 = vld [vmem:[%s915 + $0x50] sm:$0x1]
      %v966 = vsel %vm450, %v713, %v965
      %967 = vst [vmem:[%s915 + $0x50] sm:$0x1] %v966
      %v968 = vld [vmem:[%s915 + $0x54] sm:$0xf]
      %v969 = vsel %vm917, %v720, %v968
      %970 = vst [vmem:[%s915 + $0x54] sm:$0xf] %v969
      %971 = vst.msk [vmem:[%s915 + $0x58] sm:$0xf] %vm921, %v729
      %v972 = vld [vmem:[%s915 + $0x5c] sm:$0x1]
      %v973 = vsel %vm450, %v730, %v972
      %974 = vst [vmem:[%s915 + $0x5c] sm:$0x1] %v973
      %v975 = vld [vmem:[%s915 + $0x60] sm:$0xf]
      %v976 = vsel %vm917, %v737, %v975
      %977 = vst [vmem:[%s915 + $0x60] sm:$0xf] %v976
      %978 = vst.msk [vmem:[%s915 + $0x64] sm:$0xf] %vm921, %v746
      %v979 = vld [vmem:[%s915 + $0x68] sm:$0x1]
      %v980 = vsel %vm450, %v747, %v979
      %981 = vst [vmem:[%s915 + $0x68] sm:$0x1] %v980
      %v982 = vld [vmem:[%s915 + $0x6c] sm:$0xf]
      %v983 = vsel %vm917, %v754, %v982
      %984 = vst [vmem:[%s915 + $0x6c] sm:$0xf] %v983
      %985 = vst.msk [vmem:[%s915 + $0x70] sm:$0xf] %vm921, %v763
      %v986 = vld [vmem:[%s915 + $0x74] sm:$0x1]
      %v987 = vsel %vm450, %v764, %v986
      %988 = vst [vmem:[%s915 + $0x74] sm:$0x1] %v987
      %v989 = vld [vmem:[%s915 + $0x78] sm:$0xf]
      %v990 = vsel %vm917, %v771, %v989
      %991 = vst [vmem:[%s915 + $0x78] sm:$0xf] %v990
      %992 = vst.msk [vmem:[%s915 + $0x7c] sm:$0xf] %vm921, %v780
      %v993 = vld [vmem:[%s915 + $0x80] sm:$0x1]
      %v994 = vsel %vm450, %v781, %v993
      %995 = vst [vmem:[%s915 + $0x80] sm:$0x1] %v994
      %v996 = vld [vmem:[%s915 + $0x84] sm:$0xf]
      %v997 = vsel %vm917, %v788, %v996
      %998 = vst [vmem:[%s915 + $0x84] sm:$0xf] %v997
      %999 = vst.msk [vmem:[%s915 + $0x88] sm:$0xf] %vm921, %v797
      %v1000 = vld [vmem:[%s915 + $0x8c] sm:$0x1]
      %v1001 = vsel %vm450, %v798, %v1000
      %1002 = vst [vmem:[%s915 + $0x8c] sm:$0x1] %v1001
      %v1003 = vld [vmem:[%s915 + $0x90] sm:$0xf]
      %v1004 = vsel %vm917, %v805, %v1003
      %1005 = vst [vmem:[%s915 + $0x90] sm:$0xf] %v1004
      %1006 = vst.msk [vmem:[%s915 + $0x94] sm:$0xf] %vm921, %v814
      %v1007 = vld [vmem:[%s915 + $0x98] sm:$0x1]
      %v1008 = vsel %vm450, %v815, %v1007
      %1009 = vst [vmem:[%s915 + $0x98] sm:$0x1] %v1008
      %v1010 = vld [vmem:[%s915 + $0x9c] sm:$0xf]
      %v1011 = vsel %vm917, %v822, %v1010
      %1012 = vst [vmem:[%s915 + $0x9c] sm:$0xf] %v1011
      %1013 = vst.msk [vmem:[%s915 + $0xa0] sm:$0xf] %vm921, %v831
      %v1014 = vld [vmem:[%s915 + $0xa4] sm:$0x1]
      %v1015 = vsel %vm450, %v832, %v1014
      %1016 = vst [vmem:[%s915 + $0xa4] sm:$0x1] %v1015
      %v1017 = vld [vmem:[%s915 + $0xa8] sm:$0xf]
      %v1018 = vsel %vm917, %v839, %v1017
      %1019 = vst [vmem:[%s915 + $0xa8] sm:$0xf] %v1018
      %1020 = vst.msk [vmem:[%s915 + $0xac] sm:$0xf] %vm921, %v848
      %v1021 = vld [vmem:[%s915 + $0xb0] sm:$0x1]
      %v1022 = vsel %vm450, %v849, %v1021
      %1023 = vst [vmem:[%s915 + $0xb0] sm:$0x1] %v1022
      %v1024 = vld [vmem:[%s915 + $0xb4] sm:$0xf]
      %v1025 = vsel %vm917, %v856, %v1024
      %1026 = vst [vmem:[%s915 + $0xb4] sm:$0xf] %v1025
      %1027 = vst.msk [vmem:[%s915 + $0xb8] sm:$0xf] %vm921, %v865
      %v1028 = vld [vmem:[%s915 + $0xbc] sm:$0x1]
      %v1029 = vsel %vm450, %v866, %v1028
      %1030 = vst [vmem:[%s915 + $0xbc] sm:$0x1] %v1029
      %p1031 = scmp.gt.s32.totalorder %s23, 0
      // Predicated region
      $region49: #{analysis_side_net.5} parent=47 // pred_check
        %p1032 = pneg %p1031
      $region50: #{analysis_side_net.5} parent=47 // pred_check_branch
        %1034 = sbr.rel (%p1032) target = $region52
      $region51: #{analysis_side_net.5} parent=47 // pred_region
        %v1035 = vld [vmem:[%s414] sm:$0xf]
        %v1036 = vld [vmem:[%s414 + $0x4] sm:$0xf]
        %v1038 = vshrl.u32 %v1035, 16
        %v1040 = vrot.slane %v1038, 7
        %v1041 = vshll.u32 %v1035, 16
        %v1043 = vor.u32 %v1040, %v1041
        %v1044 = vrot.slane %v1040, 4
        %v1046 = vshrl.u32 %v1036, 16
        %v1048 = vrot.slane %v1046, 7
        %v1049 = vshll.u32 %v1036, 16
        %v1051 = vor.u32 %v1048, %v1049
        %v1052 = vsel %vm594, %v1044, %v1051
        %v1053 = vrot.slane %v1048, 4
        %v1057 = vld [vmem:[#allocation2] sm:$0xf]
        %v1058 = vsel %vm917, %v1043, %v1057
        %1059 = vst [vmem:[#allocation2] sm:$0xf] %v1058
        %1060 = vst.msk [vmem:[#allocation2 + $0x4] sm:$0xf] %vm921, %v1052
        %v1061 = vld [vmem:[#allocation2 + $0x8] sm:$0x1]
        %v1062 = vsel %vm450, %v1053, %v1061
        %1063 = vst [vmem:[#allocation2 + $0x8] sm:$0x1] %v1062
      $region52: #{analysis_side_net.5} parent=47 // pred_fallthru
        _
      %p1064 = scmp.eq.s32.totalorder %s23, 0
      // Predicated region
      $region53: #{analysis_side_net.5} parent=47 // pred_check
        %p1065 = pneg %p1064
      $region54: #{analysis_side_net.5} parent=47 // pred_check_branch
        %1067 = sbr.rel (%p1065) target = $region56
      $region55: #{analysis_side_net.5} parent=47 // pred_region
        %v1068 = vld [vmem:[#allocation2] sm:$0xf]
        %v1069 = vsel %vm917, 0, %v1068
        %1070 = vst [vmem:[#allocation2] sm:$0xf] %v1069
        %1071 = vst.msk [vmem:[#allocation2 + $0x4] sm:$0xf] %vm921, 0
        %v1072 = vld [vmem:[#allocation2 + $0x8] sm:$0x1]
        %v1073 = vsel %vm450, 0, %v1072
        %1074 = vst [vmem:[#allocation2 + $0x8] sm:$0x1] %v1073
      $region56: #{analysis_side_net.5} parent=47 // pred_fallthru
        _
      %p1075 = scmp.lt.s32.totalorder %s23, 0
      // Predicated region
      $region57: #{analysis_side_net.5} parent=47 // pred_check
        %p1076 = pneg %p1075
      $region58: #{analysis_side_net.5} parent=47 // pred_check_branch
        %1078 = sbr.rel (%p1076) target = $region60
      $region59: #{analysis_side_net.5} parent=47 // pred_region
        %v1079 = vld [vmem:[%s431] sm:$0xf]
        %v1080 = vld [vmem:[%s431 + $0x4] sm:$0xf]
        %v1082 = vshrl.u32 %v1079, 16
        %v1084 = vrot.slane %v1082, 7
        %v1085 = vshll.u32 %v1079, 16
        %v1087 = vor.u32 %v1084, %v1085
        %v1088 = vrot.slane %v1084, 4
        %v1090 = vshrl.u32 %v1080, 16
        %v1092 = vrot.slane %v1090, 7
        %v1093 = vshll.u32 %v1080, 16
        %v1095 = vor.u32 %v1092, %v1093
        %v1096 = vsel %vm594, %v1088, %v1095
        %v1097 = vrot.slane %v1092, 4
        %s1101 = scalar_lea.vmem [#allocation2], 204
        %v1102 = vld [vmem:[%s1101] sm:$0xf]
        %v1103 = vsel %vm917, %v1087, %v1102
        %1104 = vst [vmem:[%s1101] sm:$0xf] %v1103
        %1105 = vst.msk [vmem:[%s1101 + $0x4] sm:$0xf] %vm921, %v1096
        %v1106 = vld [vmem:[%s1101 + $0x8] sm:$0x1]
        %v1107 = vsel %vm450, %v1097, %v1106
        %1108 = vst [vmem:[%s1101 + $0x8] sm:$0x1] %v1107
      $region60: #{analysis_side_net.5} parent=47 // pred_fallthru
        _
      // Predicated region
      $region61: #{analysis_side_net.5} parent=47 // pred_check
        %p1109 = pneg %p1064
      $region62: #{analysis_side_net.5} parent=47 // pred_check_branch
        %1111 = sbr.rel (%p1109) target = $region64
      $region63: #{analysis_side_net.5} parent=47 // pred_region
        %s1112 = scalar_lea.vmem [#allocation2], 204
        %v1113 = vld [vmem:[%s1112] sm:$0xf]
        %v1114 = vsel %vm917, 0, %v1113
        %1115 = vst [vmem:[%s1112] sm:$0xf] %v1114
        %1116 = vst.msk [vmem:[%s1112 + $0x4] sm:$0xf] %vm921, 0
        %v1117 = vld [vmem:[%s1112 + $0x8] sm:$0x1]
        %v1118 = vsel %vm450, 0, %v1117
        %1119 = vst [vmem:[%s1112 + $0x8] sm:$0x1] %v1118
      $region64: #{analysis_side_net.5} parent=47 // pred_fallthru
        _
      %v1120 = vld [vmem:[#allocation2] sm:$0xf]
      %v1121 = vld [vmem:[#allocation2 + $0x4] sm:$0xf]
      %v1122 = vld [vmem:[#allocation2 + $0xc] sm:$0xf]
      %v1123 = vld [vmem:[#allocation2 + $0x10] sm:$0xf]
      %v1124 = vld [vmem:[#allocation2 + $0x18] sm:$0xf]
      %v1125 = vld [vmem:[#allocation2 + $0x1c] sm:$0xf]
      %v1126 = vld [vmem:[#allocation2 + $0x24] sm:$0xf]
      %v1127 = vld [vmem:[#allocation2 + $0x28] sm:$0xf]
      %v1128 = vld [vmem:[#allocation2 + $0x30] sm:$0xf]
      %v1129 = vld [vmem:[#allocation2 + $0x34] sm:$0xf]
      %v1130 = vld [vmem:[#allocation2 + $0x3c] sm:$0xf]
      %v1131 = vld [vmem:[#allocation2 + $0x40] sm:$0xf]
      %v1132 = vld [vmem:[#allocation2 + $0x48] sm:$0xf]
      %v1133 = vld [vmem:[#allocation2 + $0x4c] sm:$0xf]
      %v1134 = vld [vmem:[#allocation2 + $0x54] sm:$0xf]
      %v1135 = vld [vmem:[#allocation2 + $0x58] sm:$0xf]
      %v1136 = vld [vmem:[#allocation2 + $0x60] sm:$0xf]
      %v1137 = vld [vmem:[#allocation2 + $0x64] sm:$0xf]
      %v1138 = vld [vmem:[#allocation2 + $0x6c] sm:$0xf]
      %v1139 = vld [vmem:[#allocation2 + $0x70] sm:$0xf]
      %v1140 = vld [vmem:[#allocation2 + $0x78] sm:$0xf]
      %v1141 = vld [vmem:[#allocation2 + $0x7c] sm:$0xf]
      %v1142 = vld [vmem:[#allocation2 + $0x84] sm:$0xf]
      %v1143 = vld [vmem:[#allocation2 + $0x88] sm:$0xf]
      %v1144 = vld [vmem:[#allocation2 + $0x90] sm:$0xf]
      %v1145 = vld [vmem:[#allocation2 + $0x94] sm:$0xf]
      %v1146 = vld [vmem:[#allocation2 + $0x9c] sm:$0xf]
      %v1147 = vld [vmem:[#allocation2 + $0xa0] sm:$0xf]
      %v1148 = vld [vmem:[#allocation2 + $0xa8] sm:$0xf]
      %v1149 = vld [vmem:[#allocation2 + $0xac] sm:$0xf]
      %v1150 = vld [vmem:[#allocation2 + $0xb4] sm:$0xf]
      %v1151 = vld [vmem:[#allocation2 + $0xb8] sm:$0xf]
      %1152 = vst.msk [vmem:[#allocation3] sm:$0xf] %vm921, %v1120
      %1153 = vst.msk [vmem:[#allocation3 + $0xc] sm:$0xf] %vm921, %v1121
      %1154 = vst.msk [vmem:[#allocation3 + $0x18] sm:$0xf] %vm921, %v1122
      %1155 = vst.msk [vmem:[#allocation3 + $0x24] sm:$0xf] %vm921, %v1123
      %1156 = vst.msk [vmem:[#allocation3 + $0x30] sm:$0xf] %vm921, %v1124
      %1157 = vst.msk [vmem:[#allocation3 + $0x3c] sm:$0xf] %vm921, %v1125
      %1158 = vst.msk [vmem:[#allocation3 + $0x48] sm:$0xf] %vm921, %v1126
      %1159 = vst.msk [vmem:[#allocation3 + $0x54] sm:$0xf] %vm921, %v1127
      %1160 = vst.msk [vmem:[#allocation3 + $0x60] sm:$0xf] %vm921, %v1128
      %1161 = vst.msk [vmem:[#allocation3 + $0x6c] sm:$0xf] %vm921, %v1129
      %1162 = vst.msk [vmem:[#allocation3 + $0x78] sm:$0xf] %vm921, %v1130
      %1163 = vst.msk [vmem:[#allocation3 + $0x84] sm:$0xf] %vm921, %v1131
      %1164 = vst.msk [vmem:[#allocation3 + $0x90] sm:$0xf] %vm921, %v1132
      %1165 = vst.msk [vmem:[#allocation3 + $0x9c] sm:$0xf] %vm921, %v1133
      %1166 = vst.msk [vmem:[#allocation3 + $0xa8] sm:$0xf] %vm921, %v1134
      %1167 = vst.msk [vmem:[#allocation3 + $0xb4] sm:$0xf] %vm921, %v1135
      %1168 = vst.msk [vmem:[#allocation3 + $0xc0] sm:$0xf] %vm921, %v1136
      %1169 = vst.msk [vmem:[#allocation3 + $0xcc] sm:$0xf] %vm921, %v1137
      %1170 = vst.msk [vmem:[#allocation3 + $0xd8] sm:$0xf] %vm921, %v1138
      %1171 = vst.msk [vmem:[#allocation3 + $0xe4] sm:$0xf] %vm921, %v1139
      %1172 = vst.msk [vmem:[#allocation3 + $0xf0] sm:$0xf] %vm921, %v1140
      %1173 = vst.msk [vmem:[#allocation3 + $0xfc] sm:$0xf] %vm921, %v1141
      %1174 = vst.msk [vmem:[#allocation3 + $0x108] sm:$0xf] %vm921, %v1142
      %1175 = vst.msk [vmem:[#allocation3 + $0x114] sm:$0xf] %vm921, %v1143
      %1176 = vst.msk [vmem:[#allocation3 + $0x120] sm:$0xf] %vm921, %v1144
      %1177 = vst.msk [vmem:[#allocation3 + $0x12c] sm:$0xf] %vm921, %v1145
      %1178 = vst.msk [vmem:[#allocation3 + $0x138] sm:$0xf] %vm921, %v1146
      %1179 = vst.msk [vmem:[#allocation3 + $0x144] sm:$0xf] %vm921, %v1147
      %1180 = vst.msk [vmem:[#allocation3 + $0x150] sm:$0xf] %vm921, %v1148
      %1181 = vst.msk [vmem:[#allocation3 + $0x15c] sm:$0xf] %vm921, %v1149
      %1182 = vst.msk [vmem:[#allocation3 + $0x168] sm:$0xf] %vm921, %v1150
      %1183 = vst.msk [vmem:[#allocation3 + $0x174] sm:$0xf] %vm921, %v1151
      %v1184 = vld [vmem:[#allocation2] sm:$0xf]
      %v1185 = vld [vmem:[#allocation2 + $0x4] sm:$0xf]
      %v1186 = vld [vmem:[#allocation2 + $0x8] sm:$0x1]
      %v1187 = vld [vmem:[#allocation2 + $0xc] sm:$0xf]
      %v1188 = vld [vmem:[#allocation2 + $0x10] sm:$0xf]
      %v1189 = vld [vmem:[#allocation2 + $0x14] sm:$0x1]
      %v1190 = vld [vmem:[#allocation2 + $0x18] sm:$0xf]
      %v1191 = vld [vmem:[#allocation2 + $0x1c] sm:$0xf]
      %v1192 = vld [vmem:[#allocation2 + $0x20] sm:$0x1]
      %v1193 = vld [vmem:[#allocation2 + $0x24] sm:$0xf]
      %v1194 = vld [vmem:[#allocation2 + $0x28] sm:$0xf]
      %v1195 = vld [vmem:[#allocation2 + $0x2c] sm:$0x1]
      %v1196 = vld [vmem:[#allocation2 + $0x30] sm:$0xf]
      %v1197 = vld [vmem:[#allocation2 + $0x34] sm:$0xf]
      %v1198 = vld [vmem:[#allocation2 + $0x38] sm:$0x1]
      %v1199 = vld [vmem:[#allocation2 + $0x3c] sm:$0xf]
      %v1200 = vld [vmem:[#allocation2 + $0x40] sm:$0xf]
      %v1201 = vld [vmem:[#allocation2 + $0x44] sm:$0x1]
      %v1202 = vld [vmem:[#allocation2 + $0x48] sm:$0xf]
      %v1203 = vld [vmem:[#allocation2 + $0x4c] sm:$0xf]
      %v1204 = vld [vmem:[#allocation2 + $0x50] sm:$0x1]
      %v1205 = vld [vmem:[#allocation2 + $0x54] sm:$0xf]
      %v1206 = vld [vmem:[#allocation2 + $0x58] sm:$0xf]
      %v1207 = vld [vmem:[#allocation2 + $0x5c] sm:$0x1]
      %v1208 = vld [vmem:[#allocation2 + $0x60] sm:$0xf]
      %v1209 = vld [vmem:[#allocation2 + $0x64] sm:$0xf]
      %v1210 = vld [vmem:[#allocation2 + $0x68] sm:$0x1]
      %v1211 = vld [vmem:[#allocation2 + $0x6c] sm:$0xf]
      %v1212 = vld [vmem:[#allocation2 + $0x70] sm:$0xf]
      %v1213 = vld [vmem:[#allocation2 + $0x74] sm:$0x1]
      %v1214 = vld [vmem:[#allocation2 + $0x78] sm:$0xf]
      %v1215 = vld [vmem:[#allocation2 + $0x7c] sm:$0xf]
      %v1216 = vld [vmem:[#allocation2 + $0x80] sm:$0x1]
      %v1217 = vld [vmem:[#allocation2 + $0x84] sm:$0xf]
      %v1218 = vld [vmem:[#allocation2 + $0x88] sm:$0xf]
      %v1219 = vld [vmem:[#allocation2 + $0x8c] sm:$0x1]
      %v1220 = vld [vmem:[#allocation2 + $0x90] sm:$0xf]
      %v1221 = vld [vmem:[#allocation2 + $0x94] sm:$0xf]
      %v1222 = vld [vmem:[#allocation2 + $0x98] sm:$0x1]
      %v1223 = vld [vmem:[#allocation2 + $0x9c] sm:$0xf]
      %v1224 = vld [vmem:[#allocation2 + $0xa0] sm:$0xf]
      %v1225 = vld [vmem:[#allocation2 + $0xa4] sm:$0x1]
      %v1226 = vld [vmem:[#allocation2 + $0xa8] sm:$0xf]
      %v1227 = vld [vmem:[#allocation2 + $0xac] sm:$0xf]
      %v1228 = vld [vmem:[#allocation2 + $0xb0] sm:$0x1]
      %v1229 = vld [vmem:[#allocation2 + $0xb4] sm:$0xf]
      %v1230 = vld [vmem:[#allocation2 + $0xb8] sm:$0xf]
      %v1231 = vld [vmem:[#allocation2 + $0xbc] sm:$0x1]
      %vm1232 = vsmask.f32 3328
      %vm1233 = vsmask.f32 7440
      %vm1234 = vmor %vm1232, %vm1233
      %v1236 = vshrl.u32 %v1184, 16
      %v1238 = vrot.slane %v1236, 4
      %v1239 = vshll.u32 %v1184, 16
      %v1241 = vrot.slane %v1239, 5
      %v1242 = vor.u32 %v1238, %v1241
      %v1243 = vrot.slane %v1242, 4
      %v1245 = vshll.u32 %v1185, 16
      %v1247 = vrot.slane %v1245, 5
      %v1248 = vsel %vm1234, %v1243, %v1247
      %v1249 = vshrl.u32 %v1185, 16
      %v1251 = vrot.slane %v1249, 4
      %v1252 = vor.u32 %v1251, %v1247
      %v1253 = vrot.slane %v1252, 4
      %v1255 = vshll.u32 %v1186, 16
      %v1257 = vrot.slane %v1255, 5
      %v1258 = vsel %vm1234, %v1253, %v1257
      %v1260 = vshrl.u32 %v1187, 16
      %v1262 = vrot.slane %v1260, 4
      %v1263 = vshll.u32 %v1187, 16
      %v1265 = vrot.slane %v1263, 5
      %v1266 = vor.u32 %v1262, %v1265
      %v1267 = vrot.slane %v1266, 4
      %v1269 = vshll.u32 %v1188, 16
      %v1271 = vrot.slane %v1269, 5
      %v1272 = vsel %vm1234, %v1267, %v1271
      %v1273 = vshrl.u32 %v1188, 16
      %v1275 = vrot.slane %v1273, 4
      %v1276 = vor.u32 %v1275, %v1271
      %v1277 = vrot.slane %v1276, 4
      %v1279 = vshll.u32 %v1189, 16
      %v1281 = vrot.slane %v1279, 5
      %v1282 = vsel %vm1234, %v1277, %v1281
      %v1284 = vshrl.u32 %v1190, 16
      %v1286 = vrot.slane %v1284, 4
      %v1287 = vshll.u32 %v1190, 16
      %v1289 = vrot.slane %v1287, 5
      %v1290 = vor.u32 %v1286, %v1289
      %v1291 = vrot.slane %v1290, 4
      %v1293 = vshll.u32 %v1191, 16
      %v1295 = vrot.slane %v1293, 5
      %v1296 = vsel %vm1234, %v1291, %v1295
      %v1297 = vshrl.u32 %v1191, 16
      %v1299 = vrot.slane %v1297, 4
      %v1300 = vor.u32 %v1299, %v1295
      %v1301 = vrot.slane %v1300, 4
      %v1303 = vshll.u32 %v1192, 16
      %v1305 = vrot.slane %v1303, 5
      %v1306 = vsel %vm1234, %v1301, %v1305
      %v1308 = vshrl.u32 %v1193, 16
      %v1310 = vrot.slane %v1308, 4
      %v1311 = vshll.u32 %v1193, 16
      %v1313 = vrot.slane %v1311, 5
      %v1314 = vor.u32 %v1310, %v1313
      %v1315 = vrot.slane %v1314, 4
      %v1317 = vshll.u32 %v1194, 16
      %v1319 = vrot.slane %v1317, 5
      %v1320 = vsel %vm1234, %v1315, %v1319
      %v1321 = vshrl.u32 %v1194, 16
      %v1323 = vrot.slane %v1321, 4
      %v1324 = vor.u32 %v1323, %v1319
      %v1325 = vrot.slane %v1324, 4
      %v1327 = vshll.u32 %v1195, 16
      %v1329 = vrot.slane %v1327, 5
      %v1330 = vsel %vm1234, %v1325, %v1329
      %v1332 = vshrl.u32 %v1196, 16
      %v1334 = vrot.slane %v1332, 4
      %v1335 = vshll.u32 %v1196, 16
      %v1337 = vrot.slane %v1335, 5
      %v1338 = vor.u32 %v1334, %v1337
      %v1339 = vrot.slane %v1338, 4
      %v1341 = vshll.u32 %v1197, 16
      %v1343 = vrot.slane %v1341, 5
      %v1344 = vsel %vm1234, %v1339, %v1343
      %v1345 = vshrl.u32 %v1197, 16
      %v1347 = vrot.slane %v1345, 4
      %v1348 = vor.u32 %v1347, %v1343
      %v1349 = vrot.slane %v1348, 4
      %v1351 = vshll.u32 %v1198, 16
      %v1353 = vrot.slane %v1351, 5
      %v1354 = vsel %vm1234, %v1349, %v1353
      %v1356 = vshrl.u32 %v1199, 16
      %v1358 = vrot.slane %v1356, 4
      %v1359 = vshll.u32 %v1199, 16
      %v1361 = vrot.slane %v1359, 5
      %v1362 = vor.u32 %v1358, %v1361
      %v1363 = vrot.slane %v1362, 4
      %v1365 = vshll.u32 %v1200, 16
      %v1367 = vrot.slane %v1365, 5
      %v1368 = vsel %vm1234, %v1363, %v1367
      %v1369 = vshrl.u32 %v1200, 16
      %v1371 = vrot.slane %v1369, 4
      %v1372 = vor.u32 %v1371, %v1367
      %v1373 = vrot.slane %v1372, 4
      %v1375 = vshll.u32 %v1201, 16
      %v1377 = vrot.slane %v1375, 5
      %v1378 = vsel %vm1234, %v1373, %v1377
      %v1380 = vshrl.u32 %v1202, 16
      %v1382 = vrot.slane %v1380, 4
      %v1383 = vshll.u32 %v1202, 16
      %v1385 = vrot.slane %v1383, 5
      %v1386 = vor.u32 %v1382, %v1385
      %v1387 = vrot.slane %v1386, 4
      %v1389 = vshll.u32 %v1203, 16
      %v1391 = vrot.slane %v1389, 5
      %v1392 = vsel %vm1234, %v1387, %v1391
      %v1393 = vshrl.u32 %v1203, 16
      %v1395 = vrot.slane %v1393, 4
      %v1396 = vor.u32 %v1395, %v1391
      %v1397 = vrot.slane %v1396, 4
      %v1399 = vshll.u32 %v1204, 16
      %v1401 = vrot.slane %v1399, 5
      %v1402 = vsel %vm1234, %v1397, %v1401
      %v1404 = vshrl.u32 %v1205, 16
      %v1406 = vrot.slane %v1404, 4
      %v1407 = vshll.u32 %v1205, 16
      %v1409 = vrot.slane %v1407, 5
      %v1410 = vor.u32 %v1406, %v1409
      %v1411 = vrot.slane %v1410, 4
      %v1413 = vshll.u32 %v1206, 16
      %v1415 = vrot.slane %v1413, 5
      %v1416 = vsel %vm1234, %v1411, %v1415
      %v1417 = vshrl.u32 %v1206, 16
      %v1419 = vrot.slane %v1417, 4
      %v1420 = vor.u32 %v1419, %v1415
      %v1421 = vrot.slane %v1420, 4
      %v1423 = vshll.u32 %v1207, 16
      %v1425 = vrot.slane %v1423, 5
      %v1426 = vsel %vm1234, %v1421, %v1425
      %v1428 = vshrl.u32 %v1208, 16
      %v1430 = vrot.slane %v1428, 4
      %v1431 = vshll.u32 %v1208, 16
      %v1433 = vrot.slane %v1431, 5
      %v1434 = vor.u32 %v1430, %v1433
      %v1435 = vrot.slane %v1434, 4
      %v1437 = vshll.u32 %v1209, 16
      %v1439 = vrot.slane %v1437, 5
      %v1440 = vsel %vm1234, %v1435, %v1439
      %v1441 = vshrl.u32 %v1209, 16
      %v1443 = vrot.slane %v1441, 4
      %v1444 = vor.u32 %v1443, %v1439
      %v1445 = vrot.slane %v1444, 4
      %v1447 = vshll.u32 %v1210, 16
      %v1449 = vrot.slane %v1447, 5
      %v1450 = vsel %vm1234, %v1445, %v1449
      %v1452 = vshrl.u32 %v1211, 16
      %v1454 = vrot.slane %v1452, 4
      %v1455 = vshll.u32 %v1211, 16
      %v1457 = vrot.slane %v1455, 5
      %v1458 = vor.u32 %v1454, %v1457
      %v1459 = vrot.slane %v1458, 4
      %v1461 = vshll.u32 %v1212, 16
      %v1463 = vrot.slane %v1461, 5
      %v1464 = vsel %vm1234, %v1459, %v1463
      %v1465 = vshrl.u32 %v1212, 16
      %v1467 = vrot.slane %v1465, 4
      %v1468 = vor.u32 %v1467, %v1463
      %v1469 = vrot.slane %v1468, 4
      %v1471 = vshll.u32 %v1213, 16
      %v1473 = vrot.slane %v1471, 5
      %v1474 = vsel %vm1234, %v1469, %v1473
      %v1476 = vshrl.u32 %v1214, 16
      %v1478 = vrot.slane %v1476, 4
      %v1479 = vshll.u32 %v1214, 16
      %v1481 = vrot.slane %v1479, 5
      %v1482 = vor.u32 %v1478, %v1481
      %v1483 = vrot.slane %v1482, 4
      %v1485 = vshll.u32 %v1215, 16
      %v1487 = vrot.slane %v1485, 5
      %v1488 = vsel %vm1234, %v1483, %v1487
      %v1489 = vshrl.u32 %v1215, 16
      %v1491 = vrot.slane %v1489, 4
      %v1492 = vor.u32 %v1491, %v1487
      %v1493 = vrot.slane %v1492, 4
      %v1495 = vshll.u32 %v1216, 16
      %v1497 = vrot.slane %v1495, 5
      %v1498 = vsel %vm1234, %v1493, %v1497
      %v1500 = vshrl.u32 %v1217, 16
      %v1502 = vrot.slane %v1500, 4
      %v1503 = vshll.u32 %v1217, 16
      %v1505 = vrot.slane %v1503, 5
      %v1506 = vor.u32 %v1502, %v1505
      %v1507 = vrot.slane %v1506, 4
      %v1509 = vshll.u32 %v1218, 16
      %v1511 = vrot.slane %v1509, 5
      %v1512 = vsel %vm1234, %v1507, %v1511
      %v1513 = vshrl.u32 %v1218, 16
      %v1515 = vrot.slane %v1513, 4
      %v1516 = vor.u32 %v1515, %v1511
      %v1517 = vrot.slane %v1516, 4
      %v1519 = vshll.u32 %v1219, 16
      %v1521 = vrot.slane %v1519, 5
      %v1522 = vsel %vm1234, %v1517, %v1521
      %v1524 = vshrl.u32 %v1220, 16
      %v1526 = vrot.slane %v1524, 4
      %v1527 = vshll.u32 %v1220, 16
      %v1529 = vrot.slane %v1527, 5
      %v1530 = vor.u32 %v1526, %v1529
      %v1531 = vrot.slane %v1530, 4
      %v1533 = vshll.u32 %v1221, 16
      %v1535 = vrot.slane %v1533, 5
      %v1536 = vsel %vm1234, %v1531, %v1535
      %v1537 = vshrl.u32 %v1221, 16
      %v1539 = vrot.slane %v1537, 4
      %v1540 = vor.u32 %v1539, %v1535
      %v1541 = vrot.slane %v1540, 4
      %v1543 = vshll.u32 %v1222, 16
      %v1545 = vrot.slane %v1543, 5
      %v1546 = vsel %vm1234, %v1541, %v1545
      %v1548 = vshrl.u32 %v1223, 16
      %v1550 = vrot.slane %v1548, 4
      %v1551 = vshll.u32 %v1223, 16
      %v1553 = vrot.slane %v1551, 5
      %v1554 = vor.u32 %v1550, %v1553
      %v1555 = vrot.slane %v1554, 4
      %v1557 = vshll.u32 %v1224, 16
      %v1559 = vrot.slane %v1557, 5
      %v1560 = vsel %vm1234, %v1555, %v1559
      %v1561 = vshrl.u32 %v1224, 16
      %v1563 = vrot.slane %v1561, 4
      %v1564 = vor.u32 %v1563, %v1559
      %v1565 = vrot.slane %v1564, 4
      %v1567 = vshll.u32 %v1225, 16
      %v1569 = vrot.slane %v1567, 5
      %v1570 = vsel %vm1234, %v1565, %v1569
      %v1572 = vshrl.u32 %v1226, 16
      %v1574 = vrot.slane %v1572, 4
      %v1575 = vshll.u32 %v1226, 16
      %v1577 = vrot.slane %v1575, 5
      %v1578 = vor.u32 %v1574, %v1577
      %v1579 = vrot.slane %v1578, 4
      %v1581 = vshll.u32 %v1227, 16
      %v1583 = vrot.slane %v1581, 5
      %v1584 = vsel %vm1234, %v1579, %v1583
      %v1585 = vshrl.u32 %v1227, 16
      %v1587 = vrot.slane %v1585, 4
      %v1588 = vor.u32 %v1587, %v1583
      %v1589 = vrot.slane %v1588, 4
      %v1591 = vshll.u32 %v1228, 16
      %v1593 = vrot.slane %v1591, 5
      %v1594 = vsel %vm1234, %v1589, %v1593
      %v1596 = vshrl.u32 %v1229, 16
      %v1598 = vrot.slane %v1596, 4
      %v1599 = vshll.u32 %v1229, 16
      %v1601 = vrot.slane %v1599, 5
      %v1602 = vor.u32 %v1598, %v1601
      %v1603 = vrot.slane %v1602, 4
      %v1605 = vshll.u32 %v1230, 16
      %v1607 = vrot.slane %v1605, 5
      %v1608 = vsel %vm1234, %v1603, %v1607
      %v1609 = vshrl.u32 %v1230, 16
      %v1611 = vrot.slane %v1609, 4
      %v1612 = vor.u32 %v1611, %v1607
      %v1613 = vrot.slane %v1612, 4
      %v1615 = vshll.u32 %v1231, 16
      %v1617 = vrot.slane %v1615, 5
      %v1618 = vsel %vm1234, %v1613, %v1617
      %1619 = vrot.lane.b32.xlu0 %v1248, 32
      %v1620 = vpop.permute.xlu0 %1619
      %1621 = vrot.lane.b32.xlu0 %v1258, 32
      %v1622 = vpop.permute.xlu0 %1621
      %1623 = vrot.lane.b32.xlu0 %v1272, 32
      %v1624 = vpop.permute.xlu0 %1623
      %1625 = vrot.lane.b32.xlu0 %v1282, 32
      %v1626 = vpop.permute.xlu0 %1625
      %1627 = vrot.lane.b32.xlu0 %v1296, 32
      %v1628 = vpop.permute.xlu0 %1627
      %1629 = vrot.lane.b32.xlu0 %v1306, 32
      %v1630 = vpop.permute.xlu0 %1629
      %1631 = vrot.lane.b32.xlu0 %v1320, 32
      %v1632 = vpop.permute.xlu0 %1631
      %1633 = vrot.lane.b32.xlu0 %v1330, 32
      %v1634 = vpop.permute.xlu0 %1633
      %1635 = vrot.lane.b32.xlu0 %v1344, 32
      %v1636 = vpop.permute.xlu0 %1635
      %1637 = vrot.lane.b32.xlu0 %v1354, 32
      %v1638 = vpop.permute.xlu0 %1637
      %1639 = vrot.lane.b32.xlu0 %v1368, 32
      %v1640 = vpop.permute.xlu0 %1639
      %1641 = vrot.lane.b32.xlu0 %v1378, 32
      %v1642 = vpop.permute.xlu0 %1641
      %1643 = vrot.lane.b32.xlu0 %v1392, 32
      %v1644 = vpop.permute.xlu0 %1643
      %1645 = vrot.lane.b32.xlu0 %v1402, 32
      %v1646 = vpop.permute.xlu0 %1645
      %1647 = vrot.lane.b32.xlu0 %v1416, 32
      %v1648 = vpop.permute.xlu0 %1647
      %1649 = vrot.lane.b32.xlu0 %v1426, 32
      %v1650 = vpop.permute.xlu0 %1649
      %1651 = vrot.lane.b32.xlu0 %v1440, 32
      %v1652 = vpop.permute.xlu0 %1651
      %1653 = vrot.lane.b32.xlu0 %v1450, 32
      %v1654 = vpop.permute.xlu0 %1653
      %1655 = vrot.lane.b32.xlu0 %v1464, 32
      %v1656 = vpop.permute.xlu0 %1655
      %1657 = vrot.lane.b32.xlu0 %v1474, 32
      %v1658 = vpop.permute.xlu0 %1657
      %1659 = vrot.lane.b32.xlu0 %v1488, 32
      %v1660 = vpop.permute.xlu0 %1659
      %1661 = vrot.lane.b32.xlu0 %v1498, 32
      %v1662 = vpop.permute.xlu0 %1661
      %1663 = vrot.lane.b32.xlu0 %v1512, 32
      %v1664 = vpop.permute.xlu0 %1663
      %1665 = vrot.lane.b32.xlu0 %v1522, 32
      %v1666 = vpop.permute.xlu0 %1665
      %1667 = vrot.lane.b32.xlu0 %v1536, 32
      %v1668 = vpop.permute.xlu0 %1667
      %1669 = vrot.lane.b32.xlu0 %v1546, 32
      %v1670 = vpop.permute.xlu0 %1669
      %1671 = vrot.lane.b32.xlu0 %v1560, 32
      %v1672 = vpop.permute.xlu0 %1671
      %1673 = vrot.lane.b32.xlu0 %v1570, 32
      %v1674 = vpop.permute.xlu0 %1673
      %1675 = vrot.lane.b32.xlu0 %v1584, 32
      %v1676 = vpop.permute.xlu0 %1675
      %1677 = vrot.lane.b32.xlu0 %v1594, 32
      %v1678 = vpop.permute.xlu0 %1677
      %1679 = vrot.lane.b32.xlu0 %v1608, 32
      %v1680 = vpop.permute.xlu0 %1679
      %1681 = vrot.lane.b32.xlu0 %v1618, 32
      %v1682 = vpop.permute.xlu0 %1681
      %vm1715 = vcmask 519424
      %1716 = vst.msk [vmem:[#allocation3] sm:$0xf] %vm1715, %v1620
      %1717 = vst.msk [vmem:[#allocation3 + $0xc] sm:$0xf] %vm1715, %v1622
      %1718 = vst.msk [vmem:[#allocation3 + $0x18] sm:$0xf] %vm1715, %v1624
      %1719 = vst.msk [vmem:[#allocation3 + $0x24] sm:$0xf] %vm1715, %v1626
      %1720 = vst.msk [vmem:[#allocation3 + $0x30] sm:$0xf] %vm1715, %v1628
      %1721 = vst.msk [vmem:[#allocation3 + $0x3c] sm:$0xf] %vm1715, %v1630
      %1722 = vst.msk [vmem:[#allocation3 + $0x48] sm:$0xf] %vm1715, %v1632
      %1723 = vst.msk [vmem:[#allocation3 + $0x54] sm:$0xf] %vm1715, %v1634
      %1724 = vst.msk [vmem:[#allocation3 + $0x60] sm:$0xf] %vm1715, %v1636
      %1725 = vst.msk [vmem:[#allocation3 + $0x6c] sm:$0xf] %vm1715, %v1638
      %1726 = vst.msk [vmem:[#allocation3 + $0x78] sm:$0xf] %vm1715, %v1640
      %1727 = vst.msk [vmem:[#allocation3 + $0x84] sm:$0xf] %vm1715, %v1642
      %1728 = vst.msk [vmem:[#allocation3 + $0x90] sm:$0xf] %vm1715, %v1644
      %1729 = vst.msk [vmem:[#allocation3 + $0x9c] sm:$0xf] %vm1715, %v1646
      %1730 = vst.msk [vmem:[#allocation3 + $0xa8] sm:$0xf] %vm1715, %v1648
      %1731 = vst.msk [vmem:[#allocation3 + $0xb4] sm:$0xf] %vm1715, %v1650
      %1732 = vst.msk [vmem:[#allocation3 + $0xc0] sm:$0xf] %vm1715, %v1652
      %1733 = vst.msk [vmem:[#allocation3 + $0xcc] sm:$0xf] %vm1715, %v1654
      %1734 = vst.msk [vmem:[#allocation3 + $0xd8] sm:$0xf] %vm1715, %v1656
      %1735 = vst.msk [vmem:[#allocation3 + $0xe4] sm:$0xf] %vm1715, %v1658
      %1736 = vst.msk [vmem:[#allocation3 + $0xf0] sm:$0xf] %vm1715, %v1660
      %1737 = vst.msk [vmem:[#allocation3 + $0xfc] sm:$0xf] %vm1715, %v1662
      %1738 = vst.msk [vmem:[#allocation3 + $0x108] sm:$0xf] %vm1715, %v1664
      %1739 = vst.msk [vmem:[#allocation3 + $0x114] sm:$0xf] %vm1715, %v1666
      %1740 = vst.msk [vmem:[#allocation3 + $0x120] sm:$0xf] %vm1715, %v1668
      %1741 = vst.msk [vmem:[#allocation3 + $0x12c] sm:$0xf] %vm1715, %v1670
      %1742 = vst.msk [vmem:[#allocation3 + $0x138] sm:$0xf] %vm1715, %v1672
      %1743 = vst.msk [vmem:[#allocation3 + $0x144] sm:$0xf] %vm1715, %v1674
      %1744 = vst.msk [vmem:[#allocation3 + $0x150] sm:$0xf] %vm1715, %v1676
      %1745 = vst.msk [vmem:[#allocation3 + $0x15c] sm:$0xf] %vm1715, %v1678
      %1746 = vst.msk [vmem:[#allocation3 + $0x168] sm:$0xf] %vm1715, %v1680
      %1747 = vst.msk [vmem:[#allocation3 + $0x174] sm:$0xf] %vm1715, %v1682
      %v1748 = vld [vmem:[#allocation2] sm:$0xe]
      %v1749 = vld [vmem:[#allocation2 + $0x4] sm:$0xf]
      %v1750 = vld [vmem:[#allocation2 + $0x8] sm:$0x1]
      %v1751 = vld [vmem:[#allocation2 + $0xc] sm:$0xe]
      %v1752 = vld [vmem:[#allocation2 + $0x10] sm:$0xf]
      %v1753 = vld [vmem:[#allocation2 + $0x14] sm:$0x1]
      %v1754 = vld [vmem:[#allocation2 + $0x18] sm:$0xe]
      %v1755 = vld [vmem:[#allocation2 + $0x1c] sm:$0xf]
      %v1756 = vld [vmem:[#allocation2 + $0x20] sm:$0x1]
      %v1757 = vld [vmem:[#allocation2 + $0x24] sm:$0xe]
      %v1758 = vld [vmem:[#allocation2 + $0x28] sm:$0xf]
      %v1759 = vld [vmem:[#allocation2 + $0x2c] sm:$0x1]
      %v1760 = vld [vmem:[#allocation2 + $0x30] sm:$0xe]
      %v1761 = vld [vmem:[#allocation2 + $0x34] sm:$0xf]
      %v1762 = vld [vmem:[#allocation2 + $0x38] sm:$0x1]
      %v1763 = vld [vmem:[#allocation2 + $0x3c] sm:$0xe]
      %v1764 = vld [vmem:[#allocation2 + $0x40] sm:$0xf]
      %v1765 = vld [vmem:[#allocation2 + $0x44] sm:$0x1]
      %v1766 = vld [vmem:[#allocation2 + $0x48] sm:$0xe]
      %v1767 = vld [vmem:[#allocation2 + $0x4c] sm:$0xf]
      %v1768 = vld [vmem:[#allocation2 + $0x50] sm:$0x1]
      %v1769 = vld [vmem:[#allocation2 + $0x54] sm:$0xe]
      %v1770 = vld [vmem:[#allocation2 + $0x58] sm:$0xf]
      %v1771 = vld [vmem:[#allocation2 + $0x5c] sm:$0x1]
      %v1772 = vld [vmem:[#allocation2 + $0x60] sm:$0xe]
      %v1773 = vld [vmem:[#allocation2 + $0x64] sm:$0xf]
      %v1774 = vld [vmem:[#allocation2 + $0x68] sm:$0x1]
      %v1775 = vld [vmem:[#allocation2 + $0x6c] sm:$0xe]
      %v1776 = vld [vmem:[#allocation2 + $0x70] sm:$0xf]
      %v1777 = vld [vmem:[#allocation2 + $0x74] sm:$0x1]
      %v1778 = vld [vmem:[#allocation2 + $0x78] sm:$0xe]
      %v1779 = vld [vmem:[#allocation2 + $0x7c] sm:$0xf]
      %v1780 = vld [vmem:[#allocation2 + $0x80] sm:$0x1]
      %v1781 = vld [vmem:[#allocation2 + $0x84] sm:$0xe]
      %v1782 = vld [vmem:[#allocation2 + $0x88] sm:$0xf]
      %v1783 = vld [vmem:[#allocation2 + $0x8c] sm:$0x1]
      %v1784 = vld [vmem:[#allocation2 + $0x90] sm:$0xe]
      %v1785 = vld [vmem:[#allocation2 + $0x94] sm:$0xf]
      %v1786 = vld [vmem:[#allocation2 + $0x98] sm:$0x1]
      %v1787 = vld [vmem:[#allocation2 + $0x9c] sm:$0xe]
      %v1788 = vld [vmem:[#allocation2 + $0xa0] sm:$0xf]
      %v1789 = vld [vmem:[#allocation2 + $0xa4] sm:$0x1]
      %v1790 = vld [vmem:[#allocation2 + $0xa8] sm:$0xe]
      %v1791 = vld [vmem:[#allocation2 + $0xac] sm:$0xf]
      %v1792 = vld [vmem:[#allocation2 + $0xb0] sm:$0x1]
      %v1793 = vld [vmem:[#allocation2 + $0xb4] sm:$0xe]
      %v1794 = vld [vmem:[#allocation2 + $0xb8] sm:$0xf]
      %v1795 = vld [vmem:[#allocation2 + $0xbc] sm:$0x1]
      %vm1844 = vcmask 1042432
      %vm1845 = vcmask 1046532
      %vm1846 = vmor %vm1844, %vm1845
      %v1847 = vrot.slane %v1748, 5
      %v1848 = vrot.slane %v1847, 4
      %v1849 = vrot.slane %v1749, 5
      %v1850 = vsel %vm1846, %v1848, %v1849
      %v1851 = vrot.slane %v1849, 4
      %v1852 = vrot.slane %v1750, 5
      %v1853 = vsel %vm1846, %v1851, %v1852
      %v1854 = vrot.slane %v1751, 5
      %v1855 = vrot.slane %v1854, 4
      %v1856 = vrot.slane %v1752, 5
      %v1857 = vsel %vm1846, %v1855, %v1856
      %v1858 = vrot.slane %v1856, 4
      %v1859 = vrot.slane %v1753, 5
      %v1860 = vsel %vm1846, %v1858, %v1859
      %v1861 = vrot.slane %v1754, 5
      %v1862 = vrot.slane %v1861, 4
      %v1863 = vrot.slane %v1755, 5
      %v1864 = vsel %vm1846, %v1862, %v1863
      %v1865 = vrot.slane %v1863, 4
      %v1866 = vrot.slane %v1756, 5
      %v1867 = vsel %vm1846, %v1865, %v1866
      %v1868 = vrot.slane %v1757, 5
      %v1869 = vrot.slane %v1868, 4
      %v1870 = vrot.slane %v1758, 5
      %v1871 = vsel %vm1846, %v1869, %v1870
      %v1872 = vrot.slane %v1870, 4
      %v1873 = vrot.slane %v1759, 5
      %v1874 = vsel %vm1846, %v1872, %v1873
      %v1875 = vrot.slane %v1760, 5
      %v1876 = vrot.slane %v1875, 4
      %v1877 = vrot.slane %v1761, 5
      %v1878 = vsel %vm1846, %v1876, %v1877
      %v1879 = vrot.slane %v1877, 4
      %v1880 = vrot.slane %v1762, 5
      %v1881 = vsel %vm1846, %v1879, %v1880
      %v1882 = vrot.slane %v1763, 5
      %v1883 = vrot.slane %v1882, 4
      %v1884 = vrot.slane %v1764, 5
      %v1885 = vsel %vm1846, %v1883, %v1884
      %v1886 = vrot.slane %v1884, 4
      %v1887 = vrot.slane %v1765, 5
      %v1888 = vsel %vm1846, %v1886, %v1887
      %v1889 = vrot.slane %v1766, 5
      %v1890 = vrot.slane %v1889, 4
      %v1891 = vrot.slane %v1767, 5
      %v1892 = vsel %vm1846, %v1890, %v1891
      %v1893 = vrot.slane %v1891, 4
      %v1894 = vrot.slane %v1768, 5
      %v1895 = vsel %vm1846, %v1893, %v1894
      %v1896 = vrot.slane %v1769, 5
      %v1897 = vrot.slane %v1896, 4
      %v1898 = vrot.slane %v1770, 5
      %v1899 = vsel %vm1846, %v1897, %v1898
      %v1900 = vrot.slane %v1898, 4
      %v1901 = vrot.slane %v1771, 5
      %v1902 = vsel %vm1846, %v1900, %v1901
      %v1903 = vrot.slane %v1772, 5
      %v1904 = vrot.slane %v1903, 4
      %v1905 = vrot.slane %v1773, 5
      %v1906 = vsel %vm1846, %v1904, %v1905
      %v1907 = vrot.slane %v1905, 4
      %v1908 = vrot.slane %v1774, 5
      %v1909 = vsel %vm1846, %v1907, %v1908
      %v1910 = vrot.slane %v1775, 5
      %v1911 = vrot.slane %v1910, 4
      %v1912 = vrot.slane %v1776, 5
      %v1913 = vsel %vm1846, %v1911, %v1912
      %v1914 = vrot.slane %v1912, 4
      %v1915 = vrot.slane %v1777, 5
      %v1916 = vsel %vm1846, %v1914, %v1915
      %v1917 = vrot.slane %v1778, 5
      %v1918 = vrot.slane %v1917, 4
      %v1919 = vrot.slane %v1779, 5
      %v1920 = vsel %vm1846, %v1918, %v1919
      %v1921 = vrot.slane %v1919, 4
      %v1922 = vrot.slane %v1780, 5
      %v1923 = vsel %vm1846, %v1921, %v1922
      %v1924 = vrot.slane %v1781, 5
      %v1925 = vrot.slane %v1924, 4
      %v1926 = vrot.slane %v1782, 5
      %v1927 = vsel %vm1846, %v1925, %v1926
      %v1928 = vrot.slane %v1926, 4
      %v1929 = vrot.slane %v1783, 5
      %v1930 = vsel %vm1846, %v1928, %v1929
      %v1931 = vrot.slane %v1784, 5
      %v1932 = vrot.slane %v1931, 4
      %v1933 = vrot.slane %v1785, 5
      %v1934 = vsel %vm1846, %v1932, %v1933
      %v1935 = vrot.slane %v1933, 4
      %v1936 = vrot.slane %v1786, 5
      %v1937 = vsel %vm1846, %v1935, %v1936
      %v1938 = vrot.slane %v1787, 5
      %v1939 = vrot.slane %v1938, 4
      %v1940 = vrot.slane %v1788, 5
      %v1941 = vsel %vm1846, %v1939, %v1940
      %v1942 = vrot.slane %v1940, 4
      %v1943 = vrot.slane %v1789, 5
      %v1944 = vsel %vm1846, %v1942, %v1943
      %v1945 = vrot.slane %v1790, 5
      %v1946 = vrot.slane %v1945, 4
      %v1947 = vrot.slane %v1791, 5
      %v1948 = vsel %vm1846, %v1946, %v1947
      %v1949 = vrot.slane %v1947, 4
      %v1950 = vrot.slane %v1792, 5
      %v1951 = vsel %vm1846, %v1949, %v1950
      %v1952 = vrot.slane %v1793, 5
      %v1953 = vrot.slane %v1952, 4
      %v1954 = vrot.slane %v1794, 5
      %v1955 = vsel %vm1846, %v1953, %v1954
      %v1956 = vrot.slane %v1954, 4
      %v1957 = vrot.slane %v1795, 5
      %v1958 = vsel %vm1846, %v1956, %v1957
      %1959 = vrot.lane.b32.xlu0 %v1850, 64
      %v1960 = vpop.permute.xlu0 %1959
      %1961 = vrot.lane.b32.xlu0 %v1853, 64
      %v1962 = vpop.permute.xlu0 %1961
      %1963 = vrot.lane.b32.xlu0 %v1857, 64
      %v1964 = vpop.permute.xlu0 %1963
      %1965 = vrot.lane.b32.xlu0 %v1860, 64
      %v1966 = vpop.permute.xlu0 %1965
      %1967 = vrot.lane.b32.xlu0 %v1864, 64
      %v1968 = vpop.permute.xlu0 %1967
      %1969 = vrot.lane.b32.xlu0 %v1867, 64
      %v1970 = vpop.permute.xlu0 %1969
      %1971 = vrot.lane.b32.xlu0 %v1871, 64
      %v1972 = vpop.permute.xlu0 %1971
      %1973 = vrot.lane.b32.xlu0 %v1874, 64
      %v1974 = vpop.permute.xlu0 %1973
      %1975 = vrot.lane.b32.xlu0 %v1878, 64
      %v1976 = vpop.permute.xlu0 %1975
      %1977 = vrot.lane.b32.xlu0 %v1881, 64
      %v1978 = vpop.permute.xlu0 %1977
      %1979 = vrot.lane.b32.xlu0 %v1885, 64
      %v1980 = vpop.permute.xlu0 %1979
      %1981 = vrot.lane.b32.xlu0 %v1888, 64
      %v1982 = vpop.permute.xlu0 %1981
      %1983 = vrot.lane.b32.xlu0 %v1892, 64
      %v1984 = vpop.permute.xlu0 %1983
      %1985 = vrot.lane.b32.xlu0 %v1895, 64
      %v1986 = vpop.permute.xlu0 %1985
      %1987 = vrot.lane.b32.xlu0 %v1899, 64
      %v1988 = vpop.permute.xlu0 %1987
      %1989 = vrot.lane.b32.xlu0 %v1902, 64
      %v1990 = vpop.permute.xlu0 %1989
      %1991 = vrot.lane.b32.xlu0 %v1906, 64
      %v1992 = vpop.permute.xlu0 %1991
      %1993 = vrot.lane.b32.xlu0 %v1909, 64
      %v1994 = vpop.permute.xlu0 %1993
      %1995 = vrot.lane.b32.xlu0 %v1913, 64
      %v1996 = vpop.permute.xlu0 %1995
      %1997 = vrot.lane.b32.xlu0 %v1916, 64
      %v1998 = vpop.permute.xlu0 %1997
      %1999 = vrot.lane.b32.xlu0 %v1920, 64
      %v2000 = vpop.permute.xlu0 %1999
      %2001 = vrot.lane.b32.xlu0 %v1923, 64
      %v2002 = vpop.permute.xlu0 %2001
      %2003 = vrot.lane.b32.xlu0 %v1927, 64
      %v2004 = vpop.permute.xlu0 %2003
      %2005 = vrot.lane.b32.xlu0 %v1930, 64
      %v2006 = vpop.permute.xlu0 %2005
      %2007 = vrot.lane.b32.xlu0 %v1934, 64
      %v2008 = vpop.permute.xlu0 %2007
      %2009 = vrot.lane.b32.xlu0 %v1937, 64
      %v2010 = vpop.permute.xlu0 %2009
      %2011 = vrot.lane.b32.xlu0 %v1941, 64
      %v2012 = vpop.permute.xlu0 %2011
      %2013 = vrot.lane.b32.xlu0 %v1944, 64
      %v2014 = vpop.permute.xlu0 %2013
      %2015 = vrot.lane.b32.xlu0 %v1948, 64
      %v2016 = vpop.permute.xlu0 %2015
      %2017 = vrot.lane.b32.xlu0 %v1951, 64
      %v2018 = vpop.permute.xlu0 %2017
      %2019 = vrot.lane.b32.xlu0 %v1955, 64
      %v2020 = vpop.permute.xlu0 %2019
      %2021 = vrot.lane.b32.xlu0 %v1958, 64
      %v2022 = vpop.permute.xlu0 %2021
      %vm2055 = vcmask 781824
      %2056 = vst.msk [vmem:[#allocation3] sm:$0xf] %vm2055, %v1960
      %2057 = vst.msk [vmem:[#allocation3 + $0xc] sm:$0xf] %vm2055, %v1962
      %2058 = vst.msk [vmem:[#allocation3 + $0x18] sm:$0xf] %vm2055, %v1964
      %2059 = vst.msk [vmem:[#allocation3 + $0x24] sm:$0xf] %vm2055, %v1966
      %2060 = vst.msk [vmem:[#allocation3 + $0x30] sm:$0xf] %vm2055, %v1968
      %2061 = vst.msk [vmem:[#allocation3 + $0x3c] sm:$0xf] %vm2055, %v1970
      %2062 = vst.msk [vmem:[#allocation3 + $0x48] sm:$0xf] %vm2055, %v1972
      %2063 = vst.msk [vmem:[#allocation3 + $0x54] sm:$0xf] %vm2055, %v1974
      %2064 = vst.msk [vmem:[#allocation3 + $0x60] sm:$0xf] %vm2055, %v1976
      %2065 = vst.msk [vmem:[#allocation3 + $0x6c] sm:$0xf] %vm2055, %v1978
      %2066 = vst.msk [vmem:[#allocation3 + $0x78] sm:$0xf] %vm2055, %v1980
      %2067 = vst.msk [vmem:[#allocation3 + $0x84] sm:$0xf] %vm2055, %v1982
      %2068 = vst.msk [vmem:[#allocation3 + $0x90] sm:$0xf] %vm2055, %v1984
      %2069 = vst.msk [vmem:[#allocation3 + $0x9c] sm:$0xf] %vm2055, %v1986
      %2070 = vst.msk [vmem:[#allocation3 + $0xa8] sm:$0xf] %vm2055, %v1988
      %2071 = vst.msk [vmem:[#allocation3 + $0xb4] sm:$0xf] %vm2055, %v1990
      %2072 = vst.msk [vmem:[#allocation3 + $0xc0] sm:$0xf] %vm2055, %v1992
      %2073 = vst.msk [vmem:[#allocation3 + $0xcc] sm:$0xf] %vm2055, %v1994
      %2074 = vst.msk [vmem:[#allocation3 + $0xd8] sm:$0xf] %vm2055, %v1996
      %2075 = vst.msk [vmem:[#allocation3 + $0xe4] sm:$0xf] %vm2055, %v1998
      %2076 = vst.msk [vmem:[#allocation3 + $0xf0] sm:$0xf] %vm2055, %v2000
      %2077 = vst.msk [vmem:[#allocation3 + $0xfc] sm:$0xf] %vm2055, %v2002
      %2078 = vst.msk [vmem:[#allocation3 + $0x108] sm:$0xf] %vm2055, %v2004
      %2079 = vst.msk [vmem:[#allocation3 + $0x114] sm:$0xf] %vm2055, %v2006
      %2080 = vst.msk [vmem:[#allocation3 + $0x120] sm:$0xf] %vm2055, %v2008
      %2081 = vst.msk [vmem:[#allocation3 + $0x12c] sm:$0xf] %vm2055, %v2010
      %2082 = vst.msk [vmem:[#allocation3 + $0x138] sm:$0xf] %vm2055, %v2012
      %2083 = vst.msk [vmem:[#allocation3 + $0x144] sm:$0xf] %vm2055, %v2014
      %2084 = vst.msk [vmem:[#allocation3 + $0x150] sm:$0xf] %vm2055, %v2016
      %2085 = vst.msk [vmem:[#allocation3 + $0x15c] sm:$0xf] %vm2055, %v2018
      %2086 = vst.msk [vmem:[#allocation3 + $0x168] sm:$0xf] %vm2055, %v2020
      %2087 = vst.msk [vmem:[#allocation3 + $0x174] sm:$0xf] %vm2055, %v2022
      %v2088 = vld [vmem:[%s915] sm:$0xf]
      %v2089 = vld [vmem:[%s915 + $0x4] sm:$0xf]
      %v2090 = vld [vmem:[%s915 + $0xc] sm:$0xf]
      %v2091 = vld [vmem:[%s915 + $0x10] sm:$0xf]
      %v2092 = vld [vmem:[%s915 + $0x18] sm:$0xf]
      %v2093 = vld [vmem:[%s915 + $0x1c] sm:$0xf]
      %v2094 = vld [vmem:[%s915 + $0x24] sm:$0xf]
      %v2095 = vld [vmem:[%s915 + $0x28] sm:$0xf]
      %v2096 = vld [vmem:[%s915 + $0x30] sm:$0xf]
      %v2097 = vld [vmem:[%s915 + $0x34] sm:$0xf]
      %v2098 = vld [vmem:[%s915 + $0x3c] sm:$0xf]
      %v2099 = vld [vmem:[%s915 + $0x40] sm:$0xf]
      %v2100 = vld [vmem:[%s915 + $0x48] sm:$0xf]
      %v2101 = vld [vmem:[%s915 + $0x4c] sm:$0xf]
      %v2102 = vld [vmem:[%s915 + $0x54] sm:$0xf]
      %v2103 = vld [vmem:[%s915 + $0x58] sm:$0xf]
      %v2104 = vld [vmem:[%s915 + $0x60] sm:$0xf]
      %v2105 = vld [vmem:[%s915 + $0x64] sm:$0xf]
      %v2106 = vld [vmem:[%s915 + $0x6c] sm:$0xf]
      %v2107 = vld [vmem:[%s915 + $0x70] sm:$0xf]
      %v2108 = vld [vmem:[%s915 + $0x78] sm:$0xf]
      %v2109 = vld [vmem:[%s915 + $0x7c] sm:$0xf]
      %v2110 = vld [vmem:[%s915 + $0x84] sm:$0xf]
      %v2111 = vld [vmem:[%s915 + $0x88] sm:$0xf]
      %v2112 = vld [vmem:[%s915 + $0x90] sm:$0xf]
      %v2113 = vld [vmem:[%s915 + $0x94] sm:$0xf]
      %v2114 = vld [vmem:[%s915 + $0x9c] sm:$0xf]
      %v2115 = vld [vmem:[%s915 + $0xa0] sm:$0xf]
      %v2116 = vld [vmem:[%s915 + $0xa8] sm:$0xf]
      %v2117 = vld [vmem:[%s915 + $0xac] sm:$0xf]
      %v2118 = vld [vmem:[%s915 + $0xb4] sm:$0xf]
      %v2119 = vld [vmem:[%s915 + $0xb8] sm:$0xf]
      %2152 = vrot.lane.b32.xlu0 %v2088, 96
      %v2153 = vpop.permute.xlu0 %2152
      %2154 = vrot.lane.b32.xlu0 %v2089, 96
      %v2155 = vpop.permute.xlu0 %2154
      %2156 = vrot.lane.b32.xlu0 %v2090, 96
      %v2157 = vpop.permute.xlu0 %2156
      %2158 = vrot.lane.b32.xlu0 %v2091, 96
      %v2159 = vpop.permute.xlu0 %2158
      %2160 = vrot.lane.b32.xlu0 %v2092, 96
      %v2161 = vpop.permute.xlu0 %2160
      %2162 = vrot.lane.b32.xlu0 %v2093, 96
      %v2163 = vpop.permute.xlu0 %2162
      %2164 = vrot.lane.b32.xlu0 %v2094, 96
      %v2165 = vpop.permute.xlu0 %2164
      %2166 = vrot.lane.b32.xlu0 %v2095, 96
      %v2167 = vpop.permute.xlu0 %2166
      %2168 = vrot.lane.b32.xlu0 %v2096, 96
      %v2169 = vpop.permute.xlu0 %2168
      %2170 = vrot.lane.b32.xlu0 %v2097, 96
      %v2171 = vpop.permute.xlu0 %2170
      %2172 = vrot.lane.b32.xlu0 %v2098, 96
      %v2173 = vpop.permute.xlu0 %2172
      %2174 = vrot.lane.b32.xlu0 %v2099, 96
      %v2175 = vpop.permute.xlu0 %2174
      %2176 = vrot.lane.b32.xlu0 %v2100, 96
      %v2177 = vpop.permute.xlu0 %2176
      %2178 = vrot.lane.b32.xlu0 %v2101, 96
      %v2179 = vpop.permute.xlu0 %2178
      %2180 = vrot.lane.b32.xlu0 %v2102, 96
      %v2181 = vpop.permute.xlu0 %2180
      %2182 = vrot.lane.b32.xlu0 %v2103, 96
      %v2183 = vpop.permute.xlu0 %2182
      %2184 = vrot.lane.b32.xlu0 %v2104, 96
      %v2185 = vpop.permute.xlu0 %2184
      %2186 = vrot.lane.b32.xlu0 %v2105, 96
      %v2187 = vpop.permute.xlu0 %2186
      %2188 = vrot.lane.b32.xlu0 %v2106, 96
      %v2189 = vpop.permute.xlu0 %2188
      %2190 = vrot.lane.b32.xlu0 %v2107, 96
      %v2191 = vpop.permute.xlu0 %2190
      %2192 = vrot.lane.b32.xlu0 %v2108, 96
      %v2193 = vpop.permute.xlu0 %2192
      %2194 = vrot.lane.b32.xlu0 %v2109, 96
      %v2195 = vpop.permute.xlu0 %2194
      %2196 = vrot.lane.b32.xlu0 %v2110, 96
      %v2197 = vpop.permute.xlu0 %2196
      %2198 = vrot.lane.b32.xlu0 %v2111, 96
      %v2199 = vpop.permute.xlu0 %2198
      %2200 = vrot.lane.b32.xlu0 %v2112, 96
      %v2201 = vpop.permute.xlu0 %2200
      %2202 = vrot.lane.b32.xlu0 %v2113, 96
      %v2203 = vpop.permute.xlu0 %2202
      %2204 = vrot.lane.b32.xlu0 %v2114, 96
      %v2205 = vpop.permute.xlu0 %2204
      %2206 = vrot.lane.b32.xlu0 %v2115, 96
      %v2207 = vpop.permute.xlu0 %2206
      %2208 = vrot.lane.b32.xlu0 %v2116, 96
      %v2209 = vpop.permute.xlu0 %2208
      %2210 = vrot.lane.b32.xlu0 %v2117, 96
      %v2211 = vpop.permute.xlu0 %2210
      %2212 = vrot.lane.b32.xlu0 %v2118, 96
      %v2213 = vpop.permute.xlu0 %2212
      %2214 = vrot.lane.b32.xlu0 %v2119, 96
      %v2215 = vpop.permute.xlu0 %2214
      %vm2248 = vcmask 1044224
      %2249 = vst.msk [vmem:[#allocation3] sm:$0xf] %vm2248, %v2153
      %2250 = vst.msk [vmem:[#allocation3 + $0xc] sm:$0xf] %vm2248, %v2155
      %2251 = vst.msk [vmem:[#allocation3 + $0x18] sm:$0xf] %vm2248, %v2157
      %2252 = vst.msk [vmem:[#allocation3 + $0x24] sm:$0xf] %vm2248, %v2159
      %2253 = vst.msk [vmem:[#allocation3 + $0x30] sm:$0xf] %vm2248, %v2161
      %2254 = vst.msk [vmem:[#allocation3 + $0x3c] sm:$0xf] %vm2248, %v2163
      %2255 = vst.msk [vmem:[#allocation3 + $0x48] sm:$0xf] %vm2248, %v2165
      %2256 = vst.msk [vmem:[#allocation3 + $0x54] sm:$0xf] %vm2248, %v2167
      %2257 = vst.msk [vmem:[#allocation3 + $0x60] sm:$0xf] %vm2248, %v2169
      %2258 = vst.msk [vmem:[#allocation3 + $0x6c] sm:$0xf] %vm2248, %v2171
      %2259 = vst.msk [vmem:[#allocation3 + $0x78] sm:$0xf] %vm2248, %v2173
      %2260 = vst.msk [vmem:[#allocation3 + $0x84] sm:$0xf] %vm2248, %v2175
      %2261 = vst.msk [vmem:[#allocation3 + $0x90] sm:$0xf] %vm2248, %v2177
      %2262 = vst.msk [vmem:[#allocation3 + $0x9c] sm:$0xf] %vm2248, %v2179
      %2263 = vst.msk [vmem:[#allocation3 + $0xa8] sm:$0xf] %vm2248, %v2181
      %2264 = vst.msk [vmem:[#allocation3 + $0xb4] sm:$0xf] %vm2248, %v2183
      %2265 = vst.msk [vmem:[#allocation3 + $0xc0] sm:$0xf] %vm2248, %v2185
      %2266 = vst.msk [vmem:[#allocation3 + $0xcc] sm:$0xf] %vm2248, %v2187
      %2267 = vst.msk [vmem:[#allocation3 + $0xd8] sm:$0xf] %vm2248, %v2189
      %2268 = vst.msk [vmem:[#allocation3 + $0xe4] sm:$0xf] %vm2248, %v2191
      %2269 = vst.msk [vmem:[#allocation3 + $0xf0] sm:$0xf] %vm2248, %v2193
      %2270 = vst.msk [vmem:[#allocation3 + $0xfc] sm:$0xf] %vm2248, %v2195
      %2271 = vst.msk [vmem:[#allocation3 + $0x108] sm:$0xf] %vm2248, %v2197
      %2272 = vst.msk [vmem:[#allocation3 + $0x114] sm:$0xf] %vm2248, %v2199
      %2273 = vst.msk [vmem:[#allocation3 + $0x120] sm:$0xf] %vm2248, %v2201
      %2274 = vst.msk [vmem:[#allocation3 + $0x12c] sm:$0xf] %vm2248, %v2203
      %2275 = vst.msk [vmem:[#allocation3 + $0x138] sm:$0xf] %vm2248, %v2205
      %2276 = vst.msk [vmem:[#allocation3 + $0x144] sm:$0xf] %vm2248, %v2207
      %2277 = vst.msk [vmem:[#allocation3 + $0x150] sm:$0xf] %vm2248, %v2209
      %2278 = vst.msk [vmem:[#allocation3 + $0x15c] sm:$0xf] %vm2248, %v2211
      %2279 = vst.msk [vmem:[#allocation3 + $0x168] sm:$0xf] %vm2248, %v2213
      %2280 = vst.msk [vmem:[#allocation3 + $0x174] sm:$0xf] %vm2248, %v2215
      %v2281 = vld [vmem:[%s915] sm:$0xf]
      %v2282 = vld [vmem:[%s915 + $0x4] sm:$0xf]
      %v2283 = vld [vmem:[%s915 + $0x8] sm:$0x1]
      %v2284 = vld [vmem:[%s915 + $0xc] sm:$0xf]
      %v2285 = vld [vmem:[%s915 + $0x10] sm:$0xf]
      %v2286 = vld [vmem:[%s915 + $0x14] sm:$0x1]
      %v2287 = vld [vmem:[%s915 + $0x18] sm:$0xf]
      %v2288 = vld [vmem:[%s915 + $0x1c] sm:$0xf]
      %v2289 = vld [vmem:[%s915 + $0x20] sm:$0x1]
      %v2290 = vld [vmem:[%s915 + $0x24] sm:$0xf]
      %v2291 = vld [vmem:[%s915 + $0x28] sm:$0xf]
      %v2292 = vld [vmem:[%s915 + $0x2c] sm:$0x1]
      %v2293 = vld [vmem:[%s915 + $0x30] sm:$0xf]
      %v2294 = vld [vmem:[%s915 + $0x34] sm:$0xf]
      %v2295 = vld [vmem:[%s915 + $0x38] sm:$0x1]
      %v2296 = vld [vmem:[%s915 + $0x3c] sm:$0xf]
      %v2297 = vld [vmem:[%s915 + $0x40] sm:$0xf]
      %v2298 = vld [vmem:[%s915 + $0x44] sm:$0x1]
      %v2299 = vld [vmem:[%s915 + $0x48] sm:$0xf]
      %v2300 = vld [vmem:[%s915 + $0x4c] sm:$0xf]
      %v2301 = vld [vmem:[%s915 + $0x50] sm:$0x1]
      %v2302 = vld [vmem:[%s915 + $0x54] sm:$0xf]
      %v2303 = vld [vmem:[%s915 + $0x58] sm:$0xf]
      %v2304 = vld [vmem:[%s915 + $0x5c] sm:$0x1]
      %v2305 = vld [vmem:[%s915 + $0x60] sm:$0xf]
      %v2306 = vld [vmem:[%s915 + $0x64] sm:$0xf]
      %v2307 = vld [vmem:[%s915 + $0x68] sm:$0x1]
      %v2308 = vld [vmem:[%s915 + $0x6c] sm:$0xf]
      %v2309 = vld [vmem:[%s915 + $0x70] sm:$0xf]
      %v2310 = vld [vmem:[%s915 + $0x74] sm:$0x1]
      %v2311 = vld [vmem:[%s915 + $0x78] sm:$0xf]
      %v2312 = vld [vmem:[%s915 + $0x7c] sm:$0xf]
      %v2313 = vld [vmem:[%s915 + $0x80] sm:$0x1]
      %v2314 = vld [vmem:[%s915 + $0x84] sm:$0xf]
      %v2315 = vld [vmem:[%s915 + $0x88] sm:$0xf]
      %v2316 = vld [vmem:[%s915 + $0x8c] sm:$0x1]
      %v2317 = vld [vmem:[%s915 + $0x90] sm:$0xf]
      %v2318 = vld [vmem:[%s915 + $0x94] sm:$0xf]
      %v2319 = vld [vmem:[%s915 + $0x98] sm:$0x1]
      %v2320 = vld [vmem:[%s915 + $0x9c] sm:$0xf]
      %v2321 = vld [vmem:[%s915 + $0xa0] sm:$0xf]
      %v2322 = vld [vmem:[%s915 + $0xa4] sm:$0x1]
      %v2323 = vld [vmem:[%s915 + $0xa8] sm:$0xf]
      %v2324 = vld [vmem:[%s915 + $0xac] sm:$0xf]
      %v2325 = vld [vmem:[%s915 + $0xb0] sm:$0x1]
      %v2326 = vld [vmem:[%s915 + $0xb4] sm:$0xf]
      %v2327 = vld [vmem:[%s915 + $0xb8] sm:$0xf]
      %v2328 = vld [vmem:[%s915 + $0xbc] sm:$0x1]
      %v2330 = vshrl.u32 %v2281, 16
      %v2332 = vrot.slane %v2330, 4
      %v2333 = vshll.u32 %v2281, 16
      %v2335 = vrot.slane %v2333, 5
      %v2336 = vor.u32 %v2332, %v2335
      %v2337 = vrot.slane %v2336, 4
      %v2339 = vshll.u32 %v2282, 16
      %v2341 = vrot.slane %v2339, 5
      %v2342 = vsel %vm1234, %v2337, %v2341
      %v2343 = vshrl.u32 %v2282, 16
      %v2345 = vrot.slane %v2343, 4
      %v2346 = vor.u32 %v2345, %v2341
      %v2347 = vrot.slane %v2346, 4
      %v2349 = vshll.u32 %v2283, 16
      %v2351 = vrot.slane %v2349, 5
      %v2352 = vsel %vm1234, %v2347, %v2351
      %v2354 = vshrl.u32 %v2284, 16
      %v2356 = vrot.slane %v2354, 4
      %v2357 = vshll.u32 %v2284, 16
      %v2359 = vrot.slane %v2357, 5
      %v2360 = vor.u32 %v2356, %v2359
      %v2361 = vrot.slane %v2360, 4
      %v2363 = vshll.u32 %v2285, 16
      %v2365 = vrot.slane %v2363, 5
      %v2366 = vsel %vm1234, %v2361, %v2365
      %v2367 = vshrl.u32 %v2285, 16
      %v2369 = vrot.slane %v2367, 4
      %v2370 = vor.u32 %v2369, %v2365
      %v2371 = vrot.slane %v2370, 4
      %v2373 = vshll.u32 %v2286, 16
      %v2375 = vrot.slane %v2373, 5
      %v2376 = vsel %vm1234, %v2371, %v2375
      %v2378 = vshrl.u32 %v2287, 16
      %v2380 = vrot.slane %v2378, 4
      %v2381 = vshll.u32 %v2287, 16
      %v2383 = vrot.slane %v2381, 5
      %v2384 = vor.u32 %v2380, %v2383
      %v2385 = vrot.slane %v2384, 4
      %v2387 = vshll.u32 %v2288, 16
      %v2389 = vrot.slane %v2387, 5
      %v2390 = vsel %vm1234, %v2385, %v2389
      %v2391 = vshrl.u32 %v2288, 16
      %v2393 = vrot.slane %v2391, 4
      %v2394 = vor.u32 %v2393, %v2389
      %v2395 = vrot.slane %v2394, 4
      %v2397 = vshll.u32 %v2289, 16
      %v2399 = vrot.slane %v2397, 5
      %v2400 = vsel %vm1234, %v2395, %v2399
      %v2402 = vshrl.u32 %v2290, 16
      %v2404 = vrot.slane %v2402, 4
      %v2405 = vshll.u32 %v2290, 16
      %v2407 = vrot.slane %v2405, 5
      %v2408 = vor.u32 %v2404, %v2407
      %v2409 = vrot.slane %v2408, 4
      %v2411 = vshll.u32 %v2291, 16
      %v2413 = vrot.slane %v2411, 5
      %v2414 = vsel %vm1234, %v2409, %v2413
      %v2415 = vshrl.u32 %v2291, 16
      %v2417 = vrot.slane %v2415, 4
      %v2418 = vor.u32 %v2417, %v2413
      %v2419 = vrot.slane %v2418, 4
      %v2421 = vshll.u32 %v2292, 16
      %v2423 = vrot.slane %v2421, 5
      %v2424 = vsel %vm1234, %v2419, %v2423
      %v2426 = vshrl.u32 %v2293, 16
      %v2428 = vrot.slane %v2426, 4
      %v2429 = vshll.u32 %v2293, 16
      %v2431 = vrot.slane %v2429, 5
      %v2432 = vor.u32 %v2428, %v2431
      %v2433 = vrot.slane %v2432, 4
      %v2435 = vshll.u32 %v2294, 16
      %v2437 = vrot.slane %v2435, 5
      %v2438 = vsel %vm1234, %v2433, %v2437
      %v2439 = vshrl.u32 %v2294, 16
      %v2441 = vrot.slane %v2439, 4
      %v2442 = vor.u32 %v2441, %v2437
      %v2443 = vrot.slane %v2442, 4
      %v2445 = vshll.u32 %v2295, 16
      %v2447 = vrot.slane %v2445, 5
      %v2448 = vsel %vm1234, %v2443, %v2447
      %v2450 = vshrl.u32 %v2296, 16
      %v2452 = vrot.slane %v2450, 4
      %v2453 = vshll.u32 %v2296, 16
      %v2455 = vrot.slane %v2453, 5
      %v2456 = vor.u32 %v2452, %v2455
      %v2457 = vrot.slane %v2456, 4
      %v2459 = vshll.u32 %v2297, 16
      %v2461 = vrot.slane %v2459, 5
      %v2462 = vsel %vm1234, %v2457, %v2461
      %v2463 = vshrl.u32 %v2297, 16
      %v2465 = vrot.slane %v2463, 4
      %v2466 = vor.u32 %v2465, %v2461
      %v2467 = vrot.slane %v2466, 4
      %v2469 = vshll.u32 %v2298, 16
      %v2471 = vrot.slane %v2469, 5
      %v2472 = vsel %vm1234, %v2467, %v2471
      %v2474 = vshrl.u32 %v2299, 16
      %v2476 = vrot.slane %v2474, 4
      %v2477 = vshll.u32 %v2299, 16
      %v2479 = vrot.slane %v2477, 5
      %v2480 = vor.u32 %v2476, %v2479
      %v2481 = vrot.slane %v2480, 4
      %v2483 = vshll.u32 %v2300, 16
      %v2485 = vrot.slane %v2483, 5
      %v2486 = vsel %vm1234, %v2481, %v2485
      %v2487 = vshrl.u32 %v2300, 16
      %v2489 = vrot.slane %v2487, 4
      %v2490 = vor.u32 %v2489, %v2485
      %v2491 = vrot.slane %v2490, 4
      %v2493 = vshll.u32 %v2301, 16
      %v2495 = vrot.slane %v2493, 5
      %v2496 = vsel %vm1234, %v2491, %v2495
      %v2498 = vshrl.u32 %v2302, 16
      %v2500 = vrot.slane %v2498, 4
      %v2501 = vshll.u32 %v2302, 16
      %v2503 = vrot.slane %v2501, 5
      %v2504 = vor.u32 %v2500, %v2503
      %v2505 = vrot.slane %v2504, 4
      %v2507 = vshll.u32 %v2303, 16
      %v2509 = vrot.slane %v2507, 5
      %v2510 = vsel %vm1234, %v2505, %v2509
      %v2511 = vshrl.u32 %v2303, 16
      %v2513 = vrot.slane %v2511, 4
      %v2514 = vor.u32 %v2513, %v2509
      %v2515 = vrot.slane %v2514, 4
      %v2517 = vshll.u32 %v2304, 16
      %v2519 = vrot.slane %v2517, 5
      %v2520 = vsel %vm1234, %v2515, %v2519
      %v2522 = vshrl.u32 %v2305, 16
      %v2524 = vrot.slane %v2522, 4
      %v2525 = vshll.u32 %v2305, 16
      %v2527 = vrot.slane %v2525, 5
      %v2528 = vor.u32 %v2524, %v2527
      %v2529 = vrot.slane %v2528, 4
      %v2531 = vshll.u32 %v2306, 16
      %v2533 = vrot.slane %v2531, 5
      %v2534 = vsel %vm1234, %v2529, %v2533
      %v2535 = vshrl.u32 %v2306, 16
      %v2537 = vrot.slane %v2535, 4
      %v2538 = vor.u32 %v2537, %v2533
      %v2539 = vrot.slane %v2538, 4
      %v2541 = vshll.u32 %v2307, 16
      %v2543 = vrot.slane %v2541, 5
      %v2544 = vsel %vm1234, %v2539, %v2543
      %v2546 = vshrl.u32 %v2308, 16
      %v2548 = vrot.slane %v2546, 4
      %v2549 = vshll.u32 %v2308, 16
      %v2551 = vrot.slane %v2549, 5
      %v2552 = vor.u32 %v2548, %v2551
      %v2553 = vrot.slane %v2552, 4
      %v2555 = vshll.u32 %v2309, 16
      %v2557 = vrot.slane %v2555, 5
      %v2558 = vsel %vm1234, %v2553, %v2557
      %v2559 = vshrl.u32 %v2309, 16
      %v2561 = vrot.slane %v2559, 4
      %v2562 = vor.u32 %v2561, %v2557
      %v2563 = vrot.slane %v2562, 4
      %v2565 = vshll.u32 %v2310, 16
      %v2567 = vrot.slane %v2565, 5
      %v2568 = vsel %vm1234, %v2563, %v2567
      %v2570 = vshrl.u32 %v2311, 16
      %v2572 = vrot.slane %v2570, 4
      %v2573 = vshll.u32 %v2311, 16
      %v2575 = vrot.slane %v2573, 5
      %v2576 = vor.u32 %v2572, %v2575
      %v2577 = vrot.slane %v2576, 4
      %v2579 = vshll.u32 %v2312, 16
      %v2581 = vrot.slane %v2579, 5
      %v2582 = vsel %vm1234, %v2577, %v2581
      %v2583 = vshrl.u32 %v2312, 16
      %v2585 = vrot.slane %v2583, 4
      %v2586 = vor.u32 %v2585, %v2581
      %v2587 = vrot.slane %v2586, 4
      %v2589 = vshll.u32 %v2313, 16
      %v2591 = vrot.slane %v2589, 5
      %v2592 = vsel %vm1234, %v2587, %v2591
      %v2594 = vshrl.u32 %v2314, 16
      %v2596 = vrot.slane %v2594, 4
      %v2597 = vshll.u32 %v2314, 16
      %v2599 = vrot.slane %v2597, 5
      %v2600 = vor.u32 %v2596, %v2599
      %v2601 = vrot.slane %v2600, 4
      %v2603 = vshll.u32 %v2315, 16
      %v2605 = vrot.slane %v2603, 5
      %v2606 = vsel %vm1234, %v2601, %v2605
      %v2607 = vshrl.u32 %v2315, 16
      %v2609 = vrot.slane %v2607, 4
      %v2610 = vor.u32 %v2609, %v2605
      %v2611 = vrot.slane %v2610, 4
      %v2613 = vshll.u32 %v2316, 16
      %v2615 = vrot.slane %v2613, 5
      %v2616 = vsel %vm1234, %v2611, %v2615
      %v2618 = vshrl.u32 %v2317, 16
      %v2620 = vrot.slane %v2618, 4
      %v2621 = vshll.u32 %v2317, 16
      %v2623 = vrot.slane %v2621, 5
      %v2624 = vor.u32 %v2620, %v2623
      %v2625 = vrot.slane %v2624, 4
      %v2627 = vshll.u32 %v2318, 16
      %v2629 = vrot.slane %v2627, 5
      %v2630 = vsel %vm1234, %v2625, %v2629
      %v2631 = vshrl.u32 %v2318, 16
      %v2633 = vrot.slane %v2631, 4
      %v2634 = vor.u32 %v2633, %v2629
      %v2635 = vrot.slane %v2634, 4
      %v2637 = vshll.u32 %v2319, 16
      %v2639 = vrot.slane %v2637, 5
      %v2640 = vsel %vm1234, %v2635, %v2639
      %v2642 = vshrl.u32 %v2320, 16
      %v2644 = vrot.slane %v2642, 4
      %v2645 = vshll.u32 %v2320, 16
      %v2647 = vrot.slane %v2645, 5
      %v2648 = vor.u32 %v2644, %v2647
      %v2649 = vrot.slane %v2648, 4
      %v2651 = vshll.u32 %v2321, 16
      %v2653 = vrot.slane %v2651, 5
      %v2654 = vsel %vm1234, %v2649, %v2653
      %v2655 = vshrl.u32 %v2321, 16
      %v2657 = vrot.slane %v2655, 4
      %v2658 = vor.u32 %v2657, %v2653
      %v2659 = vrot.slane %v2658, 4
      %v2661 = vshll.u32 %v2322, 16
      %v2663 = vrot.slane %v2661, 5
      %v2664 = vsel %vm1234, %v2659, %v2663
      %v2666 = vshrl.u32 %v2323, 16
      %v2668 = vrot.slane %v2666, 4
      %v2669 = vshll.u32 %v2323, 16
      %v2671 = vrot.slane %v2669, 5
      %v2672 = vor.u32 %v2668, %v2671
      %v2673 = vrot.slane %v2672, 4
      %v2675 = vshll.u32 %v2324, 16
      %v2677 = vrot.slane %v2675, 5
      %v2678 = vsel %vm1234, %v2673, %v2677
      %v2679 = vshrl.u32 %v2324, 16
      %v2681 = vrot.slane %v2679, 4
      %v2682 = vor.u32 %v2681, %v2677
      %v2683 = vrot.slane %v2682, 4
      %v2685 = vshll.u32 %v2325, 16
      %v2687 = vrot.slane %v2685, 5
      %v2688 = vsel %vm1234, %v2683, %v2687
      %v2690 = vshrl.u32 %v2326, 16
      %v2692 = vrot.slane %v2690, 4
      %v2693 = vshll.u32 %v2326, 16
      %v2695 = vrot.slane %v2693, 5
      %v2696 = vor.u32 %v2692, %v2695
      %v2697 = vrot.slane %v2696, 4
      %v2699 = vshll.u32 %v2327, 16
      %v2701 = vrot.slane %v2699, 5
      %v2702 = vsel %vm1234, %v2697, %v2701
      %v2703 = vshrl.u32 %v2327, 16
      %v2705 = vrot.slane %v2703, 4
      %v2706 = vor.u32 %v2705, %v2701
      %v2707 = vrot.slane %v2706, 4
      %v2709 = vshll.u32 %v2328, 16
      %v2711 = vrot.slane %v2709, 5
      %v2712 = vsel %vm1234, %v2707, %v2711
      %2745 = vst.msk [vmem:[#allocation3 + $0x4] sm:$0xf] %vm921, %v2342
      %2746 = vst.msk [vmem:[#allocation3 + $0x10] sm:$0xf] %vm921, %v2352
      %2747 = vst.msk [vmem:[#allocation3 + $0x1c] sm:$0xf] %vm921, %v2366
      %2748 = vst.msk [vmem:[#allocation3 + $0x28] sm:$0xf] %vm921, %v2376
      %2749 = vst.msk [vmem:[#allocation3 + $0x34] sm:$0xf] %vm921, %v2390
      %2750 = vst.msk [vmem:[#allocation3 + $0x40] sm:$0xf] %vm921, %v2400
      %2751 = vst.msk [vmem:[#allocation3 + $0x4c] sm:$0xf] %vm921, %v2414
      %2752 = vst.msk [vmem:[#allocation3 + $0x58] sm:$0xf] %vm921, %v2424
      %2753 = vst.msk [vmem:[#allocation3 + $0x64] sm:$0xf] %vm921, %v2438
      %2754 = vst.msk [vmem:[#allocation3 + $0x70] sm:$0xf] %vm921, %v2448
      %2755 = vst.msk [vmem:[#allocation3 + $0x7c] sm:$0xf] %vm921, %v2462
      %2756 = vst.msk [vmem:[#allocation3 + $0x88] sm:$0xf] %vm921, %v2472
      %2757 = vst.msk [vmem:[#allocation3 + $0x94] sm:$0xf] %vm921, %v2486
      %2758 = vst.msk [vmem:[#allocation3 + $0xa0] sm:$0xf] %vm921, %v2496
      %2759 = vst.msk [vmem:[#allocation3 + $0xac] sm:$0xf] %vm921, %v2510
      %2760 = vst.msk [vmem:[#allocation3 + $0xb8] sm:$0xf] %vm921, %v2520
      %2761 = vst.msk [vmem:[#allocation3 + $0xc4] sm:$0xf] %vm921, %v2534
      %2762 = vst.msk [vmem:[#allocation3 + $0xd0] sm:$0xf] %vm921, %v2544
      %2763 = vst.msk [vmem:[#allocation3 + $0xdc] sm:$0xf] %vm921, %v2558
      %2764 = vst.msk [vmem:[#allocation3 + $0xe8] sm:$0xf] %vm921, %v2568
      %2765 = vst.msk [vmem:[#allocation3 + $0xf4] sm:$0xf] %vm921, %v2582
      %2766 = vst.msk [vmem:[#allocation3 + $0x100] sm:$0xf] %vm921, %v2592
      %2767 = vst.msk [vmem:[#allocation3 + $0x10c] sm:$0xf] %vm921, %v2606
      %2768 = vst.msk [vmem:[#allocation3 + $0x118] sm:$0xf] %vm921, %v2616
      %2769 = vst.msk [vmem:[#allocation3 + $0x124] sm:$0xf] %vm921, %v2630
      %2770 = vst.msk [vmem:[#allocation3 + $0x130] sm:$0xf] %vm921, %v2640
      %2771 = vst.msk [vmem:[#allocation3 + $0x13c] sm:$0xf] %vm921, %v2654
      %2772 = vst.msk [vmem:[#allocation3 + $0x148] sm:$0xf] %vm921, %v2664
      %2773 = vst.msk [vmem:[#allocation3 + $0x154] sm:$0xf] %vm921, %v2678
      %2774 = vst.msk [vmem:[#allocation3 + $0x160] sm:$0xf] %vm921, %v2688
      %2775 = vst.msk [vmem:[#allocation3 + $0x16c] sm:$0xf] %vm921, %v2702
      %2776 = vst.msk [vmem:[#allocation3 + $0x178] sm:$0xf] %vm921, %v2712
      %v2777 = vld [vmem:[%s915] sm:$0xe]
      %v2778 = vld [vmem:[%s915 + $0x4] sm:$0xf]
      %v2779 = vld [vmem:[%s915 + $0x8] sm:$0x1]
      %v2780 = vld [vmem:[%s915 + $0xc] sm:$0xe]
      %v2781 = vld [vmem:[%s915 + $0x10] sm:$0xf]
      %v2782 = vld [vmem:[%s915 + $0x14] sm:$0x1]
      %v2783 = vld [vmem:[%s915 + $0x18] sm:$0xe]
      %v2784 = vld [vmem:[%s915 + $0x1c] sm:$0xf]
      %v2785 = vld [vmem:[%s915 + $0x20] sm:$0x1]
      %v2786 = vld [vmem:[%s915 + $0x24] sm:$0xe]
      %v2787 = vld [vmem:[%s915 + $0x28] sm:$0xf]
      %v2788 = vld [vmem:[%s915 + $0x2c] sm:$0x1]
      %v2789 = vld [vmem:[%s915 + $0x30] sm:$0xe]
      %v2790 = vld [vmem:[%s915 + $0x34] sm:$0xf]
      %v2791 = vld [vmem:[%s915 + $0x38] sm:$0x1]
      %v2792 = vld [vmem:[%s915 + $0x3c] sm:$0xe]
      %v2793 = vld [vmem:[%s915 + $0x40] sm:$0xf]
      %v2794 = vld [vmem:[%s915 + $0x44] sm:$0x1]
      %v2795 = vld [vmem:[%s915 + $0x48] sm:$0xe]
      %v2796 = vld [vmem:[%s915 + $0x4c] sm:$0xf]
      %v2797 = vld [vmem:[%s915 + $0x50] sm:$0x1]
      %v2798 = vld [vmem:[%s915 + $0x54] sm:$0xe]
      %v2799 = vld [vmem:[%s915 + $0x58] sm:$0xf]
      %v2800 = vld [vmem:[%s915 + $0x5c] sm:$0x1]
      %v2801 = vld [vmem:[%s915 + $0x60] sm:$0xe]
      %v2802 = vld [vmem:[%s915 + $0x64] sm:$0xf]
      %v2803 = vld [vmem:[%s915 + $0x68] sm:$0x1]
      %v2804 = vld [vmem:[%s915 + $0x6c] sm:$0xe]
      %v2805 = vld [vmem:[%s915 + $0x70] sm:$0xf]
      %v2806 = vld [vmem:[%s915 + $0x74] sm:$0x1]
      %v2807 = vld [vmem:[%s915 + $0x78] sm:$0xe]
      %v2808 = vld [vmem:[%s915 + $0x7c] sm:$0xf]
      %v2809 = vld [vmem:[%s915 + $0x80] sm:$0x1]
      %v2810 = vld [vmem:[%s915 + $0x84] sm:$0xe]
      %v2811 = vld [vmem:[%s915 + $0x88] sm:$0xf]
      %v2812 = vld [vmem:[%s915 + $0x8c] sm:$0x1]
      %v2813 = vld [vmem:[%s915 + $0x90] sm:$0xe]
      %v2814 = vld [vmem:[%s915 + $0x94] sm:$0xf]
      %v2815 = vld [vmem:[%s915 + $0x98] sm:$0x1]
      %v2816 = vld [vmem:[%s915 + $0x9c] sm:$0xe]
      %v2817 = vld [vmem:[%s915 + $0xa0] sm:$0xf]
      %v2818 = vld [vmem:[%s915 + $0xa4] sm:$0x1]
      %v2819 = vld [vmem:[%s915 + $0xa8] sm:$0xe]
      %v2820 = vld [vmem:[%s915 + $0xac] sm:$0xf]
      %v2821 = vld [vmem:[%s915 + $0xb0] sm:$0x1]
      %v2822 = vld [vmem:[%s915 + $0xb4] sm:$0xe]
      %v2823 = vld [vmem:[%s915 + $0xb8] sm:$0xf]
      %v2824 = vld [vmem:[%s915 + $0xbc] sm:$0x1]
      %v2873 = vrot.slane %v2777, 5
      %v2874 = vrot.slane %v2873, 4
      %v2875 = vrot.slane %v2778, 5
      %v2876 = vsel %vm1846, %v2874, %v2875
      %v2877 = vrot.slane %v2875, 4
      %v2878 = vrot.slane %v2779, 5
      %v2879 = vsel %vm1846, %v2877, %v2878
      %v2880 = vrot.slane %v2780, 5
      %v2881 = vrot.slane %v2880, 4
      %v2882 = vrot.slane %v2781, 5
      %v2883 = vsel %vm1846, %v2881, %v2882
      %v2884 = vrot.slane %v2882, 4
      %v2885 = vrot.slane %v2782, 5
      %v2886 = vsel %vm1846, %v2884, %v2885
      %v2887 = vrot.slane %v2783, 5
      %v2888 = vrot.slane %v2887, 4
      %v2889 = vrot.slane %v2784, 5
      %v2890 = vsel %vm1846, %v2888, %v2889
      %v2891 = vrot.slane %v2889, 4
      %v2892 = vrot.slane %v2785, 5
      %v2893 = vsel %vm1846, %v2891, %v2892
      %v2894 = vrot.slane %v2786, 5
      %v2895 = vrot.slane %v2894, 4
      %v2896 = vrot.slane %v2787, 5
      %v2897 = vsel %vm1846, %v2895, %v2896
      %v2898 = vrot.slane %v2896, 4
      %v2899 = vrot.slane %v2788, 5
      %v2900 = vsel %vm1846, %v2898, %v2899
      %v2901 = vrot.slane %v2789, 5
      %v2902 = vrot.slane %v2901, 4
      %v2903 = vrot.slane %v2790, 5
      %v2904 = vsel %vm1846, %v2902, %v2903
      %v2905 = vrot.slane %v2903, 4
      %v2906 = vrot.slane %v2791, 5
      %v2907 = vsel %vm1846, %v2905, %v2906
      %v2908 = vrot.slane %v2792, 5
      %v2909 = vrot.slane %v2908, 4
      %v2910 = vrot.slane %v2793, 5
      %v2911 = vsel %vm1846, %v2909, %v2910
      %v2912 = vrot.slane %v2910, 4
      %v2913 = vrot.slane %v2794, 5
      %v2914 = vsel %vm1846, %v2912, %v2913
      %v2915 = vrot.slane %v2795, 5
      %v2916 = vrot.slane %v2915, 4
      %v2917 = vrot.slane %v2796, 5
      %v2918 = vsel %vm1846, %v2916, %v2917
      %v2919 = vrot.slane %v2917, 4
      %v2920 = vrot.slane %v2797, 5
      %v2921 = vsel %vm1846, %v2919, %v2920
      %v2922 = vrot.slane %v2798, 5
      %v2923 = vrot.slane %v2922, 4
      %v2924 = vrot.slane %v2799, 5
      %v2925 = vsel %vm1846, %v2923, %v2924
      %v2926 = vrot.slane %v2924, 4
      %v2927 = vrot.slane %v2800, 5
      %v2928 = vsel %vm1846, %v2926, %v2927
      %v2929 = vrot.slane %v2801, 5
      %v2930 = vrot.slane %v2929, 4
      %v2931 = vrot.slane %v2802, 5
      %v2932 = vsel %vm1846, %v2930, %v2931
      %v2933 = vrot.slane %v2931, 4
      %v2934 = vrot.slane %v2803, 5
      %v2935 = vsel %vm1846, %v2933, %v2934
      %v2936 = vrot.slane %v2804, 5
      %v2937 = vrot.slane %v2936, 4
      %v2938 = vrot.slane %v2805, 5
      %v2939 = vsel %vm1846, %v2937, %v2938
      %v2940 = vrot.slane %v2938, 4
      %v2941 = vrot.slane %v2806, 5
      %v2942 = vsel %vm1846, %v2940, %v2941
      %v2943 = vrot.slane %v2807, 5
      %v2944 = vrot.slane %v2943, 4
      %v2945 = vrot.slane %v2808, 5
      %v2946 = vsel %vm1846, %v2944, %v2945
      %v2947 = vrot.slane %v2945, 4
      %v2948 = vrot.slane %v2809, 5
      %v2949 = vsel %vm1846, %v2947, %v2948
      %v2950 = vrot.slane %v2810, 5
      %v2951 = vrot.slane %v2950, 4
      %v2952 = vrot.slane %v2811, 5
      %v2953 = vsel %vm1846, %v2951, %v2952
      %v2954 = vrot.slane %v2952, 4
      %v2955 = vrot.slane %v2812, 5
      %v2956 = vsel %vm1846, %v2954, %v2955
      %v2957 = vrot.slane %v2813, 5
      %v2958 = vrot.slane %v2957, 4
      %v2959 = vrot.slane %v2814, 5
      %v2960 = vsel %vm1846, %v2958, %v2959
      %v2961 = vrot.slane %v2959, 4
      %v2962 = vrot.slane %v2815, 5
      %v2963 = vsel %vm1846, %v2961, %v2962
      %v2964 = vrot.slane %v2816, 5
      %v2965 = vrot.slane %v2964, 4
      %v2966 = vrot.slane %v2817, 5
      %v2967 = vsel %vm1846, %v2965, %v2966
      %v2968 = vrot.slane %v2966, 4
      %v2969 = vrot.slane %v2818, 5
      %v2970 = vsel %vm1846, %v2968, %v2969
      %v2971 = vrot.slane %v2819, 5
      %v2972 = vrot.slane %v2971, 4
      %v2973 = vrot.slane %v2820, 5
      %v2974 = vsel %vm1846, %v2972, %v2973
      %v2975 = vrot.slane %v2973, 4
      %v2976 = vrot.slane %v2821, 5
      %v2977 = vsel %vm1846, %v2975, %v2976
      %v2978 = vrot.slane %v2822, 5
      %v2979 = vrot.slane %v2978, 4
      %v2980 = vrot.slane %v2823, 5
      %v2981 = vsel %vm1846, %v2979, %v2980
      %v2982 = vrot.slane %v2980, 4
      %v2983 = vrot.slane %v2824, 5
      %v2984 = vsel %vm1846, %v2982, %v2983
      %2985 = vrot.lane.b32.xlu0 %v2876, 32
      %v2986 = vpop.permute.xlu0 %2985
      %2987 = vrot.lane.b32.xlu0 %v2879, 32
      %v2988 = vpop.permute.xlu0 %2987
      %2989 = vrot.lane.b32.xlu0 %v2883, 32
      %v2990 = vpop.permute.xlu0 %2989
      %2991 = vrot.lane.b32.xlu0 %v2886, 32
      %v2992 = vpop.permute.xlu0 %2991
      %2993 = vrot.lane.b32.xlu0 %v2890, 32
      %v2994 = vpop.permute.xlu0 %2993
      %2995 = vrot.lane.b32.xlu0 %v2893, 32
      %v2996 = vpop.permute.xlu0 %2995
      %2997 = vrot.lane.b32.xlu0 %v2897, 32
      %v2998 = vpop.permute.xlu0 %2997
      %2999 = vrot.lane.b32.xlu0 %v2900, 32
      %v3000 = vpop.permute.xlu0 %2999
      %3001 = vrot.lane.b32.xlu0 %v2904, 32
      %v3002 = vpop.permute.xlu0 %3001
      %3003 = vrot.lane.b32.xlu0 %v2907, 32
      %v3004 = vpop.permute.xlu0 %3003
      %3005 = vrot.lane.b32.xlu0 %v2911, 32
      %v3006 = vpop.permute.xlu0 %3005
      %3007 = vrot.lane.b32.xlu0 %v2914, 32
      %v3008 = vpop.permute.xlu0 %3007
      %3009 = vrot.lane.b32.xlu0 %v2918, 32
      %v3010 = vpop.permute.xlu0 %3009
      %3011 = vrot.lane.b32.xlu0 %v2921, 32
      %v3012 = vpop.permute.xlu0 %3011
      %3013 = vrot.lane.b32.xlu0 %v2925, 32
      %v3014 = vpop.permute.xlu0 %3013
      %3015 = vrot.lane.b32.xlu0 %v2928, 32
      %v3016 = vpop.permute.xlu0 %3015
      %3017 = vrot.lane.b32.xlu0 %v2932, 32
      %v3018 = vpop.permute.xlu0 %3017
      %3019 = vrot.lane.b32.xlu0 %v2935, 32
      %v3020 = vpop.permute.xlu0 %3019
      %3021 = vrot.lane.b32.xlu0 %v2939, 32
      %v3022 = vpop.permute.xlu0 %3021
      %3023 = vrot.lane.b32.xlu0 %v2942, 32
      %v3024 = vpop.permute.xlu0 %3023
      %3025 = vrot.lane.b32.xlu0 %v2946, 32
      %v3026 = vpop.permute.xlu0 %3025
      %3027 = vrot.lane.b32.xlu0 %v2949, 32
      %v3028 = vpop.permute.xlu0 %3027
      %3029 = vrot.lane.b32.xlu0 %v2953, 32
      %v3030 = vpop.permute.xlu0 %3029
      %3031 = vrot.lane.b32.xlu0 %v2956, 32
      %v3032 = vpop.permute.xlu0 %3031
      %3033 = vrot.lane.b32.xlu0 %v2960, 32
      %v3034 = vpop.permute.xlu0 %3033
      %3035 = vrot.lane.b32.xlu0 %v2963, 32
      %v3036 = vpop.permute.xlu0 %3035
      %3037 = vrot.lane.b32.xlu0 %v2967, 32
      %v3038 = vpop.permute.xlu0 %3037
      %3039 = vrot.lane.b32.xlu0 %v2970, 32
      %v3040 = vpop.permute.xlu0 %3039
      %3041 = vrot.lane.b32.xlu0 %v2974, 32
      %v3042 = vpop.permute.xlu0 %3041
      %3043 = vrot.lane.b32.xlu0 %v2977, 32
      %v3044 = vpop.permute.xlu0 %3043
      %3045 = vrot.lane.b32.xlu0 %v2981, 32
      %v3046 = vpop.permute.xlu0 %3045
      %3047 = vrot.lane.b32.xlu0 %v2984, 32
      %v3048 = vpop.permute.xlu0 %3047
      %3081 = vst.msk [vmem:[#allocation3 + $0x4] sm:$0xf] %vm1715, %v2986
      %3082 = vst.msk [vmem:[#allocation3 + $0x10] sm:$0xf] %vm1715, %v2988
      %3083 = vst.msk [vmem:[#allocation3 + $0x1c] sm:$0xf] %vm1715, %v2990
      %3084 = vst.msk [vmem:[#allocation3 + $0x28] sm:$0xf] %vm1715, %v2992
      %3085 = vst.msk [vmem:[#allocation3 + $0x34] sm:$0xf] %vm1715, %v2994
      %3086 = vst.msk [vmem:[#allocation3 + $0x40] sm:$0xf] %vm1715, %v2996
      %3087 = vst.msk [vmem:[#allocation3 + $0x4c] sm:$0xf] %vm1715, %v2998
      %3088 = vst.msk [vmem:[#allocation3 + $0x58] sm:$0xf] %vm1715, %v3000
      %3089 = vst.msk [vmem:[#allocation3 + $0x64] sm:$0xf] %vm1715, %v3002
      %3090 = vst.msk [vmem:[#allocation3 + $0x70] sm:$0xf] %vm1715, %v3004
      %3091 = vst.msk [vmem:[#allocation3 + $0x7c] sm:$0xf] %vm1715, %v3006
      %3092 = vst.msk [vmem:[#allocation3 + $0x88] sm:$0xf] %vm1715, %v3008
      %3093 = vst.msk [vmem:[#allocation3 + $0x94] sm:$0xf] %vm1715, %v3010
      %3094 = vst.msk [vmem:[#allocation3 + $0xa0] sm:$0xf] %vm1715, %v3012
      %3095 = vst.msk [vmem:[#allocation3 + $0xac] sm:$0xf] %vm1715, %v3014
      %3096 = vst.msk [vmem:[#allocation3 + $0xb8] sm:$0xf] %vm1715, %v3016
      %3097 = vst.msk [vmem:[#allocation3 + $0xc4] sm:$0xf] %vm1715, %v3018
      %3098 = vst.msk [vmem:[#allocation3 + $0xd0] sm:$0xf] %vm1715, %v3020
      %3099 = vst.msk [vmem:[#allocation3 + $0xdc] sm:$0xf] %vm1715, %v3022
      %3100 = vst.msk [vmem:[#allocation3 + $0xe8] sm:$0xf] %vm1715, %v3024
      %3101 = vst.msk [vmem:[#allocation3 + $0xf4] sm:$0xf] %vm1715, %v3026
      %3102 = vst.msk [vmem:[#allocation3 + $0x100] sm:$0xf] %vm1715, %v3028
      %3103 = vst.msk [vmem:[#allocation3 + $0x10c] sm:$0xf] %vm1715, %v3030
      %3104 = vst.msk [vmem:[#allocation3 + $0x118] sm:$0xf] %vm1715, %v3032
      %3105 = vst.msk [vmem:[#allocation3 + $0x124] sm:$0xf] %vm1715, %v3034
      %3106 = vst.msk [vmem:[#allocation3 + $0x130] sm:$0xf] %vm1715, %v3036
      %3107 = vst.msk [vmem:[#allocation3 + $0x13c] sm:$0xf] %vm1715, %v3038
      %3108 = vst.msk [vmem:[#allocation3 + $0x148] sm:$0xf] %vm1715, %v3040
      %3109 = vst.msk [vmem:[#allocation3 + $0x154] sm:$0xf] %vm1715, %v3042
      %3110 = vst.msk [vmem:[#allocation3 + $0x160] sm:$0xf] %vm1715, %v3044
      %3111 = vst.msk [vmem:[#allocation3 + $0x16c] sm:$0xf] %vm1715, %v3046
      %3112 = vst.msk [vmem:[#allocation3 + $0x178] sm:$0xf] %vm1715, %v3048
      %s3113 = scalar_lea.vmem [#allocation2], 24
      %v3114 = vld [vmem:[%s3113] sm:$0xf]
      %v3115 = vld [vmem:[%s3113 + $0x4] sm:$0xf]
      %v3116 = vld [vmem:[%s3113 + $0xc] sm:$0xf]
      %v3117 = vld [vmem:[%s3113 + $0x10] sm:$0xf]
      %v3118 = vld [vmem:[%s3113 + $0x18] sm:$0xf]
      %v3119 = vld [vmem:[%s3113 + $0x1c] sm:$0xf]
      %v3120 = vld [vmem:[%s3113 + $0x24] sm:$0xf]
      %v3121 = vld [vmem:[%s3113 + $0x28] sm:$0xf]
      %v3122 = vld [vmem:[%s3113 + $0x30] sm:$0xf]
      %v3123 = vld [vmem:[%s3113 + $0x34] sm:$0xf]
      %v3124 = vld [vmem:[%s3113 + $0x3c] sm:$0xf]
      %v3125 = vld [vmem:[%s3113 + $0x40] sm:$0xf]
      %v3126 = vld [vmem:[%s3113 + $0x48] sm:$0xf]
      %v3127 = vld [vmem:[%s3113 + $0x4c] sm:$0xf]
      %v3128 = vld [vmem:[%s3113 + $0x54] sm:$0xf]
      %v3129 = vld [vmem:[%s3113 + $0x58] sm:$0xf]
      %v3130 = vld [vmem:[%s3113 + $0x60] sm:$0xf]
      %v3131 = vld [vmem:[%s3113 + $0x64] sm:$0xf]
      %v3132 = vld [vmem:[%s3113 + $0x6c] sm:$0xf]
      %v3133 = vld [vmem:[%s3113 + $0x70] sm:$0xf]
      %v3134 = vld [vmem:[%s3113 + $0x78] sm:$0xf]
      %v3135 = vld [vmem:[%s3113 + $0x7c] sm:$0xf]
      %v3136 = vld [vmem:[%s3113 + $0x84] sm:$0xf]
      %v3137 = vld [vmem:[%s3113 + $0x88] sm:$0xf]
      %v3138 = vld [vmem:[%s3113 + $0x90] sm:$0xf]
      %v3139 = vld [vmem:[%s3113 + $0x94] sm:$0xf]
      %v3140 = vld [vmem:[%s3113 + $0x9c] sm:$0xf]
      %v3141 = vld [vmem:[%s3113 + $0xa0] sm:$0xf]
      %v3142 = vld [vmem:[%s3113 + $0xa8] sm:$0xf]
      %v3143 = vld [vmem:[%s3113 + $0xac] sm:$0xf]
      %v3144 = vld [vmem:[%s3113 + $0xb4] sm:$0xf]
      %v3145 = vld [vmem:[%s3113 + $0xb8] sm:$0xf]
      %3178 = vrot.lane.b32.xlu0 %v3114, 64
      %v3179 = vpop.permute.xlu0 %3178
      %3180 = vrot.lane.b32.xlu0 %v3115, 64
      %v3181 = vpop.permute.xlu0 %3180
      %3182 = vrot.lane.b32.xlu0 %v3116, 64
      %v3183 = vpop.permute.xlu0 %3182
      %3184 = vrot.lane.b32.xlu0 %v3117, 64
      %v3185 = vpop.permute.xlu0 %3184
      %3186 = vrot.lane.b32.xlu0 %v3118, 64
      %v3187 = vpop.permute.xlu0 %3186
      %3188 = vrot.lane.b32.xlu0 %v3119, 64
      %v3189 = vpop.permute.xlu0 %3188
      %3190 = vrot.lane.b32.xlu0 %v3120, 64
      %v3191 = vpop.permute.xlu0 %3190
      %3192 = vrot.lane.b32.xlu0 %v3121, 64
      %v3193 = vpop.permute.xlu0 %3192
      %3194 = vrot.lane.b32.xlu0 %v3122, 64
      %v3195 = vpop.permute.xlu0 %3194
      %3196 = vrot.lane.b32.xlu0 %v3123, 64
      %v3197 = vpop.permute.xlu0 %3196
      %3198 = vrot.lane.b32.xlu0 %v3124, 64
      %v3199 = vpop.permute.xlu0 %3198
      %3200 = vrot.lane.b32.xlu0 %v3125, 64
      %v3201 = vpop.permute.xlu0 %3200
      %3202 = vrot.lane.b32.xlu0 %v3126, 64
      %v3203 = vpop.permute.xlu0 %3202
      %3204 = vrot.lane.b32.xlu0 %v3127, 64
      %v3205 = vpop.permute.xlu0 %3204
      %3206 = vrot.lane.b32.xlu0 %v3128, 64
      %v3207 = vpop.permute.xlu0 %3206
      %3208 = vrot.lane.b32.xlu0 %v3129, 64
      %v3209 = vpop.permute.xlu0 %3208
      %3210 = vrot.lane.b32.xlu0 %v3130, 64
      %v3211 = vpop.permute.xlu0 %3210
      %3212 = vrot.lane.b32.xlu0 %v3131, 64
      %v3213 = vpop.permute.xlu0 %3212
      %3214 = vrot.lane.b32.xlu0 %v3132, 64
      %v3215 = vpop.permute.xlu0 %3214
      %3216 = vrot.lane.b32.xlu0 %v3133, 64
      %v3217 = vpop.permute.xlu0 %3216
      %3218 = vrot.lane.b32.xlu0 %v3134, 64
      %v3219 = vpop.permute.xlu0 %3218
      %3220 = vrot.lane.b32.xlu0 %v3135, 64
      %v3221 = vpop.permute.xlu0 %3220
      %3222 = vrot.lane.b32.xlu0 %v3136, 64
      %v3223 = vpop.permute.xlu0 %3222
      %3224 = vrot.lane.b32.xlu0 %v3137, 64
      %v3225 = vpop.permute.xlu0 %3224
      %3226 = vrot.lane.b32.xlu0 %v3138, 64
      %v3227 = vpop.permute.xlu0 %3226
      %3228 = vrot.lane.b32.xlu0 %v3139, 64
      %v3229 = vpop.permute.xlu0 %3228
      %3230 = vrot.lane.b32.xlu0 %v3140, 64
      %v3231 = vpop.permute.xlu0 %3230
      %3232 = vrot.lane.b32.xlu0 %v3141, 64
      %v3233 = vpop.permute.xlu0 %3232
      %3234 = vrot.lane.b32.xlu0 %v3142, 64
      %v3235 = vpop.permute.xlu0 %3234
      %3236 = vrot.lane.b32.xlu0 %v3143, 64
      %v3237 = vpop.permute.xlu0 %3236
      %3238 = vrot.lane.b32.xlu0 %v3144, 64
      %v3239 = vpop.permute.xlu0 %3238
      %3240 = vrot.lane.b32.xlu0 %v3145, 64
      %v3241 = vpop.permute.xlu0 %3240
      %3274 = vst.msk [vmem:[#allocation3 + $0x4] sm:$0xf] %vm2055, %v3179
      %3275 = vst.msk [vmem:[#allocation3 + $0x10] sm:$0xf] %vm2055, %v3181
      %3276 = vst.msk [vmem:[#allocation3 + $0x1c] sm:$0xf] %vm2055, %v3183
      %3277 = vst.msk [vmem:[#allocation3 + $0x28] sm:$0xf] %vm2055, %v3185
      %3278 = vst.msk [vmem:[#allocation3 + $0x34] sm:$0xf] %vm2055, %v3187
      %3279 = vst.msk [vmem:[#allocation3 + $0x40] sm:$0xf] %vm2055, %v3189
      %3280 = vst.msk [vmem:[#allocation3 + $0x4c] sm:$0xf] %vm2055, %v3191
      %3281 = vst.msk [vmem:[#allocation3 + $0x58] sm:$0xf] %vm2055, %v3193
      %3282 = vst.msk [vmem:[#allocation3 + $0x64] sm:$0xf] %vm2055, %v3195
      %3283 = vst.msk [vmem:[#allocation3 + $0x70] sm:$0xf] %vm2055, %v3197
      %3284 = vst.msk [vmem:[#allocation3 + $0x7c] sm:$0xf] %vm2055, %v3199
      %3285 = vst.msk [vmem:[#allocation3 + $0x88] sm:$0xf] %vm2055, %v3201
      %3286 = vst.msk [vmem:[#allocation3 + $0x94] sm:$0xf] %vm2055, %v3203
      %3287 = vst.msk [vmem:[#allocation3 + $0xa0] sm:$0xf] %vm2055, %v3205
      %3288 = vst.msk [vmem:[#allocation3 + $0xac] sm:$0xf] %vm2055, %v3207
      %3289 = vst.msk [vmem:[#allocation3 + $0xb8] sm:$0xf] %vm2055, %v3209
      %3290 = vst.msk [vmem:[#allocation3 + $0xc4] sm:$0xf] %vm2055, %v3211
      %3291 = vst.msk [vmem:[#allocation3 + $0xd0] sm:$0xf] %vm2055, %v3213
      %3292 = vst.msk [vmem:[#allocation3 + $0xdc] sm:$0xf] %vm2055, %v3215
      %3293 = vst.msk [vmem:[#allocation3 + $0xe8] sm:$0xf] %vm2055, %v3217
      %3294 = vst.msk [vmem:[#allocation3 + $0xf4] sm:$0xf] %vm2055, %v3219
      %3295 = vst.msk [vmem:[#allocation3 + $0x100] sm:$0xf] %vm2055, %v3221
      %3296 = vst.msk [vmem:[#allocation3 + $0x10c] sm:$0xf] %vm2055, %v3223
      %3297 = vst.msk [vmem:[#allocation3 + $0x118] sm:$0xf] %vm2055, %v3225
      %3298 = vst.msk [vmem:[#allocation3 + $0x124] sm:$0xf] %vm2055, %v3227
      %3299 = vst.msk [vmem:[#allocation3 + $0x130] sm:$0xf] %vm2055, %v3229
      %3300 = vst.msk [vmem:[#allocation3 + $0x13c] sm:$0xf] %vm2055, %v3231
      %3301 = vst.msk [vmem:[#allocation3 + $0x148] sm:$0xf] %vm2055, %v3233
      %3302 = vst.msk [vmem:[#allocation3 + $0x154] sm:$0xf] %vm2055, %v3235
      %3303 = vst.msk [vmem:[#allocation3 + $0x160] sm:$0xf] %vm2055, %v3237
      %3304 = vst.msk [vmem:[#allocation3 + $0x16c] sm:$0xf] %vm2055, %v3239
      %3305 = vst.msk [vmem:[#allocation3 + $0x178] sm:$0xf] %vm2055, %v3241
      %v3306 = vld [vmem:[%s3113] sm:$0xf]
      %v3307 = vld [vmem:[%s3113 + $0x4] sm:$0xf]
      %v3308 = vld [vmem:[%s3113 + $0x8] sm:$0x1]
      %v3309 = vld [vmem:[%s3113 + $0xc] sm:$0xf]
      %v3310 = vld [vmem:[%s3113 + $0x10] sm:$0xf]
      %v3311 = vld [vmem:[%s3113 + $0x14] sm:$0x1]
      %v3312 = vld [vmem:[%s3113 + $0x18] sm:$0xf]
      %v3313 = vld [vmem:[%s3113 + $0x1c] sm:$0xf]
      %v3314 = vld [vmem:[%s3113 + $0x20] sm:$0x1]
      %v3315 = vld [vmem:[%s3113 + $0x24] sm:$0xf]
      %v3316 = vld [vmem:[%s3113 + $0x28] sm:$0xf]
      %v3317 = vld [vmem:[%s3113 + $0x2c] sm:$0x1]
      %v3318 = vld [vmem:[%s3113 + $0x30] sm:$0xf]
      %v3319 = vld [vmem:[%s3113 + $0x34] sm:$0xf]
      %v3320 = vld [vmem:[%s3113 + $0x38] sm:$0x1]
      %v3321 = vld [vmem:[%s3113 + $0x3c] sm:$0xf]
      %v3322 = vld [vmem:[%s3113 + $0x40] sm:$0xf]
      %v3323 = vld [vmem:[%s3113 + $0x44] sm:$0x1]
      %v3324 = vld [vmem:[%s3113 + $0x48] sm:$0xf]
      %v3325 = vld [vmem:[%s3113 + $0x4c] sm:$0xf]
      %v3326 = vld [vmem:[%s3113 + $0x50] sm:$0x1]
      %v3327 = vld [vmem:[%s3113 + $0x54] sm:$0xf]
      %v3328 = vld [vmem:[%s3113 + $0x58] sm:$0xf]
      %v3329 = vld [vmem:[%s3113 + $0x5c] sm:$0x1]
      %v3330 = vld [vmem:[%s3113 + $0x60] sm:$0xf]
      %v3331 = vld [vmem:[%s3113 + $0x64] sm:$0xf]
      %v3332 = vld [vmem:[%s3113 + $0x68] sm:$0x1]
      %v3333 = vld [vmem:[%s3113 + $0x6c] sm:$0xf]
      %v3334 = vld [vmem:[%s3113 + $0x70] sm:$0xf]
      %v3335 = vld [vmem:[%s3113 + $0x74] sm:$0x1]
      %v3336 = vld [vmem:[%s3113 + $0x78] sm:$0xf]
      %v3337 = vld [vmem:[%s3113 + $0x7c] sm:$0xf]
      %v3338 = vld [vmem:[%s3113 + $0x80] sm:$0x1]
      %v3339 = vld [vmem:[%s3113 + $0x84] sm:$0xf]
      %v3340 = vld [vmem:[%s3113 + $0x88] sm:$0xf]
      %v3341 = vld [vmem:[%s3113 + $0x8c] sm:$0x1]
      %v3342 = vld [vmem:[%s3113 + $0x90] sm:$0xf]
      %v3343 = vld [vmem:[%s3113 + $0x94] sm:$0xf]
      %v3344 = vld [vmem:[%s3113 + $0x98] sm:$0x1]
      %v3345 = vld [vmem:[%s3113 + $0x9c] sm:$0xf]
      %v3346 = vld [vmem:[%s3113 + $0xa0] sm:$0xf]
      %v3347 = vld [vmem:[%s3113 + $0xa4] sm:$0x1]
      %v3348 = vld [vmem:[%s3113 + $0xa8] sm:$0xf]
      %v3349 = vld [vmem:[%s3113 + $0xac] sm:$0xf]
      %v3350 = vld [vmem:[%s3113 + $0xb0] sm:$0x1]
      %v3351 = vld [vmem:[%s3113 + $0xb4] sm:$0xf]
      %v3352 = vld [vmem:[%s3113 + $0xb8] sm:$0xf]
      %v3353 = vld [vmem:[%s3113 + $0xbc] sm:$0x1]
      %v3355 = vshrl.u32 %v3306, 16
      %v3357 = vrot.slane %v3355, 4
      %v3358 = vshll.u32 %v3306, 16
      %v3360 = vrot.slane %v3358, 5
      %v3361 = vor.u32 %v3357, %v3360
      %v3362 = vrot.slane %v3361, 4
      %v3364 = vshll.u32 %v3307, 16
      %v3366 = vrot.slane %v3364, 5
      %v3367 = vsel %vm1234, %v3362, %v3366
      %v3368 = vshrl.u32 %v3307, 16
      %v3370 = vrot.slane %v3368, 4
      %v3371 = vor.u32 %v3370, %v3366
      %v3372 = vrot.slane %v3371, 4
      %v3374 = vshll.u32 %v3308, 16
      %v3376 = vrot.slane %v3374, 5
      %v3377 = vsel %vm1234, %v3372, %v3376
      %v3379 = vshrl.u32 %v3309, 16
      %v3381 = vrot.slane %v3379, 4
      %v3382 = vshll.u32 %v3309, 16
      %v3384 = vrot.slane %v3382, 5
      %v3385 = vor.u32 %v3381, %v3384
      %v3386 = vrot.slane %v3385, 4
      %v3388 = vshll.u32 %v3310, 16
      %v3390 = vrot.slane %v3388, 5
      %v3391 = vsel %vm1234, %v3386, %v3390
      %v3392 = vshrl.u32 %v3310, 16
      %v3394 = vrot.slane %v3392, 4
      %v3395 = vor.u32 %v3394, %v3390
      %v3396 = vrot.slane %v3395, 4
      %v3398 = vshll.u32 %v3311, 16
      %v3400 = vrot.slane %v3398, 5
      %v3401 = vsel %vm1234, %v3396, %v3400
      %v3403 = vshrl.u32 %v3312, 16
      %v3405 = vrot.slane %v3403, 4
      %v3406 = vshll.u32 %v3312, 16
      %v3408 = vrot.slane %v3406, 5
      %v3409 = vor.u32 %v3405, %v3408
      %v3410 = vrot.slane %v3409, 4
      %v3412 = vshll.u32 %v3313, 16
      %v3414 = vrot.slane %v3412, 5
      %v3415 = vsel %vm1234, %v3410, %v3414
      %v3416 = vshrl.u32 %v3313, 16
      %v3418 = vrot.slane %v3416, 4
      %v3419 = vor.u32 %v3418, %v3414
      %v3420 = vrot.slane %v3419, 4
      %v3422 = vshll.u32 %v3314, 16
      %v3424 = vrot.slane %v3422, 5
      %v3425 = vsel %vm1234, %v3420, %v3424
      %v3427 = vshrl.u32 %v3315, 16
      %v3429 = vrot.slane %v3427, 4
      %v3430 = vshll.u32 %v3315, 16
      %v3432 = vrot.slane %v3430, 5
      %v3433 = vor.u32 %v3429, %v3432
      %v3434 = vrot.slane %v3433, 4
      %v3436 = vshll.u32 %v3316, 16
      %v3438 = vrot.slane %v3436, 5
      %v3439 = vsel %vm1234, %v3434, %v3438
      %v3440 = vshrl.u32 %v3316, 16
      %v3442 = vrot.slane %v3440, 4
      %v3443 = vor.u32 %v3442, %v3438
      %v3444 = vrot.slane %v3443, 4
      %v3446 = vshll.u32 %v3317, 16
      %v3448 = vrot.slane %v3446, 5
      %v3449 = vsel %vm1234, %v3444, %v3448
      %v3451 = vshrl.u32 %v3318, 16
      %v3453 = vrot.slane %v3451, 4
      %v3454 = vshll.u32 %v3318, 16
      %v3456 = vrot.slane %v3454, 5
      %v3457 = vor.u32 %v3453, %v3456
      %v3458 = vrot.slane %v3457, 4
      %v3460 = vshll.u32 %v3319, 16
      %v3462 = vrot.slane %v3460, 5
      %v3463 = vsel %vm1234, %v3458, %v3462
      %v3464 = vshrl.u32 %v3319, 16
      %v3466 = vrot.slane %v3464, 4
      %v3467 = vor.u32 %v3466, %v3462
      %v3468 = vrot.slane %v3467, 4
      %v3470 = vshll.u32 %v3320, 16
      %v3472 = vrot.slane %v3470, 5
      %v3473 = vsel %vm1234, %v3468, %v3472
      %v3475 = vshrl.u32 %v3321, 16
      %v3477 = vrot.slane %v3475, 4
      %v3478 = vshll.u32 %v3321, 16
      %v3480 = vrot.slane %v3478, 5
      %v3481 = vor.u32 %v3477, %v3480
      %v3482 = vrot.slane %v3481, 4
      %v3484 = vshll.u32 %v3322, 16
      %v3486 = vrot.slane %v3484, 5
      %v3487 = vsel %vm1234, %v3482, %v3486
      %v3488 = vshrl.u32 %v3322, 16
      %v3490 = vrot.slane %v3488, 4
      %v3491 = vor.u32 %v3490, %v3486
      %v3492 = vrot.slane %v3491, 4
      %v3494 = vshll.u32 %v3323, 16
      %v3496 = vrot.slane %v3494, 5
      %v3497 = vsel %vm1234, %v3492, %v3496
      %v3499 = vshrl.u32 %v3324, 16
      %v3501 = vrot.slane %v3499, 4
      %v3502 = vshll.u32 %v3324, 16
      %v3504 = vrot.slane %v3502, 5
      %v3505 = vor.u32 %v3501, %v3504
      %v3506 = vrot.slane %v3505, 4
      %v3508 = vshll.u32 %v3325, 16
      %v3510 = vrot.slane %v3508, 5
      %v3511 = vsel %vm1234, %v3506, %v3510
      %v3512 = vshrl.u32 %v3325, 16
      %v3514 = vrot.slane %v3512, 4
      %v3515 = vor.u32 %v3514, %v3510
      %v3516 = vrot.slane %v3515, 4
      %v3518 = vshll.u32 %v3326, 16
      %v3520 = vrot.slane %v3518, 5
      %v3521 = vsel %vm1234, %v3516, %v3520
      %v3523 = vshrl.u32 %v3327, 16
      %v3525 = vrot.slane %v3523, 4
      %v3526 = vshll.u32 %v3327, 16
      %v3528 = vrot.slane %v3526, 5
      %v3529 = vor.u32 %v3525, %v3528
      %v3530 = vrot.slane %v3529, 4
      %v3532 = vshll.u32 %v3328, 16
      %v3534 = vrot.slane %v3532, 5
      %v3535 = vsel %vm1234, %v3530, %v3534
      %v3536 = vshrl.u32 %v3328, 16
      %v3538 = vrot.slane %v3536, 4
      %v3539 = vor.u32 %v3538, %v3534
      %v3540 = vrot.slane %v3539, 4
      %v3542 = vshll.u32 %v3329, 16
      %v3544 = vrot.slane %v3542, 5
      %v3545 = vsel %vm1234, %v3540, %v3544
      %v3547 = vshrl.u32 %v3330, 16
      %v3549 = vrot.slane %v3547, 4
      %v3550 = vshll.u32 %v3330, 16
      %v3552 = vrot.slane %v3550, 5
      %v3553 = vor.u32 %v3549, %v3552
      %v3554 = vrot.slane %v3553, 4
      %v3556 = vshll.u32 %v3331, 16
      %v3558 = vrot.slane %v3556, 5
      %v3559 = vsel %vm1234, %v3554, %v3558
      %v3560 = vshrl.u32 %v3331, 16
      %v3562 = vrot.slane %v3560, 4
      %v3563 = vor.u32 %v3562, %v3558
      %v3564 = vrot.slane %v3563, 4
      %v3566 = vshll.u32 %v3332, 16
      %v3568 = vrot.slane %v3566, 5
      %v3569 = vsel %vm1234, %v3564, %v3568
      %v3571 = vshrl.u32 %v3333, 16
      %v3573 = vrot.slane %v3571, 4
      %v3574 = vshll.u32 %v3333, 16
      %v3576 = vrot.slane %v3574, 5
      %v3577 = vor.u32 %v3573, %v3576
      %v3578 = vrot.slane %v3577, 4
      %v3580 = vshll.u32 %v3334, 16
      %v3582 = vrot.slane %v3580, 5
      %v3583 = vsel %vm1234, %v3578, %v3582
      %v3584 = vshrl.u32 %v3334, 16
      %v3586 = vrot.slane %v3584, 4
      %v3587 = vor.u32 %v3586, %v3582
      %v3588 = vrot.slane %v3587, 4
      %v3590 = vshll.u32 %v3335, 16
      %v3592 = vrot.slane %v3590, 5
      %v3593 = vsel %vm1234, %v3588, %v3592
      %v3595 = vshrl.u32 %v3336, 16
      %v3597 = vrot.slane %v3595, 4
      %v3598 = vshll.u32 %v3336, 16
      %v3600 = vrot.slane %v3598, 5
      %v3601 = vor.u32 %v3597, %v3600
      %v3602 = vrot.slane %v3601, 4
      %v3604 = vshll.u32 %v3337, 16
      %v3606 = vrot.slane %v3604, 5
      %v3607 = vsel %vm1234, %v3602, %v3606
      %v3608 = vshrl.u32 %v3337, 16
      %v3610 = vrot.slane %v3608, 4
      %v3611 = vor.u32 %v3610, %v3606
      %v3612 = vrot.slane %v3611, 4
      %v3614 = vshll.u32 %v3338, 16
      %v3616 = vrot.slane %v3614, 5
      %v3617 = vsel %vm1234, %v3612, %v3616
      %v3619 = vshrl.u32 %v3339, 16
      %v3621 = vrot.slane %v3619, 4
      %v3622 = vshll.u32 %v3339, 16
      %v3624 = vrot.slane %v3622, 5
      %v3625 = vor.u32 %v3621, %v3624
      %v3626 = vrot.slane %v3625, 4
      %v3628 = vshll.u32 %v3340, 16
      %v3630 = vrot.slane %v3628, 5
      %v3631 = vsel %vm1234, %v3626, %v3630
      %v3632 = vshrl.u32 %v3340, 16
      %v3634 = vrot.slane %v3632, 4
      %v3635 = vor.u32 %v3634, %v3630
      %v3636 = vrot.slane %v3635, 4
      %v3638 = vshll.u32 %v3341, 16
      %v3640 = vrot.slane %v3638, 5
      %v3641 = vsel %vm1234, %v3636, %v3640
      %v3643 = vshrl.u32 %v3342, 16
      %v3645 = vrot.slane %v3643, 4
      %v3646 = vshll.u32 %v3342, 16
      %v3648 = vrot.slane %v3646, 5
      %v3649 = vor.u32 %v3645, %v3648
      %v3650 = vrot.slane %v3649, 4
      %v3652 = vshll.u32 %v3343, 16
      %v3654 = vrot.slane %v3652, 5
      %v3655 = vsel %vm1234, %v3650, %v3654
      %v3656 = vshrl.u32 %v3343, 16
      %v3658 = vrot.slane %v3656, 4
      %v3659 = vor.u32 %v3658, %v3654
      %v3660 = vrot.slane %v3659, 4
      %v3662 = vshll.u32 %v3344, 16
      %v3664 = vrot.slane %v3662, 5
      %v3665 = vsel %vm1234, %v3660, %v3664
      %v3667 = vshrl.u32 %v3345, 16
      %v3669 = vrot.slane %v3667, 4
      %v3670 = vshll.u32 %v3345, 16
      %v3672 = vrot.slane %v3670, 5
      %v3673 = vor.u32 %v3669, %v3672
      %v3674 = vrot.slane %v3673, 4
      %v3676 = vshll.u32 %v3346, 16
      %v3678 = vrot.slane %v3676, 5
      %v3679 = vsel %vm1234, %v3674, %v3678
      %v3680 = vshrl.u32 %v3346, 16
      %v3682 = vrot.slane %v3680, 4
      %v3683 = vor.u32 %v3682, %v3678
      %v3684 = vrot.slane %v3683, 4
      %v3686 = vshll.u32 %v3347, 16
      %v3688 = vrot.slane %v3686, 5
      %v3689 = vsel %vm1234, %v3684, %v3688
      %v3691 = vshrl.u32 %v3348, 16
      %v3693 = vrot.slane %v3691, 4
      %v3694 = vshll.u32 %v3348, 16
      %v3696 = vrot.slane %v3694, 5
      %v3697 = vor.u32 %v3693, %v3696
      %v3698 = vrot.slane %v3697, 4
      %v3700 = vshll.u32 %v3349, 16
      %v3702 = vrot.slane %v3700, 5
      %v3703 = vsel %vm1234, %v3698, %v3702
      %v3704 = vshrl.u32 %v3349, 16
      %v3706 = vrot.slane %v3704, 4
      %v3707 = vor.u32 %v3706, %v3702
      %v3708 = vrot.slane %v3707, 4
      %v3710 = vshll.u32 %v3350, 16
      %v3712 = vrot.slane %v3710, 5
      %v3713 = vsel %vm1234, %v3708, %v3712
      %v3715 = vshrl.u32 %v3351, 16
      %v3717 = vrot.slane %v3715, 4
      %v3718 = vshll.u32 %v3351, 16
      %v3720 = vrot.slane %v3718, 5
      %v3721 = vor.u32 %v3717, %v3720
      %v3722 = vrot.slane %v3721, 4
      %v3724 = vshll.u32 %v3352, 16
      %v3726 = vrot.slane %v3724, 5
      %v3727 = vsel %vm1234, %v3722, %v3726
      %v3728 = vshrl.u32 %v3352, 16
      %v3730 = vrot.slane %v3728, 4
      %v3731 = vor.u32 %v3730, %v3726
      %v3732 = vrot.slane %v3731, 4
      %v3734 = vshll.u32 %v3353, 16
      %v3736 = vrot.slane %v3734, 5
      %v3737 = vsel %vm1234, %v3732, %v3736
      %3738 = vrot.lane.b32.xlu0 %v3367, 96
      %v3739 = vpop.permute.xlu0 %3738
      %3740 = vrot.lane.b32.xlu0 %v3377, 96
      %v3741 = vpop.permute.xlu0 %3740
      %3742 = vrot.lane.b32.xlu0 %v3391, 96
      %v3743 = vpop.permute.xlu0 %3742
      %3744 = vrot.lane.b32.xlu0 %v3401, 96
      %v3745 = vpop.permute.xlu0 %3744
      %3746 = vrot.lane.b32.xlu0 %v3415, 96
      %v3747 = vpop.permute.xlu0 %3746
      %3748 = vrot.lane.b32.xlu0 %v3425, 96
      %v3749 = vpop.permute.xlu0 %3748
      %3750 = vrot.lane.b32.xlu0 %v3439, 96
      %v3751 = vpop.permute.xlu0 %3750
      %3752 = vrot.lane.b32.xlu0 %v3449, 96
      %v3753 = vpop.permute.xlu0 %3752
      %3754 = vrot.lane.b32.xlu0 %v3463, 96
      %v3755 = vpop.permute.xlu0 %3754
      %3756 = vrot.lane.b32.xlu0 %v3473, 96
      %v3757 = vpop.permute.xlu0 %3756
      %3758 = vrot.lane.b32.xlu0 %v3487, 96
      %v3759 = vpop.permute.xlu0 %3758
      %3760 = vrot.lane.b32.xlu0 %v3497, 96
      %v3761 = vpop.permute.xlu0 %3760
      %3762 = vrot.lane.b32.xlu0 %v3511, 96
      %v3763 = vpop.permute.xlu0 %3762
      %3764 = vrot.lane.b32.xlu0 %v3521, 96
      %v3765 = vpop.permute.xlu0 %3764
      %3766 = vrot.lane.b32.xlu0 %v3535, 96
      %v3767 = vpop.permute.xlu0 %3766
      %3768 = vrot.lane.b32.xlu0 %v3545, 96
      %v3769 = vpop.permute.xlu0 %3768
      %3770 = vrot.lane.b32.xlu0 %v3559, 96
      %v3771 = vpop.permute.xlu0 %3770
      %3772 = vrot.lane.b32.xlu0 %v3569, 96
      %v3773 = vpop.permute.xlu0 %3772
      %3774 = vrot.lane.b32.xlu0 %v3583, 96
      %v3775 = vpop.permute.xlu0 %3774
      %3776 = vrot.lane.b32.xlu0 %v3593, 96
      %v3777 = vpop.permute.xlu0 %3776
      %3778 = vrot.lane.b32.xlu0 %v3607, 96
      %v3779 = vpop.permute.xlu0 %3778
      %3780 = vrot.lane.b32.xlu0 %v3617, 96
      %v3781 = vpop.permute.xlu0 %3780
      %3782 = vrot.lane.b32.xlu0 %v3631, 96
      %v3783 = vpop.permute.xlu0 %3782
      %3784 = vrot.lane.b32.xlu0 %v3641, 96
      %v3785 = vpop.permute.xlu0 %3784
      %3786 = vrot.lane.b32.xlu0 %v3655, 96
      %v3787 = vpop.permute.xlu0 %3786
      %3788 = vrot.lane.b32.xlu0 %v3665, 96
      %v3789 = vpop.permute.xlu0 %3788
      %3790 = vrot.lane.b32.xlu0 %v3679, 96
      %v3791 = vpop.permute.xlu0 %3790
      %3792 = vrot.lane.b32.xlu0 %v3689, 96
      %v3793 = vpop.permute.xlu0 %3792
      %3794 = vrot.lane.b32.xlu0 %v3703, 96
      %v3795 = vpop.permute.xlu0 %3794
      %3796 = vrot.lane.b32.xlu0 %v3713, 96
      %v3797 = vpop.permute.xlu0 %3796
      %3798 = vrot.lane.b32.xlu0 %v3727, 96
      %v3799 = vpop.permute.xlu0 %3798
      %3800 = vrot.lane.b32.xlu0 %v3737, 96
      %v3801 = vpop.permute.xlu0 %3800
      %3834 = vst.msk [vmem:[#allocation3 + $0x4] sm:$0xf] %vm2248, %v3739
      %3835 = vst.msk [vmem:[#allocation3 + $0x10] sm:$0xf] %vm2248, %v3741
      %3836 = vst.msk [vmem:[#allocation3 + $0x1c] sm:$0xf] %vm2248, %v3743
      %3837 = vst.msk [vmem:[#allocation3 + $0x28] sm:$0xf] %vm2248, %v3745
      %3838 = vst.msk [vmem:[#allocation3 + $0x34] sm:$0xf] %vm2248, %v3747
      %3839 = vst.msk [vmem:[#allocation3 + $0x40] sm:$0xf] %vm2248, %v3749
      %3840 = vst.msk [vmem:[#allocation3 + $0x4c] sm:$0xf] %vm2248, %v3751
      %3841 = vst.msk [vmem:[#allocation3 + $0x58] sm:$0xf] %vm2248, %v3753
      %3842 = vst.msk [vmem:[#allocation3 + $0x64] sm:$0xf] %vm2248, %v3755
      %3843 = vst.msk [vmem:[#allocation3 + $0x70] sm:$0xf] %vm2248, %v3757
      %3844 = vst.msk [vmem:[#allocation3 + $0x7c] sm:$0xf] %vm2248, %v3759
      %3845 = vst.msk [vmem:[#allocation3 + $0x88] sm:$0xf] %vm2248, %v3761
      %3846 = vst.msk [vmem:[#allocation3 + $0x94] sm:$0xf] %vm2248, %v3763
      %3847 = vst.msk [vmem:[#allocation3 + $0xa0] sm:$0xf] %vm2248, %v3765
      %3848 = vst.msk [vmem:[#allocation3 + $0xac] sm:$0xf] %vm2248, %v3767
      %3849 = vst.msk [vmem:[#allocation3 + $0xb8] sm:$0xf] %vm2248, %v3769
      %3850 = vst.msk [vmem:[#allocation3 + $0xc4] sm:$0xf] %vm2248, %v3771
      %3851 = vst.msk [vmem:[#allocation3 + $0xd0] sm:$0xf] %vm2248, %v3773
      %3852 = vst.msk [vmem:[#allocation3 + $0xdc] sm:$0xf] %vm2248, %v3775
      %3853 = vst.msk [vmem:[#allocation3 + $0xe8] sm:$0xf] %vm2248, %v3777
      %3854 = vst.msk [vmem:[#allocation3 + $0xf4] sm:$0xf] %vm2248, %v3779
      %3855 = vst.msk [vmem:[#allocation3 + $0x100] sm:$0xf] %vm2248, %v3781
      %3856 = vst.msk [vmem:[#allocation3 + $0x10c] sm:$0xf] %vm2248, %v3783
      %3857 = vst.msk [vmem:[#allocation3 + $0x118] sm:$0xf] %vm2248, %v3785
      %3858 = vst.msk [vmem:[#allocation3 + $0x124] sm:$0xf] %vm2248, %v3787
      %3859 = vst.msk [vmem:[#allocation3 + $0x130] sm:$0xf] %vm2248, %v3789
      %3860 = vst.msk [vmem:[#allocation3 + $0x13c] sm:$0xf] %vm2248, %v3791
      %3861 = vst.msk [vmem:[#allocation3 + $0x148] sm:$0xf] %vm2248, %v3793
      %3862 = vst.msk [vmem:[#allocation3 + $0x154] sm:$0xf] %vm2248, %v3795
      %3863 = vst.msk [vmem:[#allocation3 + $0x160] sm:$0xf] %vm2248, %v3797
      %3864 = vst.msk [vmem:[#allocation3 + $0x16c] sm:$0xf] %vm2248, %v3799
      %3865 = vst.msk [vmem:[#allocation3 + $0x178] sm:$0xf] %vm2248, %v3801
      %v3866 = vld [vmem:[%s3113] sm:$0xe]
      %v3867 = vld [vmem:[%s3113 + $0x4] sm:$0xf]
      %v3868 = vld [vmem:[%s3113 + $0x8] sm:$0x1]
      %v3869 = vld [vmem:[%s3113 + $0xc] sm:$0xe]
      %v3870 = vld [vmem:[%s3113 + $0x10] sm:$0xf]
      %v3871 = vld [vmem:[%s3113 + $0x14] sm:$0x1]
      %v3872 = vld [vmem:[%s3113 + $0x18] sm:$0xe]
      %v3873 = vld [vmem:[%s3113 + $0x1c] sm:$0xf]
      %v3874 = vld [vmem:[%s3113 + $0x20] sm:$0x1]
      %v3875 = vld [vmem:[%s3113 + $0x24] sm:$0xe]
      %v3876 = vld [vmem:[%s3113 + $0x28] sm:$0xf]
      %v3877 = vld [vmem:[%s3113 + $0x2c] sm:$0x1]
      %v3878 = vld [vmem:[%s3113 + $0x30] sm:$0xe]
      %v3879 = vld [vmem:[%s3113 + $0x34] sm:$0xf]
      %v3880 = vld [vmem:[%s3113 + $0x38] sm:$0x1]
      %v3881 = vld [vmem:[%s3113 + $0x3c] sm:$0xe]
      %v3882 = vld [vmem:[%s3113 + $0x40] sm:$0xf]
      %v3883 = vld [vmem:[%s3113 + $0x44] sm:$0x1]
      %v3884 = vld [vmem:[%s3113 + $0x48] sm:$0xe]
      %v3885 = vld [vmem:[%s3113 + $0x4c] sm:$0xf]
      %v3886 = vld [vmem:[%s3113 + $0x50] sm:$0x1]
      %v3887 = vld [vmem:[%s3113 + $0x54] sm:$0xe]
      %v3888 = vld [vmem:[%s3113 + $0x58] sm:$0xf]
      %v3889 = vld [vmem:[%s3113 + $0x5c] sm:$0x1]
      %v3890 = vld [vmem:[%s3113 + $0x60] sm:$0xe]
      %v3891 = vld [vmem:[%s3113 + $0x64] sm:$0xf]
      %v3892 = vld [vmem:[%s3113 + $0x68] sm:$0x1]
      %v3893 = vld [vmem:[%s3113 + $0x6c] sm:$0xe]
      %v3894 = vld [vmem:[%s3113 + $0x70] sm:$0xf]
      %v3895 = vld [vmem:[%s3113 + $0x74] sm:$0x1]
      %v3896 = vld [vmem:[%s3113 + $0x78] sm:$0xe]
      %v3897 = vld [vmem:[%s3113 + $0x7c] sm:$0xf]
      %v3898 = vld [vmem:[%s3113 + $0x80] sm:$0x1]
      %v3899 = vld [vmem:[%s3113 + $0x84] sm:$0xe]
      %v3900 = vld [vmem:[%s3113 + $0x88] sm:$0xf]
      %v3901 = vld [vmem:[%s3113 + $0x8c] sm:$0x1]
      %v3902 = vld [vmem:[%s3113 + $0x90] sm:$0xe]
      %v3903 = vld [vmem:[%s3113 + $0x94] sm:$0xf]
      %v3904 = vld [vmem:[%s3113 + $0x98] sm:$0x1]
      %v3905 = vld [vmem:[%s3113 + $0x9c] sm:$0xe]
      %v3906 = vld [vmem:[%s3113 + $0xa0] sm:$0xf]
      %v3907 = vld [vmem:[%s3113 + $0xa4] sm:$0x1]
      %v3908 = vld [vmem:[%s3113 + $0xa8] sm:$0xe]
      %v3909 = vld [vmem:[%s3113 + $0xac] sm:$0xf]
      %v3910 = vld [vmem:[%s3113 + $0xb0] sm:$0x1]
      %v3911 = vld [vmem:[%s3113 + $0xb4] sm:$0xe]
      %v3912 = vld [vmem:[%s3113 + $0xb8] sm:$0xf]
      %v3913 = vld [vmem:[%s3113 + $0xbc] sm:$0x1]
      %v3962 = vrot.slane %v3866, 5
      %v3963 = vrot.slane %v3962, 4
      %v3964 = vrot.slane %v3867, 5
      %v3965 = vsel %vm1846, %v3963, %v3964
      %v3966 = vrot.slane %v3964, 4
      %v3967 = vrot.slane %v3868, 5
      %v3968 = vsel %vm1846, %v3966, %v3967
      %v3969 = vrot.slane %v3869, 5
      %v3970 = vrot.slane %v3969, 4
      %v3971 = vrot.slane %v3870, 5
      %v3972 = vsel %vm1846, %v3970, %v3971
      %v3973 = vrot.slane %v3971, 4
      %v3974 = vrot.slane %v3871, 5
      %v3975 = vsel %vm1846, %v3973, %v3974
      %v3976 = vrot.slane %v3872, 5
      %v3977 = vrot.slane %v3976, 4
      %v3978 = vrot.slane %v3873, 5
      %v3979 = vsel %vm1846, %v3977, %v3978
      %v3980 = vrot.slane %v3978, 4
      %v3981 = vrot.slane %v3874, 5
      %v3982 = vsel %vm1846, %v3980, %v3981
      %v3983 = vrot.slane %v3875, 5
      %v3984 = vrot.slane %v3983, 4
      %v3985 = vrot.slane %v3876, 5
      %v3986 = vsel %vm1846, %v3984, %v3985
      %v3987 = vrot.slane %v3985, 4
      %v3988 = vrot.slane %v3877, 5
      %v3989 = vsel %vm1846, %v3987, %v3988
      %v3990 = vrot.slane %v3878, 5
      %v3991 = vrot.slane %v3990, 4
      %v3992 = vrot.slane %v3879, 5
      %v3993 = vsel %vm1846, %v3991, %v3992
      %v3994 = vrot.slane %v3992, 4
      %v3995 = vrot.slane %v3880, 5
      %v3996 = vsel %vm1846, %v3994, %v3995
      %v3997 = vrot.slane %v3881, 5
      %v3998 = vrot.slane %v3997, 4
      %v3999 = vrot.slane %v3882, 5
      %v4000 = vsel %vm1846, %v3998, %v3999
      %v4001 = vrot.slane %v3999, 4
      %v4002 = vrot.slane %v3883, 5
      %v4003 = vsel %vm1846, %v4001, %v4002
      %v4004 = vrot.slane %v3884, 5
      %v4005 = vrot.slane %v4004, 4
      %v4006 = vrot.slane %v3885, 5
      %v4007 = vsel %vm1846, %v4005, %v4006
      %v4008 = vrot.slane %v4006, 4
      %v4009 = vrot.slane %v3886, 5
      %v4010 = vsel %vm1846, %v4008, %v4009
      %v4011 = vrot.slane %v3887, 5
      %v4012 = vrot.slane %v4011, 4
      %v4013 = vrot.slane %v3888, 5
      %v4014 = vsel %vm1846, %v4012, %v4013
      %v4015 = vrot.slane %v4013, 4
      %v4016 = vrot.slane %v3889, 5
      %v4017 = vsel %vm1846, %v4015, %v4016
      %v4018 = vrot.slane %v3890, 5
      %v4019 = vrot.slane %v4018, 4
      %v4020 = vrot.slane %v3891, 5
      %v4021 = vsel %vm1846, %v4019, %v4020
      %v4022 = vrot.slane %v4020, 4
      %v4023 = vrot.slane %v3892, 5
      %v4024 = vsel %vm1846, %v4022, %v4023
      %v4025 = vrot.slane %v3893, 5
      %v4026 = vrot.slane %v4025, 4
      %v4027 = vrot.slane %v3894, 5
      %v4028 = vsel %vm1846, %v4026, %v4027
      %v4029 = vrot.slane %v4027, 4
      %v4030 = vrot.slane %v3895, 5
      %v4031 = vsel %vm1846, %v4029, %v4030
      %v4032 = vrot.slane %v3896, 5
      %v4033 = vrot.slane %v4032, 4
      %v4034 = vrot.slane %v3897, 5
      %v4035 = vsel %vm1846, %v4033, %v4034
      %v4036 = vrot.slane %v4034, 4
      %v4037 = vrot.slane %v3898, 5
      %v4038 = vsel %vm1846, %v4036, %v4037
      %v4039 = vrot.slane %v3899, 5
      %v4040 = vrot.slane %v4039, 4
      %v4041 = vrot.slane %v3900, 5
      %v4042 = vsel %vm1846, %v4040, %v4041
      %v4043 = vrot.slane %v4041, 4
      %v4044 = vrot.slane %v3901, 5
      %v4045 = vsel %vm1846, %v4043, %v4044
      %v4046 = vrot.slane %v3902, 5
      %v4047 = vrot.slane %v4046, 4
      %v4048 = vrot.slane %v3903, 5
      %v4049 = vsel %vm1846, %v4047, %v4048
      %v4050 = vrot.slane %v4048, 4
      %v4051 = vrot.slane %v3904, 5
      %v4052 = vsel %vm1846, %v4050, %v4051
      %v4053 = vrot.slane %v3905, 5
      %v4054 = vrot.slane %v4053, 4
      %v4055 = vrot.slane %v3906, 5
      %v4056 = vsel %vm1846, %v4054, %v4055
      %v4057 = vrot.slane %v4055, 4
      %v4058 = vrot.slane %v3907, 5
      %v4059 = vsel %vm1846, %v4057, %v4058
      %v4060 = vrot.slane %v3908, 5
      %v4061 = vrot.slane %v4060, 4
      %v4062 = vrot.slane %v3909, 5
      %v4063 = vsel %vm1846, %v4061, %v4062
      %v4064 = vrot.slane %v4062, 4
      %v4065 = vrot.slane %v3910, 5
      %v4066 = vsel %vm1846, %v4064, %v4065
      %v4067 = vrot.slane %v3911, 5
      %v4068 = vrot.slane %v4067, 4
      %v4069 = vrot.slane %v3912, 5
      %v4070 = vsel %vm1846, %v4068, %v4069
      %v4071 = vrot.slane %v4069, 4
      %v4072 = vrot.slane %v3913, 5
      %v4073 = vsel %vm1846, %v4071, %v4072
      %4106 = vst.msk [vmem:[#allocation3 + $0x8] sm:$0xf] %vm921, %v3965
      %4107 = vst.msk [vmem:[#allocation3 + $0x14] sm:$0xf] %vm921, %v3968
      %4108 = vst.msk [vmem:[#allocation3 + $0x20] sm:$0xf] %vm921, %v3972
      %4109 = vst.msk [vmem:[#allocation3 + $0x2c] sm:$0xf] %vm921, %v3975
      %4110 = vst.msk [vmem:[#allocation3 + $0x38] sm:$0xf] %vm921, %v3979
      %4111 = vst.msk [vmem:[#allocation3 + $0x44] sm:$0xf] %vm921, %v3982
      %4112 = vst.msk [vmem:[#allocation3 + $0x50] sm:$0xf] %vm921, %v3986
      %4113 = vst.msk [vmem:[#allocation3 + $0x5c] sm:$0xf] %vm921, %v3989
      %4114 = vst.msk [vmem:[#allocation3 + $0x68] sm:$0xf] %vm921, %v3993
      %4115 = vst.msk [vmem:[#allocation3 + $0x74] sm:$0xf] %vm921, %v3996
      %4116 = vst.msk [vmem:[#allocation3 + $0x80] sm:$0xf] %vm921, %v4000
      %4117 = vst.msk [vmem:[#allocation3 + $0x8c] sm:$0xf] %vm921, %v4003
      %4118 = vst.msk [vmem:[#allocation3 + $0x98] sm:$0xf] %vm921, %v4007
      %4119 = vst.msk [vmem:[#allocation3 + $0xa4] sm:$0xf] %vm921, %v4010
      %4120 = vst.msk [vmem:[#allocation3 + $0xb0] sm:$0xf] %vm921, %v4014
      %4121 = vst.msk [vmem:[#allocation3 + $0xbc] sm:$0xf] %vm921, %v4017
      %4122 = vst.msk [vmem:[#allocation3 + $0xc8] sm:$0xf] %vm921, %v4021
      %4123 = vst.msk [vmem:[#allocation3 + $0xd4] sm:$0xf] %vm921, %v4024
      %4124 = vst.msk [vmem:[#allocation3 + $0xe0] sm:$0xf] %vm921, %v4028
      %4125 = vst.msk [vmem:[#allocation3 + $0xec] sm:$0xf] %vm921, %v4031
      %4126 = vst.msk [vmem:[#allocation3 + $0xf8] sm:$0xf] %vm921, %v4035
      %4127 = vst.msk [vmem:[#allocation3 + $0x104] sm:$0xf] %vm921, %v4038
      %4128 = vst.msk [vmem:[#allocation3 + $0x110] sm:$0xf] %vm921, %v4042
      %4129 = vst.msk [vmem:[#allocation3 + $0x11c] sm:$0xf] %vm921, %v4045
      %4130 = vst.msk [vmem:[#allocation3 + $0x128] sm:$0xf] %vm921, %v4049
      %4131 = vst.msk [vmem:[#allocation3 + $0x134] sm:$0xf] %vm921, %v4052
      %4132 = vst.msk [vmem:[#allocation3 + $0x140] sm:$0xf] %vm921, %v4056
      %4133 = vst.msk [vmem:[#allocation3 + $0x14c] sm:$0xf] %vm921, %v4059
      %4134 = vst.msk [vmem:[#allocation3 + $0x158] sm:$0xf] %vm921, %v4063
      %4135 = vst.msk [vmem:[#allocation3 + $0x164] sm:$0xf] %vm921, %v4066
      %4136 = vst.msk [vmem:[#allocation3 + $0x170] sm:$0xf] %vm921, %v4070
      %4137 = vst.msk [vmem:[#allocation3 + $0x17c] sm:$0xf] %vm921, %v4073
      %v4138 = vld [vmem:[#allocation3] sm:$0xff]
      %v4139 = vld [vmem:[#allocation3 + $0x8] sm:$0xf]
      %v4140 = vld [vmem:[#allocation3 + $0xc] sm:$0xff]
      %v4141 = vld [vmem:[#allocation3 + $0x14] sm:$0xf]
      %v4142 = vld [vmem:[#allocation3 + $0x18] sm:$0xff]
      %v4143 = vld [vmem:[#allocation3 + $0x20] sm:$0xf]
      %v4144 = vld [vmem:[#allocation3 + $0x24] sm:$0xff]
      %v4145 = vld [vmem:[#allocation3 + $0x2c] sm:$0xf]
      %v4146 = vld [vmem:[#allocation3 + $0x30] sm:$0xff]
      %v4147 = vld [vmem:[#allocation3 + $0x38] sm:$0xf]
      %v4148 = vld [vmem:[#allocation3 + $0x3c] sm:$0xff]
      %v4149 = vld [vmem:[#allocation3 + $0x44] sm:$0xf]
      %v4150 = vld [vmem:[#allocation3 + $0x48] sm:$0xff]
      %v4151 = vld [vmem:[#allocation3 + $0x50] sm:$0xf]
      %v4152 = vld [vmem:[#allocation3 + $0x54] sm:$0xff]
      %v4153 = vld [vmem:[#allocation3 + $0x5c] sm:$0xf]
      %v4154 = vld [vmem:[#allocation3 + $0x60] sm:$0xff]
      %v4155 = vld [vmem:[#allocation3 + $0x68] sm:$0xf]
      %v4156 = vld [vmem:[#allocation3 + $0x6c] sm:$0xff]
      %v4157 = vld [vmem:[#allocation3 + $0x74] sm:$0xf]
      %v4158 = vld [vmem:[#allocation3 + $0x78] sm:$0xff]
      %v4159 = vld [vmem:[#allocation3 + $0x80] sm:$0xf]
      %v4160 = vld [vmem:[#allocation3 + $0x84] sm:$0xff]
      %v4161 = vld [vmem:[#allocation3 + $0x8c] sm:$0xf]
      %v4162 = vld [vmem:[#allocation3 + $0x90] sm:$0xff]
      %v4163 = vld [vmem:[#allocation3 + $0x98] sm:$0xf]
      %v4164 = vld [vmem:[#allocation3 + $0x9c] sm:$0xff]
      %v4165 = vld [vmem:[#allocation3 + $0xa4] sm:$0xf]
      %v4166 = vld [vmem:[#allocation3 + $0xa8] sm:$0xff]
      %v4167 = vld [vmem:[#allocation3 + $0xb0] sm:$0xf]
      %v4168 = vld [vmem:[#allocation3 + $0xb4] sm:$0xff]
      %v4169 = vld [vmem:[#allocation3 + $0xbc] sm:$0xf]
      %v4170 = vld [vmem:[#allocation3 + $0xc0] sm:$0xff]
      %v4171 = vld [vmem:[#allocation3 + $0xc8] sm:$0xf]
      %v4172 = vld [vmem:[#allocation3 + $0xcc] sm:$0xff]
      %v4173 = vld [vmem:[#allocation3 + $0xd4] sm:$0xf]
      %v4174 = vld [vmem:[#allocation3 + $0xd8] sm:$0xff]
      %v4175 = vld [vmem:[#allocation3 + $0xe0] sm:$0xf]
      %v4176 = vld [vmem:[#allocation3 + $0xe4] sm:$0xff]
      %v4177 = vld [vmem:[#allocation3 + $0xec] sm:$0xf]
      %v4178 = vld [vmem:[#allocation3 + $0xf0] sm:$0xff]
      %v4179 = vld [vmem:[#allocation3 + $0xf8] sm:$0xf]
      %v4180 = vld [vmem:[#allocation3 + $0xfc] sm:$0xff]
      %v4181 = vld [vmem:[#allocation3 + $0x104] sm:$0xf]
      %v4182 = vld [vmem:[#allocation3 + $0x108] sm:$0xff]
      %v4183 = vld [vmem:[#allocation3 + $0x110] sm:$0xf]
      %v4184 = vld [vmem:[#allocation3 + $0x114] sm:$0xff]
      %v4185 = vld [vmem:[#allocation3 + $0x11c] sm:$0xf]
      %v4186 = vld [vmem:[#allocation3 + $0x120] sm:$0xff]
      %v4187 = vld [vmem:[#allocation3 + $0x128] sm:$0xf]
      %v4188 = vld [vmem:[#allocation3 + $0x12c] sm:$0xff]
      %v4189 = vld [vmem:[#allocation3 + $0x134] sm:$0xf]
      %v4190 = vld [vmem:[#allocation3 + $0x138] sm:$0xff]
      %v4191 = vld [vmem:[#allocation3 + $0x140] sm:$0xf]
      %v4192 = vld [vmem:[#allocation3 + $0x144] sm:$0xff]
      %v4193 = vld [vmem:[#allocation3 + $0x14c] sm:$0xf]
      %v4194 = vld [vmem:[#allocation3 + $0x150] sm:$0xff]
      %v4195 = vld [vmem:[#allocation3 + $0x158] sm:$0xf]
      %v4196 = vld [vmem:[#allocation3 + $0x15c] sm:$0xff]
      %v4197 = vld [vmem:[#allocation3 + $0x164] sm:$0xf]
      %v4198 = vld [vmem:[#allocation3 + $0x168] sm:$0xff]
      %v4199 = vld [vmem:[#allocation3 + $0x170] sm:$0xf]
      %v4200 = vld [vmem:[#allocation3 + $0x174] sm:$0xff]
      %v4201 = vld [vmem:[#allocation3 + $0x17c] sm:$0xf]
      %v4202 = vld [vmem:[%s3] sm:$0xf]
      %v4203 = vld [vmem:[%s3 + $0x4] sm:$0xf]
      %v4204 = vld [vmem:[%s3 + $0x8] sm:$0xf]
      %v4205 = vld [vmem:[%s3 + $0xc] sm:$0xf]
      %v4206 = vld [vmem:[%s3 + $0x10] sm:$0xf]
      %v4207 = vld [vmem:[%s3 + $0x14] sm:$0xf]
      %v4208 = vld [vmem:[%s3 + $0x18] sm:$0xf]
      %v4209 = vld [vmem:[%s3 + $0x1c] sm:$0xf]
      %v4210 = vld [vmem:[%s3 + $0x20] sm:$0xf]
      %v4211 = vld [vmem:[%s3 + $0x24] sm:$0xf]
      %v4212 = vld [vmem:[%s3 + $0x28] sm:$0xf]
      %v4213 = vld [vmem:[%s3 + $0x2c] sm:$0xf]
      %v4214 = vld [vmem:[%s3 + $0x30] sm:$0xf]
      %v4215 = vld [vmem:[%s3 + $0x34] sm:$0xf]
      %v4216 = vld [vmem:[%s3 + $0x38] sm:$0xf]
      %v4217 = vld [vmem:[%s3 + $0x3c] sm:$0xf]
      %v4218 = vld [vmem:[%s3 + $0x40] sm:$0xf]
      %v4219 = vld [vmem:[%s3 + $0x44] sm:$0xf]
      %v4220 = vld [vmem:[%s3 + $0x48] sm:$0xf]
      %v4221 = vld [vmem:[%s3 + $0x4c] sm:$0xf]
      %v4222 = vld [vmem:[%s3 + $0x50] sm:$0xf]
      %v4223 = vld [vmem:[%s3 + $0x54] sm:$0xf]
      %v4224 = vld [vmem:[%s3 + $0x58] sm:$0xf]
      %v4225 = vld [vmem:[%s3 + $0x5c] sm:$0xf]
      %v4226 = vld [vmem:[%s3 + $0x60] sm:$0xf]
      %v4227 = vld [vmem:[%s3 + $0x64] sm:$0xf]
      %v4228 = vld [vmem:[%s3 + $0x68] sm:$0xf]
      %v4229 = vld [vmem:[%s3 + $0x6c] sm:$0xf]
      %v4230 = vld [vmem:[%s3 + $0x70] sm:$0xf]
      %v4231 = vld [vmem:[%s3 + $0x74] sm:$0xf]
      %v4232 = vld [vmem:[%s3 + $0x78] sm:$0xf]
      %v4233 = vld [vmem:[%s3 + $0x7c] sm:$0xf]
      %v4234 = vld [vmem:[%s3 + $0x80] sm:$0xf]
      %v4235 = vld [vmem:[%s3 + $0x84] sm:$0xf]
      %v4236 = vld [vmem:[%s3 + $0x88] sm:$0xf]
      %v4237 = vld [vmem:[%s3 + $0x8c] sm:$0xf]
      %v4238 = vld [vmem:[%s4] sm:$0x1]
      %v4240 = vperm.slane %v4238, 0
      %v4306 = vunpack.c.l.b16 %v4138
      %v4307 = vunpack.c.h.b16 %v4138
      %v4308 = vunpack.c.l.b16 %v4139
      %v4309 = vunpack.c.l.b16 %v4140
      %v4310 = vunpack.c.h.b16 %v4140
      %v4311 = vunpack.c.l.b16 %v4141
      %v4312 = vunpack.c.l.b16 %v4142
      %v4313 = vunpack.c.h.b16 %v4142
      %v4314 = vunpack.c.l.b16 %v4143
      %v4315 = vunpack.c.l.b16 %v4144
      %v4316 = vunpack.c.h.b16 %v4144
      %v4317 = vunpack.c.l.b16 %v4145
      %v4318 = vunpack.c.l.b16 %v4146
      %v4319 = vunpack.c.h.b16 %v4146
      %v4320 = vunpack.c.l.b16 %v4147
      %v4321 = vunpack.c.l.b16 %v4148
      %v4322 = vunpack.c.h.b16 %v4148
      %v4323 = vunpack.c.l.b16 %v4149
      %v4324 = vunpack.c.l.b16 %v4150
      %v4325 = vunpack.c.h.b16 %v4150
      %v4326 = vunpack.c.l.b16 %v4151
      %v4327 = vunpack.c.l.b16 %v4152
      %v4328 = vunpack.c.h.b16 %v4152
      %v4329 = vunpack.c.l.b16 %v4153
      %v4330 = vunpack.c.l.b16 %v4154
      %v4331 = vunpack.c.h.b16 %v4154
      %v4332 = vunpack.c.l.b16 %v4155
      %v4333 = vunpack.c.l.b16 %v4156
      %v4334 = vunpack.c.h.b16 %v4156
      %v4335 = vunpack.c.l.b16 %v4157
      %v4336 = vunpack.c.l.b16 %v4158
      %v4337 = vunpack.c.h.b16 %v4158
      %v4338 = vunpack.c.l.b16 %v4159
      %v4339 = vunpack.c.l.b16 %v4160
      %v4340 = vunpack.c.h.b16 %v4160
      %v4341 = vunpack.c.l.b16 %v4161
      %v4342 = vunpack.c.l.b16 %v4162
      %v4343 = vunpack.c.h.b16 %v4162
      %v4344 = vunpack.c.l.b16 %v4163
      %v4345 = vunpack.c.l.b16 %v4164
      %v4346 = vunpack.c.h.b16 %v4164
      %v4347 = vunpack.c.l.b16 %v4165
      %v4348 = vunpack.c.l.b16 %v4166
      %v4349 = vunpack.c.h.b16 %v4166
      %v4350 = vunpack.c.l.b16 %v4167
      %v4351 = vunpack.c.l.b16 %v4168
      %v4352 = vunpack.c.h.b16 %v4168
      %v4353 = vunpack.c.l.b16 %v4169
      %v4354 = vunpack.c.l.b16 %v4170
      %v4355 = vunpack.c.h.b16 %v4170
      %v4356 = vunpack.c.l.b16 %v4171
      %v4357 = vunpack.c.l.b16 %v4172
      %v4358 = vunpack.c.h.b16 %v4172
      %v4359 = vunpack.c.l.b16 %v4173
      %v4360 = vunpack.c.l.b16 %v4174
      %v4361 = vunpack.c.h.b16 %v4174
      %v4362 = vunpack.c.l.b16 %v4175
      %v4363 = vunpack.c.l.b16 %v4176
      %v4364 = vunpack.c.h.b16 %v4176
      %v4365 = vunpack.c.l.b16 %v4177
      %v4366 = vunpack.c.l.b16 %v4178
      %v4367 = vunpack.c.h.b16 %v4178
      %v4368 = vunpack.c.l.b16 %v4179
      %v4369 = vunpack.c.l.b16 %v4180
      %v4370 = vunpack.c.h.b16 %v4180
      %v4371 = vunpack.c.l.b16 %v4181
      %v4372 = vunpack.c.l.b16 %v4182
      %v4373 = vunpack.c.h.b16 %v4182
      %v4374 = vunpack.c.l.b16 %v4183
      %v4375 = vunpack.c.l.b16 %v4184
      %v4376 = vunpack.c.h.b16 %v4184
      %v4377 = vunpack.c.l.b16 %v4185
      %v4378 = vunpack.c.l.b16 %v4186
      %v4379 = vunpack.c.h.b16 %v4186
      %v4380 = vunpack.c.l.b16 %v4187
      %v4381 = vunpack.c.l.b16 %v4188
      %v4382 = vunpack.c.h.b16 %v4188
      %v4383 = vunpack.c.l.b16 %v4189
      %v4384 = vunpack.c.l.b16 %v4190
      %v4385 = vunpack.c.h.b16 %v4190
      %v4386 = vunpack.c.l.b16 %v4191
      %v4387 = vunpack.c.l.b16 %v4192
      %v4388 = vunpack.c.h.b16 %v4192
      %v4389 = vunpack.c.l.b16 %v4193
      %v4390 = vunpack.c.l.b16 %v4194
      %v4391 = vunpack.c.h.b16 %v4194
      %v4392 = vunpack.c.l.b16 %v4195
      %v4393 = vunpack.c.l.b16 %v4196
      %v4394 = vunpack.c.h.b16 %v4196
      %v4395 = vunpack.c.l.b16 %v4197
      %v4396 = vunpack.c.l.b16 %v4198
      %v4397 = vunpack.c.h.b16 %v4198
      %v4398 = vunpack.c.l.b16 %v4199
      %v4399 = vunpack.c.l.b16 %v4200
      %v4400 = vunpack.c.h.b16 %v4200
      %v4401 = vunpack.c.l.b16 %v4201
      %v4402 = vpack.c.b16 %v4309, %v4306
      %v4403 = vpack.c.b16 %v4310, %v4307
      %v4404 = vpack.c.b16 %v4311, %v4308
      %v4405 = vpack.c.b16 %v4315, %v4312
      %v4406 = vpack.c.b16 %v4316, %v4313
      %v4407 = vpack.c.b16 %v4317, %v4314
      %v4408 = vpack.c.b16 %v4321, %v4318
      %v4409 = vpack.c.b16 %v4322, %v4319
      %v4410 = vpack.c.b16 %v4323, %v4320
      %v4411 = vpack.c.b16 %v4327, %v4324
      %v4412 = vpack.c.b16 %v4328, %v4325
      %v4413 = vpack.c.b16 %v4329, %v4326
      %v4414 = vpack.c.b16 %v4333, %v4330
      %v4415 = vpack.c.b16 %v4334, %v4331
      %v4416 = vpack.c.b16 %v4335, %v4332
      %v4417 = vpack.c.b16 %v4339, %v4336
      %v4418 = vpack.c.b16 %v4340, %v4337
      %v4419 = vpack.c.b16 %v4341, %v4338
      %v4420 = vpack.c.b16 %v4345, %v4342
      %v4421 = vpack.c.b16 %v4346, %v4343
      %v4422 = vpack.c.b16 %v4347, %v4344
      %v4423 = vpack.c.b16 %v4351, %v4348
      %v4424 = vpack.c.b16 %v4352, %v4349
      %v4425 = vpack.c.b16 %v4353, %v4350
      %v4426 = vpack.c.b16 %v4357, %v4354
      %v4427 = vpack.c.b16 %v4358, %v4355
      %v4428 = vpack.c.b16 %v4359, %v4356
      %v4429 = vpack.c.b16 %v4363, %v4360
      %v4430 = vpack.c.b16 %v4364, %v4361
      %v4431 = vpack.c.b16 %v4365, %v4362
      %v4432 = vpack.c.b16 %v4369, %v4366
      %v4433 = vpack.c.b16 %v4370, %v4367
      %v4434 = vpack.c.b16 %v4371, %v4368
      %v4435 = vpack.c.b16 %v4375, %v4372
      %v4436 = vpack.c.b16 %v4376, %v4373
      %v4437 = vpack.c.b16 %v4377, %v4374
      %v4438 = vpack.c.b16 %v4381, %v4378
      %v4439 = vpack.c.b16 %v4382, %v4379
      %v4440 = vpack.c.b16 %v4383, %v4380
      %v4441 = vpack.c.b16 %v4387, %v4384
      %v4442 = vpack.c.b16 %v4388, %v4385
      %v4443 = vpack.c.b16 %v4389, %v4386
      %v4444 = vpack.c.b16 %v4393, %v4390
      %v4445 = vpack.c.b16 %v4394, %v4391
      %v4446 = vpack.c.b16 %v4395, %v4392
      %v4447 = vpack.c.b16 %v4399, %v4396
      %v4448 = vpack.c.b16 %v4400, %v4397
      %v4449 = vpack.c.b16 %v4401, %v4398
      %v4518 = vunpack.c.l.b16 %v4202
      %v4519 = vunpack.c.l.b16 %v4203
      %v4520 = vunpack.c.l.b16 %v4204
      %v4521 = vunpack.c.l.b16 %v4205
      %v4522 = vunpack.c.l.b16 %v4206
      %v4523 = vunpack.c.l.b16 %v4207
      %v4524 = vunpack.c.l.b16 %v4208
      %v4525 = vunpack.c.l.b16 %v4209
      %v4526 = vunpack.c.l.b16 %v4210
      %v4527 = vunpack.c.l.b16 %v4211
      %v4528 = vunpack.c.l.b16 %v4212
      %v4529 = vunpack.c.l.b16 %v4213
      %v4530 = vunpack.c.l.b16 %v4214
      %v4531 = vunpack.c.l.b16 %v4215
      %v4532 = vunpack.c.l.b16 %v4216
      %v4533 = vunpack.c.l.b16 %v4217
      %v4534 = vunpack.c.l.b16 %v4218
      %v4535 = vunpack.c.l.b16 %v4219
      %v4536 = vunpack.c.l.b16 %v4220
      %v4537 = vunpack.c.l.b16 %v4221
      %v4538 = vunpack.c.l.b16 %v4222
      %v4539 = vunpack.c.l.b16 %v4223
      %v4540 = vunpack.c.l.b16 %v4224
      %v4541 = vunpack.c.l.b16 %v4225
      %v4542 = vunpack.c.l.b16 %v4226
      %v4543 = vunpack.c.l.b16 %v4227
      %v4544 = vunpack.c.l.b16 %v4228
      %v4545 = vunpack.c.l.b16 %v4229
      %v4546 = vunpack.c.l.b16 %v4230
      %v4547 = vunpack.c.l.b16 %v4231
      %v4548 = vunpack.c.l.b16 %v4232
      %v4549 = vunpack.c.l.b16 %v4233
      %v4550 = vunpack.c.l.b16 %v4234
      %v4551 = vunpack.c.l.b16 %v4235
      %v4552 = vunpack.c.l.b16 %v4236
      %v4553 = vunpack.c.l.b16 %v4237
      %v4554 = vpack.c.b16 %v4519, %v4518
      %v4555 = vpack.c.b16 %v4521, %v4520
      %v4556 = vpack.c.b16 %v4523, %v4522
      %v4557 = vpack.c.b16 %v4525, %v4524
      %v4558 = vpack.c.b16 %v4527, %v4526
      %v4559 = vpack.c.b16 %v4529, %v4528
      %v4560 = vpack.c.b16 %v4531, %v4530
      %v4561 = vpack.c.b16 %v4533, %v4532
      %v4562 = vpack.c.b16 %v4535, %v4534
      %v4563 = vpack.c.b16 %v4537, %v4536
      %v4564 = vpack.c.b16 %v4539, %v4538
      %v4565 = vpack.c.b16 %v4541, %v4540
      %v4566 = vpack.c.b16 %v4543, %v4542
      %v4567 = vpack.c.b16 %v4545, %v4544
      %v4568 = vpack.c.b16 %v4547, %v4546
      %v4569 = vpack.c.b16 %v4549, %v4548
      %v4570 = vpack.c.b16 %v4551, %v4550
      %v4571 = vpack.c.b16 %v4553, %v4552
      %vm4590 = vcmask 261120
      %v4592 = vsel %vm4590, %v4404, 0
      %v4595 = vsel %vm4590, %v4407, 0
      %v4598 = vsel %vm4590, %v4410, 0
      %v4601 = vsel %vm4590, %v4413, 0
      %v4604 = vsel %vm4590, %v4416, 0
      %v4607 = vsel %vm4590, %v4419, 0
      %v4610 = vsel %vm4590, %v4422, 0
      %v4613 = vsel %vm4590, %v4425, 0
      %v4616 = vsel %vm4590, %v4428, 0
      %v4619 = vsel %vm4590, %v4431, 0
      %v4622 = vsel %vm4590, %v4434, 0
      %v4625 = vsel %vm4590, %v4437, 0
      %v4628 = vsel %vm4590, %v4440, 0
      %v4631 = vsel %vm4590, %v4443, 0
      %v4634 = vsel %vm4590, %v4446, 0
      %v4637 = vsel %vm4590, %v4449, 0
      %4639 = vmatpush.bf16.msra.mxu0 %v4561
      %4640 = vmatpush.bf16.msra.mxu0 %v4560
      %4641 = vmatpush.bf16.msra.mxu0 %v4559
      %4642 = vmatpush.bf16.msra.mxu0 %v4558
      %4643 = vmatpush.bf16.msra.mxu0 %v4557
      %4644 = vmatpush.bf16.msra.mxu0 %v4556
      %4645 = vmatpush.bf16.msra.mxu0 %v4555
      %4646 = vmatpush.bf16.msra.mxu0 %v4554
      %4647 = vmatmul.bf16.gmra.mxu0 %v4402
      %v4648 = vpop.f32.mrf.mxu0
      %v4649 = vadd.f32 %v4240, %v4648
      %v4650 = vpop.f32.mrf.mxu0
      %v4651 = vadd.f32 %v4240, %v4650
      %4652 = vmatmul.bf16.gmra.mxu0 %v4405
      %v4653 = vpop.f32.mrf.mxu0
      %v4654 = vadd.f32 %v4240, %v4653
      %v4655 = vpop.f32.mrf.mxu0
      %v4656 = vadd.f32 %v4240, %v4655
      %4657 = vmatmul.bf16.gmra.mxu0 %v4408
      %v4658 = vpop.f32.mrf.mxu0
      %v4659 = vadd.f32 %v4240, %v4658
      %v4660 = vpop.f32.mrf.mxu0
      %v4661 = vadd.f32 %v4240, %v4660
      %4662 = vmatmul.bf16.gmra.mxu0 %v4411
      %v4663 = vpop.f32.mrf.mxu0
      %v4664 = vadd.f32 %v4240, %v4663
      %v4665 = vpop.f32.mrf.mxu0
      %v4666 = vadd.f32 %v4240, %v4665
      %4667 = vmatmul.bf16.gmra.mxu0 %v4414
      %v4668 = vpop.f32.mrf.mxu0
      %v4669 = vadd.f32 %v4240, %v4668
      %v4670 = vpop.f32.mrf.mxu0
      %v4671 = vadd.f32 %v4240, %v4670
      %4672 = vmatmul.bf16.gmra.mxu0 %v4417
      %v4673 = vpop.f32.mrf.mxu0
      %v4674 = vadd.f32 %v4240, %v4673
      %v4675 = vpop.f32.mrf.mxu0
      %v4676 = vadd.f32 %v4240, %v4675
      %4677 = vmatmul.bf16.gmra.mxu0 %v4420
      %v4678 = vpop.f32.mrf.mxu0
      %v4679 = vadd.f32 %v4240, %v4678
      %v4680 = vpop.f32.mrf.mxu0
      %v4681 = vadd.f32 %v4240, %v4680
      %4682 = vmatmul.bf16.gmra.mxu0 %v4423
      %v4683 = vpop.f32.mrf.mxu0
      %v4684 = vadd.f32 %v4240, %v4683
      %v4685 = vpop.f32.mrf.mxu0
      %v4686 = vadd.f32 %v4240, %v4685
      %4687 = vmatmul.bf16.gmra.mxu0 %v4426
      %v4688 = vpop.f32.mrf.mxu0
      %v4689 = vadd.f32 %v4240, %v4688
      %v4690 = vpop.f32.mrf.mxu0
      %v4691 = vadd.f32 %v4240, %v4690
      %4692 = vmatmul.bf16.gmra.mxu0 %v4429
      %v4693 = vpop.f32.mrf.mxu0
      %v4694 = vadd.f32 %v4240, %v4693
      %v4695 = vpop.f32.mrf.mxu0
      %v4696 = vadd.f32 %v4240, %v4695
      %4697 = vmatmul.bf16.gmra.mxu0 %v4432
      %v4698 = vpop.f32.mrf.mxu0
      %v4699 = vadd.f32 %v4240, %v4698
      %v4700 = vpop.f32.mrf.mxu0
      %v4701 = vadd.f32 %v4240, %v4700
      %4702 = vmatmul.bf16.gmra.mxu0 %v4435
      %v4703 = vpop.f32.mrf.mxu0
      %v4704 = vadd.f32 %v4240, %v4703
      %v4705 = vpop.f32.mrf.mxu0
      %v4706 = vadd.f32 %v4240, %v4705
      %4707 = vmatmul.bf16.gmra.mxu0 %v4438
      %v4708 = vpop.f32.mrf.mxu0
      %v4709 = vadd.f32 %v4240, %v4708
      %v4710 = vpop.f32.mrf.mxu0
      %v4711 = vadd.f32 %v4240, %v4710
      %4712 = vmatmul.bf16.gmra.mxu0 %v4441
      %v4713 = vpop.f32.mrf.mxu0
      %v4714 = vadd.f32 %v4240, %v4713
      %v4715 = vpop.f32.mrf.mxu0
      %v4716 = vadd.f32 %v4240, %v4715
      %4717 = vmatmul.bf16.gmra.mxu0 %v4444
      %v4718 = vpop.f32.mrf.mxu0
      %v4719 = vadd.f32 %v4240, %v4718
      %v4720 = vpop.f32.mrf.mxu0
      %v4721 = vadd.f32 %v4240, %v4720
      %4722 = vmatmul.bf16.gmra.mxu0 %v4447
      %v4723 = vpop.f32.mrf.mxu0
      %v4724 = vadd.f32 %v4240, %v4723
      %v4725 = vpop.f32.mrf.mxu0
      %v4726 = vadd.f32 %v4240, %v4725
      %4727 = vdwg.mxu0
      %4728 = vmatpush.bf16.msra.mxu0 %v4569
      %4729 = vmatpush.bf16.msra.mxu0 %v4568
      %4730 = vmatpush.bf16.msra.mxu0 %v4567
      %4731 = vmatpush.bf16.msra.mxu0 %v4566
      %4732 = vmatpush.bf16.msra.mxu0 %v4565
      %4733 = vmatpush.bf16.msra.mxu0 %v4564
      %4734 = vmatpush.bf16.msra.mxu0 %v4563
      %4735 = vmatpush.bf16.msra.mxu0 %v4562
      %4736 = vmatmul.bf16.gmra.mxu0 %v4403
      %v4737 = vpop.f32.mrf.mxu0
      %v4738 = vadd.f32 %v4649, %v4737
      %v4739 = vpop.f32.mrf.mxu0
      %v4740 = vadd.f32 %v4651, %v4739
      %4741 = vmatmul.bf16.gmra.mxu0 %v4406
      %v4742 = vpop.f32.mrf.mxu0
      %v4743 = vadd.f32 %v4654, %v4742
      %v4744 = vpop.f32.mrf.mxu0
      %v4745 = vadd.f32 %v4656, %v4744
      %4746 = vmatmul.bf16.gmra.mxu0 %v4409
      %v4747 = vpop.f32.mrf.mxu0
      %v4748 = vadd.f32 %v4659, %v4747
      %v4749 = vpop.f32.mrf.mxu0
      %v4750 = vadd.f32 %v4661, %v4749
      %4751 = vmatmul.bf16.gmra.mxu0 %v4412
      %v4752 = vpop.f32.mrf.mxu0
      %v4753 = vadd.f32 %v4664, %v4752
      %v4754 = vpop.f32.mrf.mxu0
      %v4755 = vadd.f32 %v4666, %v4754
      %4756 = vmatmul.bf16.gmra.mxu0 %v4415
      %v4757 = vpop.f32.mrf.mxu0
      %v4758 = vadd.f32 %v4669, %v4757
      %v4759 = vpop.f32.mrf.mxu0
      %v4760 = vadd.f32 %v4671, %v4759
      %4761 = vmatmul.bf16.gmra.mxu0 %v4418
      %v4762 = vpop.f32.mrf.mxu0
      %v4763 = vadd.f32 %v4674, %v4762
      %v4764 = vpop.f32.mrf.mxu0
      %v4765 = vadd.f32 %v4676, %v4764
      %4766 = vmatmul.bf16.gmra.mxu0 %v4421
      %v4767 = vpop.f32.mrf.mxu0
      %v4768 = vadd.f32 %v4679, %v4767
      %v4769 = vpop.f32.mrf.mxu0
      %v4770 = vadd.f32 %v4681, %v4769
      %4771 = vmatmul.bf16.gmra.mxu0 %v4424
      %v4772 = vpop.f32.mrf.mxu0
      %v4773 = vadd.f32 %v4684, %v4772
      %v4774 = vpop.f32.mrf.mxu0
      %v4775 = vadd.f32 %v4686, %v4774
      %4776 = vmatmul.bf16.gmra.mxu0 %v4427
      %v4777 = vpop.f32.mrf.mxu0
      %v4778 = vadd.f32 %v4689, %v4777
      %v4779 = vpop.f32.mrf.mxu0
      %v4780 = vadd.f32 %v4691, %v4779
      %4781 = vmatmul.bf16.gmra.mxu0 %v4430
      %v4782 = vpop.f32.mrf.mxu0
      %v4783 = vadd.f32 %v4694, %v4782
      %v4784 = vpop.f32.mrf.mxu0
      %v4785 = vadd.f32 %v4696, %v4784
      %4786 = vmatmul.bf16.gmra.mxu0 %v4433
      %v4787 = vpop.f32.mrf.mxu0
      %v4788 = vadd.f32 %v4699, %v4787
      %v4789 = vpop.f32.mrf.mxu0
      %v4790 = vadd.f32 %v4701, %v4789
      %4791 = vmatmul.bf16.gmra.mxu0 %v4436
      %v4792 = vpop.f32.mrf.mxu0
      %v4793 = vadd.f32 %v4704, %v4792
      %v4794 = vpop.f32.mrf.mxu0
      %v4795 = vadd.f32 %v4706, %v4794
      %4796 = vmatmul.bf16.gmra.mxu0 %v4439
      %v4797 = vpop.f32.mrf.mxu0
      %v4798 = vadd.f32 %v4709, %v4797
      %v4799 = vpop.f32.mrf.mxu0
      %v4800 = vadd.f32 %v4711, %v4799
      %4801 = vmatmul.bf16.gmra.mxu0 %v4442
      %v4802 = vpop.f32.mrf.mxu0
      %v4803 = vadd.f32 %v4714, %v4802
      %v4804 = vpop.f32.mrf.mxu0
      %v4805 = vadd.f32 %v4716, %v4804
      %4806 = vmatmul.bf16.gmra.mxu0 %v4445
      %v4807 = vpop.f32.mrf.mxu0
      %v4808 = vadd.f32 %v4719, %v4807
      %v4809 = vpop.f32.mrf.mxu0
      %v4810 = vadd.f32 %v4721, %v4809
      %4811 = vmatmul.bf16.gmra.mxu0 %v4448
      %v4812 = vpop.f32.mrf.mxu0
      %v4813 = vadd.f32 %v4724, %v4812
      %v4814 = vpop.f32.mrf.mxu0
      %v4815 = vadd.f32 %v4726, %v4814
      %4816 = vdwg.mxu0
      %4817 = vmatpush.bf16.msra.mxu0 0
      %4818 = vmatpush.bf16.msra.mxu0 0
      %4819 = vmatpush.bf16.msra.mxu0 0
      %4820 = vmatpush.bf16.msra.mxu0 0
      %4821 = vmatpush.bf16.msra.mxu0 0
      %4822 = vmatpush.bf16.msra.mxu0 0
      %4823 = vmatpush.bf16.msra.mxu0 %v4571
      %4824 = vmatpush.bf16.msra.mxu0 %v4570
      %4825 = vmatmul.bf16.gmra.mxu0 %v4592
      %v4826 = vpop.f32.mrf.mxu0
      %v4827 = vadd.f32 %v4738, %v4826
      %v4828 = vpop.f32.mrf.mxu0
      %v4829 = vadd.f32 %v4740, %v4828
      %4830 = vmatmul.bf16.gmra.mxu0 %v4595
      %v4831 = vpop.f32.mrf.mxu0
      %v4832 = vadd.f32 %v4743, %v4831
      %v4833 = vpop.f32.mrf.mxu0
      %v4834 = vadd.f32 %v4745, %v4833
      %4835 = vmatmul.bf16.gmra.mxu0 %v4598
      %v4836 = vpop.f32.mrf.mxu0
      %v4837 = vadd.f32 %v4748, %v4836
      %v4838 = vpop.f32.mrf.mxu0
      %v4839 = vadd.f32 %v4750, %v4838
      %4840 = vmatmul.bf16.gmra.mxu0 %v4601
      %v4841 = vpop.f32.mrf.mxu0
      %v4842 = vadd.f32 %v4753, %v4841
      %v4843 = vpop.f32.mrf.mxu0
      %v4844 = vadd.f32 %v4755, %v4843
      %4845 = vmatmul.bf16.gmra.mxu0 %v4604
      %v4846 = vpop.f32.mrf.mxu0
      %v4847 = vadd.f32 %v4758, %v4846
      %v4848 = vpop.f32.mrf.mxu0
      %v4849 = vadd.f32 %v4760, %v4848
      %4850 = vmatmul.bf16.gmra.mxu0 %v4607
      %v4851 = vpop.f32.mrf.mxu0
      %v4852 = vadd.f32 %v4763, %v4851
      %v4853 = vpop.f32.mrf.mxu0
      %v4854 = vadd.f32 %v4765, %v4853
      %4855 = vmatmul.bf16.gmra.mxu0 %v4610
      %v4856 = vpop.f32.mrf.mxu0
      %v4857 = vadd.f32 %v4768, %v4856
      %v4858 = vpop.f32.mrf.mxu0
      %v4859 = vadd.f32 %v4770, %v4858
      %4860 = vmatmul.bf16.gmra.mxu0 %v4613
      %v4861 = vpop.f32.mrf.mxu0
      %v4862 = vadd.f32 %v4773, %v4861
      %v4863 = vpop.f32.mrf.mxu0
      %v4864 = vadd.f32 %v4775, %v4863
      %4865 = vmatmul.bf16.gmra.mxu0 %v4616
      %v4866 = vpop.f32.mrf.mxu0
      %v4867 = vadd.f32 %v4778, %v4866
      %v4868 = vpop.f32.mrf.mxu0
      %v4869 = vadd.f32 %v4780, %v4868
      %4870 = vmatmul.bf16.gmra.mxu0 %v4619
      %v4871 = vpop.f32.mrf.mxu0
      %v4872 = vadd.f32 %v4783, %v4871
      %v4873 = vpop.f32.mrf.mxu0
      %v4874 = vadd.f32 %v4785, %v4873
      %4875 = vmatmul.bf16.gmra.mxu0 %v4622
      %v4876 = vpop.f32.mrf.mxu0
      %v4877 = vadd.f32 %v4788, %v4876
      %v4878 = vpop.f32.mrf.mxu0
      %v4879 = vadd.f32 %v4790, %v4878
      %4880 = vmatmul.bf16.gmra.mxu0 %v4625
      %v4881 = vpop.f32.mrf.mxu0
      %v4882 = vadd.f32 %v4793, %v4881
      %v4883 = vpop.f32.mrf.mxu0
      %v4884 = vadd.f32 %v4795, %v4883
      %4885 = vmatmul.bf16.gmra.mxu0 %v4628
      %v4886 = vpop.f32.mrf.mxu0
      %v4887 = vadd.f32 %v4798, %v4886
      %v4888 = vpop.f32.mrf.mxu0
      %v4889 = vadd.f32 %v4800, %v4888
      %4890 = vmatmul.bf16.gmra.mxu0 %v4631
      %v4891 = vpop.f32.mrf.mxu0
      %v4892 = vadd.f32 %v4803, %v4891
      %v4893 = vpop.f32.mrf.mxu0
      %v4894 = vadd.f32 %v4805, %v4893
      %4895 = vmatmul.bf16.gmra.mxu0 %v4634
      %v4896 = vpop.f32.mrf.mxu0
      %v4897 = vadd.f32 %v4808, %v4896
      %v4898 = vpop.f32.mrf.mxu0
      %v4899 = vadd.f32 %v4810, %v4898
      %4900 = vmatmul.bf16.gmra.mxu0 %v4637
      %v4901 = vpop.f32.mrf.mxu0
      %v4902 = vadd.f32 %v4813, %v4901
      %v4903 = vpop.f32.mrf.mxu0
      %v4904 = vadd.f32 %v4815, %v4903
      %4905 = vdwg.mxu0
      %v4906 = vmul.f32 %v4827, %v4827
      %v4907 = vmul.f32 %v4829, %v4829
      %v4908 = vmul.f32 %v4832, %v4832
      %v4909 = vmul.f32 %v4834, %v4834
      %v4910 = vmul.f32 %v4837, %v4837
      %v4911 = vmul.f32 %v4839, %v4839
      %v4912 = vmul.f32 %v4842, %v4842
      %v4913 = vmul.f32 %v4844, %v4844
      %v4914 = vmul.f32 %v4847, %v4847
      %v4915 = vmul.f32 %v4849, %v4849
      %v4916 = vmul.f32 %v4852, %v4852
      %v4917 = vmul.f32 %v4854, %v4854
      %v4918 = vmul.f32 %v4857, %v4857
      %v4919 = vmul.f32 %v4859, %v4859
      %v4920 = vmul.f32 %v4862, %v4862
      %v4921 = vmul.f32 %v4864, %v4864
      %v4922 = vmul.f32 %v4867, %v4867
      %v4923 = vmul.f32 %v4869, %v4869
      %v4924 = vmul.f32 %v4872, %v4872
      %v4925 = vmul.f32 %v4874, %v4874
      %v4926 = vmul.f32 %v4877, %v4877
      %v4927 = vmul.f32 %v4879, %v4879
      %v4928 = vmul.f32 %v4882, %v4882
      %v4929 = vmul.f32 %v4884, %v4884
      %v4930 = vmul.f32 %v4887, %v4887
      %v4931 = vmul.f32 %v4889, %v4889
      %v4932 = vmul.f32 %v4892, %v4892
      %v4933 = vmul.f32 %v4894, %v4894
      %v4934 = vmul.f32 %v4897, %v4897
      %v4935 = vmul.f32 %v4899, %v4899
      %v4936 = vmul.f32 %v4902, %v4902
      %v4937 = vmul.f32 %v4904, %v4904
      %v4938 = vpack.c.bf16 %v4907, %v4906
      %v4939 = vpack.c.bf16 %v4909, %v4908
      %v4940 = vpack.c.bf16 %v4911, %v4910
      %v4941 = vpack.c.bf16 %v4913, %v4912
      %v4942 = vpack.c.bf16 %v4915, %v4914
      %v4943 = vpack.c.bf16 %v4917, %v4916
      %v4944 = vpack.c.bf16 %v4919, %v4918
      %v4945 = vpack.c.bf16 %v4921, %v4920
      %v4946 = vpack.c.bf16 %v4923, %v4922
      %v4947 = vpack.c.bf16 %v4925, %v4924
      %v4948 = vpack.c.bf16 %v4927, %v4926
      %v4949 = vpack.c.bf16 %v4929, %v4928
      %v4950 = vpack.c.bf16 %v4931, %v4930
      %v4951 = vpack.c.bf16 %v4933, %v4932
      %v4952 = vpack.c.bf16 %v4935, %v4934
      %v4953 = vpack.c.bf16 %v4937, %v4936
      %v4954 = vld [vmem:[%s5] sm:$0xf]
      %v4955 = vld [vmem:[%s5 + $0x4] sm:$0xf]
      %v4956 = vld [vmem:[%s5 + $0x8] sm:$0xf]
      %v4957 = vld [vmem:[%s5 + $0xc] sm:$0xf]
      %v4958 = vld [vmem:[%s6] sm:$0x1]
      %v4960 = vperm.slane %v4958, 0
      %v4966 = vunpack.c.l.b16 %v4954
      %v4967 = vunpack.c.l.b16 %v4955
      %v4968 = vunpack.c.l.b16 %v4956
      %v4969 = vunpack.c.l.b16 %v4957
      %v4970 = vpack.c.b16 %v4967, %v4966
      %v4971 = vpack.c.b16 %v4969, %v4968
      %v4975 = vsel %vm4590, %v4938, 0
      %v4978 = vsel %vm4590, %v4939, 0
      %v4981 = vsel %vm4590, %v4940, 0
      %v4984 = vsel %vm4590, %v4941, 0
      %v4987 = vsel %vm4590, %v4942, 0
      %v4990 = vsel %vm4590, %v4943, 0
      %v4993 = vsel %vm4590, %v4944, 0
      %v4996 = vsel %vm4590, %v4945, 0
      %v4999 = vsel %vm4590, %v4946, 0
      %v5002 = vsel %vm4590, %v4947, 0
      %v5005 = vsel %vm4590, %v4948, 0
      %v5008 = vsel %vm4590, %v4949, 0
      %v5011 = vsel %vm4590, %v4950, 0
      %v5014 = vsel %vm4590, %v4951, 0
      %v5017 = vsel %vm4590, %v4952, 0
      %v5020 = vsel %vm4590, %v4953, 0
      %5022 = vmatpush.bf16.msra.mxu0 0
      %5023 = vmatpush.bf16.msra.mxu0 0
      %5024 = vmatpush.bf16.msra.mxu0 0
      %5025 = vmatpush.bf16.msra.mxu0 0
      %5026 = vmatpush.bf16.msra.mxu0 0
      %5027 = vmatpush.bf16.msra.mxu0 0
      %5028 = vmatpush.bf16.msra.mxu0 %v4971
      %5029 = vmatpush.bf16.msra.mxu0 %v4970
      %5030 = vmatmul.bf16.gmra.mxu0 %v4975
      %v5031 = vpop.f32.mrf.mxu0
      %v5032 = vadd.f32 %v4960, %v5031
      %v5033 = vpop.f32.mrf.mxu0
      %v5034 = vadd.f32 %v4960, %v5033
      %5035 = vmatmul.bf16.gmra.mxu0 %v4978
      %v5036 = vpop.f32.mrf.mxu0
      %v5037 = vadd.f32 %v4960, %v5036
      %v5038 = vpop.f32.mrf.mxu0
      %v5039 = vadd.f32 %v4960, %v5038
      %5040 = vmatmul.bf16.gmra.mxu0 %v4981
      %v5041 = vpop.f32.mrf.mxu0
      %v5042 = vadd.f32 %v4960, %v5041
      %v5043 = vpop.f32.mrf.mxu0
      %v5044 = vadd.f32 %v4960, %v5043
      %5045 = vmatmul.bf16.gmra.mxu0 %v4984
      %v5046 = vpop.f32.mrf.mxu0
      %v5047 = vadd.f32 %v4960, %v5046
      %v5048 = vpop.f32.mrf.mxu0
      %v5049 = vadd.f32 %v4960, %v5048
      %5050 = vmatmul.bf16.gmra.mxu0 %v4987
      %v5051 = vpop.f32.mrf.mxu0
      %v5052 = vadd.f32 %v4960, %v5051
      %v5053 = vpop.f32.mrf.mxu0
      %v5054 = vadd.f32 %v4960, %v5053
      %5055 = vmatmul.bf16.gmra.mxu0 %v4990
      %v5056 = vpop.f32.mrf.mxu0
      %v5057 = vadd.f32 %v4960, %v5056
      %v5058 = vpop.f32.mrf.mxu0
      %v5059 = vadd.f32 %v4960, %v5058
      %5060 = vmatmul.bf16.gmra.mxu0 %v4993
      %v5061 = vpop.f32.mrf.mxu0
      %v5062 = vadd.f32 %v4960, %v5061
      %v5063 = vpop.f32.mrf.mxu0
      %v5064 = vadd.f32 %v4960, %v5063
      %5065 = vmatmul.bf16.gmra.mxu0 %v4996
      %v5066 = vpop.f32.mrf.mxu0
      %v5067 = vadd.f32 %v4960, %v5066
      %v5068 = vpop.f32.mrf.mxu0
      %v5069 = vadd.f32 %v4960, %v5068
      %5070 = vmatmul.bf16.gmra.mxu0 %v4999
      %v5071 = vpop.f32.mrf.mxu0
      %v5072 = vadd.f32 %v4960, %v5071
      %v5073 = vpop.f32.mrf.mxu0
      %v5074 = vadd.f32 %v4960, %v5073
      %5075 = vmatmul.bf16.gmra.mxu0 %v5002
      %v5076 = vpop.f32.mrf.mxu0
      %v5077 = vadd.f32 %v4960, %v5076
      %v5078 = vpop.f32.mrf.mxu0
      %v5079 = vadd.f32 %v4960, %v5078
      %5080 = vmatmul.bf16.gmra.mxu0 %v5005
      %v5081 = vpop.f32.mrf.mxu0
      %v5082 = vadd.f32 %v4960, %v5081
      %v5083 = vpop.f32.mrf.mxu0
      %v5084 = vadd.f32 %v4960, %v5083
      %5085 = vmatmul.bf16.gmra.mxu0 %v5008
      %v5086 = vpop.f32.mrf.mxu0
      %v5087 = vadd.f32 %v4960, %v5086
      %v5088 = vpop.f32.mrf.mxu0
      %v5089 = vadd.f32 %v4960, %v5088
      %5090 = vmatmul.bf16.gmra.mxu0 %v5011
      %v5091 = vpop.f32.mrf.mxu0
      %v5092 = vadd.f32 %v4960, %v5091
      %v5093 = vpop.f32.mrf.mxu0
      %v5094 = vadd.f32 %v4960, %v5093
      %5095 = vmatmul.bf16.gmra.mxu0 %v5014
      %v5096 = vpop.f32.mrf.mxu0
      %v5097 = vadd.f32 %v4960, %v5096
      %v5098 = vpop.f32.mrf.mxu0
      %v5099 = vadd.f32 %v4960, %v5098
      %5100 = vmatmul.bf16.gmra.mxu0 %v5017
      %v5101 = vpop.f32.mrf.mxu0
      %v5102 = vadd.f32 %v4960, %v5101
      %v5103 = vpop.f32.mrf.mxu0
      %v5104 = vadd.f32 %v4960, %v5103
      %5105 = vmatmul.bf16.gmra.mxu0 %v5020
      %v5106 = vpop.f32.mrf.mxu0
      %v5107 = vadd.f32 %v4960, %v5106
      %v5108 = vpop.f32.mrf.mxu0
      %v5109 = vadd.f32 %v4960, %v5108
      %5110 = vdwg.mxu0
      %v5111 = vrsqrt.pop %v5032
      %v5112 = vmul.f32 %v5111, %v5032
      %v5113 = vmul.f32 %v5112, %v5111
      %v5114 = vmul.f32 0.5, %v5113
      %v5115 = vsub.f32 1.5, %v5114
      %v5116 = vmul.f32 %v5111, %v5115
      %vm5117 = vweird.f32 %v5032
      %vm5118 = vweird.f32 %v5111
      %vm5119 = vmor %vm5117, %vm5118
      %v5120 = vsel %vm5119, %v5111, %v5116
      %v5121 = vrsqrt.pop %v5034
      %v5122 = vmul.f32 %v5121, %v5034
      %v5123 = vmul.f32 %v5122, %v5121
      %v5124 = vmul.f32 0.5, %v5123
      %v5125 = vsub.f32 1.5, %v5124
      %v5126 = vmul.f32 %v5121, %v5125
      %vm5127 = vweird.f32 %v5034
      %vm5128 = vweird.f32 %v5121
      %vm5129 = vmor %vm5127, %vm5128
      %v5130 = vsel %vm5129, %v5121, %v5126
      %v5131 = vrsqrt.pop %v5037
      %v5132 = vmul.f32 %v5131, %v5037
      %v5133 = vmul.f32 %v5132, %v5131
      %v5134 = vmul.f32 0.5, %v5133
      %v5135 = vsub.f32 1.5, %v5134
      %v5136 = vmul.f32 %v5131, %v5135
      %vm5137 = vweird.f32 %v5037
      %vm5138 = vweird.f32 %v5131
      %vm5139 = vmor %vm5137, %vm5138
      %v5140 = vsel %vm5139, %v5131, %v5136
      %v5141 = vrsqrt.pop %v5039
      %v5142 = vmul.f32 %v5141, %v5039
      %v5143 = vmul.f32 %v5142, %v5141
      %v5144 = vmul.f32 0.5, %v5143
      %v5145 = vsub.f32 1.5, %v5144
      %v5146 = vmul.f32 %v5141, %v5145
      %vm5147 = vweird.f32 %v5039
      %vm5148 = vweird.f32 %v5141
      %vm5149 = vmor %vm5147, %vm5148
      %v5150 = vsel %vm5149, %v5141, %v5146
      %v5151 = vrsqrt.pop %v5042
      %v5152 = vmul.f32 %v5151, %v5042
      %v5153 = vmul.f32 %v5152, %v5151
      %v5154 = vmul.f32 0.5, %v5153
      %v5155 = vsub.f32 1.5, %v5154
      %v5156 = vmul.f32 %v5151, %v5155
      %vm5157 = vweird.f32 %v5042
      %vm5158 = vweird.f32 %v5151
      %vm5159 = vmor %vm5157, %vm5158
      %v5160 = vsel %vm5159, %v5151, %v5156
      %v5161 = vrsqrt.pop %v5044
      %v5162 = vmul.f32 %v5161, %v5044
      %v5163 = vmul.f32 %v5162, %v5161
      %v5164 = vmul.f32 0.5, %v5163
      %v5165 = vsub.f32 1.5, %v5164
      %v5166 = vmul.f32 %v5161, %v5165
      %vm5167 = vweird.f32 %v5044
      %vm5168 = vweird.f32 %v5161
      %vm5169 = vmor %vm5167, %vm5168
      %v5170 = vsel %vm5169, %v5161, %v5166
      %v5171 = vrsqrt.pop %v5047
      %v5172 = vmul.f32 %v5171, %v5047
      %v5173 = vmul.f32 %v5172, %v5171
      %v5174 = vmul.f32 0.5, %v5173
      %v5175 = vsub.f32 1.5, %v5174
      %v5176 = vmul.f32 %v5171, %v5175
      %vm5177 = vweird.f32 %v5047
      %vm5178 = vweird.f32 %v5171
      %vm5179 = vmor %vm5177, %vm5178
      %v5180 = vsel %vm5179, %v5171, %v5176
      %v5181 = vrsqrt.pop %v5049
      %v5182 = vmul.f32 %v5181, %v5049
      %v5183 = vmul.f32 %v5182, %v5181
      %v5184 = vmul.f32 0.5, %v5183
      %v5185 = vsub.f32 1.5, %v5184
      %v5186 = vmul.f32 %v5181, %v5185
      %vm5187 = vweird.f32 %v5049
      %vm5188 = vweird.f32 %v5181
      %vm5189 = vmor %vm5187, %vm5188
      %v5190 = vsel %vm5189, %v5181, %v5186
      %v5191 = vrsqrt.pop %v5052
      %v5192 = vmul.f32 %v5191, %v5052
      %v5193 = vmul.f32 %v5192, %v5191
      %v5194 = vmul.f32 0.5, %v5193
      %v5195 = vsub.f32 1.5, %v5194
      %v5196 = vmul.f32 %v5191, %v5195
      %vm5197 = vweird.f32 %v5052
      %vm5198 = vweird.f32 %v5191
      %vm5199 = vmor %vm5197, %vm5198
      %v5200 = vsel %vm5199, %v5191, %v5196
      %v5201 = vrsqrt.pop %v5054
      %v5202 = vmul.f32 %v5201, %v5054
      %v5203 = vmul.f32 %v5202, %v5201
      %v5204 = vmul.f32 0.5, %v5203
      %v5205 = vsub.f32 1.5, %v5204
      %v5206 = vmul.f32 %v5201, %v5205
      %vm5207 = vweird.f32 %v5054
      %vm5208 = vweird.f32 %v5201
      %vm5209 = vmor %vm5207, %vm5208
      %v5210 = vsel %vm5209, %v5201, %v5206
      %v5211 = vrsqrt.pop %v5057
      %v5212 = vmul.f32 %v5211, %v5057
      %v5213 = vmul.f32 %v5212, %v5211
      %v5214 = vmul.f32 0.5, %v5213
      %v5215 = vsub.f32 1.5, %v5214
      %v5216 = vmul.f32 %v5211, %v5215
      %vm5217 = vweird.f32 %v5057
      %vm5218 = vweird.f32 %v5211
      %vm5219 = vmor %vm5217, %vm5218
      %v5220 = vsel %vm5219, %v5211, %v5216
      %v5221 = vrsqrt.pop %v5059
      %v5222 = vmul.f32 %v5221, %v5059
      %v5223 = vmul.f32 %v5222, %v5221
      %v5224 = vmul.f32 0.5, %v5223
      %v5225 = vsub.f32 1.5, %v5224
      %v5226 = vmul.f32 %v5221, %v5225
      %vm5227 = vweird.f32 %v5059
      %vm5228 = vweird.f32 %v5221
      %vm5229 = vmor %vm5227, %vm5228
      %v5230 = vsel %vm5229, %v5221, %v5226
      %v5231 = vrsqrt.pop %v5062
      %v5232 = vmul.f32 %v5231, %v5062
      %v5233 = vmul.f32 %v5232, %v5231
      %v5234 = vmul.f32 0.5, %v5233
      %v5235 = vsub.f32 1.5, %v5234
      %v5236 = vmul.f32 %v5231, %v5235
      %vm5237 = vweird.f32 %v5062
      %vm5238 = vweird.f32 %v5231
      %vm5239 = vmor %vm5237, %vm5238
      %v5240 = vsel %vm5239, %v5231, %v5236
      %v5241 = vrsqrt.pop %v5064
      %v5242 = vmul.f32 %v5241, %v5064
      %v5243 = vmul.f32 %v5242, %v5241
      %v5244 = vmul.f32 0.5, %v5243
      %v5245 = vsub.f32 1.5, %v5244
      %v5246 = vmul.f32 %v5241, %v5245
      %vm5247 = vweird.f32 %v5064
      %vm5248 = vweird.f32 %v5241
      %vm5249 = vmor %vm5247, %vm5248
      %v5250 = vsel %vm5249, %v5241, %v5246
      %v5251 = vrsqrt.pop %v5067
      %v5252 = vmul.f32 %v5251, %v5067
      %v5253 = vmul.f32 %v5252, %v5251
      %v5254 = vmul.f32 0.5, %v5253
      %v5255 = vsub.f32 1.5, %v5254
      %v5256 = vmul.f32 %v5251, %v5255
      %vm5257 = vweird.f32 %v5067
      %vm5258 = vweird.f32 %v5251
      %vm5259 = vmor %vm5257, %vm5258
      %v5260 = vsel %vm5259, %v5251, %v5256
      %v5261 = vrsqrt.pop %v5069
      %v5262 = vmul.f32 %v5261, %v5069
      %v5263 = vmul.f32 %v5262, %v5261
      %v5264 = vmul.f32 0.5, %v5263
      %v5265 = vsub.f32 1.5, %v5264
      %v5266 = vmul.f32 %v5261, %v5265
      %vm5267 = vweird.f32 %v5069
      %vm5268 = vweird.f32 %v5261
      %vm5269 = vmor %vm5267, %vm5268
      %v5270 = vsel %vm5269, %v5261, %v5266
      %v5271 = vrsqrt.pop %v5072
      %v5272 = vmul.f32 %v5271, %v5072
      %v5273 = vmul.f32 %v5272, %v5271
      %v5274 = vmul.f32 0.5, %v5273
      %v5275 = vsub.f32 1.5, %v5274
      %v5276 = vmul.f32 %v5271, %v5275
      %vm5277 = vweird.f32 %v5072
      %vm5278 = vweird.f32 %v5271
      %vm5279 = vmor %vm5277, %vm5278
      %v5280 = vsel %vm5279, %v5271, %v5276
      %v5281 = vrsqrt.pop %v5074
      %v5282 = vmul.f32 %v5281, %v5074
      %v5283 = vmul.f32 %v5282, %v5281
      %v5284 = vmul.f32 0.5, %v5283
      %v5285 = vsub.f32 1.5, %v5284
      %v5286 = vmul.f32 %v5281, %v5285
      %vm5287 = vweird.f32 %v5074
      %vm5288 = vweird.f32 %v5281
      %vm5289 = vmor %vm5287, %vm5288
      %v5290 = vsel %vm5289, %v5281, %v5286
      %v5291 = vrsqrt.pop %v5077
      %v5292 = vmul.f32 %v5291, %v5077
      %v5293 = vmul.f32 %v5292, %v5291
      %v5294 = vmul.f32 0.5, %v5293
      %v5295 = vsub.f32 1.5, %v5294
      %v5296 = vmul.f32 %v5291, %v5295
      %vm5297 = vweird.f32 %v5077
      %vm5298 = vweird.f32 %v5291
      %vm5299 = vmor %vm5297, %vm5298
      %v5300 = vsel %vm5299, %v5291, %v5296
      %v5301 = vrsqrt.pop %v5079
      %v5302 = vmul.f32 %v5301, %v5079
      %v5303 = vmul.f32 %v5302, %v5301
      %v5304 = vmul.f32 0.5, %v5303
      %v5305 = vsub.f32 1.5, %v5304
      %v5306 = vmul.f32 %v5301, %v5305
      %vm5307 = vweird.f32 %v5079
      %vm5308 = vweird.f32 %v5301
      %vm5309 = vmor %vm5307, %vm5308
      %v5310 = vsel %vm5309, %v5301, %v5306
      %v5311 = vrsqrt.pop %v5082
      %v5312 = vmul.f32 %v5311, %v5082
      %v5313 = vmul.f32 %v5312, %v5311
      %v5314 = vmul.f32 0.5, %v5313
      %v5315 = vsub.f32 1.5, %v5314
      %v5316 = vmul.f32 %v5311, %v5315
      %vm5317 = vweird.f32 %v5082
      %vm5318 = vweird.f32 %v5311
      %vm5319 = vmor %vm5317, %vm5318
      %v5320 = vsel %vm5319, %v5311, %v5316
      %v5321 = vrsqrt.pop %v5084
      %v5322 = vmul.f32 %v5321, %v5084
      %v5323 = vmul.f32 %v5322, %v5321
      %v5324 = vmul.f32 0.5, %v5323
      %v5325 = vsub.f32 1.5, %v5324
      %v5326 = vmul.f32 %v5321, %v5325
      %vm5327 = vweird.f32 %v5084
      %vm5328 = vweird.f32 %v5321
      %vm5329 = vmor %vm5327, %vm5328
      %v5330 = vsel %vm5329, %v5321, %v5326
      %v5331 = vrsqrt.pop %v5087
      %v5332 = vmul.f32 %v5331, %v5087
      %v5333 = vmul.f32 %v5332, %v5331
      %v5334 = vmul.f32 0.5, %v5333
      %v5335 = vsub.f32 1.5, %v5334
      %v5336 = vmul.f32 %v5331, %v5335
      %vm5337 = vweird.f32 %v5087
      %vm5338 = vweird.f32 %v5331
      %vm5339 = vmor %vm5337, %vm5338
      %v5340 = vsel %vm5339, %v5331, %v5336
      %v5341 = vrsqrt.pop %v5089
      %v5342 = vmul.f32 %v5341, %v5089
      %v5343 = vmul.f32 %v5342, %v5341
      %v5344 = vmul.f32 0.5, %v5343
      %v5345 = vsub.f32 1.5, %v5344
      %v5346 = vmul.f32 %v5341, %v5345
      %vm5347 = vweird.f32 %v5089
      %vm5348 = vweird.f32 %v5341
      %vm5349 = vmor %vm5347, %vm5348
      %v5350 = vsel %vm5349, %v5341, %v5346
      %v5351 = vrsqrt.pop %v5092
      %v5352 = vmul.f32 %v5351, %v5092
      %v5353 = vmul.f32 %v5352, %v5351
      %v5354 = vmul.f32 0.5, %v5353
      %v5355 = vsub.f32 1.5, %v5354
      %v5356 = vmul.f32 %v5351, %v5355
      %vm5357 = vweird.f32 %v5092
      %vm5358 = vweird.f32 %v5351
      %vm5359 = vmor %vm5357, %vm5358
      %v5360 = vsel %vm5359, %v5351, %v5356
      %v5361 = vrsqrt.pop %v5094
      %v5362 = vmul.f32 %v5361, %v5094
      %v5363 = vmul.f32 %v5362, %v5361
      %v5364 = vmul.f32 0.5, %v5363
      %v5365 = vsub.f32 1.5, %v5364
      %v5366 = vmul.f32 %v5361, %v5365
      %vm5367 = vweird.f32 %v5094
      %vm5368 = vweird.f32 %v5361
      %vm5369 = vmor %vm5367, %vm5368
      %v5370 = vsel %vm5369, %v5361, %v5366
      %v5371 = vrsqrt.pop %v5097
      %v5372 = vmul.f32 %v5371, %v5097
      %v5373 = vmul.f32 %v5372, %v5371
      %v5374 = vmul.f32 0.5, %v5373
      %v5375 = vsub.f32 1.5, %v5374
      %v5376 = vmul.f32 %v5371, %v5375
      %vm5377 = vweird.f32 %v5097
      %vm5378 = vweird.f32 %v5371
      %vm5379 = vmor %vm5377, %vm5378
      %v5380 = vsel %vm5379, %v5371, %v5376
      %v5381 = vrsqrt.pop %v5099
      %v5382 = vmul.f32 %v5381, %v5099
      %v5383 = vmul.f32 %v5382, %v5381
      %v5384 = vmul.f32 0.5, %v5383
      %v5385 = vsub.f32 1.5, %v5384
      %v5386 = vmul.f32 %v5381, %v5385
      %vm5387 = vweird.f32 %v5099
      %vm5388 = vweird.f32 %v5381
      %vm5389 = vmor %vm5387, %vm5388
      %v5390 = vsel %vm5389, %v5381, %v5386
      %v5391 = vrsqrt.pop %v5102
      %v5392 = vmul.f32 %v5391, %v5102
      %v5393 = vmul.f32 %v5392, %v5391
      %v5394 = vmul.f32 0.5, %v5393
      %v5395 = vsub.f32 1.5, %v5394
      %v5396 = vmul.f32 %v5391, %v5395
      %vm5397 = vweird.f32 %v5102
      %vm5398 = vweird.f32 %v5391
      %vm5399 = vmor %vm5397, %vm5398
      %v5400 = vsel %vm5399, %v5391, %v5396
      %v5401 = vrsqrt.pop %v5104
      %v5402 = vmul.f32 %v5401, %v5104
      %v5403 = vmul.f32 %v5402, %v5401
      %v5404 = vmul.f32 0.5, %v5403
      %v5405 = vsub.f32 1.5, %v5404
      %v5406 = vmul.f32 %v5401, %v5405
      %vm5407 = vweird.f32 %v5104
      %vm5408 = vweird.f32 %v5401
      %vm5409 = vmor %vm5407, %vm5408
      %v5410 = vsel %vm5409, %v5401, %v5406
      %v5411 = vrsqrt.pop %v5107
      %v5412 = vmul.f32 %v5411, %v5107
      %v5413 = vmul.f32 %v5412, %v5411
      %v5414 = vmul.f32 0.5, %v5413
      %v5415 = vsub.f32 1.5, %v5414
      %v5416 = vmul.f32 %v5411, %v5415
      %vm5417 = vweird.f32 %v5107
      %vm5418 = vweird.f32 %v5411
      %vm5419 = vmor %vm5417, %vm5418
      %v5420 = vsel %vm5419, %v5411, %v5416
      %v5421 = vrsqrt.pop %v5109
      %v5422 = vmul.f32 %v5421, %v5109
      %v5423 = vmul.f32 %v5422, %v5421
      %v5424 = vmul.f32 0.5, %v5423
      %v5425 = vsub.f32 1.5, %v5424
      %v5426 = vmul.f32 %v5421, %v5425
      %vm5427 = vweird.f32 %v5109
      %vm5428 = vweird.f32 %v5421
      %vm5429 = vmor %vm5427, %vm5428
      %v5430 = vsel %vm5429, %v5421, %v5426
      %v5431 = vmul.f32 %v4827, %v5120
      %v5432 = vmul.f32 %v4829, %v5130
      %v5433 = vmul.f32 %v4832, %v5140
      %v5434 = vmul.f32 %v4834, %v5150
      %v5435 = vmul.f32 %v4837, %v5160
      %v5436 = vmul.f32 %v4839, %v5170
      %v5437 = vmul.f32 %v4842, %v5180
      %v5438 = vmul.f32 %v4844, %v5190
      %v5439 = vmul.f32 %v4847, %v5200
      %v5440 = vmul.f32 %v4849, %v5210
      %v5441 = vmul.f32 %v4852, %v5220
      %v5442 = vmul.f32 %v4854, %v5230
      %v5443 = vmul.f32 %v4857, %v5240
      %v5444 = vmul.f32 %v4859, %v5250
      %v5445 = vmul.f32 %v4862, %v5260
      %v5446 = vmul.f32 %v4864, %v5270
      %v5447 = vmul.f32 %v4867, %v5280
      %v5448 = vmul.f32 %v4869, %v5290
      %v5449 = vmul.f32 %v4872, %v5300
      %v5450 = vmul.f32 %v4874, %v5310
      %v5451 = vmul.f32 %v4877, %v5320
      %v5452 = vmul.f32 %v4879, %v5330
      %v5453 = vmul.f32 %v4882, %v5340
      %v5454 = vmul.f32 %v4884, %v5350
      %v5455 = vmul.f32 %v4887, %v5360
      %v5456 = vmul.f32 %v4889, %v5370
      %v5457 = vmul.f32 %v4892, %v5380
      %v5458 = vmul.f32 %v4894, %v5390
      %v5459 = vmul.f32 %v4897, %v5400
      %v5460 = vmul.f32 %v4899, %v5410
      %v5461 = vmul.f32 %v4902, %v5420
      %v5462 = vmul.f32 %v4904, %v5430
      %v5463 = vpack.c.bf16 %v5431, %v5431
      %v5464 = vpack.c.bf16 %v5432, %v5432
      %v5465 = vpack.c.bf16 %v5433, %v5433
      %v5466 = vpack.c.bf16 %v5434, %v5434
      %v5467 = vpack.c.bf16 %v5435, %v5435
      %v5468 = vpack.c.bf16 %v5436, %v5436
      %v5469 = vpack.c.bf16 %v5437, %v5437
      %v5470 = vpack.c.bf16 %v5438, %v5438
      %v5471 = vpack.c.bf16 %v5439, %v5439
      %v5472 = vpack.c.bf16 %v5440, %v5440
      %v5473 = vpack.c.bf16 %v5441, %v5441
      %v5474 = vpack.c.bf16 %v5442, %v5442
      %v5475 = vpack.c.bf16 %v5443, %v5443
      %v5476 = vpack.c.bf16 %v5444, %v5444
      %v5477 = vpack.c.bf16 %v5445, %v5445
      %v5478 = vpack.c.bf16 %v5446, %v5446
      %v5479 = vpack.c.bf16 %v5447, %v5447
      %v5480 = vpack.c.bf16 %v5448, %v5448
      %v5481 = vpack.c.bf16 %v5449, %v5449
      %v5482 = vpack.c.bf16 %v5450, %v5450
      %v5483 = vpack.c.bf16 %v5451, %v5451
      %v5484 = vpack.c.bf16 %v5452, %v5452
      %v5485 = vpack.c.bf16 %v5453, %v5453
      %v5486 = vpack.c.bf16 %v5454, %v5454
      %v5487 = vpack.c.bf16 %v5455, %v5455
      %v5488 = vpack.c.bf16 %v5456, %v5456
      %v5489 = vpack.c.bf16 %v5457, %v5457
      %v5490 = vpack.c.bf16 %v5458, %v5458
      %v5491 = vpack.c.bf16 %v5459, %v5459
      %v5492 = vpack.c.bf16 %v5460, %v5460
      %v5493 = vpack.c.bf16 %v5461, %v5461
      %v5494 = vpack.c.bf16 %v5462, %v5462
      %5495 = vst.msk [vmem:[%s445] sm:$0xf] %vm921, %v5463
      %5496 = vst.msk [vmem:[%s445 + $0x4] sm:$0xf] %vm921, %v5464
      %5497 = vst.msk [vmem:[%s445 + $0x8] sm:$0xf] %vm921, %v5465
      %5498 = vst.msk [vmem:[%s445 + $0xc] sm:$0xf] %vm921, %v5466
      %5499 = vst.msk [vmem:[%s445 + $0x10] sm:$0xf] %vm921, %v5467
      %5500 = vst.msk [vmem:[%s445 + $0x14] sm:$0xf] %vm921, %v5468
      %5501 = vst.msk [vmem:[%s445 + $0x18] sm:$0xf] %vm921, %v5469
      %5502 = vst.msk [vmem:[%s445 + $0x1c] sm:$0xf] %vm921, %v5470
      %5503 = vst.msk [vmem:[%s445 + $0x20] sm:$0xf] %vm921, %v5471
      %5504 = vst.msk [vmem:[%s445 + $0x24] sm:$0xf] %vm921, %v5472
      %5505 = vst.msk [vmem:[%s445 + $0x28] sm:$0xf] %vm921, %v5473
      %5506 = vst.msk [vmem:[%s445 + $0x2c] sm:$0xf] %vm921, %v5474
      %5507 = vst.msk [vmem:[%s445 + $0x30] sm:$0xf] %vm921, %v5475
      %5508 = vst.msk [vmem:[%s445 + $0x34] sm:$0xf] %vm921, %v5476
      %5509 = vst.msk [vmem:[%s445 + $0x38] sm:$0xf] %vm921, %v5477
      %5510 = vst.msk [vmem:[%s445 + $0x3c] sm:$0xf] %vm921, %v5478
      %5511 = vst.msk [vmem:[%s445 + $0x40] sm:$0xf] %vm921, %v5479
      %5512 = vst.msk [vmem:[%s445 + $0x44] sm:$0xf] %vm921, %v5480
      %5513 = vst.msk [vmem:[%s445 + $0x48] sm:$0xf] %vm921, %v5481
      %5514 = vst.msk [vmem:[%s445 + $0x4c] sm:$0xf] %vm921, %v5482
      %5515 = vst.msk [vmem:[%s445 + $0x50] sm:$0xf] %vm921, %v5483
      %5516 = vst.msk [vmem:[%s445 + $0x54] sm:$0xf] %vm921, %v5484
      %5517 = vst.msk [vmem:[%s445 + $0x58] sm:$0xf] %vm921, %v5485
      %5518 = vst.msk [vmem:[%s445 + $0x5c] sm:$0xf] %vm921, %v5486
      %5519 = vst.msk [vmem:[%s445 + $0x60] sm:$0xf] %vm921, %v5487
      %5520 = vst.msk [vmem:[%s445 + $0x64] sm:$0xf] %vm921, %v5488
      %5521 = vst.msk [vmem:[%s445 + $0x68] sm:$0xf] %vm921, %v5489
      %5522 = vst.msk [vmem:[%s445 + $0x6c] sm:$0xf] %vm921, %v5490
      %5523 = vst.msk [vmem:[%s445 + $0x70] sm:$0xf] %vm921, %v5491
      %5524 = vst.msk [vmem:[%s445 + $0x74] sm:$0xf] %vm921, %v5492
      %5525 = vst.msk [vmem:[%s445 + $0x78] sm:$0xf] %vm921, %v5493
      %5526 = vst.msk [vmem:[%s445 + $0x7c] sm:$0xf] %vm921, %v5494
      %s5527 = smul.u32 16, %s23
      %p5528 = scmp.lt.s32.totalorder %s22, 1
      %s5529 = scalar_select %p5528, %s22, 1
      %p5530 = scmp.lt.s32.totalorder %s5527, 15
      %s5531 = scalar_select %p5530, %s5527, 15
      %s5532 = smul.addr %s5531, 2
      %s5533 = smul.addr %s5529, 32
      %s5534 = sadd.s32 %s5532, %s5533
      %s5535 = smul.addr %s5534, 4
      %s5536 = scalar_lea.vmem %s7, %s5535
      // Predicated region
      $region65: #{analysis_side_net.5} parent=47 // pred_check
        %p5537 = pneg %p234
      $region66: #{analysis_side_net.5} parent=47 // pred_check_branch
        %5539 = sbr.rel (%p5537) target = $region68
      $region67: #{analysis_side_net.5} parent=47 // pred_region
        %s5540 = smul.u32 16, %s23
      $region68: #{analysis_side_net.5} parent=47 // pred_fallthru
        _
    $region48: #{analysis_side_net.5} parent=5 // pred_fallthru
      _
    %p5541 = scmp.le.s32.totalorder 2, %s13
    // Predicated region
    $region69: #{analysis_side_net.5} parent=5 // pred_check
      %p5542 = pneg %p5541
    $region70: #{analysis_side_net.5} parent=5 // pred_check_branch
      %5544 = sbr.rel (%p5542) target = $region72
    $region71: #{analysis_side_net.5} parent=5 // pred_region
      %s5545 = ssub.s32 %s13, 2
      // Predicated region
      $region73: #{analysis_side_net.5} parent=71 // pred_check
        %p5546 = pneg %p240
      $region74: #{analysis_side_net.5} parent=71 // pred_check_branch
        %5548 = sbr.rel (%p5546) target = $region76
      $region75: #{analysis_side_net.5} parent=71 // pred_region
        %s5549 = smul.u32 16, %s25
        %p5550 = scmp.lt.s32.totalorder %s24, 1
        %s5551 = scalar_select %p5550, %s24, 1
        %p5552 = scmp.lt.s32.totalorder %s5549, 15
        %s5553 = scalar_select %p5552, %s5549, 15
        %s5554 = smul.addr %s5553, 2
        %s5555 = smul.addr %s5551, 32
        %s5556 = sadd.s32 %s5554, %s5555
        %s5557 = smul.addr %s5556, 4
        %s5558 = scalar_lea.vmem %s7, %s5557
      $region76: #{analysis_side_net.5} parent=71 // pred_fallthru
        _
    $region72: #{analysis_side_net.5} parent=5 // pred_fallthru
      _
  $region6: #{analysis_side_net.5} parent=0 // loop_footer
    %s17 = sadd.s32 1, %s13
  $region7: #{analysis_side_net.5} parent=0 // loop_footer_branch
    %12 = sbr.rel target = $region3
  $region8: #{analysis_side_net.5} parent=0 // loop_exit
    _

// kernel: analysis_side_net.7
$region0: #{analysis_side_net.7}
  #allocation0 [shape = 'u32[]', space=smem, size = 0x4, offset = 0x4, fixed_abs, tag = 'smem constant byte address 0x4 - core index']
  #allocation1 [shape = 'u32[72,128]{1,0:T(1,128)}', space=vmem, size = 0x9000, scoped, tag = 'internal scratch']
  #allocation2 [shape = 'bf16[18,18,32]{2,1,0:T(8,128)(2,1)}', space=vmem, size = 0x1b000, scoped, tag = 'scratch operand']
  #allocation3 [shape = 'f32[1,1]{1,0:T(1,128)S(1)}', space=vmem, size = 0x200, scoped, tag = 'scoped memory for analysis_side_net.7']
  %s0 = inlined_call_operand.vmem [shape: bf16[2,16,16,32], index: 0, kind: input, shape index: {}, may-alias: {0,1,2}]
  %s1 = inlined_call_operand.vmem [shape: bf16[2,16,16,32], index: 1, kind: input, shape index: {}, may-alias: {0,1,2}]
  %s2 = inlined_call_operand.vmem [shape: bf16[2,16,16,32], index: 2, kind: input, shape index: {}, may-alias: {0,1,2}]
  %s3 = inlined_call_operand.vmem [shape: f32[9,32], index: 3, kind: input, shape index: {}]
  %s4 = inlined_call_operand.<no memory space> [shape: f32[1,1], index: 4, kind: input, shape index: {}]
  %s5 = inlined_call_operand.hbm [shape: f32[2,16,16], index: 5, kind: output, shape index: {}]
  %s6 = sld [smem:[#allocation0]]
  $region69: #{analysis_side_net.7} parent=0
    _
  %s8 = ssub.s32 1, %s6
  %s9 = scalar_select 0, %s8, %s6
  %v10 = vstv %s4
  %11 = vst [vmem:[#allocation3] sm:$0x1] %v10
  $region1: #{analysis_side_net.7} parent=0
    #allocation4 [shape = 'u8[16384]{0}', space=vmem, size = 0x4000, scoped, tag = 'output window, operand 0']
    #allocation5 [shape = 's32[2]{0}', space=sflag, size = 0x8, scoped, tag = 'scoped memory for analysis_side_net.7']
    %12 = vsyncpa [#allocation5], 0
    %s13 = scalar_lea.sflag [#allocation5], 1
    %14 = vsyncpa %s13, 0
    loop: start=0, step=1, limit=4
    $region2: #{analysis_side_net.7} parent=1 // loop_pre_header
      _
    $region3: #{analysis_side_net.7} parent=1 // loop_header
      %s16 = sphi 0, %s20
      %p17 = scmp.ge.s32.totalorder %s16, 4
      %s23 = sphi 0, %s35
      %s24 = sphi 0, %s31
      %s25 = sphi 0, %s23
      %s26 = sphi 0, %s24
      %s27 = sphi 0, %s25
      %s28 = sphi 0, %s26
      %s40 = sphi 0, %s42
      %s43 = sphi 0, %s40
      %s44 = sphi 0, %s43
      %s60 = sphi 0, %s44
      %s76 = sphi 0, %s78
      %s79 = sphi 0, %s76
      %s80 = sphi 0, %s79
      %s96 = sphi 0, %s80
      %s112 = sphi 0, %s114
      %s115 = sphi 0, %s112
      %s116 = sphi 0, %s115
      %s132 = sphi 0, %s116
      %s136 = sphi 0, %s136
      %s138 = sphi 0, %s136
      %s139 = sphi 0, %s138
      %s153 = sphi 0, %s139
      %s157 = sphi 0, %s157
      %s159 = sphi 0, %s157
      %s160 = sphi 0, %s159
      %s174 = sphi 0, %s160
      %s182 = sphi 0, %s184
      %s185 = sphi 0, %s182
      %s186 = sphi 0, %s185
      %s202 = sphi 0, %s186
    $region4: #{analysis_side_net.7} parent=1 // loop_header_branch
      %19 = sbr.rel (%p17) target = $region8
    $region5: #{analysis_side_net.7} parent=1 // loop_body
      %s21 = ssub.s32 %s16, 1
      %s22 = ssub.s32 %s16, 2
      %s29 = sadd.s32 1, %s24
      %p30 = scmp.ge.s32.totalorder %s29, 1
      %s31 = scalar_select %p30, 0, %s29
      %s32 = sadd.s32 1, %s23
      %s33 = scalar_select %p30, %s32, %s23
      %p34 = scmp.ge.s32.totalorder %s33, 2
      %s35 = scalar_select %p34, 0, %s33
      %s36 = ssub.s32 %s23, %s35
      %s37 = ssub.s32 %s24, %s31
      %s38 = sor.u32 %s36, %s37
      %p39 = scmp.eq.s32.totalorder %s38, 0
      %s41 = sadd.s32 %s40, 1
      %s42 = scalar_select %p39, %s40, %s41
      %p45 = pneg %p39
      %p46 = scmp.eq.s32.totalorder %s16, 1
      %p47 = por %p45, %p46
      %p48 = scmp.ne.s32.totalorder %s40, %s43
      %p49 = scmp.eq.s32.totalorder %s16, 0
      %p50 = por %p48, %p49
      %p51 = scmp.ne.s32.totalorder %s40, %s43
      %p52 = scmp.eq.s32.totalorder %s21, 1
      %p53 = por %p51, %p52
      %p54 = scmp.ne.s32.totalorder %s43, %s44
      %p55 = scmp.eq.s32.totalorder %s21, 0
      %p56 = por %p54, %p55
      %p57 = scmp.ne.s32.totalorder %s43, %s44
      %p58 = scmp.eq.s32.totalorder %s22, 1
      %p59 = por %p57, %p58
      %p61 = scmp.ne.s32.totalorder %s44, %s60
      %p62 = scmp.eq.s32.totalorder %s22, 0
      %p63 = por %p61, %p62
      %s64 = smul.u32 %s24, 16
      %s65 = ssub.s32 %s64, 1
      %p66 = scmp.gt.s32.totalorder %s65, 0
      %s67 = scalar_select %p66, %s65, 0
      %s68 = smul.u32 %s31, 16
      %s69 = ssub.s32 %s68, 1
      %p70 = scmp.gt.s32.totalorder %s69, 0
      %s71 = scalar_select %p70, %s69, 0
      %s72 = ssub.s32 %s23, %s35
      %s73 = ssub.s32 %s67, %s71
      %s74 = sor.u32 %s72, %s73
      %p75 = scmp.eq.s32.totalorder %s74, 0
      %s77 = sadd.s32 %s76, 1
      %s78 = scalar_select %p75, %s76, %s77
      %p81 = pneg %p75
      %p82 = scmp.eq.s32.totalorder %s16, 1
      %p83 = por %p81, %p82
      %p84 = scmp.ne.s32.totalorder %s76, %s79
      %p85 = scmp.eq.s32.totalorder %s16, 0
      %p86 = por %p84, %p85
      %p87 = scmp.ne.s32.totalorder %s76, %s79
      %p88 = scmp.eq.s32.totalorder %s21, 1
      %p89 = por %p87, %p88
      %p90 = scmp.ne.s32.totalorder %s79, %s80
      %p91 = scmp.eq.s32.totalorder %s21, 0
      %p92 = por %p90, %p91
      %p93 = scmp.ne.s32.totalorder %s79, %s80
      %p94 = scmp.eq.s32.totalorder %s22, 1
      %p95 = por %p93, %p94
      %p97 = scmp.ne.s32.totalorder %s80, %s96
      %p98 = scmp.eq.s32.totalorder %s22, 0
      %p99 = por %p97, %p98
      %s100 = smul.u32 %s24, 16
      %s101 = sadd.s32 %s100, 16
      %p102 = scmp.lt.s32.totalorder %s101, 15
      %s103 = scalar_select %p102, %s101, 15
      %s104 = smul.u32 %s31, 16
      %s105 = sadd.s32 %s104, 16
      %p106 = scmp.lt.s32.totalorder %s105, 15
      %s107 = scalar_select %p106, %s105, 15
      %s108 = ssub.s32 %s23, %s35
      %s109 = ssub.s32 %s103, %s107
      %s110 = sor.u32 %s108, %s109
      %p111 = scmp.eq.s32.totalorder %s110, 0
      %s113 = sadd.s32 %s112, 1
      %s114 = scalar_select %p111, %s112, %s113
      %p117 = pneg %p111
      %p118 = scmp.eq.s32.totalorder %s16, 1
      %p119 = por %p117, %p118
      %p120 = scmp.ne.s32.totalorder %s112, %s115
      %p121 = scmp.eq.s32.totalorder %s16, 0
      %p122 = por %p120, %p121
      %p123 = scmp.ne.s32.totalorder %s112, %s115
      %p124 = scmp.eq.s32.totalorder %s21, 1
      %p125 = por %p123, %p124
      %p126 = scmp.ne.s32.totalorder %s115, %s116
      %p127 = scmp.eq.s32.totalorder %s21, 0
      %p128 = por %p126, %p127
      %p129 = scmp.ne.s32.totalorder %s115, %s116
      %p130 = scmp.eq.s32.totalorder %s22, 1
      %p131 = por %p129, %p130
      %p133 = scmp.ne.s32.totalorder %s116, %s132
      %p134 = scmp.eq.s32.totalorder %s22, 0
      %p135 = por %p133, %p134
      %s137 = sadd.s32 %s136, 1
      %p140 = scmp.eq.s32.totalorder %s16, 1
      %p141 = scmp.ne.s32.totalorder %s136, %s138
      %p142 = scmp.eq.s32.totalorder %s16, 0
      %p143 = por %p141, %p142
      %p144 = scmp.ne.s32.totalorder %s136, %s138
      %p145 = scmp.eq.s32.totalorder %s21, 1
      %p146 = por %p144, %p145
      %p147 = scmp.ne.s32.totalorder %s138, %s139
      %p148 = scmp.eq.s32.totalorder %s21, 0
      %p149 = por %p147, %p148
      %p150 = scmp.ne.s32.totalorder %s138, %s139
      %p151 = scmp.eq.s32.totalorder %s22, 1
      %p152 = por %p150, %p151
      %p154 = scmp.ne.s32.totalorder %s139, %s153
      %p155 = scmp.eq.s32.totalorder %s22, 0
      %p156 = por %p154, %p155
      %s158 = sadd.s32 %s157, 1
      %p161 = scmp.eq.s32.totalorder %s16, 1
      %p162 = scmp.ne.s32.totalorder %s157, %s159
      %p163 = scmp.eq.s32.totalorder %s16, 0
      %p164 = por %p162, %p163
      %p165 = scmp.ne.s32.totalorder %s157, %s159
      %p166 = scmp.eq.s32.totalorder %s21, 1
      %p167 = por %p165, %p166
      %p168 = scmp.ne.s32.totalorder %s159, %s160
      %p169 = scmp.eq.s32.totalorder %s21, 0
      %p170 = por %p168, %p169
      %p171 = scmp.ne.s32.totalorder %s159, %s160
      %p172 = scmp.eq.s32.totalorder %s22, 1
      %p173 = por %p171, %p172
      %p175 = scmp.ne.s32.totalorder %s160, %s174
      %p176 = scmp.eq.s32.totalorder %s22, 0
      %p177 = por %p175, %p176
      %s178 = ssub.s32 %s23, %s35
      %s179 = ssub.s32 %s24, %s31
      %s180 = sor.u32 %s178, %s179
      %p181 = scmp.eq.s32.totalorder %s180, 0
      %s183 = sadd.s32 %s182, 1
      %s184 = scalar_select %p181, %s182, %s183
      %p187 = pneg %p181
      %p188 = scmp.eq.s32.totalorder %s16, 1
      %p189 = por %p187, %p188
      %p190 = scmp.ne.s32.totalorder %s182, %s185
      %p191 = scmp.eq.s32.totalorder %s16, 0
      %p192 = por %p190, %p191
      %p193 = scmp.ne.s32.totalorder %s182, %s185
      %p194 = scmp.eq.s32.totalorder %s21, 1
      %p195 = por %p193, %p194
      %p196 = scmp.ne.s32.totalorder %s185, %s186
      %p197 = scmp.eq.s32.totalorder %s21, 0
      %p198 = por %p196, %p197
      %p199 = scmp.ne.s32.totalorder %s185, %s186
      %p200 = scmp.eq.s32.totalorder %s22, 1
      %p201 = por %p199, %p200
      %p203 = scmp.ne.s32.totalorder %s186, %s202
      %p204 = scmp.eq.s32.totalorder %s22, 0
      %p205 = por %p203, %p204
      %p206 = scmp.le.s32.totalorder 1, %s16
      %p207 = scmp.lt.s32.totalorder %s16, 3
      %p208 = pnand %p206, %p207
      %p209 = pneg %p208
      // Predicated region
      $region9: #{analysis_side_net.7} parent=5 // pred_check
        _
      $region10: #{analysis_side_net.7} parent=5 // pred_check_branch
        %211 = sbr.rel (%p208) target = $region12
      $region11: #{analysis_side_net.7} parent=5 // pred_region
        %s212 = ssub.s32 %s16, 1
        // Predicated region
        $region13: #{analysis_side_net.7} parent=11 // pred_check
          %p213 = pneg %p149
        $region14: #{analysis_side_net.7} parent=11 // pred_check_branch
          %215 = sbr.rel (%p213) target = $region16
        $region15: #{analysis_side_net.7} parent=11 // pred_region
          _
        $region16: #{analysis_side_net.7} parent=11 // pred_fallthru
          _
        // Predicated region
        $region17: #{analysis_side_net.7} parent=11 // pred_check
          %p216 = pneg %p170
        $region18: #{analysis_side_net.7} parent=11 // pred_check_branch
          %218 = sbr.rel (%p216) target = $region20
        $region19: #{analysis_side_net.7} parent=11 // pred_region
          _
        $region20: #{analysis_side_net.7} parent=11 // pred_fallthru
          _
      $region12: #{analysis_side_net.7} parent=5 // pred_fallthru
        _
      %p219 = scmp.lt.s32.totalorder %s16, 2
      // Predicated region
      $region21: #{analysis_side_net.7} parent=5 // pred_check
        %p220 = pneg %p219
      $region22: #{analysis_side_net.7} parent=5 // pred_check_branch
        %222 = sbr.rel (%p220) target = $region24
      $region23: #{analysis_side_net.7} parent=5 // pred_region
        // Predicated region
        $region25: #{analysis_side_net.7} parent=23 // pred_check
          %p223 = pneg %p50
        $region26: #{analysis_side_net.7} parent=23 // pred_check_branch
          %225 = sbr.rel (%p223) target = $region28
        $region27: #{analysis_side_net.7} parent=23 // pred_region
          %s226 = smul.u32 16, %s24
          %p227 = scmp.lt.s32.totalorder %s23, 1
          %s228 = scalar_select %p227, %s23, 1
          %p229 = scmp.lt.s32.totalorder %s226, 15
          %s230 = scalar_select %p229, %s226, 15
          %s231 = smul.addr %s230, 2
          %s232 = smul.addr %s228, 32
          %s233 = sadd.s32 %s231, %s232
          %s234 = smul.addr %s233, 4
          %s235 = scalar_lea.vmem %s0, %s234
          %s236 = smul.u32 16, %s24
        $region28: #{analysis_side_net.7} parent=23 // pred_fallthru
          _
        // Predicated region
        $region29: #{analysis_side_net.7} parent=23 // pred_check
          %p237 = pneg %p86
        $region30: #{analysis_side_net.7} parent=23 // pred_check_branch
          %239 = sbr.rel (%p237) target = $region32
        $region31: #{analysis_side_net.7} parent=23 // pred_region
          %s240 = smul.u32 %s24, 16
          %s241 = ssub.s32 %s240, 1
          %p242 = scmp.gt.s32.totalorder %s241, 0
          %s243 = scalar_select %p242, %s241, 0
          %p244 = scmp.lt.s32.totalorder %s23, 1
          %s245 = scalar_select %p244, %s23, 1
          %p246 = scmp.lt.s32.totalorder %s243, 15
          %s247 = scalar_select %p246, %s243, 15
          %s248 = smul.addr %s247, 2
          %s249 = smul.addr %s245, 32
          %s250 = sadd.s32 %s248, %s249
          %s251 = smul.addr %s250, 4
          %s252 = scalar_lea.vmem %s1, %s251
          %s253 = smul.u32 %s24, 16
          %s254 = ssub.s32 %s253, 1
          %p255 = scmp.gt.s32.totalorder %s254, 0
          %s256 = scalar_select %p255, %s254, 0
        $region32: #{analysis_side_net.7} parent=23 // pred_fallthru
          _
        // Predicated region
        $region33: #{analysis_side_net.7} parent=23 // pred_check
          %p257 = pneg %p122
        $region34: #{analysis_side_net.7} parent=23 // pred_check_branch
          %259 = sbr.rel (%p257) target = $region36
        $region35: #{analysis_side_net.7} parent=23 // pred_region
          %s260 = smul.u32 %s24, 16
          %s261 = sadd.s32 %s260, 16
          %p262 = scmp.lt.s32.totalorder %s261, 15
          %s263 = scalar_select %p262, %s261, 15
          %p264 = scmp.lt.s32.totalorder %s23, 1
          %s265 = scalar_select %p264, %s23, 1
          %p266 = scmp.lt.s32.totalorder %s263, 15
          %s267 = scalar_select %p266, %s263, 15
          %s268 = smul.addr %s267, 2
          %s269 = smul.addr %s265, 32
          %s270 = sadd.s32 %s268, %s269
          %s271 = smul.addr %s270, 4
          %s272 = scalar_lea.vmem %s2, %s271
          %s273 = smul.u32 %s24, 16
          %s274 = sadd.s32 %s273, 16
          %p275 = scmp.lt.s32.totalorder %s274, 15
          %s276 = scalar_select %p275, %s274, 15
        $region36: #{analysis_side_net.7} parent=23 // pred_fallthru
          _
      $region24: #{analysis_side_net.7} parent=5 // pred_fallthru
        _
      %p277 = scmp.le.s32.totalorder 1, %s16
      %p278 = scmp.lt.s32.totalorder %s16, 3
      %p279 = pnand %p277, %p278
      %p280 = pneg %p279
      // Predicated region
      $region37: #{analysis_side_net.7} parent=5 // pred_check
        _
      $region38: #{analysis_side_net.7} parent=5 // pred_check_branch
        %282 = sbr.rel (%p279) target = $region40
      $region39: #{analysis_side_net.7} parent=5 // pred_region
        %s283 = ssub.s32 %s16, 1
        %s284 = smul.u32 16, %s26
        %p285 = scmp.lt.s32.totalorder %s25, 1
        %s286 = scalar_select %p285, %s25, 1
        %p287 = scmp.lt.s32.totalorder %s284, 15
        %s288 = scalar_select %p287, %s284, 15
        %s289 = smul.addr %s288, 2
        %s290 = smul.addr %s286, 32
        %s291 = sadd.s32 %s289, %s290
        %s292 = smul.addr %s291, 4
        %s293 = scalar_lea.vmem %s0, %s292
        %p294 = pneg %p56
        %p295 = pneg %p53
        %s296 = smul.u32 %s26, 16
        %s297 = ssub.s32 %s296, 1
        %p298 = scmp.gt.s32.totalorder %s297, 0
        %s299 = scalar_select %p298, %s297, 0
        %p300 = scmp.lt.s32.totalorder %s25, 1
        %s301 = scalar_select %p300, %s25, 1
        %p302 = scmp.lt.s32.totalorder %s299, 15
        %s303 = scalar_select %p302, %s299, 15
        %s304 = smul.addr %s303, 2
        %s305 = smul.addr %s301, 32
        %s306 = sadd.s32 %s304, %s305
        %s307 = smul.addr %s306, 4
        %s308 = scalar_lea.vmem %s1, %s307
        %p309 = pneg %p92
        %p310 = pneg %p89
        %s311 = smul.u32 %s26, 16
        %s312 = sadd.s32 %s311, 16
        %p313 = scmp.lt.s32.totalorder %s312, 15
        %s314 = scalar_select %p313, %s312, 15
        %p315 = scmp.lt.s32.totalorder %s25, 1
        %s316 = scalar_select %p315, %s25, 1
        %p317 = scmp.lt.s32.totalorder %s314, 15
        %s318 = scalar_select %p317, %s314, 15
        %s319 = smul.addr %s318, 2
        %s320 = smul.addr %s316, 32
        %s321 = sadd.s32 %s319, %s320
        %s322 = smul.addr %s321, 4
        %s323 = scalar_lea.vmem %s2, %s322
        %p324 = pneg %p128
        %p325 = pneg %p125
        %p326 = pneg %p149
        %p327 = pneg %p146
        %p328 = pneg %p170
        %p329 = pneg %p167
        %p330 = pneg %p198
        %p331 = pneg %p195
        %s332 = sand.u32 %s185, 1
        %s333 = scalar_lea.sflag [#allocation5], %s332
        %s334 = sand.u32 %s185, 1
        %s335 = smul.addr %s334, 16
        %s336 = scalar_lea.vmem [#allocation4], %s335
        %s337 = smul.u32 16, %s26
        %p338 = scmp.lt.s32.totalorder %s25, 1
        %s339 = scalar_select %p338, %s25, 1
        %p340 = scmp.lt.s32.totalorder %s337, 15
        %s341 = scalar_select %p340, %s337, 15
        %s342 = smul.addr %s341, 2
        %s343 = smul.addr %s339, 32
        %s344 = sadd.s32 %s342, %s343
        %s345 = smul.addr %s344, 4
        %s346 = scalar_lea.vmem %s0, %s345
        %s347 = smul.u32 16, %s26
        %s348 = smul.u32 %s26, 16
        %s349 = ssub.s32 %s348, 1
        %p350 = scmp.gt.s32.totalorder %s349, 0
        %s351 = scalar_select %p350, %s349, 0
        %p352 = scmp.lt.s32.totalorder %s25, 1
        %s353 = scalar_select %p352, %s25, 1
        %p354 = scmp.lt.s32.totalorder %s351, 15
        %s355 = scalar_select %p354, %s351, 15
        %s356 = smul.addr %s355, 2
        %s357 = smul.addr %s353, 32
        %s358 = sadd.s32 %s356, %s357
        %s359 = smul.addr %s358, 4
        %s360 = scalar_lea.vmem %s1, %s359
        %s361 = smul.u32 %s26, 16
        %s362 = ssub.s32 %s361, 1
        %p363 = scmp.gt.s32.totalorder %s362, 0
        %s364 = scalar_select %p363, %s362, 0
        %s365 = smul.u32 %s26, 16
        %s366 = sadd.s32 %s365, 16
        %p367 = scmp.lt.s32.totalorder %s366, 15
        %s368 = scalar_select %p367, %s366, 15
        %p369 = scmp.lt.s32.totalorder %s25, 1
        %s370 = scalar_select %p369, %s25, 1
        %p371 = scmp.lt.s32.totalorder %s368, 15
        %s372 = scalar_select %p371, %s368, 15
        %s373 = smul.addr %s372, 2
        %s374 = smul.addr %s370, 32
        %s375 = sadd.s32 %s373, %s374
        %s376 = smul.addr %s375, 4
        %s377 = scalar_lea.vmem %s2, %s376
        %s378 = smul.u32 %s26, 16
        %s379 = sadd.s32 %s378, 16
        %p380 = scmp.lt.s32.totalorder %s379, 15
        %s381 = scalar_select %p380, %s379, 15
        %s382 = smul.u32 2, %s26
        %vm384 = vcmask 253952
        %vm385 = vsmask.f32 256
        %vm386 = vmand %vm384, %vm385
        %v387 = vld [vmem:[#allocation2] sm:$0x1]
        %v388 = vsel %vm386, 0, %v387
        %389 = vst [vmem:[#allocation2] sm:$0x1] %v388
        %v390 = vld [vmem:[#allocation2 + $0xc] sm:$0x1]
        %v391 = vsel %vm386, 0, %v390
        %392 = vst [vmem:[#allocation2 + $0xc] sm:$0x1] %v391
        %v393 = vld [vmem:[#allocation2 + $0x18] sm:$0x1]
        %v394 = vsel %vm386, 0, %v393
        %395 = vst [vmem:[#allocation2 + $0x18] sm:$0x1] %v394
        %v396 = vld [vmem:[#allocation2 + $0x24] sm:$0x1]
        %v397 = vsel %vm386, 0, %v396
        %398 = vst [vmem:[#allocation2 + $0x24] sm:$0x1] %v397
        %v399 = vld [vmem:[#allocation2 + $0x30] sm:$0x1]
        %v400 = vsel %vm386, 0, %v399
        %401 = vst [vmem:[#allocation2 + $0x30] sm:$0x1] %v400
        %v402 = vld [vmem:[#allocation2 + $0x3c] sm:$0x1]
        %v403 = vsel %vm386, 0, %v402
        %404 = vst [vmem:[#allocation2 + $0x3c] sm:$0x1] %v403
        %v405 = vld [vmem:[#allocation2 + $0x48] sm:$0x1]
        %v406 = vsel %vm386, 0, %v405
        %407 = vst [vmem:[#allocation2 + $0x48] sm:$0x1] %v406
        %v408 = vld [vmem:[#allocation2 + $0x54] sm:$0x1]
        %v409 = vsel %vm386, 0, %v408
        %410 = vst [vmem:[#allocation2 + $0x54] sm:$0x1] %v409
        %v411 = vld [vmem:[#allocation2 + $0x60] sm:$0x1]
        %v412 = vsel %vm386, 0, %v411
        %413 = vst [vmem:[#allocation2 + $0x60] sm:$0x1] %v412
        %v414 = vld [vmem:[#allocation2 + $0x6c] sm:$0x1]
        %v415 = vsel %vm386, 0, %v414
        %416 = vst [vmem:[#allocation2 + $0x6c] sm:$0x1] %v415
        %v417 = vld [vmem:[#allocation2 + $0x78] sm:$0x1]
        %v418 = vsel %vm386, 0, %v417
        %419 = vst [vmem:[#allocation2 + $0x78] sm:$0x1] %v418
        %v420 = vld [vmem:[#allocation2 + $0x84] sm:$0x1]
        %v421 = vsel %vm386, 0, %v420
        %422 = vst [vmem:[#allocation2 + $0x84] sm:$0x1] %v421
        %v423 = vld [vmem:[#allocation2 + $0x90] sm:$0x1]
        %v424 = vsel %vm386, 0, %v423
        %425 = vst [vmem:[#allocation2 + $0x90] sm:$0x1] %v424
        %v426 = vld [vmem:[#allocation2 + $0x9c] sm:$0x1]
        %v427 = vsel %vm386, 0, %v426
        %428 = vst [vmem:[#allocation2 + $0x9c] sm:$0x1] %v427
        %v429 = vld [vmem:[#allocation2 + $0xa8] sm:$0x1]
        %v430 = vsel %vm386, 0, %v429
        %431 = vst [vmem:[#allocation2 + $0xa8] sm:$0x1] %v430
        %v432 = vld [vmem:[#allocation2 + $0xb4] sm:$0x1]
        %v433 = vsel %vm386, 0, %v432
        %434 = vst [vmem:[#allocation2 + $0xb4] sm:$0x1] %v433
        %v435 = vld [vmem:[#allocation2 + $0xc0] sm:$0x1]
        %v436 = vsel %vm386, 0, %v435
        %437 = vst [vmem:[#allocation2 + $0xc0] sm:$0x1] %v436
        %v438 = vld [vmem:[#allocation2 + $0xcc] sm:$0x1]
        %v439 = vsel %vm386, 0, %v438
        %440 = vst [vmem:[#allocation2 + $0xcc] sm:$0x1] %v439
        %vm441 = vsmask.f32 7938
        %vm442 = vmand %vm384, %vm441
        %v443 = vld [vmem:[#allocation2 + $0x8] sm:$0x1]
        %v444 = vsel %vm442, 0, %v443
        %445 = vst [vmem:[#allocation2 + $0x8] sm:$0x1] %v444
        %v446 = vld [vmem:[#allocation2 + $0x14] sm:$0x1]
        %v447 = vsel %vm442, 0, %v446
        %448 = vst [vmem:[#allocation2 + $0x14] sm:$0x1] %v447
        %v449 = vld [vmem:[#allocation2 + $0x20] sm:$0x1]
        %v450 = vsel %vm442, 0, %v449
        %451 = vst [vmem:[#allocation2 + $0x20] sm:$0x1] %v450
        %v452 = vld [vmem:[#allocation2 + $0x2c] sm:$0x1]
        %v453 = vsel %vm442, 0, %v452
        %454 = vst [vmem:[#allocation2 + $0x2c] sm:$0x1] %v453
        %v455 = vld [vmem:[#allocation2 + $0x38] sm:$0x1]
        %v456 = vsel %vm442, 0, %v455
        %457 = vst [vmem:[#allocation2 + $0x38] sm:$0x1] %v456
        %v458 = vld [vmem:[#allocation2 + $0x44] sm:$0x1]
        %v459 = vsel %vm442, 0, %v458
        %460 = vst [vmem:[#allocation2 + $0x44] sm:$0x1] %v459
        %v461 = vld [vmem:[#allocation2 + $0x50] sm:$0x1]
        %v462 = vsel %vm442, 0, %v461
        %463 = vst [vmem:[#allocation2 + $0x50] sm:$0x1] %v462
        %v464 = vld [vmem:[#allocation2 + $0x5c] sm:$0x1]
        %v465 = vsel %vm442, 0, %v464
        %466 = vst [vmem:[#allocation2 + $0x5c] sm:$0x1] %v465
        %v467 = vld [vmem:[#allocation2 + $0x68] sm:$0x1]
        %v468 = vsel %vm442, 0, %v467
        %469 = vst [vmem:[#allocation2 + $0x68] sm:$0x1] %v468
        %v470 = vld [vmem:[#allocation2 + $0x74] sm:$0x1]
        %v471 = vsel %vm442, 0, %v470
        %472 = vst [vmem:[#allocation2 + $0x74] sm:$0x1] %v471
        %v473 = vld [vmem:[#allocation2 + $0x80] sm:$0x1]
        %v474 = vsel %vm442, 0, %v473
        %475 = vst [vmem:[#allocation2 + $0x80] sm:$0x1] %v474
        %v476 = vld [vmem:[#allocation2 + $0x8c] sm:$0x1]
        %v477 = vsel %vm442, 0, %v476
        %478 = vst [vmem:[#allocation2 + $0x8c] sm:$0x1] %v477
        %v479 = vld [vmem:[#allocation2 + $0x98] sm:$0x1]
        %v480 = vsel %vm442, 0, %v479
        %481 = vst [vmem:[#allocation2 + $0x98] sm:$0x1] %v480
        %v482 = vld [vmem:[#allocation2 + $0xa4] sm:$0x1]
        %v483 = vsel %vm442, 0, %v482
        %484 = vst [vmem:[#allocation2 + $0xa4] sm:$0x1] %v483
        %v485 = vld [vmem:[#allocation2 + $0xb0] sm:$0x1]
        %v486 = vsel %vm442, 0, %v485
        %487 = vst [vmem:[#allocation2 + $0xb0] sm:$0x1] %v486
        %v488 = vld [vmem:[#allocation2 + $0xbc] sm:$0x1]
        %v489 = vsel %vm442, 0, %v488
        %490 = vst [vmem:[#allocation2 + $0xbc] sm:$0x1] %v489
        %v491 = vld [vmem:[#allocation2 + $0xc8] sm:$0x1]
        %v492 = vsel %vm442, 0, %v491
        %493 = vst [vmem:[#allocation2 + $0xc8] sm:$0x1] %v492
        %v494 = vld [vmem:[#allocation2 + $0xd4] sm:$0x1]
        %v495 = vsel %vm442, 0, %v494
        %496 = vst [vmem:[#allocation2 + $0xd4] sm:$0x1] %v495
        %v497 = vld [vmem:[%s346] sm:$0xf]
        %v498 = vld [vmem:[%s346 + $0x4] sm:$0xf]
        %v499 = vld [vmem:[%s346 + $0x8] sm:$0xf]
        %v500 = vld [vmem:[%s346 + $0xc] sm:$0xf]
        %v501 = vld [vmem:[%s346 + $0x10] sm:$0xf]
        %v502 = vld [vmem:[%s346 + $0x14] sm:$0xf]
        %v503 = vld [vmem:[%s346 + $0x18] sm:$0xf]
        %v504 = vld [vmem:[%s346 + $0x1c] sm:$0xf]
        %v505 = vld [vmem:[%s346 + $0x20] sm:$0xf]
        %v506 = vld [vmem:[%s346 + $0x24] sm:$0xf]
        %v507 = vld [vmem:[%s346 + $0x28] sm:$0xf]
        %v508 = vld [vmem:[%s346 + $0x2c] sm:$0xf]
        %v509 = vld [vmem:[%s346 + $0x30] sm:$0xf]
        %v510 = vld [vmem:[%s346 + $0x34] sm:$0xf]
        %v511 = vld [vmem:[%s346 + $0x38] sm:$0xf]
        %v512 = vld [vmem:[%s346 + $0x3c] sm:$0xf]
        %v513 = vld [vmem:[%s346 + $0x40] sm:$0xf]
        %v514 = vld [vmem:[%s346 + $0x44] sm:$0xf]
        %v515 = vld [vmem:[%s346 + $0x48] sm:$0xf]
        %v516 = vld [vmem:[%s346 + $0x4c] sm:$0xf]
        %v517 = vld [vmem:[%s346 + $0x50] sm:$0xf]
        %v518 = vld [vmem:[%s346 + $0x54] sm:$0xf]
        %v519 = vld [vmem:[%s346 + $0x58] sm:$0xf]
        %v520 = vld [vmem:[%s346 + $0x5c] sm:$0xf]
        %v521 = vld [vmem:[%s346 + $0x60] sm:$0xf]
        %v522 = vld [vmem:[%s346 + $0x64] sm:$0xf]
        %v523 = vld [vmem:[%s346 + $0x68] sm:$0xf]
        %v524 = vld [vmem:[%s346 + $0x6c] sm:$0xf]
        %v525 = vld [vmem:[%s346 + $0x70] sm:$0xf]
        %v526 = vld [vmem:[%s346 + $0x74] sm:$0xf]
        %v527 = vld [vmem:[%s346 + $0x78] sm:$0xf]
        %v528 = vld [vmem:[%s346 + $0x7c] sm:$0xf]
        %vm529 = vsmask.f32 4368
        %vm530 = vmor %vm385, %vm529
        %v532 = vshrl.u32 %v497, 16
        %v534 = vrot.slane %v532, 7
        %v535 = vshll.u32 %v497, 16
        %v537 = vor.u32 %v534, %v535
        %v538 = vrot.slane %v534, 4
        %v540 = vshrl.u32 %v498, 16
        %v542 = vrot.slane %v540, 7
        %v543 = vshll.u32 %v498, 16
        %v545 = vor.u32 %v542, %v543
        %v546 = vsel %vm530, %v538, %v545
        %v547 = vrot.slane %v542, 4
        %v549 = vshrl.u32 %v499, 16
        %v551 = vrot.slane %v549, 7
        %v552 = vshll.u32 %v499, 16
        %v554 = vor.u32 %v551, %v552
        %v555 = vrot.slane %v551, 4
        %v557 = vshrl.u32 %v500, 16
        %v559 = vrot.slane %v557, 7
        %v560 = vshll.u32 %v500, 16
        %v562 = vor.u32 %v559, %v560
        %v563 = vsel %vm530, %v555, %v562
        %v564 = vrot.slane %v559, 4
        %v566 = vshrl.u32 %v501, 16
        %v568 = vrot.slane %v566, 7
        %v569 = vshll.u32 %v501, 16
        %v571 = vor.u32 %v568, %v569
        %v572 = vrot.slane %v568, 4
        %v574 = vshrl.u32 %v502, 16
        %v576 = vrot.slane %v574, 7
        %v577 = vshll.u32 %v502, 16
        %v579 = vor.u32 %v576, %v577
        %v580 = vsel %vm530, %v572, %v579
        %v581 = vrot.slane %v576, 4
        %v583 = vshrl.u32 %v503, 16
        %v585 = vrot.slane %v583, 7
        %v586 = vshll.u32 %v503, 16
        %v588 = vor.u32 %v585, %v586
        %v589 = vrot.slane %v585, 4
        %v591 = vshrl.u32 %v504, 16
        %v593 = vrot.slane %v591, 7
        %v594 = vshll.u32 %v504, 16
        %v596 = vor.u32 %v593, %v594
        %v597 = vsel %vm530, %v589, %v596
        %v598 = vrot.slane %v593, 4
        %v600 = vshrl.u32 %v505, 16
        %v602 = vrot.slane %v600, 7
        %v603 = vshll.u32 %v505, 16
        %v605 = vor.u32 %v602, %v603
        %v606 = vrot.slane %v602, 4
        %v608 = vshrl.u32 %v506, 16
        %v610 = vrot.slane %v608, 7
        %v611 = vshll.u32 %v506, 16
        %v613 = vor.u32 %v610, %v611
        %v614 = vsel %vm530, %v606, %v613
        %v615 = vrot.slane %v610, 4
        %v617 = vshrl.u32 %v507, 16
        %v619 = vrot.slane %v617, 7
        %v620 = vshll.u32 %v507, 16
        %v622 = vor.u32 %v619, %v620
        %v623 = vrot.slane %v619, 4
        %v625 = vshrl.u32 %v508, 16
        %v627 = vrot.slane %v625, 7
        %v628 = vshll.u32 %v508, 16
        %v630 = vor.u32 %v627, %v628
        %v631 = vsel %vm530, %v623, %v630
        %v632 = vrot.slane %v627, 4
        %v634 = vshrl.u32 %v509, 16
        %v636 = vrot.slane %v634, 7
        %v637 = vshll.u32 %v509, 16
        %v639 = vor.u32 %v636, %v637
        %v640 = vrot.slane %v636, 4
        %v642 = vshrl.u32 %v510, 16
        %v644 = vrot.slane %v642, 7
        %v645 = vshll.u32 %v510, 16
        %v647 = vor.u32 %v644, %v645
        %v648 = vsel %vm530, %v640, %v647
        %v649 = vrot.slane %v644, 4
        %v651 = vshrl.u32 %v511, 16
        %v653 = vrot.slane %v651, 7
        %v654 = vshll.u32 %v511, 16
        %v656 = vor.u32 %v653, %v654
        %v657 = vrot.slane %v653, 4
        %v659 = vshrl.u32 %v512, 16
        %v661 = vrot.slane %v659, 7
        %v662 = vshll.u32 %v512, 16
        %v664 = vor.u32 %v661, %v662
        %v665 = vsel %vm530, %v657, %v664
        %v666 = vrot.slane %v661, 4
        %v668 = vshrl.u32 %v513, 16
        %v670 = vrot.slane %v668, 7
        %v671 = vshll.u32 %v513, 16
        %v673 = vor.u32 %v670, %v671
        %v674 = vrot.slane %v670, 4
        %v676 = vshrl.u32 %v514, 16
        %v678 = vrot.slane %v676, 7
        %v679 = vshll.u32 %v514, 16
        %v681 = vor.u32 %v678, %v679
        %v682 = vsel %vm530, %v674, %v681
        %v683 = vrot.slane %v678, 4
        %v685 = vshrl.u32 %v515, 16
        %v687 = vrot.slane %v685, 7
        %v688 = vshll.u32 %v515, 16
        %v690 = vor.u32 %v687, %v688
        %v691 = vrot.slane %v687, 4
        %v693 = vshrl.u32 %v516, 16
        %v695 = vrot.slane %v693, 7
        %v696 = vshll.u32 %v516, 16
        %v698 = vor.u32 %v695, %v696
        %v699 = vsel %vm530, %v691, %v698
        %v700 = vrot.slane %v695, 4
        %v702 = vshrl.u32 %v517, 16
        %v704 = vrot.slane %v702, 7
        %v705 = vshll.u32 %v517, 16
        %v707 = vor.u32 %v704, %v705
        %v708 = vrot.slane %v704, 4
        %v710 = vshrl.u32 %v518, 16
        %v712 = vrot.slane %v710, 7
        %v713 = vshll.u32 %v518, 16
        %v715 = vor.u32 %v712, %v713
        %v716 = vsel %vm530, %v708, %v715
        %v717 = vrot.slane %v712, 4
        %v719 = vshrl.u32 %v519, 16
        %v721 = vrot.slane %v719, 7
        %v722 = vshll.u32 %v519, 16
        %v724 = vor.u32 %v721, %v722
        %v725 = vrot.slane %v721, 4
        %v727 = vshrl.u32 %v520, 16
        %v729 = vrot.slane %v727, 7
        %v730 = vshll.u32 %v520, 16
        %v732 = vor.u32 %v729, %v730
        %v733 = vsel %vm530, %v725, %v732
        %v734 = vrot.slane %v729, 4
        %v736 = vshrl.u32 %v521, 16
        %v738 = vrot.slane %v736, 7
        %v739 = vshll.u32 %v521, 16
        %v741 = vor.u32 %v738, %v739
        %v742 = vrot.slane %v738, 4
        %v744 = vshrl.u32 %v522, 16
        %v746 = vrot.slane %v744, 7
        %v747 = vshll.u32 %v522, 16
        %v749 = vor.u32 %v746, %v747
        %v750 = vsel %vm530, %v742, %v749
        %v751 = vrot.slane %v746, 4
        %v753 = vshrl.u32 %v523, 16
        %v755 = vrot.slane %v753, 7
        %v756 = vshll.u32 %v523, 16
        %v758 = vor.u32 %v755, %v756
        %v759 = vrot.slane %v755, 4
        %v761 = vshrl.u32 %v524, 16
        %v763 = vrot.slane %v761, 7
        %v764 = vshll.u32 %v524, 16
        %v766 = vor.u32 %v763, %v764
        %v767 = vsel %vm530, %v759, %v766
        %v768 = vrot.slane %v763, 4
        %v770 = vshrl.u32 %v525, 16
        %v772 = vrot.slane %v770, 7
        %v773 = vshll.u32 %v525, 16
        %v775 = vor.u32 %v772, %v773
        %v776 = vrot.slane %v772, 4
        %v778 = vshrl.u32 %v526, 16
        %v780 = vrot.slane %v778, 7
        %v781 = vshll.u32 %v526, 16
        %v783 = vor.u32 %v780, %v781
        %v784 = vsel %vm530, %v776, %v783
        %v785 = vrot.slane %v780, 4
        %v787 = vshrl.u32 %v527, 16
        %v789 = vrot.slane %v787, 7
        %v790 = vshll.u32 %v527, 16
        %v792 = vor.u32 %v789, %v790
        %v793 = vrot.slane %v789, 4
        %v795 = vshrl.u32 %v528, 16
        %v797 = vrot.slane %v795, 7
        %v798 = vshll.u32 %v528, 16
        %v800 = vor.u32 %v797, %v798
        %v801 = vsel %vm530, %v793, %v800
        %v802 = vrot.slane %v797, 4
        %s851 = scalar_lea.vmem [#allocation2], 12
        %vm852 = vcmask 257024
        %vm853 = vmand %vm852, %vm441
        %v854 = vld [vmem:[%s851] sm:$0xf]
        %v855 = vsel %vm853, %v537, %v854
        %856 = vst [vmem:[%s851] sm:$0xf] %v855
        %vm857 = vcmask 257024
        %858 = vst.msk [vmem:[%s851 + $0x4] sm:$0xf] %vm857, %v546
        %v859 = vld [vmem:[%s851 + $0x8] sm:$0x1]
        %v860 = vsel %vm386, %v547, %v859
        %861 = vst [vmem:[%s851 + $0x8] sm:$0x1] %v860
        %v862 = vld [vmem:[%s851 + $0xc] sm:$0xf]
        %v863 = vsel %vm853, %v554, %v862
        %864 = vst [vmem:[%s851 + $0xc] sm:$0xf] %v863
        %865 = vst.msk [vmem:[%s851 + $0x10] sm:$0xf] %vm857, %v563
        %v866 = vld [vmem:[%s851 + $0x14] sm:$0x1]
        %v867 = vsel %vm386, %v564, %v866
        %868 = vst [vmem:[%s851 + $0x14] sm:$0x1] %v867
        %v869 = vld [vmem:[%s851 + $0x18] sm:$0xf]
        %v870 = vsel %vm853, %v571, %v869
        %871 = vst [vmem:[%s851 + $0x18] sm:$0xf] %v870
        %872 = vst.msk [vmem:[%s851 + $0x1c] sm:$0xf] %vm857, %v580
        %v873 = vld [vmem:[%s851 + $0x20] sm:$0x1]
        %v874 = vsel %vm386, %v581, %v873
        %875 = vst [vmem:[%s851 + $0x20] sm:$0x1] %v874
        %v876 = vld [vmem:[%s851 + $0x24] sm:$0xf]
        %v877 = vsel %vm853, %v588, %v876
        %878 = vst [vmem:[%s851 + $0x24] sm:$0xf] %v877
        %879 = vst.msk [vmem:[%s851 + $0x28] sm:$0xf] %vm857, %v597
        %v880 = vld [vmem:[%s851 + $0x2c] sm:$0x1]
        %v881 = vsel %vm386, %v598, %v880
        %882 = vst [vmem:[%s851 + $0x2c] sm:$0x1] %v881
        %v883 = vld [vmem:[%s851 + $0x30] sm:$0xf]
        %v884 = vsel %vm853, %v605, %v883
        %885 = vst [vmem:[%s851 + $0x30] sm:$0xf] %v884
        %886 = vst.msk [vmem:[%s851 + $0x34] sm:$0xf] %vm857, %v614
        %v887 = vld [vmem:[%s851 + $0x38] sm:$0x1]
        %v888 = vsel %vm386, %v615, %v887
        %889 = vst [vmem:[%s851 + $0x38] sm:$0x1] %v888
        %v890 = vld [vmem:[%s851 + $0x3c] sm:$0xf]
        %v891 = vsel %vm853, %v622, %v890
        %892 = vst [vmem:[%s851 + $0x3c] sm:$0xf] %v891
        %893 = vst.msk [vmem:[%s851 + $0x40] sm:$0xf] %vm857, %v631
        %v894 = vld [vmem:[%s851 + $0x44] sm:$0x1]
        %v895 = vsel %vm386, %v632, %v894
        %896 = vst [vmem:[%s851 + $0x44] sm:$0x1] %v895
        %v897 = vld [vmem:[%s851 + $0x48] sm:$0xf]
        %v898 = vsel %vm853, %v639, %v897
        %899 = vst [vmem:[%s851 + $0x48] sm:$0xf] %v898
        %900 = vst.msk [vmem:[%s851 + $0x4c] sm:$0xf] %vm857, %v648
        %v901 = vld [vmem:[%s851 + $0x50] sm:$0x1]
        %v902 = vsel %vm386, %v649, %v901
        %903 = vst [vmem:[%s851 + $0x50] sm:$0x1] %v902
        %v904 = vld [vmem:[%s851 + $0x54] sm:$0xf]
        %v905 = vsel %vm853, %v656, %v904
        %906 = vst [vmem:[%s851 + $0x54] sm:$0xf] %v905
        %907 = vst.msk [vmem:[%s851 + $0x58] sm:$0xf] %vm857, %v665
        %v908 = vld [vmem:[%s851 + $0x5c] sm:$0x1]
        %v909 = vsel %vm386, %v666, %v908
        %910 = vst [vmem:[%s851 + $0x5c] sm:$0x1] %v909
        %v911 = vld [vmem:[%s851 + $0x60] sm:$0xf]
        %v912 = vsel %vm853, %v673, %v911
        %913 = vst [vmem:[%s851 + $0x60] sm:$0xf] %v912
        %914 = vst.msk [vmem:[%s851 + $0x64] sm:$0xf] %vm857, %v682
        %v915 = vld [vmem:[%s851 + $0x68] sm:$0x1]
        %v916 = vsel %vm386, %v683, %v915
        %917 = vst [vmem:[%s851 + $0x68] sm:$0x1] %v916
        %v918 = vld [vmem:[%s851 + $0x6c] sm:$0xf]
        %v919 = vsel %vm853, %v690, %v918
        %920 = vst [vmem:[%s851 + $0x6c] sm:$0xf] %v919
        %921 = vst.msk [vmem:[%s851 + $0x70] sm:$0xf] %vm857, %v699
        %v922 = vld [vmem:[%s851 + $0x74] sm:$0x1]
        %v923 = vsel %vm386, %v700, %v922
        %924 = vst [vmem:[%s851 + $0x74] sm:$0x1] %v923
        %v925 = vld [vmem:[%s851 + $0x78] sm:$0xf]
        %v926 = vsel %vm853, %v707, %v925
        %927 = vst [vmem:[%s851 + $0x78] sm:$0xf] %v926
        %928 = vst.msk [vmem:[%s851 + $0x7c] sm:$0xf] %vm857, %v716
        %v929 = vld [vmem:[%s851 + $0x80] sm:$0x1]
        %v930 = vsel %vm386, %v717, %v929
        %931 = vst [vmem:[%s851 + $0x80] sm:$0x1] %v930
        %v932 = vld [vmem:[%s851 + $0x84] sm:$0xf]
        %v933 = vsel %vm853, %v724, %v932
        %934 = vst [vmem:[%s851 + $0x84] sm:$0xf] %v933
        %935 = vst.msk [vmem:[%s851 + $0x88] sm:$0xf] %vm857, %v733
        %v936 = vld [vmem:[%s851 + $0x8c] sm:$0x1]
        %v937 = vsel %vm386, %v734, %v936
        %938 = vst [vmem:[%s851 + $0x8c] sm:$0x1] %v937
        %v939 = vld [vmem:[%s851 + $0x90] sm:$0xf]
        %v940 = vsel %vm853, %v741, %v939
        %941 = vst [vmem:[%s851 + $0x90] sm:$0xf] %v940
        %942 = vst.msk [vmem:[%s851 + $0x94] sm:$0xf] %vm857, %v750
        %v943 = vld [vmem:[%s851 + $0x98] sm:$0x1]
        %v944 = vsel %vm386, %v751, %v943
        %945 = vst [vmem:[%s851 + $0x98] sm:$0x1] %v944
        %v946 = vld [vmem:[%s851 + $0x9c] sm:$0xf]
        %v947 = vsel %vm853, %v758, %v946
        %948 = vst [vmem:[%s851 + $0x9c] sm:$0xf] %v947
        %949 = vst.msk [vmem:[%s851 + $0xa0] sm:$0xf] %vm857, %v767
        %v950 = vld [vmem:[%s851 + $0xa4] sm:$0x1]
        %v951 = vsel %vm386, %v768, %v950
        %952 = vst [vmem:[%s851 + $0xa4] sm:$0x1] %v951
        %v953 = vld [vmem:[%s851 + $0xa8] sm:$0xf]
        %v954 = vsel %vm853, %v775, %v953
        %955 = vst [vmem:[%s851 + $0xa8] sm:$0xf] %v954
        %956 = vst.msk [vmem:[%s851 + $0xac] sm:$0xf] %vm857, %v784
        %v957 = vld [vmem:[%s851 + $0xb0] sm:$0x1]
        %v958 = vsel %vm386, %v785, %v957
        %959 = vst [vmem:[%s851 + $0xb0] sm:$0x1] %v958
        %v960 = vld [vmem:[%s851 + $0xb4] sm:$0xf]
        %v961 = vsel %vm853, %v792, %v960
        %962 = vst [vmem:[%s851 + $0xb4] sm:$0xf] %v961
        %963 = vst.msk [vmem:[%s851 + $0xb8] sm:$0xf] %vm857, %v801
        %v964 = vld [vmem:[%s851 + $0xbc] sm:$0x1]
        %v965 = vsel %vm386, %v802, %v964
        %966 = vst [vmem:[%s851 + $0xbc] sm:$0x1] %v965
        %p967 = scmp.gt.s32.totalorder %s26, 0
        // Predicated region
        $region41: #{analysis_side_net.7} parent=39 // pred_check
          %p968 = pneg %p967
        $region42: #{analysis_side_net.7} parent=39 // pred_check_branch
          %970 = sbr.rel (%p968) target = $region44
        $region43: #{analysis_side_net.7} parent=39 // pred_region
          %v971 = vld [vmem:[%s360] sm:$0xf]
          %v972 = vld [vmem:[%s360 + $0x4] sm:$0xf]
          %v974 = vshrl.u32 %v971, 16
          %v976 = vrot.slane %v974, 7
          %v977 = vshll.u32 %v971, 16
          %v979 = vor.u32 %v976, %v977
          %v980 = vrot.slane %v976, 4
          %v982 = vshrl.u32 %v972, 16
          %v984 = vrot.slane %v982, 7
          %v985 = vshll.u32 %v972, 16
          %v987 = vor.u32 %v984, %v985
          %v988 = vsel %vm530, %v980, %v987
          %v989 = vrot.slane %v984, 4
          %v993 = vld [vmem:[#allocation2] sm:$0xf]
          %v994 = vsel %vm853, %v979, %v993
          %995 = vst [vmem:[#allocation2] sm:$0xf] %v994
          %996 = vst.msk [vmem:[#allocation2 + $0x4] sm:$0xf] %vm857, %v988
          %v997 = vld [vmem:[#allocation2 + $0x8] sm:$0x1]
          %v998 = vsel %vm386, %v989, %v997
          %999 = vst [vmem:[#allocation2 + $0x8] sm:$0x1] %v998
        $region44: #{analysis_side_net.7} parent=39 // pred_fallthru
          _
        %p1000 = scmp.eq.s32.totalorder %s26, 0
        // Predicated region
        $region45: #{analysis_side_net.7} parent=39 // pred_check
          %p1001 = pneg %p1000
        $region46: #{analysis_side_net.7} parent=39 // pred_check_branch
          %1003 = sbr.rel (%p1001) target = $region48
        $region47: #{analysis_side_net.7} parent=39 // pred_region
          %v1004 = vld [vmem:[#allocation2] sm:$0xf]
          %v1005 = vsel %vm853, 0, %v1004
          %1006 = vst [vmem:[#allocation2] sm:$0xf] %v1005
          %1007 = vst.msk [vmem:[#allocation2 + $0x4] sm:$0xf] %vm857, 0
          %v1008 = vld [vmem:[#allocation2 + $0x8] sm:$0x1]
          %v1009 = vsel %vm386, 0, %v1008
          %1010 = vst [vmem:[#allocation2 + $0x8] sm:$0x1] %v1009
        $region48: #{analysis_side_net.7} parent=39 // pred_fallthru
          _
        %p1011 = scmp.lt.s32.totalorder %s26, 0
        // Predicated region
        $region49: #{analysis_side_net.7} parent=39 // pred_check
          %p1012 = pneg %p1011
        $region50: #{analysis_side_net.7} parent=39 // pred_check_branch
          %1014 = sbr.rel (%p1012) target = $region52
        $region51: #{analysis_side_net.7} parent=39 // pred_region
          %v1015 = vld [vmem:[%s377] sm:$0xf]
          %v1016 = vld [vmem:[%s377 + $0x4] sm:$0xf]
          %v1018 = vshrl.u32 %v1015, 16
          %v1020 = vrot.slane %v1018, 7
          %v1021 = vshll.u32 %v1015, 16
          %v1023 = vor.u32 %v1020, %v1021
          %v1024 = vrot.slane %v1020, 4
          %v1026 = vshrl.u32 %v1016, 16
          %v1028 = vrot.slane %v1026, 7
          %v1029 = vshll.u32 %v1016, 16
          %v1031 = vor.u32 %v1028, %v1029
          %v1032 = vsel %vm530, %v1024, %v1031
          %v1033 = vrot.slane %v1028, 4
          %s1037 = scalar_lea.vmem [#allocation2], 204
          %v1038 = vld [vmem:[%s1037] sm:$0xf]
          %v1039 = vsel %vm853, %v1023, %v1038
          %1040 = vst [vmem:[%s1037] sm:$0xf] %v1039
          %1041 = vst.msk [vmem:[%s1037 + $0x4] sm:$0xf] %vm857, %v1032
          %v1042 = vld [vmem:[%s1037 + $0x8] sm:$0x1]
          %v1043 = vsel %vm386, %v1033, %v1042
          %1044 = vst [vmem:[%s1037 + $0x8] sm:$0x1] %v1043
        $region52: #{analysis_side_net.7} parent=39 // pred_fallthru
          _
        // Predicated region
        $region53: #{analysis_side_net.7} parent=39 // pred_check
          %p1045 = pneg %p1000
        $region54: #{analysis_side_net.7} parent=39 // pred_check_branch
          %1047 = sbr.rel (%p1045) target = $region56
        $region55: #{analysis_side_net.7} parent=39 // pred_region
          %s1048 = scalar_lea.vmem [#allocation2], 204
          %v1049 = vld [vmem:[%s1048] sm:$0xf]
          %v1050 = vsel %vm853, 0, %v1049
          %1051 = vst [vmem:[%s1048] sm:$0xf] %v1050
          %1052 = vst.msk [vmem:[%s1048 + $0x4] sm:$0xf] %vm857, 0
          %v1053 = vld [vmem:[%s1048 + $0x8] sm:$0x1]
          %v1054 = vsel %vm386, 0, %v1053
          %1055 = vst [vmem:[%s1048 + $0x8] sm:$0x1] %v1054
        $region56: #{analysis_side_net.7} parent=39 // pred_fallthru
          _
        %v1056 = vld [vmem:[#allocation2] sm:$0xf]
        %v1057 = vld [vmem:[#allocation2 + $0x4] sm:$0xf]
        %v1058 = vld [vmem:[#allocation2 + $0xc] sm:$0xf]
        %v1059 = vld [vmem:[#allocation2 + $0x10] sm:$0xf]
        %v1060 = vld [vmem:[#allocation2 + $0x18] sm:$0xf]
        %v1061 = vld [vmem:[#allocation2 + $0x1c] sm:$0xf]
        %v1062 = vld [vmem:[#allocation2 + $0x24] sm:$0xf]
        %v1063 = vld [vmem:[#allocation2 + $0x28] sm:$0xf]
        %v1064 = vld [vmem:[#allocation2 + $0x30] sm:$0xf]
        %v1065 = vld [vmem:[#allocation2 + $0x34] sm:$0xf]
        %v1066 = vld [vmem:[#allocation2 + $0x3c] sm:$0xf]
        %v1067 = vld [vmem:[#allocation2 + $0x40] sm:$0xf]
        %v1068 = vld [vmem:[#allocation2 + $0x48] sm:$0xf]
        %v1069 = vld [vmem:[#allocation2 + $0x4c] sm:$0xf]
        %v1070 = vld [vmem:[#allocation2 + $0x54] sm:$0xf]
        %v1071 = vld [vmem:[#allocation2 + $0x58] sm:$0xf]
        %v1072 = vld [vmem:[#allocation2 + $0x60] sm:$0xf]
        %v1073 = vld [vmem:[#allocation2 + $0x64] sm:$0xf]
        %v1074 = vld [vmem:[#allocation2 + $0x6c] sm:$0xf]
        %v1075 = vld [vmem:[#allocation2 + $0x70] sm:$0xf]
        %v1076 = vld [vmem:[#allocation2 + $0x78] sm:$0xf]
        %v1077 = vld [vmem:[#allocation2 + $0x7c] sm:$0xf]
        %v1078 = vld [vmem:[#allocation2 + $0x84] sm:$0xf]
        %v1079 = vld [vmem:[#allocation2 + $0x88] sm:$0xf]
        %v1080 = vld [vmem:[#allocation2 + $0x90] sm:$0xf]
        %v1081 = vld [vmem:[#allocation2 + $0x94] sm:$0xf]
        %v1082 = vld [vmem:[#allocation2 + $0x9c] sm:$0xf]
        %v1083 = vld [vmem:[#allocation2 + $0xa0] sm:$0xf]
        %v1084 = vld [vmem:[#allocation2 + $0xa8] sm:$0xf]
        %v1085 = vld [vmem:[#allocation2 + $0xac] sm:$0xf]
        %v1086 = vld [vmem:[#allocation2 + $0xb4] sm:$0xf]
        %v1087 = vld [vmem:[#allocation2 + $0xb8] sm:$0xf]
        %v1088 = vunpack.c.l.bf16 %v1056
        %v1089 = vunpack.c.l.bf16 %v1057
        %v1090 = vunpack.c.l.bf16 %v1058
        %v1091 = vunpack.c.l.bf16 %v1059
        %v1092 = vunpack.c.l.bf16 %v1060
        %v1093 = vunpack.c.l.bf16 %v1061
        %v1094 = vunpack.c.l.bf16 %v1062
        %v1095 = vunpack.c.l.bf16 %v1063
        %v1096 = vunpack.c.l.bf16 %v1064
        %v1097 = vunpack.c.l.bf16 %v1065
        %v1098 = vunpack.c.l.bf16 %v1066
        %v1099 = vunpack.c.l.bf16 %v1067
        %v1100 = vunpack.c.l.bf16 %v1068
        %v1101 = vunpack.c.l.bf16 %v1069
        %v1102 = vunpack.c.l.bf16 %v1070
        %v1103 = vunpack.c.l.bf16 %v1071
        %v1104 = vunpack.c.l.bf16 %v1072
        %v1105 = vunpack.c.l.bf16 %v1073
        %v1106 = vunpack.c.l.bf16 %v1074
        %v1107 = vunpack.c.l.bf16 %v1075
        %v1108 = vunpack.c.l.bf16 %v1076
        %v1109 = vunpack.c.l.bf16 %v1077
        %v1110 = vunpack.c.l.bf16 %v1078
        %v1111 = vunpack.c.l.bf16 %v1079
        %v1112 = vunpack.c.l.bf16 %v1080
        %v1113 = vunpack.c.l.bf16 %v1081
        %v1114 = vunpack.c.l.bf16 %v1082
        %v1115 = vunpack.c.l.bf16 %v1083
        %v1116 = vunpack.c.l.bf16 %v1084
        %v1117 = vunpack.c.l.bf16 %v1085
        %v1118 = vunpack.c.l.bf16 %v1086
        %v1119 = vunpack.c.l.bf16 %v1087
        %v1120 = vld [vmem:[%s3] sm:$0x1]
        %v1121 = vperm.slane %v1120, 0
        %v1122 = vmul.f32 %v1088, %v1121
        %v1123 = vmul.f32 %v1089, %v1121
        %v1124 = vmul.f32 %v1090, %v1121
        %v1125 = vmul.f32 %v1091, %v1121
        %v1126 = vmul.f32 %v1092, %v1121
        %v1127 = vmul.f32 %v1093, %v1121
        %v1128 = vmul.f32 %v1094, %v1121
        %v1129 = vmul.f32 %v1095, %v1121
        %v1130 = vmul.f32 %v1096, %v1121
        %v1131 = vmul.f32 %v1097, %v1121
        %v1132 = vmul.f32 %v1098, %v1121
        %v1133 = vmul.f32 %v1099, %v1121
        %v1134 = vmul.f32 %v1100, %v1121
        %v1135 = vmul.f32 %v1101, %v1121
        %v1136 = vmul.f32 %v1102, %v1121
        %v1137 = vmul.f32 %v1103, %v1121
        %v1138 = vmul.f32 %v1104, %v1121
        %v1139 = vmul.f32 %v1105, %v1121
        %v1140 = vmul.f32 %v1106, %v1121
        %v1141 = vmul.f32 %v1107, %v1121
        %v1142 = vmul.f32 %v1108, %v1121
        %v1143 = vmul.f32 %v1109, %v1121
        %v1144 = vmul.f32 %v1110, %v1121
        %v1145 = vmul.f32 %v1111, %v1121
        %v1146 = vmul.f32 %v1112, %v1121
        %v1147 = vmul.f32 %v1113, %v1121
        %v1148 = vmul.f32 %v1114, %v1121
        %v1149 = vmul.f32 %v1115, %v1121
        %v1150 = vmul.f32 %v1116, %v1121
        %v1151 = vmul.f32 %v1117, %v1121
        %v1152 = vmul.f32 %v1118, %v1121
        %v1153 = vmul.f32 %v1119, %v1121
        %vm1154 = vcmask 261120
        %v1155 = vsel %vm1154, %v1122, 0.0
        %1156 = vadd.xlane.f32.xlu0 %v1155
        %v1157 = vpop.xlane.xlu0 %1156
        %v1158 = vsel %vm1154, %v1123, 0.0
        %1159 = vadd.xlane.f32.xlu0 %v1158
        %v1160 = vpop.xlane.xlu0 %1159
        %v1161 = vsel %vm1154, %v1124, 0.0
        %1162 = vadd.xlane.f32.xlu0 %v1161
        %v1163 = vpop.xlane.xlu0 %1162
        %v1164 = vsel %vm1154, %v1125, 0.0
        %1165 = vadd.xlane.f32.xlu0 %v1164
        %v1166 = vpop.xlane.xlu0 %1165
        %v1167 = vsel %vm1154, %v1126, 0.0
        %1168 = vadd.xlane.f32.xlu0 %v1167
        %v1169 = vpop.xlane.xlu0 %1168
        %v1170 = vsel %vm1154, %v1127, 0.0
        %1171 = vadd.xlane.f32.xlu0 %v1170
        %v1172 = vpop.xlane.xlu0 %1171
        %v1173 = vsel %vm1154, %v1128, 0.0
        %1174 = vadd.xlane.f32.xlu0 %v1173
        %v1175 = vpop.xlane.xlu0 %1174
        %v1176 = vsel %vm1154, %v1129, 0.0
        %1177 = vadd.xlane.f32.xlu0 %v1176
        %v1178 = vpop.xlane.xlu0 %1177
        %v1179 = vsel %vm1154, %v1130, 0.0
        %1180 = vadd.xlane.f32.xlu0 %v1179
        %v1181 = vpop.xlane.xlu0 %1180
        %v1182 = vsel %vm1154, %v1131, 0.0
        %1183 = vadd.xlane.f32.xlu0 %v1182
        %v1184 = vpop.xlane.xlu0 %1183
        %v1185 = vsel %vm1154, %v1132, 0.0
        %1186 = vadd.xlane.f32.xlu0 %v1185
        %v1187 = vpop.xlane.xlu0 %1186
        %v1188 = vsel %vm1154, %v1133, 0.0
        %1189 = vadd.xlane.f32.xlu0 %v1188
        %v1190 = vpop.xlane.xlu0 %1189
        %v1191 = vsel %vm1154, %v1134, 0.0
        %1192 = vadd.xlane.f32.xlu0 %v1191
        %v1193 = vpop.xlane.xlu0 %1192
        %v1194 = vsel %vm1154, %v1135, 0.0
        %1195 = vadd.xlane.f32.xlu0 %v1194
        %v1196 = vpop.xlane.xlu0 %1195
        %v1197 = vsel %vm1154, %v1136, 0.0
        %1198 = vadd.xlane.f32.xlu0 %v1197
        %v1199 = vpop.xlane.xlu0 %1198
        %v1200 = vsel %vm1154, %v1137, 0.0
        %1201 = vadd.xlane.f32.xlu0 %v1200
        %v1202 = vpop.xlane.xlu0 %1201
        %v1203 = vsel %vm1154, %v1138, 0.0
        %1204 = vadd.xlane.f32.xlu0 %v1203
        %v1205 = vpop.xlane.xlu0 %1204
        %v1206 = vsel %vm1154, %v1139, 0.0
        %1207 = vadd.xlane.f32.xlu0 %v1206
        %v1208 = vpop.xlane.xlu0 %1207
        %v1209 = vsel %vm1154, %v1140, 0.0
        %1210 = vadd.xlane.f32.xlu0 %v1209
        %v1211 = vpop.xlane.xlu0 %1210
        %v1212 = vsel %vm1154, %v1141, 0.0
        %1213 = vadd.xlane.f32.xlu0 %v1212
        %v1214 = vpop.xlane.xlu0 %1213
        %v1215 = vsel %vm1154, %v1142, 0.0
        %1216 = vadd.xlane.f32.xlu0 %v1215
        %v1217 = vpop.xlane.xlu0 %1216
        %v1218 = vsel %vm1154, %v1143, 0.0
        %1219 = vadd.xlane.f32.xlu0 %v1218
        %v1220 = vpop.xlane.xlu0 %1219
        %v1221 = vsel %vm1154, %v1144, 0.0
        %1222 = vadd.xlane.f32.xlu0 %v1221
        %v1223 = vpop.xlane.xlu0 %1222
        %v1224 = vsel %vm1154, %v1145, 0.0
        %1225 = vadd.xlane.f32.xlu0 %v1224
        %v1226 = vpop.xlane.xlu0 %1225
        %v1227 = vsel %vm1154, %v1146, 0.0
        %1228 = vadd.xlane.f32.xlu0 %v1227
        %v1229 = vpop.xlane.xlu0 %1228
        %v1230 = vsel %vm1154, %v1147, 0.0
        %1231 = vadd.xlane.f32.xlu0 %v1230
        %v1232 = vpop.xlane.xlu0 %1231
        %v1233 = vsel %vm1154, %v1148, 0.0
        %1234 = vadd.xlane.f32.xlu0 %v1233
        %v1235 = vpop.xlane.xlu0 %1234
        %v1236 = vsel %vm1154, %v1149, 0.0
        %1237 = vadd.xlane.f32.xlu0 %v1236
        %v1238 = vpop.xlane.xlu0 %1237
        %v1239 = vsel %vm1154, %v1150, 0.0
        %1240 = vadd.xlane.f32.xlu0 %v1239
        %v1241 = vpop.xlane.xlu0 %1240
        %v1242 = vsel %vm1154, %v1151, 0.0
        %1243 = vadd.xlane.f32.xlu0 %v1242
        %v1244 = vpop.xlane.xlu0 %1243
        %v1245 = vsel %vm1154, %v1152, 0.0
        %1246 = vadd.xlane.f32.xlu0 %v1245
        %v1247 = vpop.xlane.xlu0 %1246
        %v1248 = vsel %vm1154, %v1153, 0.0
        %1249 = vadd.xlane.f32.xlu0 %v1248
        %v1250 = vpop.xlane.xlu0 %1249
        %v1251 = vadd.f32 %v1157, 0.0
        %v1252 = vadd.f32 %v1160, 0.0
        %v1253 = vadd.f32 %v1163, 0.0
        %v1254 = vadd.f32 %v1166, 0.0
        %v1255 = vadd.f32 %v1169, 0.0
        %v1256 = vadd.f32 %v1172, 0.0
        %v1257 = vadd.f32 %v1175, 0.0
        %v1258 = vadd.f32 %v1178, 0.0
        %v1259 = vadd.f32 %v1181, 0.0
        %v1260 = vadd.f32 %v1184, 0.0
        %v1261 = vadd.f32 %v1187, 0.0
        %v1262 = vadd.f32 %v1190, 0.0
        %v1263 = vadd.f32 %v1193, 0.0
        %v1264 = vadd.f32 %v1196, 0.0
        %v1265 = vadd.f32 %v1199, 0.0
        %v1266 = vadd.f32 %v1202, 0.0
        %v1267 = vadd.f32 %v1205, 0.0
        %v1268 = vadd.f32 %v1208, 0.0
        %v1269 = vadd.f32 %v1211, 0.0
        %v1270 = vadd.f32 %v1214, 0.0
        %v1271 = vadd.f32 %v1217, 0.0
        %v1272 = vadd.f32 %v1220, 0.0
        %v1273 = vadd.f32 %v1223, 0.0
        %v1274 = vadd.f32 %v1226, 0.0
        %v1275 = vadd.f32 %v1229, 0.0
        %v1276 = vadd.f32 %v1232, 0.0
        %v1277 = vadd.f32 %v1235, 0.0
        %v1278 = vadd.f32 %v1238, 0.0
        %v1279 = vadd.f32 %v1241, 0.0
        %v1280 = vadd.f32 %v1244, 0.0
        %v1281 = vadd.f32 %v1247, 0.0
        %v1282 = vadd.f32 %v1250, 0.0
        %v1283 = vld [vmem:[#allocation2 + $0x8] sm:$0x1]
        %v1284 = vld [vmem:[#allocation2 + $0x14] sm:$0x1]
        %v1285 = vld [vmem:[#allocation2 + $0x20] sm:$0x1]
        %v1286 = vld [vmem:[#allocation2 + $0x2c] sm:$0x1]
        %v1287 = vld [vmem:[#allocation2 + $0x38] sm:$0x1]
        %v1288 = vld [vmem:[#allocation2 + $0x44] sm:$0x1]
        %v1289 = vld [vmem:[#allocation2 + $0x50] sm:$0x1]
        %v1290 = vld [vmem:[#allocation2 + $0x5c] sm:$0x1]
        %v1291 = vld [vmem:[#allocation2 + $0x68] sm:$0x1]
        %v1292 = vld [vmem:[#allocation2 + $0x74] sm:$0x1]
        %v1293 = vld [vmem:[#allocation2 + $0x80] sm:$0x1]
        %v1294 = vld [vmem:[#allocation2 + $0x8c] sm:$0x1]
        %v1295 = vld [vmem:[#allocation2 + $0x98] sm:$0x1]
        %v1296 = vld [vmem:[#allocation2 + $0xa4] sm:$0x1]
        %v1297 = vld [vmem:[#allocation2 + $0xb0] sm:$0x1]
        %v1298 = vld [vmem:[#allocation2 + $0xbc] sm:$0x1]
        %v1299 = vunpack.c.l.bf16 %v1283
        %v1300 = vunpack.c.l.bf16 %v1284
        %v1301 = vunpack.c.l.bf16 %v1285
        %v1302 = vunpack.c.l.bf16 %v1286
        %v1303 = vunpack.c.l.bf16 %v1287
        %v1304 = vunpack.c.l.bf16 %v1288
        %v1305 = vunpack.c.l.bf16 %v1289
        %v1306 = vunpack.c.l.bf16 %v1290
        %v1307 = vunpack.c.l.bf16 %v1291
        %v1308 = vunpack.c.l.bf16 %v1292
        %v1309 = vunpack.c.l.bf16 %v1293
        %v1310 = vunpack.c.l.bf16 %v1294
        %v1311 = vunpack.c.l.bf16 %v1295
        %v1312 = vunpack.c.l.bf16 %v1296
        %v1313 = vunpack.c.l.bf16 %v1297
        %v1314 = vunpack.c.l.bf16 %v1298
        %v1315 = vld [vmem:[%s3 + $0x1] sm:$0x1]
        %v1316 = vperm.slane %v1315, 0
        %v1317 = vmul.f32 %v1088, %v1316
        %v1318 = vmul.f32 %v1089, %v1316
        %v1319 = vmul.f32 %v1299, %v1316
        %v1320 = vmul.f32 %v1090, %v1316
        %v1321 = vmul.f32 %v1091, %v1316
        %v1322 = vmul.f32 %v1300, %v1316
        %v1323 = vmul.f32 %v1092, %v1316
        %v1324 = vmul.f32 %v1093, %v1316
        %v1325 = vmul.f32 %v1301, %v1316
        %v1326 = vmul.f32 %v1094, %v1316
        %v1327 = vmul.f32 %v1095, %v1316
        %v1328 = vmul.f32 %v1302, %v1316
        %v1329 = vmul.f32 %v1096, %v1316
        %v1330 = vmul.f32 %v1097, %v1316
        %v1331 = vmul.f32 %v1303, %v1316
        %v1332 = vmul.f32 %v1098, %v1316
        %v1333 = vmul.f32 %v1099, %v1316
        %v1334 = vmul.f32 %v1304, %v1316
        %v1335 = vmul.f32 %v1100, %v1316
        %v1336 = vmul.f32 %v1101, %v1316
        %v1337 = vmul.f32 %v1305, %v1316
        %v1338 = vmul.f32 %v1102, %v1316
        %v1339 = vmul.f32 %v1103, %v1316
        %v1340 = vmul.f32 %v1306, %v1316
        %v1341 = vmul.f32 %v1104, %v1316
        %v1342 = vmul.f32 %v1105, %v1316
        %v1343 = vmul.f32 %v1307, %v1316
        %v1344 = vmul.f32 %v1106, %v1316
        %v1345 = vmul.f32 %v1107, %v1316
        %v1346 = vmul.f32 %v1308, %v1316
        %v1347 = vmul.f32 %v1108, %v1316
        %v1348 = vmul.f32 %v1109, %v1316
        %v1349 = vmul.f32 %v1309, %v1316
        %v1350 = vmul.f32 %v1110, %v1316
        %v1351 = vmul.f32 %v1111, %v1316
        %v1352 = vmul.f32 %v1310, %v1316
        %v1353 = vmul.f32 %v1112, %v1316
        %v1354 = vmul.f32 %v1113, %v1316
        %v1355 = vmul.f32 %v1311, %v1316
        %v1356 = vmul.f32 %v1114, %v1316
        %v1357 = vmul.f32 %v1115, %v1316
        %v1358 = vmul.f32 %v1312, %v1316
        %v1359 = vmul.f32 %v1116, %v1316
        %v1360 = vmul.f32 %v1117, %v1316
        %v1361 = vmul.f32 %v1313, %v1316
        %v1362 = vmul.f32 %v1118, %v1316
        %v1363 = vmul.f32 %v1119, %v1316
        %v1364 = vmul.f32 %v1314, %v1316
        %vm1365 = vcmask 261121
        %v1366 = vsel %vm1365, %v1317, 0.0
        %1367 = vadd.xlane.f32.xlu0 %v1366
        %v1368 = vpop.xlane.xlu0 %1367
        %v1369 = vsel %vm1154, %v1318, 0.0
        %1370 = vadd.xlane.f32.xlu0 %v1369
        %v1371 = vpop.xlane.xlu0 %1370
        %vm1372 = vcmask 253952
        %v1373 = vsel %vm1372, %v1319, 0.0
        %1374 = vadd.xlane.f32.xlu0 %v1373
        %v1375 = vpop.xlane.xlu0 %1374
        %v1376 = vsel %vm1365, %v1320, 0.0
        %1377 = vadd.xlane.f32.xlu0 %v1376
        %v1378 = vpop.xlane.xlu0 %1377
        %v1379 = vsel %vm1154, %v1321, 0.0
        %1380 = vadd.xlane.f32.xlu0 %v1379
        %v1381 = vpop.xlane.xlu0 %1380
        %v1382 = vsel %vm1372, %v1322, 0.0
        %1383 = vadd.xlane.f32.xlu0 %v1382
        %v1384 = vpop.xlane.xlu0 %1383
        %v1385 = vsel %vm1365, %v1323, 0.0
        %1386 = vadd.xlane.f32.xlu0 %v1385
        %v1387 = vpop.xlane.xlu0 %1386
        %v1388 = vsel %vm1154, %v1324, 0.0
        %1389 = vadd.xlane.f32.xlu0 %v1388
        %v1390 = vpop.xlane.xlu0 %1389
        %v1391 = vsel %vm1372, %v1325, 0.0
        %1392 = vadd.xlane.f32.xlu0 %v1391
        %v1393 = vpop.xlane.xlu0 %1392
        %v1394 = vsel %vm1365, %v1326, 0.0
        %1395 = vadd.xlane.f32.xlu0 %v1394
        %v1396 = vpop.xlane.xlu0 %1395
        %v1397 = vsel %vm1154, %v1327, 0.0
        %1398 = vadd.xlane.f32.xlu0 %v1397
        %v1399 = vpop.xlane.xlu0 %1398
        %v1400 = vsel %vm1372, %v1328, 0.0
        %1401 = vadd.xlane.f32.xlu0 %v1400
        %v1402 = vpop.xlane.xlu0 %1401
        %v1403 = vsel %vm1365, %v1329, 0.0
        %1404 = vadd.xlane.f32.xlu0 %v1403
        %v1405 = vpop.xlane.xlu0 %1404
        %v1406 = vsel %vm1154, %v1330, 0.0
        %1407 = vadd.xlane.f32.xlu0 %v1406
        %v1408 = vpop.xlane.xlu0 %1407
        %v1409 = vsel %vm1372, %v1331, 0.0
        %1410 = vadd.xlane.f32.xlu0 %v1409
        %v1411 = vpop.xlane.xlu0 %1410
        %v1412 = vsel %vm1365, %v1332, 0.0
        %1413 = vadd.xlane.f32.xlu0 %v1412
        %v1414 = vpop.xlane.xlu0 %1413
        %v1415 = vsel %vm1154, %v1333, 0.0
        %1416 = vadd.xlane.f32.xlu0 %v1415
        %v1417 = vpop.xlane.xlu0 %1416
        %v1418 = vsel %vm1372, %v1334, 0.0
        %1419 = vadd.xlane.f32.xlu0 %v1418
        %v1420 = vpop.xlane.xlu0 %1419
        %v1421 = vsel %vm1365, %v1335, 0.0
        %1422 = vadd.xlane.f32.xlu0 %v1421
        %v1423 = vpop.xlane.xlu0 %1422
        %v1424 = vsel %vm1154, %v1336, 0.0
        %1425 = vadd.xlane.f32.xlu0 %v1424
        %v1426 = vpop.xlane.xlu0 %1425
        %v1427 = vsel %vm1372, %v1337, 0.0
        %1428 = vadd.xlane.f32.xlu0 %v1427
        %v1429 = vpop.xlane.xlu0 %1428
        %v1430 = vsel %vm1365, %v1338, 0.0
        %1431 = vadd.xlane.f32.xlu0 %v1430
        %v1432 = vpop.xlane.xlu0 %1431
        %v1433 = vsel %vm1154, %v1339, 0.0
        %1434 = vadd.xlane.f32.xlu0 %v1433
        %v1435 = vpop.xlane.xlu0 %1434
        %v1436 = vsel %vm1372, %v1340, 0.0
        %1437 = vadd.xlane.f32.xlu0 %v1436
        %v1438 = vpop.xlane.xlu0 %1437
        %v1439 = vsel %vm1365, %v1341, 0.0
        %1440 = vadd.xlane.f32.xlu0 %v1439
        %v1441 = vpop.xlane.xlu0 %1440
        %v1442 = vsel %vm1154, %v1342, 0.0
        %1443 = vadd.xlane.f32.xlu0 %v1442
        %v1444 = vpop.xlane.xlu0 %1443
        %v1445 = vsel %vm1372, %v1343, 0.0
        %1446 = vadd.xlane.f32.xlu0 %v1445
        %v1447 = vpop.xlane.xlu0 %1446
        %v1448 = vsel %vm1365, %v1344, 0.0
        %1449 = vadd.xlane.f32.xlu0 %v1448
        %v1450 = vpop.xlane.xlu0 %1449
        %v1451 = vsel %vm1154, %v1345, 0.0
        %1452 = vadd.xlane.f32.xlu0 %v1451
        %v1453 = vpop.xlane.xlu0 %1452
        %v1454 = vsel %vm1372, %v1346, 0.0
        %1455 = vadd.xlane.f32.xlu0 %v1454
        %v1456 = vpop.xlane.xlu0 %1455
        %v1457 = vsel %vm1365, %v1347, 0.0
        %1458 = vadd.xlane.f32.xlu0 %v1457
        %v1459 = vpop.xlane.xlu0 %1458
        %v1460 = vsel %vm1154, %v1348, 0.0
        %1461 = vadd.xlane.f32.xlu0 %v1460
        %v1462 = vpop.xlane.xlu0 %1461
        %v1463 = vsel %vm1372, %v1349, 0.0
        %1464 = vadd.xlane.f32.xlu0 %v1463
        %v1465 = vpop.xlane.xlu0 %1464
        %v1466 = vsel %vm1365, %v1350, 0.0
        %1467 = vadd.xlane.f32.xlu0 %v1466
        %v1468 = vpop.xlane.xlu0 %1467
        %v1469 = vsel %vm1154, %v1351, 0.0
        %1470 = vadd.xlane.f32.xlu0 %v1469
        %v1471 = vpop.xlane.xlu0 %1470
        %v1472 = vsel %vm1372, %v1352, 0.0
        %1473 = vadd.xlane.f32.xlu0 %v1472
        %v1474 = vpop.xlane.xlu0 %1473
        %v1475 = vsel %vm1365, %v1353, 0.0
        %1476 = vadd.xlane.f32.xlu0 %v1475
        %v1477 = vpop.xlane.xlu0 %1476
        %v1478 = vsel %vm1154, %v1354, 0.0
        %1479 = vadd.xlane.f32.xlu0 %v1478
        %v1480 = vpop.xlane.xlu0 %1479
        %v1481 = vsel %vm1372, %v1355, 0.0
        %1482 = vadd.xlane.f32.xlu0 %v1481
        %v1483 = vpop.xlane.xlu0 %1482
        %v1484 = vsel %vm1365, %v1356, 0.0
        %1485 = vadd.xlane.f32.xlu0 %v1484
        %v1486 = vpop.xlane.xlu0 %1485
        %v1487 = vsel %vm1154, %v1357, 0.0
        %1488 = vadd.xlane.f32.xlu0 %v1487
        %v1489 = vpop.xlane.xlu0 %1488
        %v1490 = vsel %vm1372, %v1358, 0.0
        %1491 = vadd.xlane.f32.xlu0 %v1490
        %v1492 = vpop.xlane.xlu0 %1491
        %v1493 = vsel %vm1365, %v1359, 0.0
        %1494 = vadd.xlane.f32.xlu0 %v1493
        %v1495 = vpop.xlane.xlu0 %1494
        %v1496 = vsel %vm1154, %v1360, 0.0
        %1497 = vadd.xlane.f32.xlu0 %v1496
        %v1498 = vpop.xlane.xlu0 %1497
        %v1499 = vsel %vm1372, %v1361, 0.0
        %1500 = vadd.xlane.f32.xlu0 %v1499
        %v1501 = vpop.xlane.xlu0 %1500
        %v1502 = vsel %vm1365, %v1362, 0.0
        %1503 = vadd.xlane.f32.xlu0 %v1502
        %v1504 = vpop.xlane.xlu0 %1503
        %v1505 = vsel %vm1154, %v1363, 0.0
        %1506 = vadd.xlane.f32.xlu0 %v1505
        %v1507 = vpop.xlane.xlu0 %1506
        %v1508 = vsel %vm1372, %v1364, 0.0
        %1509 = vadd.xlane.f32.xlu0 %v1508
        %v1510 = vpop.xlane.xlu0 %1509
        %vm1559 = vcmask 1046528
        %v1560 = vrot.slane %v1368, 1
        %v1561 = vrot.slane %v1371, 1
        %v1562 = vsel %vm1559, %v1560, %v1561
        %v1563 = vrot.slane %v1375, 1
        %v1564 = vsel %vm1559, %v1561, %v1563
        %v1565 = vrot.slane %v1378, 1
        %v1566 = vrot.slane %v1381, 1
        %v1567 = vsel %vm1559, %v1565, %v1566
        %v1568 = vrot.slane %v1384, 1
        %v1569 = vsel %vm1559, %v1566, %v1568
        %v1570 = vrot.slane %v1387, 1
        %v1571 = vrot.slane %v1390, 1
        %v1572 = vsel %vm1559, %v1570, %v1571
        %v1573 = vrot.slane %v1393, 1
        %v1574 = vsel %vm1559, %v1571, %v1573
        %v1575 = vrot.slane %v1396, 1
        %v1576 = vrot.slane %v1399, 1
        %v1577 = vsel %vm1559, %v1575, %v1576
        %v1578 = vrot.slane %v1402, 1
        %v1579 = vsel %vm1559, %v1576, %v1578
        %v1580 = vrot.slane %v1405, 1
        %v1581 = vrot.slane %v1408, 1
        %v1582 = vsel %vm1559, %v1580, %v1581
        %v1583 = vrot.slane %v1411, 1
        %v1584 = vsel %vm1559, %v1581, %v1583
        %v1585 = vrot.slane %v1414, 1
        %v1586 = vrot.slane %v1417, 1
        %v1587 = vsel %vm1559, %v1585, %v1586
        %v1588 = vrot.slane %v1420, 1
        %v1589 = vsel %vm1559, %v1586, %v1588
        %v1590 = vrot.slane %v1423, 1
        %v1591 = vrot.slane %v1426, 1
        %v1592 = vsel %vm1559, %v1590, %v1591
        %v1593 = vrot.slane %v1429, 1
        %v1594 = vsel %vm1559, %v1591, %v1593
        %v1595 = vrot.slane %v1432, 1
        %v1596 = vrot.slane %v1435, 1
        %v1597 = vsel %vm1559, %v1595, %v1596
        %v1598 = vrot.slane %v1438, 1
        %v1599 = vsel %vm1559, %v1596, %v1598
        %v1600 = vrot.slane %v1441, 1
        %v1601 = vrot.slane %v1444, 1
        %v1602 = vsel %vm1559, %v1600, %v1601
        %v1603 = vrot.slane %v1447, 1
        %v1604 = vsel %vm1559, %v1601, %v1603
        %v1605 = vrot.slane %v1450, 1
        %v1606 = vrot.slane %v1453, 1
        %v1607 = vsel %vm1559, %v1605, %v1606
        %v1608 = vrot.slane %v1456, 1
        %v1609 = vsel %vm1559, %v1606, %v1608
        %v1610 = vrot.slane %v1459, 1
        %v1611 = vrot.slane %v1462, 1
        %v1612 = vsel %vm1559, %v1610, %v1611
        %v1613 = vrot.slane %v1465, 1
        %v1614 = vsel %vm1559, %v1611, %v1613
        %v1615 = vrot.slane %v1468, 1
        %v1616 = vrot.slane %v1471, 1
        %v1617 = vsel %vm1559, %v1615, %v1616
        %v1618 = vrot.slane %v1474, 1
        %v1619 = vsel %vm1559, %v1616, %v1618
        %v1620 = vrot.slane %v1477, 1
        %v1621 = vrot.slane %v1480, 1
        %v1622 = vsel %vm1559, %v1620, %v1621
        %v1623 = vrot.slane %v1483, 1
        %v1624 = vsel %vm1559, %v1621, %v1623
        %v1625 = vrot.slane %v1486, 1
        %v1626 = vrot.slane %v1489, 1
        %v1627 = vsel %vm1559, %v1625, %v1626
        %v1628 = vrot.slane %v1492, 1
        %v1629 = vsel %vm1559, %v1626, %v1628
        %v1630 = vrot.slane %v1495, 1
        %v1631 = vrot.slane %v1498, 1
        %v1632 = vsel %vm1559, %v1630, %v1631
        %v1633 = vrot.slane %v1501, 1
        %v1634 = vsel %vm1559, %v1631, %v1633
        %v1635 = vrot.slane %v1504, 1
        %v1636 = vrot.slane %v1507, 1
        %v1637 = vsel %vm1559, %v1635, %v1636
        %v1638 = vrot.slane %v1510, 1
        %v1639 = vsel %vm1559, %v1636, %v1638
        %v1672 = vadd.f32 %v1251, %v1562
        %v1673 = vadd.f32 %v1252, %v1564
        %v1674 = vadd.f32 %v1253, %v1567
        %v1675 = vadd.f32 %v1254, %v1569
        %v1676 = vadd.f32 %v1255, %v1572
        %v1677 = vadd.f32 %v1256, %v1574
        %v1678 = vadd.f32 %v1257, %v1577
        %v1679 = vadd.f32 %v1258, %v1579
        %v1680 = vadd.f32 %v1259, %v1582
        %v1681 = vadd.f32 %v1260, %v1584
        %v1682 = vadd.f32 %v1261, %v1587
        %v1683 = vadd.f32 %v1262, %v1589
        %v1684 = vadd.f32 %v1263, %v1592
        %v1685 = vadd.f32 %v1264, %v1594
        %v1686 = vadd.f32 %v1265, %v1597
        %v1687 = vadd.f32 %v1266, %v1599
        %v1688 = vadd.f32 %v1267, %v1602
        %v1689 = vadd.f32 %v1268, %v1604
        %v1690 = vadd.f32 %v1269, %v1607
        %v1691 = vadd.f32 %v1270, %v1609
        %v1692 = vadd.f32 %v1271, %v1612
        %v1693 = vadd.f32 %v1272, %v1614
        %v1694 = vadd.f32 %v1273, %v1617
        %v1695 = vadd.f32 %v1274, %v1619
        %v1696 = vadd.f32 %v1275, %v1622
        %v1697 = vadd.f32 %v1276, %v1624
        %v1698 = vadd.f32 %v1277, %v1627
        %v1699 = vadd.f32 %v1278, %v1629
        %v1700 = vadd.f32 %v1279, %v1632
        %v1701 = vadd.f32 %v1280, %v1634
        %v1702 = vadd.f32 %v1281, %v1637
        %v1703 = vadd.f32 %v1282, %v1639
        %v1704 = vld [vmem:[#allocation2] sm:$0xe]
        %v1705 = vld [vmem:[#allocation2 + $0xc] sm:$0xe]
        %v1706 = vld [vmem:[#allocation2 + $0x18] sm:$0xe]
        %v1707 = vld [vmem:[#allocation2 + $0x24] sm:$0xe]
        %v1708 = vld [vmem:[#allocation2 + $0x30] sm:$0xe]
        %v1709 = vld [vmem:[#allocation2 + $0x3c] sm:$0xe]
        %v1710 = vld [vmem:[#allocation2 + $0x48] sm:$0xe]
        %v1711 = vld [vmem:[#allocation2 + $0x54] sm:$0xe]
        %v1712 = vld [vmem:[#allocation2 + $0x60] sm:$0xe]
        %v1713 = vld [vmem:[#allocation2 + $0x6c] sm:$0xe]
        %v1714 = vld [vmem:[#allocation2 + $0x78] sm:$0xe]
        %v1715 = vld [vmem:[#allocation2 + $0x84] sm:$0xe]
        %v1716 = vld [vmem:[#allocation2 + $0x90] sm:$0xe]
        %v1717 = vld [vmem:[#allocation2 + $0x9c] sm:$0xe]
        %v1718 = vld [vmem:[#allocation2 + $0xa8] sm:$0xe]
        %v1719 = vld [vmem:[#allocation2 + $0xb4] sm:$0xe]
        %v1720 = vunpack.c.l.bf16 %v1704
        %v1721 = vunpack.c.l.bf16 %v1705
        %v1722 = vunpack.c.l.bf16 %v1706
        %v1723 = vunpack.c.l.bf16 %v1707
        %v1724 = vunpack.c.l.bf16 %v1708
        %v1725 = vunpack.c.l.bf16 %v1709
        %v1726 = vunpack.c.l.bf16 %v1710
        %v1727 = vunpack.c.l.bf16 %v1711
        %v1728 = vunpack.c.l.bf16 %v1712
        %v1729 = vunpack.c.l.bf16 %v1713
        %v1730 = vunpack.c.l.bf16 %v1714
        %v1731 = vunpack.c.l.bf16 %v1715
        %v1732 = vunpack.c.l.bf16 %v1716
        %v1733 = vunpack.c.l.bf16 %v1717
        %v1734 = vunpack.c.l.bf16 %v1718
        %v1735 = vunpack.c.l.bf16 %v1719
        %v1736 = vld [vmem:[%s3 + $0x2] sm:$0x1]
        %v1737 = vperm.slane %v1736, 0
        %v1738 = vmul.f32 %v1720, %v1737
        %v1739 = vmul.f32 %v1089, %v1737
        %v1740 = vmul.f32 %v1299, %v1737
        %v1741 = vmul.f32 %v1721, %v1737
        %v1742 = vmul.f32 %v1091, %v1737
        %v1743 = vmul.f32 %v1300, %v1737
        %v1744 = vmul.f32 %v1722, %v1737
        %v1745 = vmul.f32 %v1093, %v1737
        %v1746 = vmul.f32 %v1301, %v1737
        %v1747 = vmul.f32 %v1723, %v1737
        %v1748 = vmul.f32 %v1095, %v1737
        %v1749 = vmul.f32 %v1302, %v1737
        %v1750 = vmul.f32 %v1724, %v1737
        %v1751 = vmul.f32 %v1097, %v1737
        %v1752 = vmul.f32 %v1303, %v1737
        %v1753 = vmul.f32 %v1725, %v1737
        %v1754 = vmul.f32 %v1099, %v1737
        %v1755 = vmul.f32 %v1304, %v1737
        %v1756 = vmul.f32 %v1726, %v1737
        %v1757 = vmul.f32 %v1101, %v1737
        %v1758 = vmul.f32 %v1305, %v1737
        %v1759 = vmul.f32 %v1727, %v1737
        %v1760 = vmul.f32 %v1103, %v1737
        %v1761 = vmul.f32 %v1306, %v1737
        %v1762 = vmul.f32 %v1728, %v1737
        %v1763 = vmul.f32 %v1105, %v1737
        %v1764 = vmul.f32 %v1307, %v1737
        %v1765 = vmul.f32 %v1729, %v1737
        %v1766 = vmul.f32 %v1107, %v1737
        %v1767 = vmul.f32 %v1308, %v1737
        %v1768 = vmul.f32 %v1730, %v1737
        %v1769 = vmul.f32 %v1109, %v1737
        %v1770 = vmul.f32 %v1309, %v1737
        %v1771 = vmul.f32 %v1731, %v1737
        %v1772 = vmul.f32 %v1111, %v1737
        %v1773 = vmul.f32 %v1310, %v1737
        %v1774 = vmul.f32 %v1732, %v1737
        %v1775 = vmul.f32 %v1113, %v1737
        %v1776 = vmul.f32 %v1311, %v1737
        %v1777 = vmul.f32 %v1733, %v1737
        %v1778 = vmul.f32 %v1115, %v1737
        %v1779 = vmul.f32 %v1312, %v1737
        %v1780 = vmul.f32 %v1734, %v1737
        %v1781 = vmul.f32 %v1117, %v1737
        %v1782 = vmul.f32 %v1313, %v1737
        %v1783 = vmul.f32 %v1735, %v1737
        %v1784 = vmul.f32 %v1119, %v1737
        %v1785 = vmul.f32 %v1314, %v1737
        %vm1786 = vcmask 261122
        %v1787 = vsel %vm1786, %v1738, 0.0
        %1788 = vadd.xlane.f32.xlu0 %v1787
        %v1789 = vpop.xlane.xlu0 %1788
        %v1790 = vsel %vm1154, %v1739, 0.0
        %1791 = vadd.xlane.f32.xlu0 %v1790
        %v1792 = vpop.xlane.xlu0 %1791
        %vm1793 = vcmask 254976
        %v1794 = vsel %vm1793, %v1740, 0.0
        %1795 = vadd.xlane.f32.xlu0 %v1794
        %v1796 = vpop.xlane.xlu0 %1795
        %v1797 = vsel %vm1786, %v1741, 0.0
        %1798 = vadd.xlane.f32.xlu0 %v1797
        %v1799 = vpop.xlane.xlu0 %1798
        %v1800 = vsel %vm1154, %v1742, 0.0
        %1801 = vadd.xlane.f32.xlu0 %v1800
        %v1802 = vpop.xlane.xlu0 %1801
        %v1803 = vsel %vm1793, %v1743, 0.0
        %1804 = vadd.xlane.f32.xlu0 %v1803
        %v1805 = vpop.xlane.xlu0 %1804
        %v1806 = vsel %vm1786, %v1744, 0.0
        %1807 = vadd.xlane.f32.xlu0 %v1806
        %v1808 = vpop.xlane.xlu0 %1807
        %v1809 = vsel %vm1154, %v1745, 0.0
        %1810 = vadd.xlane.f32.xlu0 %v1809
        %v1811 = vpop.xlane.xlu0 %1810
        %v1812 = vsel %vm1793, %v1746, 0.0
        %1813 = vadd.xlane.f32.xlu0 %v1812
        %v1814 = vpop.xlane.xlu0 %1813
        %v1815 = vsel %vm1786, %v1747, 0.0
        %1816 = vadd.xlane.f32.xlu0 %v1815
        %v1817 = vpop.xlane.xlu0 %1816
        %v1818 = vsel %vm1154, %v1748, 0.0
        %1819 = vadd.xlane.f32.xlu0 %v1818
        %v1820 = vpop.xlane.xlu0 %1819
        %v1821 = vsel %vm1793, %v1749, 0.0
        %1822 = vadd.xlane.f32.xlu0 %v1821
        %v1823 = vpop.xlane.xlu0 %1822
        %v1824 = vsel %vm1786, %v1750, 0.0
        %1825 = vadd.xlane.f32.xlu0 %v1824
        %v1826 = vpop.xlane.xlu0 %1825
        %v1827 = vsel %vm1154, %v1751, 0.0
        %1828 = vadd.xlane.f32.xlu0 %v1827
        %v1829 = vpop.xlane.xlu0 %1828
        %v1830 = vsel %vm1793, %v1752, 0.0
        %1831 = vadd.xlane.f32.xlu0 %v1830
        %v1832 = vpop.xlane.xlu0 %1831
        %v1833 = vsel %vm1786, %v1753, 0.0
        %1834 = vadd.xlane.f32.xlu0 %v1833
        %v1835 = vpop.xlane.xlu0 %1834
        %v1836 = vsel %vm1154, %v1754, 0.0
        %1837 = vadd.xlane.f32.xlu0 %v1836
        %v1838 = vpop.xlane.xlu0 %1837
        %v1839 = vsel %vm1793, %v1755, 0.0
        %1840 = vadd.xlane.f32.xlu0 %v1839
        %v1841 = vpop.xlane.xlu0 %1840
        %v1842 = vsel %vm1786, %v1756, 0.0
        %1843 = vadd.xlane.f32.xlu0 %v1842
        %v1844 = vpop.xlane.xlu0 %1843
        %v1845 = vsel %vm1154, %v1757, 0.0
        %1846 = vadd.xlane.f32.xlu0 %v1845
        %v1847 = vpop.xlane.xlu0 %1846
        %v1848 = vsel %vm1793, %v1758, 0.0
        %1849 = vadd.xlane.f32.xlu0 %v1848
        %v1850 = vpop.xlane.xlu0 %1849
        %v1851 = vsel %vm1786, %v1759, 0.0
        %1852 = vadd.xlane.f32.xlu0 %v1851
        %v1853 = vpop.xlane.xlu0 %1852
        %v1854 = vsel %vm1154, %v1760, 0.0
        %1855 = vadd.xlane.f32.xlu0 %v1854
        %v1856 = vpop.xlane.xlu0 %1855
        %v1857 = vsel %vm1793, %v1761, 0.0
        %1858 = vadd.xlane.f32.xlu0 %v1857
        %v1859 = vpop.xlane.xlu0 %1858
        %v1860 = vsel %vm1786, %v1762, 0.0
        %1861 = vadd.xlane.f32.xlu0 %v1860
        %v1862 = vpop.xlane.xlu0 %1861
        %v1863 = vsel %vm1154, %v1763, 0.0
        %1864 = vadd.xlane.f32.xlu0 %v1863
        %v1865 = vpop.xlane.xlu0 %1864
        %v1866 = vsel %vm1793, %v1764, 0.0
        %1867 = vadd.xlane.f32.xlu0 %v1866
        %v1868 = vpop.xlane.xlu0 %1867
        %v1869 = vsel %vm1786, %v1765, 0.0
        %1870 = vadd.xlane.f32.xlu0 %v1869
        %v1871 = vpop.xlane.xlu0 %1870
        %v1872 = vsel %vm1154, %v1766, 0.0
        %1873 = vadd.xlane.f32.xlu0 %v1872
        %v1874 = vpop.xlane.xlu0 %1873
        %v1875 = vsel %vm1793, %v1767, 0.0
        %1876 = vadd.xlane.f32.xlu0 %v1875
        %v1877 = vpop.xlane.xlu0 %1876
        %v1878 = vsel %vm1786, %v1768, 0.0
        %1879 = vadd.xlane.f32.xlu0 %v1878
        %v1880 = vpop.xlane.xlu0 %1879
        %v1881 = vsel %vm1154, %v1769, 0.0
        %1882 = vadd.xlane.f32.xlu0 %v1881
        %v1883 = vpop.xlane.xlu0 %1882
        %v1884 = vsel %vm1793, %v1770, 0.0
        %1885 = vadd.xlane.f32.xlu0 %v1884
        %v1886 = vpop.xlane.xlu0 %1885
        %v1887 = vsel %vm1786, %v1771, 0.0
        %1888 = vadd.xlane.f32.xlu0 %v1887
        %v1889 = vpop.xlane.xlu0 %1888
        %v1890 = vsel %vm1154, %v1772, 0.0
        %1891 = vadd.xlane.f32.xlu0 %v1890
        %v1892 = vpop.xlane.xlu0 %1891
        %v1893 = vsel %vm1793, %v1773, 0.0
        %1894 = vadd.xlane.f32.xlu0 %v1893
        %v1895 = vpop.xlane.xlu0 %1894
        %v1896 = vsel %vm1786, %v1774, 0.0
        %1897 = vadd.xlane.f32.xlu0 %v1896
        %v1898 = vpop.xlane.xlu0 %1897
        %v1899 = vsel %vm1154, %v1775, 0.0
        %1900 = vadd.xlane.f32.xlu0 %v1899
        %v1901 = vpop.xlane.xlu0 %1900
        %v1902 = vsel %vm1793, %v1776, 0.0
        %1903 = vadd.xlane.f32.xlu0 %v1902
        %v1904 = vpop.xlane.xlu0 %1903
        %v1905 = vsel %vm1786, %v1777, 0.0
        %1906 = vadd.xlane.f32.xlu0 %v1905
        %v1907 = vpop.xlane.xlu0 %1906
        %v1908 = vsel %vm1154, %v1778, 0.0
        %1909 = vadd.xlane.f32.xlu0 %v1908
        %v1910 = vpop.xlane.xlu0 %1909
        %v1911 = vsel %vm1793, %v1779, 0.0
        %1912 = vadd.xlane.f32.xlu0 %v1911
        %v1913 = vpop.xlane.xlu0 %1912
        %v1914 = vsel %vm1786, %v1780, 0.0
        %1915 = vadd.xlane.f32.xlu0 %v1914
        %v1916 = vpop.xlane.xlu0 %1915
        %v1917 = vsel %vm1154, %v1781, 0.0
        %1918 = vadd.xlane.f32.xlu0 %v1917
        %v1919 = vpop.xlane.xlu0 %1918
        %v1920 = vsel %vm1793, %v1782, 0.0
        %1921 = vadd.xlane.f32.xlu0 %v1920
        %v1922 = vpop.xlane.xlu0 %1921
        %v1923 = vsel %vm1786, %v1783, 0.0
        %1924 = vadd.xlane.f32.xlu0 %v1923
        %v1925 = vpop.xlane.xlu0 %1924
        %v1926 = vsel %vm1154, %v1784, 0.0
        %1927 = vadd.xlane.f32.xlu0 %v1926
        %v1928 = vpop.xlane.xlu0 %1927
        %v1929 = vsel %vm1793, %v1785, 0.0
        %1930 = vadd.xlane.f32.xlu0 %v1929
        %v1931 = vpop.xlane.xlu0 %1930
        %vm1980 = vcmask 1045504
        %v1981 = vrot.slane %v1789, 2
        %v1982 = vrot.slane %v1792, 2
        %v1983 = vsel %vm1980, %v1981, %v1982
        %v1984 = vrot.slane %v1796, 2
        %v1985 = vsel %vm1980, %v1982, %v1984
        %v1986 = vrot.slane %v1799, 2
        %v1987 = vrot.slane %v1802, 2
        %v1988 = vsel %vm1980, %v1986, %v1987
        %v1989 = vrot.slane %v1805, 2
        %v1990 = vsel %vm1980, %v1987, %v1989
        %v1991 = vrot.slane %v1808, 2
        %v1992 = vrot.slane %v1811, 2
        %v1993 = vsel %vm1980, %v1991, %v1992
        %v1994 = vrot.slane %v1814, 2
        %v1995 = vsel %vm1980, %v1992, %v1994
        %v1996 = vrot.slane %v1817, 2
        %v1997 = vrot.slane %v1820, 2
        %v1998 = vsel %vm1980, %v1996, %v1997
        %v1999 = vrot.slane %v1823, 2
        %v2000 = vsel %vm1980, %v1997, %v1999
        %v2001 = vrot.slane %v1826, 2
        %v2002 = vrot.slane %v1829, 2
        %v2003 = vsel %vm1980, %v2001, %v2002
        %v2004 = vrot.slane %v1832, 2
        %v2005 = vsel %vm1980, %v2002, %v2004
        %v2006 = vrot.slane %v1835, 2
        %v2007 = vrot.slane %v1838, 2
        %v2008 = vsel %vm1980, %v2006, %v2007
        %v2009 = vrot.slane %v1841, 2
        %v2010 = vsel %vm1980, %v2007, %v2009
        %v2011 = vrot.slane %v1844, 2
        %v2012 = vrot.slane %v1847, 2
        %v2013 = vsel %vm1980, %v2011, %v2012
        %v2014 = vrot.slane %v1850, 2
        %v2015 = vsel %vm1980, %v2012, %v2014
        %v2016 = vrot.slane %v1853, 2
        %v2017 = vrot.slane %v1856, 2
        %v2018 = vsel %vm1980, %v2016, %v2017
        %v2019 = vrot.slane %v1859, 2
        %v2020 = vsel %vm1980, %v2017, %v2019
        %v2021 = vrot.slane %v1862, 2
        %v2022 = vrot.slane %v1865, 2
        %v2023 = vsel %vm1980, %v2021, %v2022
        %v2024 = vrot.slane %v1868, 2
        %v2025 = vsel %vm1980, %v2022, %v2024
        %v2026 = vrot.slane %v1871, 2
        %v2027 = vrot.slane %v1874, 2
        %v2028 = vsel %vm1980, %v2026, %v2027
        %v2029 = vrot.slane %v1877, 2
        %v2030 = vsel %vm1980, %v2027, %v2029
        %v2031 = vrot.slane %v1880, 2
        %v2032 = vrot.slane %v1883, 2
        %v2033 = vsel %vm1980, %v2031, %v2032
        %v2034 = vrot.slane %v1886, 2
        %v2035 = vsel %vm1980, %v2032, %v2034
        %v2036 = vrot.slane %v1889, 2
        %v2037 = vrot.slane %v1892, 2
        %v2038 = vsel %vm1980, %v2036, %v2037
        %v2039 = vrot.slane %v1895, 2
        %v2040 = vsel %vm1980, %v2037, %v2039
        %v2041 = vrot.slane %v1898, 2
        %v2042 = vrot.slane %v1901, 2
        %v2043 = vsel %vm1980, %v2041, %v2042
        %v2044 = vrot.slane %v1904, 2
        %v2045 = vsel %vm1980, %v2042, %v2044
        %v2046 = vrot.slane %v1907, 2
        %v2047 = vrot.slane %v1910, 2
        %v2048 = vsel %vm1980, %v2046, %v2047
        %v2049 = vrot.slane %v1913, 2
        %v2050 = vsel %vm1980, %v2047, %v2049
        %v2051 = vrot.slane %v1916, 2
        %v2052 = vrot.slane %v1919, 2
        %v2053 = vsel %vm1980, %v2051, %v2052
        %v2054 = vrot.slane %v1922, 2
        %v2055 = vsel %vm1980, %v2052, %v2054
        %v2056 = vrot.slane %v1925, 2
        %v2057 = vrot.slane %v1928, 2
        %v2058 = vsel %vm1980, %v2056, %v2057
        %v2059 = vrot.slane %v1931, 2
        %v2060 = vsel %vm1980, %v2057, %v2059
        %v2093 = vadd.f32 %v1672, %v1983
        %v2094 = vadd.f32 %v1673, %v1985
        %v2095 = vadd.f32 %v1674, %v1988
        %v2096 = vadd.f32 %v1675, %v1990
        %v2097 = vadd.f32 %v1676, %v1993
        %v2098 = vadd.f32 %v1677, %v1995
        %v2099 = vadd.f32 %v1678, %v1998
        %v2100 = vadd.f32 %v1679, %v2000
        %v2101 = vadd.f32 %v1680, %v2003
        %v2102 = vadd.f32 %v1681, %v2005
        %v2103 = vadd.f32 %v1682, %v2008
        %v2104 = vadd.f32 %v1683, %v2010
        %v2105 = vadd.f32 %v1684, %v2013
        %v2106 = vadd.f32 %v1685, %v2015
        %v2107 = vadd.f32 %v1686, %v2018
        %v2108 = vadd.f32 %v1687, %v2020
        %v2109 = vadd.f32 %v1688, %v2023
        %v2110 = vadd.f32 %v1689, %v2025
        %v2111 = vadd.f32 %v1690, %v2028
        %v2112 = vadd.f32 %v1691, %v2030
        %v2113 = vadd.f32 %v1692, %v2033
        %v2114 = vadd.f32 %v1693, %v2035
        %v2115 = vadd.f32 %v1694, %v2038
        %v2116 = vadd.f32 %v1695, %v2040
        %v2117 = vadd.f32 %v1696, %v2043
        %v2118 = vadd.f32 %v1697, %v2045
        %v2119 = vadd.f32 %v1698, %v2048
        %v2120 = vadd.f32 %v1699, %v2050
        %v2121 = vadd.f32 %v1700, %v2053
        %v2122 = vadd.f32 %v1701, %v2055
        %v2123 = vadd.f32 %v1702, %v2058
        %v2124 = vadd.f32 %v1703, %v2060
        %v2125 = vld [vmem:[%s851] sm:$0xf]
        %v2126 = vld [vmem:[%s851 + $0x4] sm:$0xf]
        %v2127 = vld [vmem:[%s851 + $0xc] sm:$0xf]
        %v2128 = vld [vmem:[%s851 + $0x10] sm:$0xf]
        %v2129 = vld [vmem:[%s851 + $0x18] sm:$0xf]
        %v2130 = vld [vmem:[%s851 + $0x1c] sm:$0xf]
        %v2131 = vld [vmem:[%s851 + $0x24] sm:$0xf]
        %v2132 = vld [vmem:[%s851 + $0x28] sm:$0xf]
        %v2133 = vld [vmem:[%s851 + $0x30] sm:$0xf]
        %v2134 = vld [vmem:[%s851 + $0x34] sm:$0xf]
        %v2135 = vld [vmem:[%s851 + $0x3c] sm:$0xf]
        %v2136 = vld [vmem:[%s851 + $0x40] sm:$0xf]
        %v2137 = vld [vmem:[%s851 + $0x48] sm:$0xf]
        %v2138 = vld [vmem:[%s851 + $0x4c] sm:$0xf]
        %v2139 = vld [vmem:[%s851 + $0x54] sm:$0xf]
        %v2140 = vld [vmem:[%s851 + $0x58] sm:$0xf]
        %v2141 = vld [vmem:[%s851 + $0x60] sm:$0xf]
        %v2142 = vld [vmem:[%s851 + $0x64] sm:$0xf]
        %v2143 = vld [vmem:[%s851 + $0x6c] sm:$0xf]
        %v2144 = vld [vmem:[%s851 + $0x70] sm:$0xf]
        %v2145 = vld [vmem:[%s851 + $0x78] sm:$0xf]
        %v2146 = vld [vmem:[%s851 + $0x7c] sm:$0xf]
        %v2147 = vld [vmem:[%s851 + $0x84] sm:$0xf]
        %v2148 = vld [vmem:[%s851 + $0x88] sm:$0xf]
        %v2149 = vld [vmem:[%s851 + $0x90] sm:$0xf]
        %v2150 = vld [vmem:[%s851 + $0x94] sm:$0xf]
        %v2151 = vld [vmem:[%s851 + $0x9c] sm:$0xf]
        %v2152 = vld [vmem:[%s851 + $0xa0] sm:$0xf]
        %v2153 = vld [vmem:[%s851 + $0xa8] sm:$0xf]
        %v2154 = vld [vmem:[%s851 + $0xac] sm:$0xf]
        %v2155 = vld [vmem:[%s851 + $0xb4] sm:$0xf]
        %v2156 = vld [vmem:[%s851 + $0xb8] sm:$0xf]
        %v2157 = vunpack.c.l.bf16 %v2125
        %v2158 = vunpack.c.l.bf16 %v2126
        %v2159 = vunpack.c.l.bf16 %v2127
        %v2160 = vunpack.c.l.bf16 %v2128
        %v2161 = vunpack.c.l.bf16 %v2129
        %v2162 = vunpack.c.l.bf16 %v2130
        %v2163 = vunpack.c.l.bf16 %v2131
        %v2164 = vunpack.c.l.bf16 %v2132
        %v2165 = vunpack.c.l.bf16 %v2133
        %v2166 = vunpack.c.l.bf16 %v2134
        %v2167 = vunpack.c.l.bf16 %v2135
        %v2168 = vunpack.c.l.bf16 %v2136
        %v2169 = vunpack.c.l.bf16 %v2137
        %v2170 = vunpack.c.l.bf16 %v2138
        %v2171 = vunpack.c.l.bf16 %v2139
        %v2172 = vunpack.c.l.bf16 %v2140
        %v2173 = vunpack.c.l.bf16 %v2141
        %v2174 = vunpack.c.l.bf16 %v2142
        %v2175 = vunpack.c.l.bf16 %v2143
        %v2176 = vunpack.c.l.bf16 %v2144
        %v2177 = vunpack.c.l.bf16 %v2145
        %v2178 = vunpack.c.l.bf16 %v2146
        %v2179 = vunpack.c.l.bf16 %v2147
        %v2180 = vunpack.c.l.bf16 %v2148
        %v2181 = vunpack.c.l.bf16 %v2149
        %v2182 = vunpack.c.l.bf16 %v2150
        %v2183 = vunpack.c.l.bf16 %v2151
        %v2184 = vunpack.c.l.bf16 %v2152
        %v2185 = vunpack.c.l.bf16 %v2153
        %v2186 = vunpack.c.l.bf16 %v2154
        %v2187 = vunpack.c.l.bf16 %v2155
        %v2188 = vunpack.c.l.bf16 %v2156
        %v2189 = vld [vmem:[%s3 + $0x3] sm:$0x1]
        %v2190 = vperm.slane %v2189, 0
        %v2191 = vmul.f32 %v2157, %v2190
        %v2192 = vmul.f32 %v2158, %v2190
        %v2193 = vmul.f32 %v2159, %v2190
        %v2194 = vmul.f32 %v2160, %v2190
        %v2195 = vmul.f32 %v2161, %v2190
        %v2196 = vmul.f32 %v2162, %v2190
        %v2197 = vmul.f32 %v2163, %v2190
        %v2198 = vmul.f32 %v2164, %v2190
        %v2199 = vmul.f32 %v2165, %v2190
        %v2200 = vmul.f32 %v2166, %v2190
        %v2201 = vmul.f32 %v2167, %v2190
        %v2202 = vmul.f32 %v2168, %v2190
        %v2203 = vmul.f32 %v2169, %v2190
        %v2204 = vmul.f32 %v2170, %v2190
        %v2205 = vmul.f32 %v2171, %v2190
        %v2206 = vmul.f32 %v2172, %v2190
        %v2207 = vmul.f32 %v2173, %v2190
        %v2208 = vmul.f32 %v2174, %v2190
        %v2209 = vmul.f32 %v2175, %v2190
        %v2210 = vmul.f32 %v2176, %v2190
        %v2211 = vmul.f32 %v2177, %v2190
        %v2212 = vmul.f32 %v2178, %v2190
        %v2213 = vmul.f32 %v2179, %v2190
        %v2214 = vmul.f32 %v2180, %v2190
        %v2215 = vmul.f32 %v2181, %v2190
        %v2216 = vmul.f32 %v2182, %v2190
        %v2217 = vmul.f32 %v2183, %v2190
        %v2218 = vmul.f32 %v2184, %v2190
        %v2219 = vmul.f32 %v2185, %v2190
        %v2220 = vmul.f32 %v2186, %v2190
        %v2221 = vmul.f32 %v2187, %v2190
        %v2222 = vmul.f32 %v2188, %v2190
        %v2223 = vsel %vm1154, %v2191, 0.0
        %2224 = vadd.xlane.f32.xlu0 %v2223
        %v2225 = vpop.xlane.xlu0 %2224
        %v2226 = vsel %vm1154, %v2192, 0.0
        %2227 = vadd.xlane.f32.xlu0 %v2226
        %v2228 = vpop.xlane.xlu0 %2227
        %v2229 = vsel %vm1154, %v2193, 0.0
        %2230 = vadd.xlane.f32.xlu0 %v2229
        %v2231 = vpop.xlane.xlu0 %2230
        %v2232 = vsel %vm1154, %v2194, 0.0
        %2233 = vadd.xlane.f32.xlu0 %v2232
        %v2234 = vpop.xlane.xlu0 %2233
        %v2235 = vsel %vm1154, %v2195, 0.0
        %2236 = vadd.xlane.f32.xlu0 %v2235
        %v2237 = vpop.xlane.xlu0 %2236
        %v2238 = vsel %vm1154, %v2196, 0.0
        %2239 = vadd.xlane.f32.xlu0 %v2238
        %v2240 = vpop.xlane.xlu0 %2239
        %v2241 = vsel %vm1154, %v2197, 0.0
        %2242 = vadd.xlane.f32.xlu0 %v2241
        %v2243 = vpop.xlane.xlu0 %2242
        %v2244 = vsel %vm1154, %v2198, 0.0
        %2245 = vadd.xlane.f32.xlu0 %v2244
        %v2246 = vpop.xlane.xlu0 %2245
        %v2247 = vsel %vm1154, %v2199, 0.0
        %2248 = vadd.xlane.f32.xlu0 %v2247
        %v2249 = vpop.xlane.xlu0 %2248
        %v2250 = vsel %vm1154, %v2200, 0.0
        %2251 = vadd.xlane.f32.xlu0 %v2250
        %v2252 = vpop.xlane.xlu0 %2251
        %v2253 = vsel %vm1154, %v2201, 0.0
        %2254 = vadd.xlane.f32.xlu0 %v2253
        %v2255 = vpop.xlane.xlu0 %2254
        %v2256 = vsel %vm1154, %v2202, 0.0
        %2257 = vadd.xlane.f32.xlu0 %v2256
        %v2258 = vpop.xlane.xlu0 %2257
        %v2259 = vsel %vm1154, %v2203, 0.0
        %2260 = vadd.xlane.f32.xlu0 %v2259
        %v2261 = vpop.xlane.xlu0 %2260
        %v2262 = vsel %vm1154, %v2204, 0.0
        %2263 = vadd.xlane.f32.xlu0 %v2262
        %v2264 = vpop.xlane.xlu0 %2263
        %v2265 = vsel %vm1154, %v2205, 0.0
        %2266 = vadd.xlane.f32.xlu0 %v2265
        %v2267 = vpop.xlane.xlu0 %2266
        %v2268 = vsel %vm1154, %v2206, 0.0
        %2269 = vadd.xlane.f32.xlu0 %v2268
        %v2270 = vpop.xlane.xlu0 %2269
        %v2271 = vsel %vm1154, %v2207, 0.0
        %2272 = vadd.xlane.f32.xlu0 %v2271
        %v2273 = vpop.xlane.xlu0 %2272
        %v2274 = vsel %vm1154, %v2208, 0.0
        %2275 = vadd.xlane.f32.xlu0 %v2274
        %v2276 = vpop.xlane.xlu0 %2275
        %v2277 = vsel %vm1154, %v2209, 0.0
        %2278 = vadd.xlane.f32.xlu0 %v2277
        %v2279 = vpop.xlane.xlu0 %2278
        %v2280 = vsel %vm1154, %v2210, 0.0
        %2281 = vadd.xlane.f32.xlu0 %v2280
        %v2282 = vpop.xlane.xlu0 %2281
        %v2283 = vsel %vm1154, %v2211, 0.0
        %2284 = vadd.xlane.f32.xlu0 %v2283
        %v2285 = vpop.xlane.xlu0 %2284
        %v2286 = vsel %vm1154, %v2212, 0.0
        %2287 = vadd.xlane.f32.xlu0 %v2286
        %v2288 = vpop.xlane.xlu0 %2287
        %v2289 = vsel %vm1154, %v2213, 0.0
        %2290 = vadd.xlane.f32.xlu0 %v2289
        %v2291 = vpop.xlane.xlu0 %2290
        %v2292 = vsel %vm1154, %v2214, 0.0
        %2293 = vadd.xlane.f32.xlu0 %v2292
        %v2294 = vpop.xlane.xlu0 %2293
        %v2295 = vsel %vm1154, %v2215, 0.0
        %2296 = vadd.xlane.f32.xlu0 %v2295
        %v2297 = vpop.xlane.xlu0 %2296
        %v2298 = vsel %vm1154, %v2216, 0.0
        %2299 = vadd.xlane.f32.xlu0 %v2298
        %v2300 = vpop.xlane.xlu0 %2299
        %v2301 = vsel %vm1154, %v2217, 0.0
        %2302 = vadd.xlane.f32.xlu0 %v2301
        %v2303 = vpop.xlane.xlu0 %2302
        %v2304 = vsel %vm1154, %v2218, 0.0
        %2305 = vadd.xlane.f32.xlu0 %v2304
        %v2306 = vpop.xlane.xlu0 %2305
        %v2307 = vsel %vm1154, %v2219, 0.0
        %2308 = vadd.xlane.f32.xlu0 %v2307
        %v2309 = vpop.xlane.xlu0 %2308
        %v2310 = vsel %vm1154, %v2220, 0.0
        %2311 = vadd.xlane.f32.xlu0 %v2310
        %v2312 = vpop.xlane.xlu0 %2311
        %v2313 = vsel %vm1154, %v2221, 0.0
        %2314 = vadd.xlane.f32.xlu0 %v2313
        %v2315 = vpop.xlane.xlu0 %2314
        %v2316 = vsel %vm1154, %v2222, 0.0
        %2317 = vadd.xlane.f32.xlu0 %v2316
        %v2318 = vpop.xlane.xlu0 %2317
        %v2319 = vadd.f32 %v2093, %v2225
        %v2320 = vadd.f32 %v2094, %v2228
        %v2321 = vadd.f32 %v2095, %v2231
        %v2322 = vadd.f32 %v2096, %v2234
        %v2323 = vadd.f32 %v2097, %v2237
        %v2324 = vadd.f32 %v2098, %v2240
        %v2325 = vadd.f32 %v2099, %v2243
        %v2326 = vadd.f32 %v2100, %v2246
        %v2327 = vadd.f32 %v2101, %v2249
        %v2328 = vadd.f32 %v2102, %v2252
        %v2329 = vadd.f32 %v2103, %v2255
        %v2330 = vadd.f32 %v2104, %v2258
        %v2331 = vadd.f32 %v2105, %v2261
        %v2332 = vadd.f32 %v2106, %v2264
        %v2333 = vadd.f32 %v2107, %v2267
        %v2334 = vadd.f32 %v2108, %v2270
        %v2335 = vadd.f32 %v2109, %v2273
        %v2336 = vadd.f32 %v2110, %v2276
        %v2337 = vadd.f32 %v2111, %v2279
        %v2338 = vadd.f32 %v2112, %v2282
        %v2339 = vadd.f32 %v2113, %v2285
        %v2340 = vadd.f32 %v2114, %v2288
        %v2341 = vadd.f32 %v2115, %v2291
        %v2342 = vadd.f32 %v2116, %v2294
        %v2343 = vadd.f32 %v2117, %v2297
        %v2344 = vadd.f32 %v2118, %v2300
        %v2345 = vadd.f32 %v2119, %v2303
        %v2346 = vadd.f32 %v2120, %v2306
        %v2347 = vadd.f32 %v2121, %v2309
        %v2348 = vadd.f32 %v2122, %v2312
        %v2349 = vadd.f32 %v2123, %v2315
        %v2350 = vadd.f32 %v2124, %v2318
        %v2351 = vld [vmem:[%s851 + $0x8] sm:$0x1]
        %v2352 = vld [vmem:[%s851 + $0x14] sm:$0x1]
        %v2353 = vld [vmem:[%s851 + $0x20] sm:$0x1]
        %v2354 = vld [vmem:[%s851 + $0x2c] sm:$0x1]
        %v2355 = vld [vmem:[%s851 + $0x38] sm:$0x1]
        %v2356 = vld [vmem:[%s851 + $0x44] sm:$0x1]
        %v2357 = vld [vmem:[%s851 + $0x50] sm:$0x1]
        %v2358 = vld [vmem:[%s851 + $0x5c] sm:$0x1]
        %v2359 = vld [vmem:[%s851 + $0x68] sm:$0x1]
        %v2360 = vld [vmem:[%s851 + $0x74] sm:$0x1]
        %v2361 = vld [vmem:[%s851 + $0x80] sm:$0x1]
        %v2362 = vld [vmem:[%s851 + $0x8c] sm:$0x1]
        %v2363 = vld [vmem:[%s851 + $0x98] sm:$0x1]
        %v2364 = vld [vmem:[%s851 + $0xa4] sm:$0x1]
        %v2365 = vld [vmem:[%s851 + $0xb0] sm:$0x1]
        %v2366 = vld [vmem:[%s851 + $0xbc] sm:$0x1]
        %v2367 = vunpack.c.l.bf16 %v2351
        %v2368 = vunpack.c.l.bf16 %v2352
        %v2369 = vunpack.c.l.bf16 %v2353
        %v2370 = vunpack.c.l.bf16 %v2354
        %v2371 = vunpack.c.l.bf16 %v2355
        %v2372 = vunpack.c.l.bf16 %v2356
        %v2373 = vunpack.c.l.bf16 %v2357
        %v2374 = vunpack.c.l.bf16 %v2358
        %v2375 = vunpack.c.l.bf16 %v2359
        %v2376 = vunpack.c.l.bf16 %v2360
        %v2377 = vunpack.c.l.bf16 %v2361
        %v2378 = vunpack.c.l.bf16 %v2362
        %v2379 = vunpack.c.l.bf16 %v2363
        %v2380 = vunpack.c.l.bf16 %v2364
        %v2381 = vunpack.c.l.bf16 %v2365
        %v2382 = vunpack.c.l.bf16 %v2366
        %v2383 = vld [vmem:[%s3 + $0x4] sm:$0x1]
        %v2384 = vperm.slane %v2383, 0
        %v2385 = vmul.f32 %v2157, %v2384
        %v2386 = vmul.f32 %v2158, %v2384
        %v2387 = vmul.f32 %v2367, %v2384
        %v2388 = vmul.f32 %v2159, %v2384
        %v2389 = vmul.f32 %v2160, %v2384
        %v2390 = vmul.f32 %v2368, %v2384
        %v2391 = vmul.f32 %v2161, %v2384
        %v2392 = vmul.f32 %v2162, %v2384
        %v2393 = vmul.f32 %v2369, %v2384
        %v2394 = vmul.f32 %v2163, %v2384
        %v2395 = vmul.f32 %v2164, %v2384
        %v2396 = vmul.f32 %v2370, %v2384
        %v2397 = vmul.f32 %v2165, %v2384
        %v2398 = vmul.f32 %v2166, %v2384
        %v2399 = vmul.f32 %v2371, %v2384
        %v2400 = vmul.f32 %v2167, %v2384
        %v2401 = vmul.f32 %v2168, %v2384
        %v2402 = vmul.f32 %v2372, %v2384
        %v2403 = vmul.f32 %v2169, %v2384
        %v2404 = vmul.f32 %v2170, %v2384
        %v2405 = vmul.f32 %v2373, %v2384
        %v2406 = vmul.f32 %v2171, %v2384
        %v2407 = vmul.f32 %v2172, %v2384
        %v2408 = vmul.f32 %v2374, %v2384
        %v2409 = vmul.f32 %v2173, %v2384
        %v2410 = vmul.f32 %v2174, %v2384
        %v2411 = vmul.f32 %v2375, %v2384
        %v2412 = vmul.f32 %v2175, %v2384
        %v2413 = vmul.f32 %v2176, %v2384
        %v2414 = vmul.f32 %v2376, %v2384
        %v2415 = vmul.f32 %v2177, %v2384
        %v2416 = vmul.f32 %v2178, %v2384
        %v2417 = vmul.f32 %v2377, %v2384
        %v2418 = vmul.f32 %v2179, %v2384
        %v2419 = vmul.f32 %v2180, %v2384
        %v2420 = vmul.f32 %v2378, %v2384
        %v2421 = vmul.f32 %v2181, %v2384
        %v2422 = vmul.f32 %v2182, %v2384
        %v2423 = vmul.f32 %v2379, %v2384
        %v2424 = vmul.f32 %v2183, %v2384
        %v2425 = vmul.f32 %v2184, %v2384
        %v2426 = vmul.f32 %v2380, %v2384
        %v2427 = vmul.f32 %v2185, %v2384
        %v2428 = vmul.f32 %v2186, %v2384
        %v2429 = vmul.f32 %v2381, %v2384
        %v2430 = vmul.f32 %v2187, %v2384
        %v2431 = vmul.f32 %v2188, %v2384
        %v2432 = vmul.f32 %v2382, %v2384
        %v2433 = vsel %vm1365, %v2385, 0.0
        %2434 = vadd.xlane.f32.xlu0 %v2433
        %v2435 = vpop.xlane.xlu0 %2434
        %v2436 = vsel %vm1154, %v2386, 0.0
        %2437 = vadd.xlane.f32.xlu0 %v2436
        %v2438 = vpop.xlane.xlu0 %2437
        %v2439 = vsel %vm1372, %v2387, 0.0
        %2440 = vadd.xlane.f32.xlu0 %v2439
        %v2441 = vpop.xlane.xlu0 %2440
        %v2442 = vsel %vm1365, %v2388, 0.0
        %2443 = vadd.xlane.f32.xlu0 %v2442
        %v2444 = vpop.xlane.xlu0 %2443
        %v2445 = vsel %vm1154, %v2389, 0.0
        %2446 = vadd.xlane.f32.xlu0 %v2445
        %v2447 = vpop.xlane.xlu0 %2446
        %v2448 = vsel %vm1372, %v2390, 0.0
        %2449 = vadd.xlane.f32.xlu0 %v2448
        %v2450 = vpop.xlane.xlu0 %2449
        %v2451 = vsel %vm1365, %v2391, 0.0
        %2452 = vadd.xlane.f32.xlu0 %v2451
        %v2453 = vpop.xlane.xlu0 %2452
        %v2454 = vsel %vm1154, %v2392, 0.0
        %2455 = vadd.xlane.f32.xlu0 %v2454
        %v2456 = vpop.xlane.xlu0 %2455
        %v2457 = vsel %vm1372, %v2393, 0.0
        %2458 = vadd.xlane.f32.xlu0 %v2457
        %v2459 = vpop.xlane.xlu0 %2458
        %v2460 = vsel %vm1365, %v2394, 0.0
        %2461 = vadd.xlane.f32.xlu0 %v2460
        %v2462 = vpop.xlane.xlu0 %2461
        %v2463 = vsel %vm1154, %v2395, 0.0
        %2464 = vadd.xlane.f32.xlu0 %v2463
        %v2465 = vpop.xlane.xlu0 %2464
        %v2466 = vsel %vm1372, %v2396, 0.0
        %2467 = vadd.xlane.f32.xlu0 %v2466
        %v2468 = vpop.xlane.xlu0 %2467
        %v2469 = vsel %vm1365, %v2397, 0.0
        %2470 = vadd.xlane.f32.xlu0 %v2469
        %v2471 = vpop.xlane.xlu0 %2470
        %v2472 = vsel %vm1154, %v2398, 0.0
        %2473 = vadd.xlane.f32.xlu0 %v2472
        %v2474 = vpop.xlane.xlu0 %2473
        %v2475 = vsel %vm1372, %v2399, 0.0
        %2476 = vadd.xlane.f32.xlu0 %v2475
        %v2477 = vpop.xlane.xlu0 %2476
        %v2478 = vsel %vm1365, %v2400, 0.0
        %2479 = vadd.xlane.f32.xlu0 %v2478
        %v2480 = vpop.xlane.xlu0 %2479
        %v2481 = vsel %vm1154, %v2401, 0.0
        %2482 = vadd.xlane.f32.xlu0 %v2481
        %v2483 = vpop.xlane.xlu0 %2482
        %v2484 = vsel %vm1372, %v2402, 0.0
        %2485 = vadd.xlane.f32.xlu0 %v2484
        %v2486 = vpop.xlane.xlu0 %2485
        %v2487 = vsel %vm1365, %v2403, 0.0
        %2488 = vadd.xlane.f32.xlu0 %v2487
        %v2489 = vpop.xlane.xlu0 %2488
        %v2490 = vsel %vm1154, %v2404, 0.0
        %2491 = vadd.xlane.f32.xlu0 %v2490
        %v2492 = vpop.xlane.xlu0 %2491
        %v2493 = vsel %vm1372, %v2405, 0.0
        %2494 = vadd.xlane.f32.xlu0 %v2493
        %v2495 = vpop.xlane.xlu0 %2494
        %v2496 = vsel %vm1365, %v2406, 0.0
        %2497 = vadd.xlane.f32.xlu0 %v2496
        %v2498 = vpop.xlane.xlu0 %2497
        %v2499 = vsel %vm1154, %v2407, 0.0
        %2500 = vadd.xlane.f32.xlu0 %v2499
        %v2501 = vpop.xlane.xlu0 %2500
        %v2502 = vsel %vm1372, %v2408, 0.0
        %2503 = vadd.xlane.f32.xlu0 %v2502
        %v2504 = vpop.xlane.xlu0 %2503
        %v2505 = vsel %vm1365, %v2409, 0.0
        %2506 = vadd.xlane.f32.xlu0 %v2505
        %v2507 = vpop.xlane.xlu0 %2506
        %v2508 = vsel %vm1154, %v2410, 0.0
        %2509 = vadd.xlane.f32.xlu0 %v2508
        %v2510 = vpop.xlane.xlu0 %2509
        %v2511 = vsel %vm1372, %v2411, 0.0
        %2512 = vadd.xlane.f32.xlu0 %v2511
        %v2513 = vpop.xlane.xlu0 %2512
        %v2514 = vsel %vm1365, %v2412, 0.0
        %2515 = vadd.xlane.f32.xlu0 %v2514
        %v2516 = vpop.xlane.xlu0 %2515
        %v2517 = vsel %vm1154, %v2413, 0.0
        %2518 = vadd.xlane.f32.xlu0 %v2517
        %v2519 = vpop.xlane.xlu0 %2518
        %v2520 = vsel %vm1372, %v2414, 0.0
        %2521 = vadd.xlane.f32.xlu0 %v2520
        %v2522 = vpop.xlane.xlu0 %2521
        %v2523 = vsel %vm1365, %v2415, 0.0
        %2524 = vadd.xlane.f32.xlu0 %v2523
        %v2525 = vpop.xlane.xlu0 %2524
        %v2526 = vsel %vm1154, %v2416, 0.0
        %2527 = vadd.xlane.f32.xlu0 %v2526
        %v2528 = vpop.xlane.xlu0 %2527
        %v2529 = vsel %vm1372, %v2417, 0.0
        %2530 = vadd.xlane.f32.xlu0 %v2529
        %v2531 = vpop.xlane.xlu0 %2530
        %v2532 = vsel %vm1365, %v2418, 0.0
        %2533 = vadd.xlane.f32.xlu0 %v2532
        %v2534 = vpop.xlane.xlu0 %2533
        %v2535 = vsel %vm1154, %v2419, 0.0
        %2536 = vadd.xlane.f32.xlu0 %v2535
        %v2537 = vpop.xlane.xlu0 %2536
        %v2538 = vsel %vm1372, %v2420, 0.0
        %2539 = vadd.xlane.f32.xlu0 %v2538
        %v2540 = vpop.xlane.xlu0 %2539
        %v2541 = vsel %vm1365, %v2421, 0.0
        %2542 = vadd.xlane.f32.xlu0 %v2541
        %v2543 = vpop.xlane.xlu0 %2542
        %v2544 = vsel %vm1154, %v2422, 0.0
        %2545 = vadd.xlane.f32.xlu0 %v2544
        %v2546 = vpop.xlane.xlu0 %2545
        %v2547 = vsel %vm1372, %v2423, 0.0
        %2548 = vadd.xlane.f32.xlu0 %v2547
        %v2549 = vpop.xlane.xlu0 %2548
        %v2550 = vsel %vm1365, %v2424, 0.0
        %2551 = vadd.xlane.f32.xlu0 %v2550
        %v2552 = vpop.xlane.xlu0 %2551
        %v2553 = vsel %vm1154, %v2425, 0.0
        %2554 = vadd.xlane.f32.xlu0 %v2553
        %v2555 = vpop.xlane.xlu0 %2554
        %v2556 = vsel %vm1372, %v2426, 0.0
        %2557 = vadd.xlane.f32.xlu0 %v2556
        %v2558 = vpop.xlane.xlu0 %2557
        %v2559 = vsel %vm1365, %v2427, 0.0
        %2560 = vadd.xlane.f32.xlu0 %v2559
        %v2561 = vpop.xlane.xlu0 %2560
        %v2562 = vsel %vm1154, %v2428, 0.0
        %2563 = vadd.xlane.f32.xlu0 %v2562
        %v2564 = vpop.xlane.xlu0 %2563
        %v2565 = vsel %vm1372, %v2429, 0.0
        %2566 = vadd.xlane.f32.xlu0 %v2565
        %v2567 = vpop.xlane.xlu0 %2566
        %v2568 = vsel %vm1365, %v2430, 0.0
        %2569 = vadd.xlane.f32.xlu0 %v2568
        %v2570 = vpop.xlane.xlu0 %2569
        %v2571 = vsel %vm1154, %v2431, 0.0
        %2572 = vadd.xlane.f32.xlu0 %v2571
        %v2573 = vpop.xlane.xlu0 %2572
        %v2574 = vsel %vm1372, %v2432, 0.0
        %2575 = vadd.xlane.f32.xlu0 %v2574
        %v2576 = vpop.xlane.xlu0 %2575
        %v2625 = vrot.slane %v2435, 1
        %v2626 = vrot.slane %v2438, 1
        %v2627 = vsel %vm1559, %v2625, %v2626
        %v2628 = vrot.slane %v2441, 1
        %v2629 = vsel %vm1559, %v2626, %v2628
        %v2630 = vrot.slane %v2444, 1
        %v2631 = vrot.slane %v2447, 1
        %v2632 = vsel %vm1559, %v2630, %v2631
        %v2633 = vrot.slane %v2450, 1
        %v2634 = vsel %vm1559, %v2631, %v2633
        %v2635 = vrot.slane %v2453, 1
        %v2636 = vrot.slane %v2456, 1
        %v2637 = vsel %vm1559, %v2635, %v2636
        %v2638 = vrot.slane %v2459, 1
        %v2639 = vsel %vm1559, %v2636, %v2638
        %v2640 = vrot.slane %v2462, 1
        %v2641 = vrot.slane %v2465, 1
        %v2642 = vsel %vm1559, %v2640, %v2641
        %v2643 = vrot.slane %v2468, 1
        %v2644 = vsel %vm1559, %v2641, %v2643
        %v2645 = vrot.slane %v2471, 1
        %v2646 = vrot.slane %v2474, 1
        %v2647 = vsel %vm1559, %v2645, %v2646
        %v2648 = vrot.slane %v2477, 1
        %v2649 = vsel %vm1559, %v2646, %v2648
        %v2650 = vrot.slane %v2480, 1
        %v2651 = vrot.slane %v2483, 1
        %v2652 = vsel %vm1559, %v2650, %v2651
        %v2653 = vrot.slane %v2486, 1
        %v2654 = vsel %vm1559, %v2651, %v2653
        %v2655 = vrot.slane %v2489, 1
        %v2656 = vrot.slane %v2492, 1
        %v2657 = vsel %vm1559, %v2655, %v2656
        %v2658 = vrot.slane %v2495, 1
        %v2659 = vsel %vm1559, %v2656, %v2658
        %v2660 = vrot.slane %v2498, 1
        %v2661 = vrot.slane %v2501, 1
        %v2662 = vsel %vm1559, %v2660, %v2661
        %v2663 = vrot.slane %v2504, 1
        %v2664 = vsel %vm1559, %v2661, %v2663
        %v2665 = vrot.slane %v2507, 1
        %v2666 = vrot.slane %v2510, 1
        %v2667 = vsel %vm1559, %v2665, %v2666
        %v2668 = vrot.slane %v2513, 1
        %v2669 = vsel %vm1559, %v2666, %v2668
        %v2670 = vrot.slane %v2516, 1
        %v2671 = vrot.slane %v2519, 1
        %v2672 = vsel %vm1559, %v2670, %v2671
        %v2673 = vrot.slane %v2522, 1
        %v2674 = vsel %vm1559, %v2671, %v2673
        %v2675 = vrot.slane %v2525, 1
        %v2676 = vrot.slane %v2528, 1
        %v2677 = vsel %vm1559, %v2675, %v2676
        %v2678 = vrot.slane %v2531, 1
        %v2679 = vsel %vm1559, %v2676, %v2678
        %v2680 = vrot.slane %v2534, 1
        %v2681 = vrot.slane %v2537, 1
        %v2682 = vsel %vm1559, %v2680, %v2681
        %v2683 = vrot.slane %v2540, 1
        %v2684 = vsel %vm1559, %v2681, %v2683
        %v2685 = vrot.slane %v2543, 1
        %v2686 = vrot.slane %v2546, 1
        %v2687 = vsel %vm1559, %v2685, %v2686
        %v2688 = vrot.slane %v2549, 1
        %v2689 = vsel %vm1559, %v2686, %v2688
        %v2690 = vrot.slane %v2552, 1
        %v2691 = vrot.slane %v2555, 1
        %v2692 = vsel %vm1559, %v2690, %v2691
        %v2693 = vrot.slane %v2558, 1
        %v2694 = vsel %vm1559, %v2691, %v2693
        %v2695 = vrot.slane %v2561, 1
        %v2696 = vrot.slane %v2564, 1
        %v2697 = vsel %vm1559, %v2695, %v2696
        %v2698 = vrot.slane %v2567, 1
        %v2699 = vsel %vm1559, %v2696, %v2698
        %v2700 = vrot.slane %v2570, 1
        %v2701 = vrot.slane %v2573, 1
        %v2702 = vsel %vm1559, %v2700, %v2701
        %v2703 = vrot.slane %v2576, 1
        %v2704 = vsel %vm1559, %v2701, %v2703
        %v2737 = vadd.f32 %v2319, %v2627
        %v2738 = vadd.f32 %v2320, %v2629
        %v2739 = vadd.f32 %v2321, %v2632
        %v2740 = vadd.f32 %v2322, %v2634
        %v2741 = vadd.f32 %v2323, %v2637
        %v2742 = vadd.f32 %v2324, %v2639
        %v2743 = vadd.f32 %v2325, %v2642
        %v2744 = vadd.f32 %v2326, %v2644
        %v2745 = vadd.f32 %v2327, %v2647
        %v2746 = vadd.f32 %v2328, %v2649
        %v2747 = vadd.f32 %v2329, %v2652
        %v2748 = vadd.f32 %v2330, %v2654
        %v2749 = vadd.f32 %v2331, %v2657
        %v2750 = vadd.f32 %v2332, %v2659
        %v2751 = vadd.f32 %v2333, %v2662
        %v2752 = vadd.f32 %v2334, %v2664
        %v2753 = vadd.f32 %v2335, %v2667
        %v2754 = vadd.f32 %v2336, %v2669
        %v2755 = vadd.f32 %v2337, %v2672
        %v2756 = vadd.f32 %v2338, %v2674
        %v2757 = vadd.f32 %v2339, %v2677
        %v2758 = vadd.f32 %v2340, %v2679
        %v2759 = vadd.f32 %v2341, %v2682
        %v2760 = vadd.f32 %v2342, %v2684
        %v2761 = vadd.f32 %v2343, %v2687
        %v2762 = vadd.f32 %v2344, %v2689
        %v2763 = vadd.f32 %v2345, %v2692
        %v2764 = vadd.f32 %v2346, %v2694
        %v2765 = vadd.f32 %v2347, %v2697
        %v2766 = vadd.f32 %v2348, %v2699
        %v2767 = vadd.f32 %v2349, %v2702
        %v2768 = vadd.f32 %v2350, %v2704
        %v2769 = vld [vmem:[%s851] sm:$0xe]
        %v2770 = vld [vmem:[%s851 + $0xc] sm:$0xe]
        %v2771 = vld [vmem:[%s851 + $0x18] sm:$0xe]
        %v2772 = vld [vmem:[%s851 + $0x24] sm:$0xe]
        %v2773 = vld [vmem:[%s851 + $0x30] sm:$0xe]
        %v2774 = vld [vmem:[%s851 + $0x3c] sm:$0xe]
        %v2775 = vld [vmem:[%s851 + $0x48] sm:$0xe]
        %v2776 = vld [vmem:[%s851 + $0x54] sm:$0xe]
        %v2777 = vld [vmem:[%s851 + $0x60] sm:$0xe]
        %v2778 = vld [vmem:[%s851 + $0x6c] sm:$0xe]
        %v2779 = vld [vmem:[%s851 + $0x78] sm:$0xe]
        %v2780 = vld [vmem:[%s851 + $0x84] sm:$0xe]
        %v2781 = vld [vmem:[%s851 + $0x90] sm:$0xe]
        %v2782 = vld [vmem:[%s851 + $0x9c] sm:$0xe]
        %v2783 = vld [vmem:[%s851 + $0xa8] sm:$0xe]
        %v2784 = vld [vmem:[%s851 + $0xb4] sm:$0xe]
        %v2785 = vunpack.c.l.bf16 %v2769
        %v2786 = vunpack.c.l.bf16 %v2770
        %v2787 = vunpack.c.l.bf16 %v2771
        %v2788 = vunpack.c.l.bf16 %v2772
        %v2789 = vunpack.c.l.bf16 %v2773
        %v2790 = vunpack.c.l.bf16 %v2774
        %v2791 = vunpack.c.l.bf16 %v2775
        %v2792 = vunpack.c.l.bf16 %v2776
        %v2793 = vunpack.c.l.bf16 %v2777
        %v2794 = vunpack.c.l.bf16 %v2778
        %v2795 = vunpack.c.l.bf16 %v2779
        %v2796 = vunpack.c.l.bf16 %v2780
        %v2797 = vunpack.c.l.bf16 %v2781
        %v2798 = vunpack.c.l.bf16 %v2782
        %v2799 = vunpack.c.l.bf16 %v2783
        %v2800 = vunpack.c.l.bf16 %v2784
        %v2801 = vld [vmem:[%s3 + $0x5] sm:$0x1]
        %v2802 = vperm.slane %v2801, 0
        %v2803 = vmul.f32 %v2785, %v2802
        %v2804 = vmul.f32 %v2158, %v2802
        %v2805 = vmul.f32 %v2367, %v2802
        %v2806 = vmul.f32 %v2786, %v2802
        %v2807 = vmul.f32 %v2160, %v2802
        %v2808 = vmul.f32 %v2368, %v2802
        %v2809 = vmul.f32 %v2787, %v2802
        %v2810 = vmul.f32 %v2162, %v2802
        %v2811 = vmul.f32 %v2369, %v2802
        %v2812 = vmul.f32 %v2788, %v2802
        %v2813 = vmul.f32 %v2164, %v2802
        %v2814 = vmul.f32 %v2370, %v2802
        %v2815 = vmul.f32 %v2789, %v2802
        %v2816 = vmul.f32 %v2166, %v2802
        %v2817 = vmul.f32 %v2371, %v2802
        %v2818 = vmul.f32 %v2790, %v2802
        %v2819 = vmul.f32 %v2168, %v2802
        %v2820 = vmul.f32 %v2372, %v2802
        %v2821 = vmul.f32 %v2791, %v2802
        %v2822 = vmul.f32 %v2170, %v2802
        %v2823 = vmul.f32 %v2373, %v2802
        %v2824 = vmul.f32 %v2792, %v2802
        %v2825 = vmul.f32 %v2172, %v2802
        %v2826 = vmul.f32 %v2374, %v2802
        %v2827 = vmul.f32 %v2793, %v2802
        %v2828 = vmul.f32 %v2174, %v2802
        %v2829 = vmul.f32 %v2375, %v2802
        %v2830 = vmul.f32 %v2794, %v2802
        %v2831 = vmul.f32 %v2176, %v2802
        %v2832 = vmul.f32 %v2376, %v2802
        %v2833 = vmul.f32 %v2795, %v2802
        %v2834 = vmul.f32 %v2178, %v2802
        %v2835 = vmul.f32 %v2377, %v2802
        %v2836 = vmul.f32 %v2796, %v2802
        %v2837 = vmul.f32 %v2180, %v2802
        %v2838 = vmul.f32 %v2378, %v2802
        %v2839 = vmul.f32 %v2797, %v2802
        %v2840 = vmul.f32 %v2182, %v2802
        %v2841 = vmul.f32 %v2379, %v2802
        %v2842 = vmul.f32 %v2798, %v2802
        %v2843 = vmul.f32 %v2184, %v2802
        %v2844 = vmul.f32 %v2380, %v2802
        %v2845 = vmul.f32 %v2799, %v2802
        %v2846 = vmul.f32 %v2186, %v2802
        %v2847 = vmul.f32 %v2381, %v2802
        %v2848 = vmul.f32 %v2800, %v2802
        %v2849 = vmul.f32 %v2188, %v2802
        %v2850 = vmul.f32 %v2382, %v2802
        %v2851 = vsel %vm1786, %v2803, 0.0
        %2852 = vadd.xlane.f32.xlu0 %v2851
        %v2853 = vpop.xlane.xlu0 %2852
        %v2854 = vsel %vm1154, %v2804, 0.0
        %2855 = vadd.xlane.f32.xlu0 %v2854
        %v2856 = vpop.xlane.xlu0 %2855
        %v2857 = vsel %vm1793, %v2805, 0.0
        %2858 = vadd.xlane.f32.xlu0 %v2857
        %v2859 = vpop.xlane.xlu0 %2858
        %v2860 = vsel %vm1786, %v2806, 0.0
        %2861 = vadd.xlane.f32.xlu0 %v2860
        %v2862 = vpop.xlane.xlu0 %2861
        %v2863 = vsel %vm1154, %v2807, 0.0
        %2864 = vadd.xlane.f32.xlu0 %v2863
        %v2865 = vpop.xlane.xlu0 %2864
        %v2866 = vsel %vm1793, %v2808, 0.0
        %2867 = vadd.xlane.f32.xlu0 %v2866
        %v2868 = vpop.xlane.xlu0 %2867
        %v2869 = vsel %vm1786, %v2809, 0.0
        %2870 = vadd.xlane.f32.xlu0 %v2869
        %v2871 = vpop.xlane.xlu0 %2870
        %v2872 = vsel %vm1154, %v2810, 0.0
        %2873 = vadd.xlane.f32.xlu0 %v2872
        %v2874 = vpop.xlane.xlu0 %2873
        %v2875 = vsel %vm1793, %v2811, 0.0
        %2876 = vadd.xlane.f32.xlu0 %v2875
        %v2877 = vpop.xlane.xlu0 %2876
        %v2878 = vsel %vm1786, %v2812, 0.0
        %2879 = vadd.xlane.f32.xlu0 %v2878
        %v2880 = vpop.xlane.xlu0 %2879
        %v2881 = vsel %vm1154, %v2813, 0.0
        %2882 = vadd.xlane.f32.xlu0 %v2881
        %v2883 = vpop.xlane.xlu0 %2882
        %v2884 = vsel %vm1793, %v2814, 0.0
        %2885 = vadd.xlane.f32.xlu0 %v2884
        %v2886 = vpop.xlane.xlu0 %2885
        %v2887 = vsel %vm1786, %v2815, 0.0
        %2888 = vadd.xlane.f32.xlu0 %v2887
        %v2889 = vpop.xlane.xlu0 %2888
        %v2890 = vsel %vm1154, %v2816, 0.0
        %2891 = vadd.xlane.f32.xlu0 %v2890
        %v2892 = vpop.xlane.xlu0 %2891
        %v2893 = vsel %vm1793, %v2817, 0.0
        %2894 = vadd.xlane.f32.xlu0 %v2893
        %v2895 = vpop.xlane.xlu0 %2894
        %v2896 = vsel %vm1786, %v2818, 0.0
        %2897 = vadd.xlane.f32.xlu0 %v2896
        %v2898 = vpop.xlane.xlu0 %2897
        %v2899 = vsel %vm1154, %v2819, 0.0
        %2900 = vadd.xlane.f32.xlu0 %v2899
        %v2901 = vpop.xlane.xlu0 %2900
        %v2902 = vsel %vm1793, %v2820, 0.0
        %2903 = vadd.xlane.f32.xlu0 %v2902
        %v2904 = vpop.xlane.xlu0 %2903
        %v2905 = vsel %vm1786, %v2821, 0.0
        %2906 = vadd.xlane.f32.xlu0 %v2905
        %v2907 = vpop.xlane.xlu0 %2906
        %v2908 = vsel %vm1154, %v2822, 0.0
        %2909 = vadd.xlane.f32.xlu0 %v2908
        %v2910 = vpop.xlane.xlu0 %2909
        %v2911 = vsel %vm1793, %v2823, 0.0
        %2912 = vadd.xlane.f32.xlu0 %v2911
        %v2913 = vpop.xlane.xlu0 %2912
        %v2914 = vsel %vm1786, %v2824, 0.0
        %2915 = vadd.xlane.f32.xlu0 %v2914
        %v2916 = vpop.xlane.xlu0 %2915
        %v2917 = vsel %vm1154, %v2825, 0.0
        %2918 = vadd.xlane.f32.xlu0 %v2917
        %v2919 = vpop.xlane.xlu0 %2918
        %v2920 = vsel %vm1793, %v2826, 0.0
        %2921 = vadd.xlane.f32.xlu0 %v2920
        %v2922 = vpop.xlane.xlu0 %2921
        %v2923 = vsel %vm1786, %v2827, 0.0
        %2924 = vadd.xlane.f32.xlu0 %v2923
        %v2925 = vpop.xlane.xlu0 %2924
        %v2926 = vsel %vm1154, %v2828, 0.0
        %2927 = vadd.xlane.f32.xlu0 %v2926
        %v2928 = vpop.xlane.xlu0 %2927
        %v2929 = vsel %vm1793, %v2829, 0.0
        %2930 = vadd.xlane.f32.xlu0 %v2929
        %v2931 = vpop.xlane.xlu0 %2930
        %v2932 = vsel %vm1786, %v2830, 0.0
        %2933 = vadd.xlane.f32.xlu0 %v2932
        %v2934 = vpop.xlane.xlu0 %2933
        %v2935 = vsel %vm1154, %v2831, 0.0
        %2936 = vadd.xlane.f32.xlu0 %v2935
        %v2937 = vpop.xlane.xlu0 %2936
        %v2938 = vsel %vm1793, %v2832, 0.0
        %2939 = vadd.xlane.f32.xlu0 %v2938
        %v2940 = vpop.xlane.xlu0 %2939
        %v2941 = vsel %vm1786, %v2833, 0.0
        %2942 = vadd.xlane.f32.xlu0 %v2941
        %v2943 = vpop.xlane.xlu0 %2942
        %v2944 = vsel %vm1154, %v2834, 0.0
        %2945 = vadd.xlane.f32.xlu0 %v2944
        %v2946 = vpop.xlane.xlu0 %2945
        %v2947 = vsel %vm1793, %v2835, 0.0
        %2948 = vadd.xlane.f32.xlu0 %v2947
        %v2949 = vpop.xlane.xlu0 %2948
        %v2950 = vsel %vm1786, %v2836, 0.0
        %2951 = vadd.xlane.f32.xlu0 %v2950
        %v2952 = vpop.xlane.xlu0 %2951
        %v2953 = vsel %vm1154, %v2837, 0.0
        %2954 = vadd.xlane.f32.xlu0 %v2953
        %v2955 = vpop.xlane.xlu0 %2954
        %v2956 = vsel %vm1793, %v2838, 0.0
        %2957 = vadd.xlane.f32.xlu0 %v2956
        %v2958 = vpop.xlane.xlu0 %2957
        %v2959 = vsel %vm1786, %v2839, 0.0
        %2960 = vadd.xlane.f32.xlu0 %v2959
        %v2961 = vpop.xlane.xlu0 %2960
        %v2962 = vsel %vm1154, %v2840, 0.0
        %2963 = vadd.xlane.f32.xlu0 %v2962
        %v2964 = vpop.xlane.xlu0 %2963
        %v2965 = vsel %vm1793, %v2841, 0.0
        %2966 = vadd.xlane.f32.xlu0 %v2965
        %v2967 = vpop.xlane.xlu0 %2966
        %v2968 = vsel %vm1786, %v2842, 0.0
        %2969 = vadd.xlane.f32.xlu0 %v2968
        %v2970 = vpop.xlane.xlu0 %2969
        %v2971 = vsel %vm1154, %v2843, 0.0
        %2972 = vadd.xlane.f32.xlu0 %v2971
        %v2973 = vpop.xlane.xlu0 %2972
        %v2974 = vsel %vm1793, %v2844, 0.0
        %2975 = vadd.xlane.f32.xlu0 %v2974
        %v2976 = vpop.xlane.xlu0 %2975
        %v2977 = vsel %vm1786, %v2845, 0.0
        %2978 = vadd.xlane.f32.xlu0 %v2977
        %v2979 = vpop.xlane.xlu0 %2978
        %v2980 = vsel %vm1154, %v2846, 0.0
        %2981 = vadd.xlane.f32.xlu0 %v2980
        %v2982 = vpop.xlane.xlu0 %2981
        %v2983 = vsel %vm1793, %v2847, 0.0
        %2984 = vadd.xlane.f32.xlu0 %v2983
        %v2985 = vpop.xlane.xlu0 %2984
        %v2986 = vsel %vm1786, %v2848, 0.0
        %2987 = vadd.xlane.f32.xlu0 %v2986
        %v2988 = vpop.xlane.xlu0 %2987
        %v2989 = vsel %vm1154, %v2849, 0.0
        %2990 = vadd.xlane.f32.xlu0 %v2989
        %v2991 = vpop.xlane.xlu0 %2990
        %v2992 = vsel %vm1793, %v2850, 0.0
        %2993 = vadd.xlane.f32.xlu0 %v2992
        %v2994 = vpop.xlane.xlu0 %2993
        %v3043 = vrot.slane %v2853, 2
        %v3044 = vrot.slane %v2856, 2
        %v3045 = vsel %vm1980, %v3043, %v3044
        %v3046 = vrot.slane %v2859, 2
        %v3047 = vsel %vm1980, %v3044, %v3046
        %v3048 = vrot.slane %v2862, 2
        %v3049 = vrot.slane %v2865, 2
        %v3050 = vsel %vm1980, %v3048, %v3049
        %v3051 = vrot.slane %v2868, 2
        %v3052 = vsel %vm1980, %v3049, %v3051
        %v3053 = vrot.slane %v2871, 2
        %v3054 = vrot.slane %v2874, 2
        %v3055 = vsel %vm1980, %v3053, %v3054
        %v3056 = vrot.slane %v2877, 2
        %v3057 = vsel %vm1980, %v3054, %v3056
        %v3058 = vrot.slane %v2880, 2
        %v3059 = vrot.slane %v2883, 2
        %v3060 = vsel %vm1980, %v3058, %v3059
        %v3061 = vrot.slane %v2886, 2
        %v3062 = vsel %vm1980, %v3059, %v3061
        %v3063 = vrot.slane %v2889, 2
        %v3064 = vrot.slane %v2892, 2
        %v3065 = vsel %vm1980, %v3063, %v3064
        %v3066 = vrot.slane %v2895, 2
        %v3067 = vsel %vm1980, %v3064, %v3066
        %v3068 = vrot.slane %v2898, 2
        %v3069 = vrot.slane %v2901, 2
        %v3070 = vsel %vm1980, %v3068, %v3069
        %v3071 = vrot.slane %v2904, 2
        %v3072 = vsel %vm1980, %v3069, %v3071
        %v3073 = vrot.slane %v2907, 2
        %v3074 = vrot.slane %v2910, 2
        %v3075 = vsel %vm1980, %v3073, %v3074
        %v3076 = vrot.slane %v2913, 2
        %v3077 = vsel %vm1980, %v3074, %v3076
        %v3078 = vrot.slane %v2916, 2
        %v3079 = vrot.slane %v2919, 2
        %v3080 = vsel %vm1980, %v3078, %v3079
        %v3081 = vrot.slane %v2922, 2
        %v3082 = vsel %vm1980, %v3079, %v3081
        %v3083 = vrot.slane %v2925, 2
        %v3084 = vrot.slane %v2928, 2
        %v3085 = vsel %vm1980, %v3083, %v3084
        %v3086 = vrot.slane %v2931, 2
        %v3087 = vsel %vm1980, %v3084, %v3086
        %v3088 = vrot.slane %v2934, 2
        %v3089 = vrot.slane %v2937, 2
        %v3090 = vsel %vm1980, %v3088, %v3089
        %v3091 = vrot.slane %v2940, 2
        %v3092 = vsel %vm1980, %v3089, %v3091
        %v3093 = vrot.slane %v2943, 2
        %v3094 = vrot.slane %v2946, 2
        %v3095 = vsel %vm1980, %v3093, %v3094
        %v3096 = vrot.slane %v2949, 2
        %v3097 = vsel %vm1980, %v3094, %v3096
        %v3098 = vrot.slane %v2952, 2
        %v3099 = vrot.slane %v2955, 2
        %v3100 = vsel %vm1980, %v3098, %v3099
        %v3101 = vrot.slane %v2958, 2
        %v3102 = vsel %vm1980, %v3099, %v3101
        %v3103 = vrot.slane %v2961, 2
        %v3104 = vrot.slane %v2964, 2
        %v3105 = vsel %vm1980, %v3103, %v3104
        %v3106 = vrot.slane %v2967, 2
        %v3107 = vsel %vm1980, %v3104, %v3106
        %v3108 = vrot.slane %v2970, 2
        %v3109 = vrot.slane %v2973, 2
        %v3110 = vsel %vm1980, %v3108, %v3109
        %v3111 = vrot.slane %v2976, 2
        %v3112 = vsel %vm1980, %v3109, %v3111
        %v3113 = vrot.slane %v2979, 2
        %v3114 = vrot.slane %v2982, 2
        %v3115 = vsel %vm1980, %v3113, %v3114
        %v3116 = vrot.slane %v2985, 2
        %v3117 = vsel %vm1980, %v3114, %v3116
        %v3118 = vrot.slane %v2988, 2
        %v3119 = vrot.slane %v2991, 2
        %v3120 = vsel %vm1980, %v3118, %v3119
        %v3121 = vrot.slane %v2994, 2
        %v3122 = vsel %vm1980, %v3119, %v3121
        %v3155 = vadd.f32 %v2737, %v3045
        %v3156 = vadd.f32 %v2738, %v3047
        %v3157 = vadd.f32 %v2739, %v3050
        %v3158 = vadd.f32 %v2740, %v3052
        %v3159 = vadd.f32 %v2741, %v3055
        %v3160 = vadd.f32 %v2742, %v3057
        %v3161 = vadd.f32 %v2743, %v3060
        %v3162 = vadd.f32 %v2744, %v3062
        %v3163 = vadd.f32 %v2745, %v3065
        %v3164 = vadd.f32 %v2746, %v3067
        %v3165 = vadd.f32 %v2747, %v3070
        %v3166 = vadd.f32 %v2748, %v3072
        %v3167 = vadd.f32 %v2749, %v3075
        %v3168 = vadd.f32 %v2750, %v3077
        %v3169 = vadd.f32 %v2751, %v3080
        %v3170 = vadd.f32 %v2752, %v3082
        %v3171 = vadd.f32 %v2753, %v3085
        %v3172 = vadd.f32 %v2754, %v3087
        %v3173 = vadd.f32 %v2755, %v3090
        %v3174 = vadd.f32 %v2756, %v3092
        %v3175 = vadd.f32 %v2757, %v3095
        %v3176 = vadd.f32 %v2758, %v3097
        %v3177 = vadd.f32 %v2759, %v3100
        %v3178 = vadd.f32 %v2760, %v3102
        %v3179 = vadd.f32 %v2761, %v3105
        %v3180 = vadd.f32 %v2762, %v3107
        %v3181 = vadd.f32 %v2763, %v3110
        %v3182 = vadd.f32 %v2764, %v3112
        %v3183 = vadd.f32 %v2765, %v3115
        %v3184 = vadd.f32 %v2766, %v3117
        %v3185 = vadd.f32 %v2767, %v3120
        %v3186 = vadd.f32 %v2768, %v3122
        %s3187 = scalar_lea.vmem [#allocation2], 24
        %v3188 = vld [vmem:[%s3187] sm:$0xf]
        %v3189 = vld [vmem:[%s3187 + $0x4] sm:$0xf]
        %v3190 = vld [vmem:[%s3187 + $0xc] sm:$0xf]
        %v3191 = vld [vmem:[%s3187 + $0x10] sm:$0xf]
        %v3192 = vld [vmem:[%s3187 + $0x18] sm:$0xf]
        %v3193 = vld [vmem:[%s3187 + $0x1c] sm:$0xf]
        %v3194 = vld [vmem:[%s3187 + $0x24] sm:$0xf]
        %v3195 = vld [vmem:[%s3187 + $0x28] sm:$0xf]
        %v3196 = vld [vmem:[%s3187 + $0x30] sm:$0xf]
        %v3197 = vld [vmem:[%s3187 + $0x34] sm:$0xf]
        %v3198 = vld [vmem:[%s3187 + $0x3c] sm:$0xf]
        %v3199 = vld [vmem:[%s3187 + $0x40] sm:$0xf]
        %v3200 = vld [vmem:[%s3187 + $0x48] sm:$0xf]
        %v3201 = vld [vmem:[%s3187 + $0x4c] sm:$0xf]
        %v3202 = vld [vmem:[%s3187 + $0x54] sm:$0xf]
        %v3203 = vld [vmem:[%s3187 + $0x58] sm:$0xf]
        %v3204 = vld [vmem:[%s3187 + $0x60] sm:$0xf]
        %v3205 = vld [vmem:[%s3187 + $0x64] sm:$0xf]
        %v3206 = vld [vmem:[%s3187 + $0x6c] sm:$0xf]
        %v3207 = vld [vmem:[%s3187 + $0x70] sm:$0xf]
        %v3208 = vld [vmem:[%s3187 + $0x78] sm:$0xf]
        %v3209 = vld [vmem:[%s3187 + $0x7c] sm:$0xf]
        %v3210 = vld [vmem:[%s3187 + $0x84] sm:$0xf]
        %v3211 = vld [vmem:[%s3187 + $0x88] sm:$0xf]
        %v3212 = vld [vmem:[%s3187 + $0x90] sm:$0xf]
        %v3213 = vld [vmem:[%s3187 + $0x94] sm:$0xf]
        %v3214 = vld [vmem:[%s3187 + $0x9c] sm:$0xf]
        %v3215 = vld [vmem:[%s3187 + $0xa0] sm:$0xf]
        %v3216 = vld [vmem:[%s3187 + $0xa8] sm:$0xf]
        %v3217 = vld [vmem:[%s3187 + $0xac] sm:$0xf]
        %v3218 = vld [vmem:[%s3187 + $0xb4] sm:$0xf]
        %v3219 = vld [vmem:[%s3187 + $0xb8] sm:$0xf]
        %v3220 = vunpack.c.l.bf16 %v3188
        %v3221 = vunpack.c.l.bf16 %v3189
        %v3222 = vunpack.c.l.bf16 %v3190
        %v3223 = vunpack.c.l.bf16 %v3191
        %v3224 = vunpack.c.l.bf16 %v3192
        %v3225 = vunpack.c.l.bf16 %v3193
        %v3226 = vunpack.c.l.bf16 %v3194
        %v3227 = vunpack.c.l.bf16 %v3195
        %v3228 = vunpack.c.l.bf16 %v3196
        %v3229 = vunpack.c.l.bf16 %v3197
        %v3230 = vunpack.c.l.bf16 %v3198
        %v3231 = vunpack.c.l.bf16 %v3199
        %v3232 = vunpack.c.l.bf16 %v3200
        %v3233 = vunpack.c.l.bf16 %v3201
        %v3234 = vunpack.c.l.bf16 %v3202
        %v3235 = vunpack.c.l.bf16 %v3203
        %v3236 = vunpack.c.l.bf16 %v3204
        %v3237 = vunpack.c.l.bf16 %v3205
        %v3238 = vunpack.c.l.bf16 %v3206
        %v3239 = vunpack.c.l.bf16 %v3207
        %v3240 = vunpack.c.l.bf16 %v3208
        %v3241 = vunpack.c.l.bf16 %v3209
        %v3242 = vunpack.c.l.bf16 %v3210
        %v3243 = vunpack.c.l.bf16 %v3211
        %v3244 = vunpack.c.l.bf16 %v3212
        %v3245 = vunpack.c.l.bf16 %v3213
        %v3246 = vunpack.c.l.bf16 %v3214
        %v3247 = vunpack.c.l.bf16 %v3215
        %v3248 = vunpack.c.l.bf16 %v3216
        %v3249 = vunpack.c.l.bf16 %v3217
        %v3250 = vunpack.c.l.bf16 %v3218
        %v3251 = vunpack.c.l.bf16 %v3219
        %v3252 = vld [vmem:[%s3 + $0x6] sm:$0x1]
        %v3253 = vperm.slane %v3252, 0
        %v3254 = vmul.f32 %v3220, %v3253
        %v3255 = vmul.f32 %v3221, %v3253
        %v3256 = vmul.f32 %v3222, %v3253
        %v3257 = vmul.f32 %v3223, %v3253
        %v3258 = vmul.f32 %v3224, %v3253
        %v3259 = vmul.f32 %v3225, %v3253
        %v3260 = vmul.f32 %v3226, %v3253
        %v3261 = vmul.f32 %v3227, %v3253
        %v3262 = vmul.f32 %v3228, %v3253
        %v3263 = vmul.f32 %v3229, %v3253
        %v3264 = vmul.f32 %v3230, %v3253
        %v3265 = vmul.f32 %v3231, %v3253
        %v3266 = vmul.f32 %v3232, %v3253
        %v3267 = vmul.f32 %v3233, %v3253
        %v3268 = vmul.f32 %v3234, %v3253
        %v3269 = vmul.f32 %v3235, %v3253
        %v3270 = vmul.f32 %v3236, %v3253
        %v3271 = vmul.f32 %v3237, %v3253
        %v3272 = vmul.f32 %v3238, %v3253
        %v3273 = vmul.f32 %v3239, %v3253
        %v3274 = vmul.f32 %v3240, %v3253
        %v3275 = vmul.f32 %v3241, %v3253
        %v3276 = vmul.f32 %v3242, %v3253
        %v3277 = vmul.f32 %v3243, %v3253
        %v3278 = vmul.f32 %v3244, %v3253
        %v3279 = vmul.f32 %v3245, %v3253
        %v3280 = vmul.f32 %v3246, %v3253
        %v3281 = vmul.f32 %v3247, %v3253
        %v3282 = vmul.f32 %v3248, %v3253
        %v3283 = vmul.f32 %v3249, %v3253
        %v3284 = vmul.f32 %v3250, %v3253
        %v3285 = vmul.f32 %v3251, %v3253
        %v3286 = vsel %vm1154, %v3254, 0.0
        %3287 = vadd.xlane.f32.xlu0 %v3286
        %v3288 = vpop.xlane.xlu0 %3287
        %v3289 = vsel %vm1154, %v3255, 0.0
        %3290 = vadd.xlane.f32.xlu0 %v3289
        %v3291 = vpop.xlane.xlu0 %3290
        %v3292 = vsel %vm1154, %v3256, 0.0
        %3293 = vadd.xlane.f32.xlu0 %v3292
        %v3294 = vpop.xlane.xlu0 %3293
        %v3295 = vsel %vm1154, %v3257, 0.0
        %3296 = vadd.xlane.f32.xlu0 %v3295
        %v3297 = vpop.xlane.xlu0 %3296
        %v3298 = vsel %vm1154, %v3258, 0.0
        %3299 = vadd.xlane.f32.xlu0 %v3298
        %v3300 = vpop.xlane.xlu0 %3299
        %v3301 = vsel %vm1154, %v3259, 0.0
        %3302 = vadd.xlane.f32.xlu0 %v3301
        %v3303 = vpop.xlane.xlu0 %3302
        %v3304 = vsel %vm1154, %v3260, 0.0
        %3305 = vadd.xlane.f32.xlu0 %v3304
        %v3306 = vpop.xlane.xlu0 %3305
        %v3307 = vsel %vm1154, %v3261, 0.0
        %3308 = vadd.xlane.f32.xlu0 %v3307
        %v3309 = vpop.xlane.xlu0 %3308
        %v3310 = vsel %vm1154, %v3262, 0.0
        %3311 = vadd.xlane.f32.xlu0 %v3310
        %v3312 = vpop.xlane.xlu0 %3311
        %v3313 = vsel %vm1154, %v3263, 0.0
        %3314 = vadd.xlane.f32.xlu0 %v3313
        %v3315 = vpop.xlane.xlu0 %3314
        %v3316 = vsel %vm1154, %v3264, 0.0
        %3317 = vadd.xlane.f32.xlu0 %v3316
        %v3318 = vpop.xlane.xlu0 %3317
        %v3319 = vsel %vm1154, %v3265, 0.0
        %3320 = vadd.xlane.f32.xlu0 %v3319
        %v3321 = vpop.xlane.xlu0 %3320
        %v3322 = vsel %vm1154, %v3266, 0.0
        %3323 = vadd.xlane.f32.xlu0 %v3322
        %v3324 = vpop.xlane.xlu0 %3323
        %v3325 = vsel %vm1154, %v3267, 0.0
        %3326 = vadd.xlane.f32.xlu0 %v3325
        %v3327 = vpop.xlane.xlu0 %3326
        %v3328 = vsel %vm1154, %v3268, 0.0
        %3329 = vadd.xlane.f32.xlu0 %v3328
        %v3330 = vpop.xlane.xlu0 %3329
        %v3331 = vsel %vm1154, %v3269, 0.0
        %3332 = vadd.xlane.f32.xlu0 %v3331
        %v3333 = vpop.xlane.xlu0 %3332
        %v3334 = vsel %vm1154, %v3270, 0.0
        %3335 = vadd.xlane.f32.xlu0 %v3334
        %v3336 = vpop.xlane.xlu0 %3335
        %v3337 = vsel %vm1154, %v3271, 0.0
        %3338 = vadd.xlane.f32.xlu0 %v3337
        %v3339 = vpop.xlane.xlu0 %3338
        %v3340 = vsel %vm1154, %v3272, 0.0
        %3341 = vadd.xlane.f32.xlu0 %v3340
        %v3342 = vpop.xlane.xlu0 %3341
        %v3343 = vsel %vm1154, %v3273, 0.0
        %3344 = vadd.xlane.f32.xlu0 %v3343
        %v3345 = vpop.xlane.xlu0 %3344
        %v3346 = vsel %vm1154, %v3274, 0.0
        %3347 = vadd.xlane.f32.xlu0 %v3346
        %v3348 = vpop.xlane.xlu0 %3347
        %v3349 = vsel %vm1154, %v3275, 0.0
        %3350 = vadd.xlane.f32.xlu0 %v3349
        %v3351 = vpop.xlane.xlu0 %3350
        %v3352 = vsel %vm1154, %v3276, 0.0
        %3353 = vadd.xlane.f32.xlu0 %v3352
        %v3354 = vpop.xlane.xlu0 %3353
        %v3355 = vsel %vm1154, %v3277, 0.0
        %3356 = vadd.xlane.f32.xlu0 %v3355
        %v3357 = vpop.xlane.xlu0 %3356
        %v3358 = vsel %vm1154, %v3278, 0.0
        %3359 = vadd.xlane.f32.xlu0 %v3358
        %v3360 = vpop.xlane.xlu0 %3359
        %v3361 = vsel %vm1154, %v3279, 0.0
        %3362 = vadd.xlane.f32.xlu0 %v3361
        %v3363 = vpop.xlane.xlu0 %3362
        %v3364 = vsel %vm1154, %v3280, 0.0
        %3365 = vadd.xlane.f32.xlu0 %v3364
        %v3366 = vpop.xlane.xlu0 %3365
        %v3367 = vsel %vm1154, %v3281, 0.0
        %3368 = vadd.xlane.f32.xlu0 %v3367
        %v3369 = vpop.xlane.xlu0 %3368
        %v3370 = vsel %vm1154, %v3282, 0.0
        %3371 = vadd.xlane.f32.xlu0 %v3370
        %v3372 = vpop.xlane.xlu0 %3371
        %v3373 = vsel %vm1154, %v3283, 0.0
        %3374 = vadd.xlane.f32.xlu0 %v3373
        %v3375 = vpop.xlane.xlu0 %3374
        %v3376 = vsel %vm1154, %v3284, 0.0
        %3377 = vadd.xlane.f32.xlu0 %v3376
        %v3378 = vpop.xlane.xlu0 %3377
        %v3379 = vsel %vm1154, %v3285, 0.0
        %3380 = vadd.xlane.f32.xlu0 %v3379
        %v3381 = vpop.xlane.xlu0 %3380
        %v3382 = vadd.f32 %v3155, %v3288
        %v3383 = vadd.f32 %v3156, %v3291
        %v3384 = vadd.f32 %v3157, %v3294
        %v3385 = vadd.f32 %v3158, %v3297
        %v3386 = vadd.f32 %v3159, %v3300
        %v3387 = vadd.f32 %v3160, %v3303
        %v3388 = vadd.f32 %v3161, %v3306
        %v3389 = vadd.f32 %v3162, %v3309
        %v3390 = vadd.f32 %v3163, %v3312
        %v3391 = vadd.f32 %v3164, %v3315
        %v3392 = vadd.f32 %v3165, %v3318
        %v3393 = vadd.f32 %v3166, %v3321
        %v3394 = vadd.f32 %v3167, %v3324
        %v3395 = vadd.f32 %v3168, %v3327
        %v3396 = vadd.f32 %v3169, %v3330
        %v3397 = vadd.f32 %v3170, %v3333
        %v3398 = vadd.f32 %v3171, %v3336
        %v3399 = vadd.f32 %v3172, %v3339
        %v3400 = vadd.f32 %v3173, %v3342
        %v3401 = vadd.f32 %v3174, %v3345
        %v3402 = vadd.f32 %v3175, %v3348
        %v3403 = vadd.f32 %v3176, %v3351
        %v3404 = vadd.f32 %v3177, %v3354
        %v3405 = vadd.f32 %v3178, %v3357
        %v3406 = vadd.f32 %v3179, %v3360
        %v3407 = vadd.f32 %v3180, %v3363
        %v3408 = vadd.f32 %v3181, %v3366
        %v3409 = vadd.f32 %v3182, %v3369
        %v3410 = vadd.f32 %v3183, %v3372
        %v3411 = vadd.f32 %v3184, %v3375
        %v3412 = vadd.f32 %v3185, %v3378
        %v3413 = vadd.f32 %v3186, %v3381
        %v3414 = vld [vmem:[%s3187 + $0x8] sm:$0x1]
        %v3415 = vld [vmem:[%s3187 + $0x14] sm:$0x1]
        %v3416 = vld [vmem:[%s3187 + $0x20] sm:$0x1]
        %v3417 = vld [vmem:[%s3187 + $0x2c] sm:$0x1]
        %v3418 = vld [vmem:[%s3187 + $0x38] sm:$0x1]
        %v3419 = vld [vmem:[%s3187 + $0x44] sm:$0x1]
        %v3420 = vld [vmem:[%s3187 + $0x50] sm:$0x1]
        %v3421 = vld [vmem:[%s3187 + $0x5c] sm:$0x1]
        %v3422 = vld [vmem:[%s3187 + $0x68] sm:$0x1]
        %v3423 = vld [vmem:[%s3187 + $0x74] sm:$0x1]
        %v3424 = vld [vmem:[%s3187 + $0x80] sm:$0x1]
        %v3425 = vld [vmem:[%s3187 + $0x8c] sm:$0x1]
        %v3426 = vld [vmem:[%s3187 + $0x98] sm:$0x1]
        %v3427 = vld [vmem:[%s3187 + $0xa4] sm:$0x1]
        %v3428 = vld [vmem:[%s3187 + $0xb0] sm:$0x1]
        %v3429 = vld [vmem:[%s3187 + $0xbc] sm:$0x1]
        %v3430 = vunpack.c.l.bf16 %v3414
        %v3431 = vunpack.c.l.bf16 %v3415
        %v3432 = vunpack.c.l.bf16 %v3416
        %v3433 = vunpack.c.l.bf16 %v3417
        %v3434 = vunpack.c.l.bf16 %v3418
        %v3435 = vunpack.c.l.bf16 %v3419
        %v3436 = vunpack.c.l.bf16 %v3420
        %v3437 = vunpack.c.l.bf16 %v3421
        %v3438 = vunpack.c.l.bf16 %v3422
        %v3439 = vunpack.c.l.bf16 %v3423
        %v3440 = vunpack.c.l.bf16 %v3424
        %v3441 = vunpack.c.l.bf16 %v3425
        %v3442 = vunpack.c.l.bf16 %v3426
        %v3443 = vunpack.c.l.bf16 %v3427
        %v3444 = vunpack.c.l.bf16 %v3428
        %v3445 = vunpack.c.l.bf16 %v3429
        %v3446 = vld [vmem:[%s3 + $0x7] sm:$0x1]
        %v3447 = vperm.slane %v3446, 0
        %v3448 = vmul.f32 %v3220, %v3447
        %v3449 = vmul.f32 %v3221, %v3447
        %v3450 = vmul.f32 %v3430, %v3447
        %v3451 = vmul.f32 %v3222, %v3447
        %v3452 = vmul.f32 %v3223, %v3447
        %v3453 = vmul.f32 %v3431, %v3447
        %v3454 = vmul.f32 %v3224, %v3447
        %v3455 = vmul.f32 %v3225, %v3447
        %v3456 = vmul.f32 %v3432, %v3447
        %v3457 = vmul.f32 %v3226, %v3447
        %v3458 = vmul.f32 %v3227, %v3447
        %v3459 = vmul.f32 %v3433, %v3447
        %v3460 = vmul.f32 %v3228, %v3447
        %v3461 = vmul.f32 %v3229, %v3447
        %v3462 = vmul.f32 %v3434, %v3447
        %v3463 = vmul.f32 %v3230, %v3447
        %v3464 = vmul.f32 %v3231, %v3447
        %v3465 = vmul.f32 %v3435, %v3447
        %v3466 = vmul.f32 %v3232, %v3447
        %v3467 = vmul.f32 %v3233, %v3447
        %v3468 = vmul.f32 %v3436, %v3447
        %v3469 = vmul.f32 %v3234, %v3447
        %v3470 = vmul.f32 %v3235, %v3447
        %v3471 = vmul.f32 %v3437, %v3447
        %v3472 = vmul.f32 %v3236, %v3447
        %v3473 = vmul.f32 %v3237, %v3447
        %v3474 = vmul.f32 %v3438, %v3447
        %v3475 = vmul.f32 %v3238, %v3447
        %v3476 = vmul.f32 %v3239, %v3447
        %v3477 = vmul.f32 %v3439, %v3447
        %v3478 = vmul.f32 %v3240, %v3447
        %v3479 = vmul.f32 %v3241, %v3447
        %v3480 = vmul.f32 %v3440, %v3447
        %v3481 = vmul.f32 %v3242, %v3447
        %v3482 = vmul.f32 %v3243, %v3447
        %v3483 = vmul.f32 %v3441, %v3447
        %v3484 = vmul.f32 %v3244, %v3447
        %v3485 = vmul.f32 %v3245, %v3447
        %v3486 = vmul.f32 %v3442, %v3447
        %v3487 = vmul.f32 %v3246, %v3447
        %v3488 = vmul.f32 %v3247, %v3447
        %v3489 = vmul.f32 %v3443, %v3447
        %v3490 = vmul.f32 %v3248, %v3447
        %v3491 = vmul.f32 %v3249, %v3447
        %v3492 = vmul.f32 %v3444, %v3447
        %v3493 = vmul.f32 %v3250, %v3447
        %v3494 = vmul.f32 %v3251, %v3447
        %v3495 = vmul.f32 %v3445, %v3447
        %v3496 = vsel %vm1365, %v3448, 0.0
        %3497 = vadd.xlane.f32.xlu0 %v3496
        %v3498 = vpop.xlane.xlu0 %3497
        %v3499 = vsel %vm1154, %v3449, 0.0
        %3500 = vadd.xlane.f32.xlu0 %v3499
        %v3501 = vpop.xlane.xlu0 %3500
        %v3502 = vsel %vm1372, %v3450, 0.0
        %3503 = vadd.xlane.f32.xlu0 %v3502
        %v3504 = vpop.xlane.xlu0 %3503
        %v3505 = vsel %vm1365, %v3451, 0.0
        %3506 = vadd.xlane.f32.xlu0 %v3505
        %v3507 = vpop.xlane.xlu0 %3506
        %v3508 = vsel %vm1154, %v3452, 0.0
        %3509 = vadd.xlane.f32.xlu0 %v3508
        %v3510 = vpop.xlane.xlu0 %3509
        %v3511 = vsel %vm1372, %v3453, 0.0
        %3512 = vadd.xlane.f32.xlu0 %v3511
        %v3513 = vpop.xlane.xlu0 %3512
        %v3514 = vsel %vm1365, %v3454, 0.0
        %3515 = vadd.xlane.f32.xlu0 %v3514
        %v3516 = vpop.xlane.xlu0 %3515
        %v3517 = vsel %vm1154, %v3455, 0.0
        %3518 = vadd.xlane.f32.xlu0 %v3517
        %v3519 = vpop.xlane.xlu0 %3518
        %v3520 = vsel %vm1372, %v3456, 0.0
        %3521 = vadd.xlane.f32.xlu0 %v3520
        %v3522 = vpop.xlane.xlu0 %3521
        %v3523 = vsel %vm1365, %v3457, 0.0
        %3524 = vadd.xlane.f32.xlu0 %v3523
        %v3525 = vpop.xlane.xlu0 %3524
        %v3526 = vsel %vm1154, %v3458, 0.0
        %3527 = vadd.xlane.f32.xlu0 %v3526
        %v3528 = vpop.xlane.xlu0 %3527
        %v3529 = vsel %vm1372, %v3459, 0.0
        %3530 = vadd.xlane.f32.xlu0 %v3529
        %v3531 = vpop.xlane.xlu0 %3530
        %v3532 = vsel %vm1365, %v3460, 0.0
        %3533 = vadd.xlane.f32.xlu0 %v3532
        %v3534 = vpop.xlane.xlu0 %3533
        %v3535 = vsel %vm1154, %v3461, 0.0
        %3536 = vadd.xlane.f32.xlu0 %v3535
        %v3537 = vpop.xlane.xlu0 %3536
        %v3538 = vsel %vm1372, %v3462, 0.0
        %3539 = vadd.xlane.f32.xlu0 %v3538
        %v3540 = vpop.xlane.xlu0 %3539
        %v3541 = vsel %vm1365, %v3463, 0.0
        %3542 = vadd.xlane.f32.xlu0 %v3541
        %v3543 = vpop.xlane.xlu0 %3542
        %v3544 = vsel %vm1154, %v3464, 0.0
        %3545 = vadd.xlane.f32.xlu0 %v3544
        %v3546 = vpop.xlane.xlu0 %3545
        %v3547 = vsel %vm1372, %v3465, 0.0
        %3548 = vadd.xlane.f32.xlu0 %v3547
        %v3549 = vpop.xlane.xlu0 %3548
        %v3550 = vsel %vm1365, %v3466, 0.0
        %3551 = vadd.xlane.f32.xlu0 %v3550
        %v3552 = vpop.xlane.xlu0 %3551
        %v3553 = vsel %vm1154, %v3467, 0.0
        %3554 = vadd.xlane.f32.xlu0 %v3553
        %v3555 = vpop.xlane.xlu0 %3554
        %v3556 = vsel %vm1372, %v3468, 0.0
        %3557 = vadd.xlane.f32.xlu0 %v3556
        %v3558 = vpop.xlane.xlu0 %3557
        %v3559 = vsel %vm1365, %v3469, 0.0
        %3560 = vadd.xlane.f32.xlu0 %v3559
        %v3561 = vpop.xlane.xlu0 %3560
        %v3562 = vsel %vm1154, %v3470, 0.0
        %3563 = vadd.xlane.f32.xlu0 %v3562
        %v3564 = vpop.xlane.xlu0 %3563
        %v3565 = vsel %vm1372, %v3471, 0.0
        %3566 = vadd.xlane.f32.xlu0 %v3565
        %v3567 = vpop.xlane.xlu0 %3566
        %v3568 = vsel %vm1365, %v3472, 0.0
        %3569 = vadd.xlane.f32.xlu0 %v3568
        %v3570 = vpop.xlane.xlu0 %3569
        %v3571 = vsel %vm1154, %v3473, 0.0
        %3572 = vadd.xlane.f32.xlu0 %v3571
        %v3573 = vpop.xlane.xlu0 %3572
        %v3574 = vsel %vm1372, %v3474, 0.0
        %3575 = vadd.xlane.f32.xlu0 %v3574
        %v3576 = vpop.xlane.xlu0 %3575
        %v3577 = vsel %vm1365, %v3475, 0.0
        %3578 = vadd.xlane.f32.xlu0 %v3577
        %v3579 = vpop.xlane.xlu0 %3578
        %v3580 = vsel %vm1154, %v3476, 0.0
        %3581 = vadd.xlane.f32.xlu0 %v3580
        %v3582 = vpop.xlane.xlu0 %3581
        %v3583 = vsel %vm1372, %v3477, 0.0
        %3584 = vadd.xlane.f32.xlu0 %v3583
        %v3585 = vpop.xlane.xlu0 %3584
        %v3586 = vsel %vm1365, %v3478, 0.0
        %3587 = vadd.xlane.f32.xlu0 %v3586
        %v3588 = vpop.xlane.xlu0 %3587
        %v3589 = vsel %vm1154, %v3479, 0.0
        %3590 = vadd.xlane.f32.xlu0 %v3589
        %v3591 = vpop.xlane.xlu0 %3590
        %v3592 = vsel %vm1372, %v3480, 0.0
        %3593 = vadd.xlane.f32.xlu0 %v3592
        %v3594 = vpop.xlane.xlu0 %3593
        %v3595 = vsel %vm1365, %v3481, 0.0
        %3596 = vadd.xlane.f32.xlu0 %v3595
        %v3597 = vpop.xlane.xlu0 %3596
        %v3598 = vsel %vm1154, %v3482, 0.0
        %3599 = vadd.xlane.f32.xlu0 %v3598
        %v3600 = vpop.xlane.xlu0 %3599
        %v3601 = vsel %vm1372, %v3483, 0.0
        %3602 = vadd.xlane.f32.xlu0 %v3601
        %v3603 = vpop.xlane.xlu0 %3602
        %v3604 = vsel %vm1365, %v3484, 0.0
        %3605 = vadd.xlane.f32.xlu0 %v3604
        %v3606 = vpop.xlane.xlu0 %3605
        %v3607 = vsel %vm1154, %v3485, 0.0
        %3608 = vadd.xlane.f32.xlu0 %v3607
        %v3609 = vpop.xlane.xlu0 %3608
        %v3610 = vsel %vm1372, %v3486, 0.0
        %3611 = vadd.xlane.f32.xlu0 %v3610
        %v3612 = vpop.xlane.xlu0 %3611
        %v3613 = vsel %vm1365, %v3487, 0.0
        %3614 = vadd.xlane.f32.xlu0 %v3613
        %v3615 = vpop.xlane.xlu0 %3614
        %v3616 = vsel %vm1154, %v3488, 0.0
        %3617 = vadd.xlane.f32.xlu0 %v3616
        %v3618 = vpop.xlane.xlu0 %3617
        %v3619 = vsel %vm1372, %v3489, 0.0
        %3620 = vadd.xlane.f32.xlu0 %v3619
        %v3621 = vpop.xlane.xlu0 %3620
        %v3622 = vsel %vm1365, %v3490, 0.0
        %3623 = vadd.xlane.f32.xlu0 %v3622
        %v3624 = vpop.xlane.xlu0 %3623
        %v3625 = vsel %vm1154, %v3491, 0.0
        %3626 = vadd.xlane.f32.xlu0 %v3625
        %v3627 = vpop.xlane.xlu0 %3626
        %v3628 = vsel %vm1372, %v3492, 0.0
        %3629 = vadd.xlane.f32.xlu0 %v3628
        %v3630 = vpop.xlane.xlu0 %3629
        %v3631 = vsel %vm1365, %v3493, 0.0
        %3632 = vadd.xlane.f32.xlu0 %v3631
        %v3633 = vpop.xlane.xlu0 %3632
        %v3634 = vsel %vm1154, %v3494, 0.0
        %3635 = vadd.xlane.f32.xlu0 %v3634
        %v3636 = vpop.xlane.xlu0 %3635
        %v3637 = vsel %vm1372, %v3495, 0.0
        %3638 = vadd.xlane.f32.xlu0 %v3637
        %v3639 = vpop.xlane.xlu0 %3638
        %v3688 = vrot.slane %v3498, 1
        %v3689 = vrot.slane %v3501, 1
        %v3690 = vsel %vm1559, %v3688, %v3689
        %v3691 = vrot.slane %v3504, 1
        %v3692 = vsel %vm1559, %v3689, %v3691
        %v3693 = vrot.slane %v3507, 1
        %v3694 = vrot.slane %v3510, 1
        %v3695 = vsel %vm1559, %v3693, %v3694
        %v3696 = vrot.slane %v3513, 1
        %v3697 = vsel %vm1559, %v3694, %v3696
        %v3698 = vrot.slane %v3516, 1
        %v3699 = vrot.slane %v3519, 1
        %v3700 = vsel %vm1559, %v3698, %v3699
        %v3701 = vrot.slane %v3522, 1
        %v3702 = vsel %vm1559, %v3699, %v3701
        %v3703 = vrot.slane %v3525, 1
        %v3704 = vrot.slane %v3528, 1
        %v3705 = vsel %vm1559, %v3703, %v3704
        %v3706 = vrot.slane %v3531, 1
        %v3707 = vsel %vm1559, %v3704, %v3706
        %v3708 = vrot.slane %v3534, 1
        %v3709 = vrot.slane %v3537, 1
        %v3710 = vsel %vm1559, %v3708, %v3709
        %v3711 = vrot.slane %v3540, 1
        %v3712 = vsel %vm1559, %v3709, %v3711
        %v3713 = vrot.slane %v3543, 1
        %v3714 = vrot.slane %v3546, 1
        %v3715 = vsel %vm1559, %v3713, %v3714
        %v3716 = vrot.slane %v3549, 1
        %v3717 = vsel %vm1559, %v3714, %v3716
        %v3718 = vrot.slane %v3552, 1
        %v3719 = vrot.slane %v3555, 1
        %v3720 = vsel %vm1559, %v3718, %v3719
        %v3721 = vrot.slane %v3558, 1
        %v3722 = vsel %vm1559, %v3719, %v3721
        %v3723 = vrot.slane %v3561, 1
        %v3724 = vrot.slane %v3564, 1
        %v3725 = vsel %vm1559, %v3723, %v3724
        %v3726 = vrot.slane %v3567, 1
        %v3727 = vsel %vm1559, %v3724, %v3726
        %v3728 = vrot.slane %v3570, 1
        %v3729 = vrot.slane %v3573, 1
        %v3730 = vsel %vm1559, %v3728, %v3729
        %v3731 = vrot.slane %v3576, 1
        %v3732 = vsel %vm1559, %v3729, %v3731
        %v3733 = vrot.slane %v3579, 1
        %v3734 = vrot.slane %v3582, 1
        %v3735 = vsel %vm1559, %v3733, %v3734
        %v3736 = vrot.slane %v3585, 1
        %v3737 = vsel %vm1559, %v3734, %v3736
        %v3738 = vrot.slane %v3588, 1
        %v3739 = vrot.slane %v3591, 1
        %v3740 = vsel %vm1559, %v3738, %v3739
        %v3741 = vrot.slane %v3594, 1
        %v3742 = vsel %vm1559, %v3739, %v3741
        %v3743 = vrot.slane %v3597, 1
        %v3744 = vrot.slane %v3600, 1
        %v3745 = vsel %vm1559, %v3743, %v3744
        %v3746 = vrot.slane %v3603, 1
        %v3747 = vsel %vm1559, %v3744, %v3746
        %v3748 = vrot.slane %v3606, 1
        %v3749 = vrot.slane %v3609, 1
        %v3750 = vsel %vm1559, %v3748, %v3749
        %v3751 = vrot.slane %v3612, 1
        %v3752 = vsel %vm1559, %v3749, %v3751
        %v3753 = vrot.slane %v3615, 1
        %v3754 = vrot.slane %v3618, 1
        %v3755 = vsel %vm1559, %v3753, %v3754
        %v3756 = vrot.slane %v3621, 1
        %v3757 = vsel %vm1559, %v3754, %v3756
        %v3758 = vrot.slane %v3624, 1
        %v3759 = vrot.slane %v3627, 1
        %v3760 = vsel %vm1559, %v3758, %v3759
        %v3761 = vrot.slane %v3630, 1
        %v3762 = vsel %vm1559, %v3759, %v3761
        %v3763 = vrot.slane %v3633, 1
        %v3764 = vrot.slane %v3636, 1
        %v3765 = vsel %vm1559, %v3763, %v3764
        %v3766 = vrot.slane %v3639, 1
        %v3767 = vsel %vm1559, %v3764, %v3766
        %v3800 = vadd.f32 %v3382, %v3690
        %v3801 = vadd.f32 %v3383, %v3692
        %v3802 = vadd.f32 %v3384, %v3695
        %v3803 = vadd.f32 %v3385, %v3697
        %v3804 = vadd.f32 %v3386, %v3700
        %v3805 = vadd.f32 %v3387, %v3702
        %v3806 = vadd.f32 %v3388, %v3705
        %v3807 = vadd.f32 %v3389, %v3707
        %v3808 = vadd.f32 %v3390, %v3710
        %v3809 = vadd.f32 %v3391, %v3712
        %v3810 = vadd.f32 %v3392, %v3715
        %v3811 = vadd.f32 %v3393, %v3717
        %v3812 = vadd.f32 %v3394, %v3720
        %v3813 = vadd.f32 %v3395, %v3722
        %v3814 = vadd.f32 %v3396, %v3725
        %v3815 = vadd.f32 %v3397, %v3727
        %v3816 = vadd.f32 %v3398, %v3730
        %v3817 = vadd.f32 %v3399, %v3732
        %v3818 = vadd.f32 %v3400, %v3735
        %v3819 = vadd.f32 %v3401, %v3737
        %v3820 = vadd.f32 %v3402, %v3740
        %v3821 = vadd.f32 %v3403, %v3742
        %v3822 = vadd.f32 %v3404, %v3745
        %v3823 = vadd.f32 %v3405, %v3747
        %v3824 = vadd.f32 %v3406, %v3750
        %v3825 = vadd.f32 %v3407, %v3752
        %v3826 = vadd.f32 %v3408, %v3755
        %v3827 = vadd.f32 %v3409, %v3757
        %v3828 = vadd.f32 %v3410, %v3760
        %v3829 = vadd.f32 %v3411, %v3762
        %v3830 = vadd.f32 %v3412, %v3765
        %v3831 = vadd.f32 %v3413, %v3767
        %v3832 = vld [vmem:[%s3187] sm:$0xe]
        %v3833 = vld [vmem:[%s3187 + $0xc] sm:$0xe]
        %v3834 = vld [vmem:[%s3187 + $0x18] sm:$0xe]
        %v3835 = vld [vmem:[%s3187 + $0x24] sm:$0xe]
        %v3836 = vld [vmem:[%s3187 + $0x30] sm:$0xe]
        %v3837 = vld [vmem:[%s3187 + $0x3c] sm:$0xe]
        %v3838 = vld [vmem:[%s3187 + $0x48] sm:$0xe]
        %v3839 = vld [vmem:[%s3187 + $0x54] sm:$0xe]
        %v3840 = vld [vmem:[%s3187 + $0x60] sm:$0xe]
        %v3841 = vld [vmem:[%s3187 + $0x6c] sm:$0xe]
        %v3842 = vld [vmem:[%s3187 + $0x78] sm:$0xe]
        %v3843 = vld [vmem:[%s3187 + $0x84] sm:$0xe]
        %v3844 = vld [vmem:[%s3187 + $0x90] sm:$0xe]
        %v3845 = vld [vmem:[%s3187 + $0x9c] sm:$0xe]
        %v3846 = vld [vmem:[%s3187 + $0xa8] sm:$0xe]
        %v3847 = vld [vmem:[%s3187 + $0xb4] sm:$0xe]
        %v3848 = vunpack.c.l.bf16 %v3832
        %v3849 = vunpack.c.l.bf16 %v3833
        %v3850 = vunpack.c.l.bf16 %v3834
        %v3851 = vunpack.c.l.bf16 %v3835
        %v3852 = vunpack.c.l.bf16 %v3836
        %v3853 = vunpack.c.l.bf16 %v3837
        %v3854 = vunpack.c.l.bf16 %v3838
        %v3855 = vunpack.c.l.bf16 %v3839
        %v3856 = vunpack.c.l.bf16 %v3840
        %v3857 = vunpack.c.l.bf16 %v3841
        %v3858 = vunpack.c.l.bf16 %v3842
        %v3859 = vunpack.c.l.bf16 %v3843
        %v3860 = vunpack.c.l.bf16 %v3844
        %v3861 = vunpack.c.l.bf16 %v3845
        %v3862 = vunpack.c.l.bf16 %v3846
        %v3863 = vunpack.c.l.bf16 %v3847
        %v3864 = vld [vmem:[%s3 + $0x8] sm:$0x1]
        %v3865 = vperm.slane %v3864, 0
        %v3866 = vmul.f32 %v3848, %v3865
        %v3867 = vmul.f32 %v3221, %v3865
        %v3868 = vmul.f32 %v3430, %v3865
        %v3869 = vmul.f32 %v3849, %v3865
        %v3870 = vmul.f32 %v3223, %v3865
        %v3871 = vmul.f32 %v3431, %v3865
        %v3872 = vmul.f32 %v3850, %v3865
        %v3873 = vmul.f32 %v3225, %v3865
        %v3874 = vmul.f32 %v3432, %v3865
        %v3875 = vmul.f32 %v3851, %v3865
        %v3876 = vmul.f32 %v3227, %v3865
        %v3877 = vmul.f32 %v3433, %v3865
        %v3878 = vmul.f32 %v3852, %v3865
        %v3879 = vmul.f32 %v3229, %v3865
        %v3880 = vmul.f32 %v3434, %v3865
        %v3881 = vmul.f32 %v3853, %v3865
        %v3882 = vmul.f32 %v3231, %v3865
        %v3883 = vmul.f32 %v3435, %v3865
        %v3884 = vmul.f32 %v3854, %v3865
        %v3885 = vmul.f32 %v3233, %v3865
        %v3886 = vmul.f32 %v3436, %v3865
        %v3887 = vmul.f32 %v3855, %v3865
        %v3888 = vmul.f32 %v3235, %v3865
        %v3889 = vmul.f32 %v3437, %v3865
        %v3890 = vmul.f32 %v3856, %v3865
        %v3891 = vmul.f32 %v3237, %v3865
        %v3892 = vmul.f32 %v3438, %v3865
        %v3893 = vmul.f32 %v3857, %v3865
        %v3894 = vmul.f32 %v3239, %v3865
        %v3895 = vmul.f32 %v3439, %v3865
        %v3896 = vmul.f32 %v3858, %v3865
        %v3897 = vmul.f32 %v3241, %v3865
        %v3898 = vmul.f32 %v3440, %v3865
        %v3899 = vmul.f32 %v3859, %v3865
        %v3900 = vmul.f32 %v3243, %v3865
        %v3901 = vmul.f32 %v3441, %v3865
        %v3902 = vmul.f32 %v3860, %v3865
        %v3903 = vmul.f32 %v3245, %v3865
        %v3904 = vmul.f32 %v3442, %v3865
        %v3905 = vmul.f32 %v3861, %v3865
        %v3906 = vmul.f32 %v3247, %v3865
        %v3907 = vmul.f32 %v3443, %v3865
        %v3908 = vmul.f32 %v3862, %v3865
        %v3909 = vmul.f32 %v3249, %v3865
        %v3910 = vmul.f32 %v3444, %v3865
        %v3911 = vmul.f32 %v3863, %v3865
        %v3912 = vmul.f32 %v3251, %v3865
        %v3913 = vmul.f32 %v3445, %v3865
        %v3914 = vsel %vm1786, %v3866, 0.0
        %3915 = vadd.xlane.f32.xlu0 %v3914
        %v3916 = vpop.xlane.xlu0 %3915
        %v3917 = vsel %vm1154, %v3867, 0.0
        %3918 = vadd.xlane.f32.xlu0 %v3917
        %v3919 = vpop.xlane.xlu0 %3918
        %v3920 = vsel %vm1793, %v3868, 0.0
        %3921 = vadd.xlane.f32.xlu0 %v3920
        %v3922 = vpop.xlane.xlu0 %3921
        %v3923 = vsel %vm1786, %v3869, 0.0
        %3924 = vadd.xlane.f32.xlu0 %v3923
        %v3925 = vpop.xlane.xlu0 %3924
        %v3926 = vsel %vm1154, %v3870, 0.0
        %3927 = vadd.xlane.f32.xlu0 %v3926
        %v3928 = vpop.xlane.xlu0 %3927
        %v3929 = vsel %vm1793, %v3871, 0.0
        %3930 = vadd.xlane.f32.xlu0 %v3929
        %v3931 = vpop.xlane.xlu0 %3930
        %v3932 = vsel %vm1786, %v3872, 0.0
        %3933 = vadd.xlane.f32.xlu0 %v3932
        %v3934 = vpop.xlane.xlu0 %3933
        %v3935 = vsel %vm1154, %v3873, 0.0
        %3936 = vadd.xlane.f32.xlu0 %v3935
        %v3937 = vpop.xlane.xlu0 %3936
        %v3938 = vsel %vm1793, %v3874, 0.0
        %3939 = vadd.xlane.f32.xlu0 %v3938
        %v3940 = vpop.xlane.xlu0 %3939
        %v3941 = vsel %vm1786, %v3875, 0.0
        %3942 = vadd.xlane.f32.xlu0 %v3941
        %v3943 = vpop.xlane.xlu0 %3942
        %v3944 = vsel %vm1154, %v3876, 0.0
        %3945 = vadd.xlane.f32.xlu0 %v3944
        %v3946 = vpop.xlane.xlu0 %3945
        %v3947 = vsel %vm1793, %v3877, 0.0
        %3948 = vadd.xlane.f32.xlu0 %v3947
        %v3949 = vpop.xlane.xlu0 %3948
        %v3950 = vsel %vm1786, %v3878, 0.0
        %3951 = vadd.xlane.f32.xlu0 %v3950
        %v3952 = vpop.xlane.xlu0 %3951
        %v3953 = vsel %vm1154, %v3879, 0.0
        %3954 = vadd.xlane.f32.xlu0 %v3953
        %v3955 = vpop.xlane.xlu0 %3954
        %v3956 = vsel %vm1793, %v3880, 0.0
        %3957 = vadd.xlane.f32.xlu0 %v3956
        %v3958 = vpop.xlane.xlu0 %3957
        %v3959 = vsel %vm1786, %v3881, 0.0
        %3960 = vadd.xlane.f32.xlu0 %v3959
        %v3961 = vpop.xlane.xlu0 %3960
        %v3962 = vsel %vm1154, %v3882, 0.0
        %3963 = vadd.xlane.f32.xlu0 %v3962
        %v3964 = vpop.xlane.xlu0 %3963
        %v3965 = vsel %vm1793, %v3883, 0.0
        %3966 = vadd.xlane.f32.xlu0 %v3965
        %v3967 = vpop.xlane.xlu0 %3966
        %v3968 = vsel %vm1786, %v3884, 0.0
        %3969 = vadd.xlane.f32.xlu0 %v3968
        %v3970 = vpop.xlane.xlu0 %3969
        %v3971 = vsel %vm1154, %v3885, 0.0
        %3972 = vadd.xlane.f32.xlu0 %v3971
        %v3973 = vpop.xlane.xlu0 %3972
        %v3974 = vsel %vm1793, %v3886, 0.0
        %3975 = vadd.xlane.f32.xlu0 %v3974
        %v3976 = vpop.xlane.xlu0 %3975
        %v3977 = vsel %vm1786, %v3887, 0.0
        %3978 = vadd.xlane.f32.xlu0 %v3977
        %v3979 = vpop.xlane.xlu0 %3978
        %v3980 = vsel %vm1154, %v3888, 0.0
        %3981 = vadd.xlane.f32.xlu0 %v3980
        %v3982 = vpop.xlane.xlu0 %3981
        %v3983 = vsel %vm1793, %v3889, 0.0
        %3984 = vadd.xlane.f32.xlu0 %v3983
        %v3985 = vpop.xlane.xlu0 %3984
        %v3986 = vsel %vm1786, %v3890, 0.0
        %3987 = vadd.xlane.f32.xlu0 %v3986
        %v3988 = vpop.xlane.xlu0 %3987
        %v3989 = vsel %vm1154, %v3891, 0.0
        %3990 = vadd.xlane.f32.xlu0 %v3989
        %v3991 = vpop.xlane.xlu0 %3990
        %v3992 = vsel %vm1793, %v3892, 0.0
        %3993 = vadd.xlane.f32.xlu0 %v3992
        %v3994 = vpop.xlane.xlu0 %3993
        %v3995 = vsel %vm1786, %v3893, 0.0
        %3996 = vadd.xlane.f32.xlu0 %v3995
        %v3997 = vpop.xlane.xlu0 %3996
        %v3998 = vsel %vm1154, %v3894, 0.0
        %3999 = vadd.xlane.f32.xlu0 %v3998
        %v4000 = vpop.xlane.xlu0 %3999
        %v4001 = vsel %vm1793, %v3895, 0.0
        %4002 = vadd.xlane.f32.xlu0 %v4001
        %v4003 = vpop.xlane.xlu0 %4002
        %v4004 = vsel %vm1786, %v3896, 0.0
        %4005 = vadd.xlane.f32.xlu0 %v4004
        %v4006 = vpop.xlane.xlu0 %4005
        %v4007 = vsel %vm1154, %v3897, 0.0
        %4008 = vadd.xlane.f32.xlu0 %v4007
        %v4009 = vpop.xlane.xlu0 %4008
        %v4010 = vsel %vm1793, %v3898, 0.0
        %4011 = vadd.xlane.f32.xlu0 %v4010
        %v4012 = vpop.xlane.xlu0 %4011
        %v4013 = vsel %vm1786, %v3899, 0.0
        %4014 = vadd.xlane.f32.xlu0 %v4013
        %v4015 = vpop.xlane.xlu0 %4014
        %v4016 = vsel %vm1154, %v3900, 0.0
        %4017 = vadd.xlane.f32.xlu0 %v4016
        %v4018 = vpop.xlane.xlu0 %4017
        %v4019 = vsel %vm1793, %v3901, 0.0
        %4020 = vadd.xlane.f32.xlu0 %v4019
        %v4021 = vpop.xlane.xlu0 %4020
        %v4022 = vsel %vm1786, %v3902, 0.0
        %4023 = vadd.xlane.f32.xlu0 %v4022
        %v4024 = vpop.xlane.xlu0 %4023
        %v4025 = vsel %vm1154, %v3903, 0.0
        %4026 = vadd.xlane.f32.xlu0 %v4025
        %v4027 = vpop.xlane.xlu0 %4026
        %v4028 = vsel %vm1793, %v3904, 0.0
        %4029 = vadd.xlane.f32.xlu0 %v4028
        %v4030 = vpop.xlane.xlu0 %4029
        %v4031 = vsel %vm1786, %v3905, 0.0
        %4032 = vadd.xlane.f32.xlu0 %v4031
        %v4033 = vpop.xlane.xlu0 %4032
        %v4034 = vsel %vm1154, %v3906, 0.0
        %4035 = vadd.xlane.f32.xlu0 %v4034
        %v4036 = vpop.xlane.xlu0 %4035
        %v4037 = vsel %vm1793, %v3907, 0.0
        %4038 = vadd.xlane.f32.xlu0 %v4037
        %v4039 = vpop.xlane.xlu0 %4038
        %v4040 = vsel %vm1786, %v3908, 0.0
        %4041 = vadd.xlane.f32.xlu0 %v4040
        %v4042 = vpop.xlane.xlu0 %4041
        %v4043 = vsel %vm1154, %v3909, 0.0
        %4044 = vadd.xlane.f32.xlu0 %v4043
        %v4045 = vpop.xlane.xlu0 %4044
        %v4046 = vsel %vm1793, %v3910, 0.0
        %4047 = vadd.xlane.f32.xlu0 %v4046
        %v4048 = vpop.xlane.xlu0 %4047
        %v4049 = vsel %vm1786, %v3911, 0.0
        %4050 = vadd.xlane.f32.xlu0 %v4049
        %v4051 = vpop.xlane.xlu0 %4050
        %v4052 = vsel %vm1154, %v3912, 0.0
        %4053 = vadd.xlane.f32.xlu0 %v4052
        %v4054 = vpop.xlane.xlu0 %4053
        %v4055 = vsel %vm1793, %v3913, 0.0
        %4056 = vadd.xlane.f32.xlu0 %v4055
        %v4057 = vpop.xlane.xlu0 %4056
        %v4106 = vrot.slane %v3916, 2
        %v4107 = vrot.slane %v3919, 2
        %v4108 = vsel %vm1980, %v4106, %v4107
        %v4109 = vrot.slane %v3922, 2
        %v4110 = vsel %vm1980, %v4107, %v4109
        %v4111 = vrot.slane %v3925, 2
        %v4112 = vrot.slane %v3928, 2
        %v4113 = vsel %vm1980, %v4111, %v4112
        %v4114 = vrot.slane %v3931, 2
        %v4115 = vsel %vm1980, %v4112, %v4114
        %v4116 = vrot.slane %v3934, 2
        %v4117 = vrot.slane %v3937, 2
        %v4118 = vsel %vm1980, %v4116, %v4117
        %v4119 = vrot.slane %v3940, 2
        %v4120 = vsel %vm1980, %v4117, %v4119
        %v4121 = vrot.slane %v3943, 2
        %v4122 = vrot.slane %v3946, 2
        %v4123 = vsel %vm1980, %v4121, %v4122
        %v4124 = vrot.slane %v3949, 2
        %v4125 = vsel %vm1980, %v4122, %v4124
        %v4126 = vrot.slane %v3952, 2
        %v4127 = vrot.slane %v3955, 2
        %v4128 = vsel %vm1980, %v4126, %v4127
        %v4129 = vrot.slane %v3958, 2
        %v4130 = vsel %vm1980, %v4127, %v4129
        %v4131 = vrot.slane %v3961, 2
        %v4132 = vrot.slane %v3964, 2
        %v4133 = vsel %vm1980, %v4131, %v4132
        %v4134 = vrot.slane %v3967, 2
        %v4135 = vsel %vm1980, %v4132, %v4134
        %v4136 = vrot.slane %v3970, 2
        %v4137 = vrot.slane %v3973, 2
        %v4138 = vsel %vm1980, %v4136, %v4137
        %v4139 = vrot.slane %v3976, 2
        %v4140 = vsel %vm1980, %v4137, %v4139
        %v4141 = vrot.slane %v3979, 2
        %v4142 = vrot.slane %v3982, 2
        %v4143 = vsel %vm1980, %v4141, %v4142
        %v4144 = vrot.slane %v3985, 2
        %v4145 = vsel %vm1980, %v4142, %v4144
        %v4146 = vrot.slane %v3988, 2
        %v4147 = vrot.slane %v3991, 2
        %v4148 = vsel %vm1980, %v4146, %v4147
        %v4149 = vrot.slane %v3994, 2
        %v4150 = vsel %vm1980, %v4147, %v4149
        %v4151 = vrot.slane %v3997, 2
        %v4152 = vrot.slane %v4000, 2
        %v4153 = vsel %vm1980, %v4151, %v4152
        %v4154 = vrot.slane %v4003, 2
        %v4155 = vsel %vm1980, %v4152, %v4154
        %v4156 = vrot.slane %v4006, 2
        %v4157 = vrot.slane %v4009, 2
        %v4158 = vsel %vm1980, %v4156, %v4157
        %v4159 = vrot.slane %v4012, 2
        %v4160 = vsel %vm1980, %v4157, %v4159
        %v4161 = vrot.slane %v4015, 2
        %v4162 = vrot.slane %v4018, 2
        %v4163 = vsel %vm1980, %v4161, %v4162
        %v4164 = vrot.slane %v4021, 2
        %v4165 = vsel %vm1980, %v4162, %v4164
        %v4166 = vrot.slane %v4024, 2
        %v4167 = vrot.slane %v4027, 2
        %v4168 = vsel %vm1980, %v4166, %v4167
        %v4169 = vrot.slane %v4030, 2
        %v4170 = vsel %vm1980, %v4167, %v4169
        %v4171 = vrot.slane %v4033, 2
        %v4172 = vrot.slane %v4036, 2
        %v4173 = vsel %vm1980, %v4171, %v4172
        %v4174 = vrot.slane %v4039, 2
        %v4175 = vsel %vm1980, %v4172, %v4174
        %v4176 = vrot.slane %v4042, 2
        %v4177 = vrot.slane %v4045, 2
        %v4178 = vsel %vm1980, %v4176, %v4177
        %v4179 = vrot.slane %v4048, 2
        %v4180 = vsel %vm1980, %v4177, %v4179
        %v4181 = vrot.slane %v4051, 2
        %v4182 = vrot.slane %v4054, 2
        %v4183 = vsel %vm1980, %v4181, %v4182
        %v4184 = vrot.slane %v4057, 2
        %v4185 = vsel %vm1980, %v4182, %v4184
        %v4218 = vadd.f32 %v3800, %v4108
        %v4219 = vadd.f32 %v3801, %v4110
        %v4220 = vadd.f32 %v3802, %v4113
        %v4221 = vadd.f32 %v3803, %v4115
        %v4222 = vadd.f32 %v3804, %v4118
        %v4223 = vadd.f32 %v3805, %v4120
        %v4224 = vadd.f32 %v3806, %v4123
        %v4225 = vadd.f32 %v3807, %v4125
        %v4226 = vadd.f32 %v3808, %v4128
        %v4227 = vadd.f32 %v3809, %v4130
        %v4228 = vadd.f32 %v3810, %v4133
        %v4229 = vadd.f32 %v3811, %v4135
        %v4230 = vadd.f32 %v3812, %v4138
        %v4231 = vadd.f32 %v3813, %v4140
        %v4232 = vadd.f32 %v3814, %v4143
        %v4233 = vadd.f32 %v3815, %v4145
        %v4234 = vadd.f32 %v3816, %v4148
        %v4235 = vadd.f32 %v3817, %v4150
        %v4236 = vadd.f32 %v3818, %v4153
        %v4237 = vadd.f32 %v3819, %v4155
        %v4238 = vadd.f32 %v3820, %v4158
        %v4239 = vadd.f32 %v3821, %v4160
        %v4240 = vadd.f32 %v3822, %v4163
        %v4241 = vadd.f32 %v3823, %v4165
        %v4242 = vadd.f32 %v3824, %v4168
        %v4243 = vadd.f32 %v3825, %v4170
        %v4244 = vadd.f32 %v3826, %v4173
        %v4245 = vadd.f32 %v3827, %v4175
        %v4246 = vadd.f32 %v3828, %v4178
        %v4247 = vadd.f32 %v3829, %v4180
        %v4248 = vadd.f32 %v3830, %v4183
        %v4249 = vadd.f32 %v3831, %v4185
        %v4250 = vld [vmem:[#allocation3] sm:$0x1]
        %v4252 = vperm.slane %v4250, 0
        %4253 = vset.pattern.permute.xlu0 0
        %4254 = vperm.xlu0 %4253, %v4252
        %v4255 = vpop.permute.xlu0 %4254
        %v4257 = vadd.f32 %v4218, %v4255
        %v4258 = vadd.f32 %v4219, %v4255
        %v4259 = vadd.f32 %v4220, %v4255
        %v4260 = vadd.f32 %v4221, %v4255
        %v4261 = vadd.f32 %v4222, %v4255
        %v4262 = vadd.f32 %v4223, %v4255
        %v4263 = vadd.f32 %v4224, %v4255
        %v4264 = vadd.f32 %v4225, %v4255
        %v4265 = vadd.f32 %v4226, %v4255
        %v4266 = vadd.f32 %v4227, %v4255
        %v4267 = vadd.f32 %v4228, %v4255
        %v4268 = vadd.f32 %v4229, %v4255
        %v4269 = vadd.f32 %v4230, %v4255
        %v4270 = vadd.f32 %v4231, %v4255
        %v4271 = vadd.f32 %v4232, %v4255
        %v4272 = vadd.f32 %v4233, %v4255
        %v4273 = vadd.f32 %v4234, %v4255
        %v4274 = vadd.f32 %v4235, %v4255
        %v4275 = vadd.f32 %v4236, %v4255
        %v4276 = vadd.f32 %v4237, %v4255
        %v4277 = vadd.f32 %v4238, %v4255
        %v4278 = vadd.f32 %v4239, %v4255
        %v4279 = vadd.f32 %v4240, %v4255
        %v4280 = vadd.f32 %v4241, %v4255
        %v4281 = vadd.f32 %v4242, %v4255
        %v4282 = vadd.f32 %v4243, %v4255
        %v4283 = vadd.f32 %v4244, %v4255
        %v4284 = vadd.f32 %v4245, %v4255
        %v4285 = vadd.f32 %v4246, %v4255
        %v4286 = vadd.f32 %v4247, %v4255
        %v4287 = vadd.f32 %v4248, %v4255
        %v4288 = vadd.f32 %v4249, %v4255
        %4321 = vset.pattern.permute.xlu0 0
        %4322 = vperm.xlu0 %4321, %v4257
        %v4323 = vpop.permute.xlu0 %4322
        %4324 = vset.pattern.permute.xlu0 0
        %4325 = vperm.xlu0 %4324, %v4258
        %v4326 = vpop.permute.xlu0 %4325
        %4327 = vset.pattern.permute.xlu0 0
        %4328 = vperm.xlu0 %4327, %v4259
        %v4329 = vpop.permute.xlu0 %4328
        %4330 = vset.pattern.permute.xlu0 0
        %4331 = vperm.xlu0 %4330, %v4260
        %v4332 = vpop.permute.xlu0 %4331
        %4333 = vset.pattern.permute.xlu0 0
        %4334 = vperm.xlu0 %4333, %v4261
        %v4335 = vpop.permute.xlu0 %4334
        %4336 = vset.pattern.permute.xlu0 0
        %4337 = vperm.xlu0 %4336, %v4262
        %v4338 = vpop.permute.xlu0 %4337
        %4339 = vset.pattern.permute.xlu0 0
        %4340 = vperm.xlu0 %4339, %v4263
        %v4341 = vpop.permute.xlu0 %4340
        %4342 = vset.pattern.permute.xlu0 0
        %4343 = vperm.xlu0 %4342, %v4264
        %v4344 = vpop.permute.xlu0 %4343
        %4345 = vset.pattern.permute.xlu0 0
        %4346 = vperm.xlu0 %4345, %v4265
        %v4347 = vpop.permute.xlu0 %4346
        %4348 = vset.pattern.permute.xlu0 0
        %4349 = vperm.xlu0 %4348, %v4266
        %v4350 = vpop.permute.xlu0 %4349
        %4351 = vset.pattern.permute.xlu0 0
        %4352 = vperm.xlu0 %4351, %v4267
        %v4353 = vpop.permute.xlu0 %4352
        %4354 = vset.pattern.permute.xlu0 0
        %4355 = vperm.xlu0 %4354, %v4268
        %v4356 = vpop.permute.xlu0 %4355
        %4357 = vset.pattern.permute.xlu0 0
        %4358 = vperm.xlu0 %4357, %v4269
        %v4359 = vpop.permute.xlu0 %4358
        %4360 = vset.pattern.permute.xlu0 0
        %4361 = vperm.xlu0 %4360, %v4270
        %v4362 = vpop.permute.xlu0 %4361
        %4363 = vset.pattern.permute.xlu0 0
        %4364 = vperm.xlu0 %4363, %v4271
        %v4365 = vpop.permute.xlu0 %4364
        %4366 = vset.pattern.permute.xlu0 0
        %4367 = vperm.xlu0 %4366, %v4272
        %v4368 = vpop.permute.xlu0 %4367
        %4369 = vset.pattern.permute.xlu0 0
        %4370 = vperm.xlu0 %4369, %v4273
        %v4371 = vpop.permute.xlu0 %4370
        %4372 = vset.pattern.permute.xlu0 0
        %4373 = vperm.xlu0 %4372, %v4274
        %v4374 = vpop.permute.xlu0 %4373
        %4375 = vset.pattern.permute.xlu0 0
        %4376 = vperm.xlu0 %4375, %v4275
        %v4377 = vpop.permute.xlu0 %4376
        %4378 = vset.pattern.permute.xlu0 0
        %4379 = vperm.xlu0 %4378, %v4276
        %v4380 = vpop.permute.xlu0 %4379
        %4381 = vset.pattern.permute.xlu0 0
        %4382 = vperm.xlu0 %4381, %v4277
        %v4383 = vpop.permute.xlu0 %4382
        %4384 = vset.pattern.permute.xlu0 0
        %4385 = vperm.xlu0 %4384, %v4278
        %v4386 = vpop.permute.xlu0 %4385
        %4387 = vset.pattern.permute.xlu0 0
        %4388 = vperm.xlu0 %4387, %v4279
        %v4389 = vpop.permute.xlu0 %4388
        %4390 = vset.pattern.permute.xlu0 0
        %4391 = vperm.xlu0 %4390, %v4280
        %v4392 = vpop.permute.xlu0 %4391
        %4393 = vset.pattern.permute.xlu0 0
        %4394 = vperm.xlu0 %4393, %v4281
        %v4395 = vpop.permute.xlu0 %4394
        %4396 = vset.pattern.permute.xlu0 0
        %4397 = vperm.xlu0 %4396, %v4282
        %v4398 = vpop.permute.xlu0 %4397
        %4399 = vset.pattern.permute.xlu0 0
        %4400 = vperm.xlu0 %4399, %v4283
        %v4401 = vpop.permute.xlu0 %4400
        %4402 = vset.pattern.permute.xlu0 0
        %4403 = vperm.xlu0 %4402, %v4284
        %v4404 = vpop.permute.xlu0 %4403
        %4405 = vset.pattern.permute.xlu0 0
        %4406 = vperm.xlu0 %4405, %v4285
        %v4407 = vpop.permute.xlu0 %4406
        %4408 = vset.pattern.permute.xlu0 0
        %4409 = vperm.xlu0 %4408, %v4286
        %v4410 = vpop.permute.xlu0 %4409
        %4411 = vset.pattern.permute.xlu0 0
        %4412 = vperm.xlu0 %4411, %v4287
        %v4413 = vpop.permute.xlu0 %4412
        %4414 = vset.pattern.permute.xlu0 0
        %4415 = vperm.xlu0 %4414, %v4288
        %v4416 = vpop.permute.xlu0 %4415
        %v4417 = vlaneseq
        %v4418 = vand.u32 %v4417, 127
        %v4419 = vperm.slane %v4323, %v4418
        %v4420 = vadd.s32 %v4418, 4294967288
        %v4421 = vperm.slane %v4326, %v4420
        %vm4422 = vcmask 130112
        %v4423 = vsel %vm4422, %v4421, %v4419
        %v4424 = vperm.slane %v4329, %v4418
        %v4425 = vperm.slane %v4332, %v4420
        %v4426 = vsel %vm4422, %v4425, %v4424
        %v4427 = vperm.slane %v4335, %v4418
        %v4428 = vperm.slane %v4338, %v4420
        %v4429 = vsel %vm4422, %v4428, %v4427
        %v4430 = vperm.slane %v4341, %v4418
        %v4431 = vperm.slane %v4344, %v4420
        %v4432 = vsel %vm4422, %v4431, %v4430
        %v4433 = vperm.slane %v4347, %v4418
        %v4434 = vperm.slane %v4350, %v4420
        %v4435 = vsel %vm4422, %v4434, %v4433
        %v4436 = vperm.slane %v4353, %v4418
        %v4437 = vperm.slane %v4356, %v4420
        %v4438 = vsel %vm4422, %v4437, %v4436
        %v4439 = vperm.slane %v4359, %v4418
        %v4440 = vperm.slane %v4362, %v4420
        %v4441 = vsel %vm4422, %v4440, %v4439
        %v4442 = vperm.slane %v4365, %v4418
        %v4443 = vperm.slane %v4368, %v4420
        %v4444 = vsel %vm4422, %v4443, %v4442
        %v4445 = vperm.slane %v4371, %v4418
        %v4446 = vperm.slane %v4374, %v4420
        %v4447 = vsel %vm4422, %v4446, %v4445
        %v4448 = vperm.slane %v4377, %v4418
        %v4449 = vperm.slane %v4380, %v4420
        %v4450 = vsel %vm4422, %v4449, %v4448
        %v4451 = vperm.slane %v4383, %v4418
        %v4452 = vperm.slane %v4386, %v4420
        %v4453 = vsel %vm4422, %v4452, %v4451
        %v4454 = vperm.slane %v4389, %v4418
        %v4455 = vperm.slane %v4392, %v4420
        %v4456 = vsel %vm4422, %v4455, %v4454
        %v4457 = vperm.slane %v4395, %v4418
        %v4458 = vperm.slane %v4398, %v4420
        %v4459 = vsel %vm4422, %v4458, %v4457
        %v4460 = vperm.slane %v4401, %v4418
        %v4461 = vperm.slane %v4404, %v4420
        %v4462 = vsel %vm4422, %v4461, %v4460
        %v4463 = vperm.slane %v4407, %v4418
        %v4464 = vperm.slane %v4410, %v4420
        %v4465 = vsel %vm4422, %v4464, %v4463
        %v4466 = vperm.slane %v4413, %v4418
        %v4467 = vperm.slane %v4416, %v4420
        %v4468 = vsel %vm4422, %v4467, %v4466
        %vm4469 = vcmask 1041409
        %v4470 = vsel %vm4469, %v4426, %v4423
        %vm4471 = vcmask 1042434
        %v4472 = vsel %vm4471, %v4429, %v4470
        %vm4473 = vcmask 1043459
        %v4474 = vsel %vm4473, %v4432, %v4472
        %vm4475 = vcmask 1044484
        %v4476 = vsel %vm4475, %v4435, %v4474
        %vm4477 = vcmask 1045509
        %v4478 = vsel %vm4477, %v4438, %v4476
        %vm4479 = vcmask 1046534
        %v4480 = vsel %vm4479, %v4441, %v4478
        %vm4481 = vcmask 1047559
        %v4482 = vsel %vm4481, %v4444, %v4480
        %v4483 = vsel %vm4469, %v4450, %v4447
        %v4484 = vsel %vm4471, %v4453, %v4483
        %v4485 = vsel %vm4473, %v4456, %v4484
        %v4486 = vsel %vm4475, %v4459, %v4485
        %v4487 = vsel %vm4477, %v4462, %v4486
        %v4488 = vsel %vm4479, %v4465, %v4487
        %v4489 = vsel %vm4481, %v4468, %v4488
        %vm4492 = vcmask 130048
        %4493 = vst.msk [vmem:[%s336] sm:$0xff] %vm4492, %v4482
        %4494 = vst.msk [vmem:[%s336 + $0x8] sm:$0xff] %vm4492, %v4489
        %s4495 = sand.u32 %s185, 1
        %s4496 = scalar_lea.sflag [#allocation5], %s4495
        %s4497 = sand.u32 %s185, 1
        %s4498 = smul.addr %s4497, 16
        %s4499 = scalar_lea.vmem [#allocation4], %s4498
        // Predicated region
        $region57: #{analysis_side_net.7} parent=39 // pred_check
          %p4500 = pneg %p195
        $region58: #{analysis_side_net.7} parent=39 // pred_check_branch
          %4502 = sbr.rel (%p4500) target = $region60
        $region59: #{analysis_side_net.7} parent=39 // pred_region
          %s4503 = smul.u32 2, %s26
          %4505 = vsyncadd %s4496, 0
          %s4506 = smul.addr %s25, 2
          %s4507 = sadd.s32 %s4503, %s4506
          %s4508 = smul.addr %s4507, 8
          %s4509 = scalar_lea.hbm %s5, %s4508
          %s4510 = sshll.u32 %s4499, 4
          %s4511 = int_to_ptr.vmem [resolvable:$true] %s4510
          %s4512 = sshll.u32 %s4509, 4
          %s4513 = int_to_ptr.hbm [resolvable:$true] %s4512
          %4518 = dma.vmem_to_hbm [thread:$0]  %s4511, 256, %s4513, %s4496, 128, 128, 8
        $region60: #{analysis_side_net.7} parent=39 // pred_fallthru
          _
      $region40: #{analysis_side_net.7} parent=5 // pred_fallthru
        _
      %p4519 = scmp.le.s32.totalorder 2, %s16
      // Predicated region
      $region61: #{analysis_side_net.7} parent=5 // pred_check
        %p4520 = pneg %p4519
      $region62: #{analysis_side_net.7} parent=5 // pred_check_branch
        %4522 = sbr.rel (%p4520) target = $region64
      $region63: #{analysis_side_net.7} parent=5 // pred_region
        %s4523 = ssub.s32 %s16, 2
        // Predicated region
        $region65: #{analysis_side_net.7} parent=63 // pred_check
          %p4524 = pneg %p201
        $region66: #{analysis_side_net.7} parent=63 // pred_check_branch
          %4526 = sbr.rel (%p4524) target = $region68
        $region67: #{analysis_side_net.7} parent=63 // pred_region
          %s4527 = sand.u32 %s186, 1
          %s4528 = scalar_lea.sflag [#allocation5], %s4527
          %s4529 = sand.u32 %s186, 1
          %s4530 = smul.addr %s4529, 16
          %s4531 = scalar_lea.vmem [#allocation4], %s4530
          %4533 = dma.done %s4528, 256
        $region68: #{analysis_side_net.7} parent=63 // pred_fallthru
          _
      $region64: #{analysis_side_net.7} parent=5 // pred_fallthru
        _
    $region6: #{analysis_side_net.7} parent=1 // loop_footer
      %s20 = sadd.s32 1, %s16
    $region7: #{analysis_side_net.7} parent=1 // loop_footer_branch
      %15 = sbr.rel target = $region3
    $region8: #{analysis_side_net.7} parent=1 // loop_exit
      _
    %4534 = vsyncpa [#allocation5], 1
    %s4535 = scalar_lea.sflag [#allocation5], 1
    %4536 = vsyncpa %s4535, 1

</llo_original>
